<compile_context>
chip_gen: v5e
topology: v5e:2x2
jax: 0.10.0
libtpu: 0.0.40
codegen_flags: <defaults>
</compile_context>

<pallas_src>
import functools

import jax
import jax.numpy as jnp
from jax.experimental import pallas as pl
from jax.experimental.pallas import tpu as pltpu


def _dygconv_kernel(x_ref, wd_ref, scale_ref, shift_ref, w1m2_ref, w2_ref, b_ref,
                    o_ref, *, k, dilation):
    N = x_ref.shape[1]
    x_bf = x_ref[0]                                              # (N, C) bf16

    # --- downconvs: 1x1 conv (C->32) + folded BatchNorm(eval) + ReLU, f32 math ---
    code = jnp.dot(x_bf, wd_ref[...], preferred_element_type=jnp.float32)
    code = jnp.maximum(code * scale_ref[...] + shift_ref[...], 0.0)        # (N, 32)

    # --- F.normalize along channels: rsqrt runs on the EUP slot ---
    sumsq = jnp.sum(code * code, axis=-1, keepdims=True)
    inv_norm = jax.lax.rsqrt(jnp.maximum(sumsq, 1e-24))
    cn = (code * inv_norm).astype(jnp.bfloat16)

    # --- negative pairwise squared distance on unit-norm rows: 2*<ci,cj> - 2 ---
    dist = 2.0 * jax.lax.dot_general(cn, cn, (((1,), (1,)), ((), ())),
                                     preferred_element_type=jnp.float32) - 2.0

    # Pin the diagonal above every off-diagonal entry so each node keeps itself
    # as its first neighbour (torch knn has dist(i,i)=0 == max; bf16-safe here).
    row_i = jax.lax.broadcasted_iota(jnp.int32, (N, N), 0)
    col_i = jax.lax.broadcasted_iota(jnp.int32, (N, N), 1)
    dist = jnp.where(row_i == col_i, 1.0, dist)
    col_f = col_i.astype(jnp.float32)                            # hoisted out of the loop

    # --- EdgeConv precompute ---
    base = (jnp.dot(x_bf, w1m2_ref[...], preferred_element_type=jnp.float32)
            + b_ref[...])                                        # (N, Cout) f32
    z_bf = jnp.dot(x_bf, w2_ref[...],
                   preferred_element_type=jnp.float32).astype(jnp.bfloat16)  # (N, Cout)

    # --- fused dilated k-NN + neighbour gather + K-max ---
    # Iterative argmax (lowest-index tie-break) -> exact one-hot selector per row
    # -> MXU matmul gather of Z rows -> running max.  ReLU applied once after the
    # K-max (exact: relu(base + .) is monotone in the neighbour value).
    neg = jnp.float32(-1e30)
    zmax = None
    for m in range(k * dilation):
        row_max = jnp.max(dist, axis=-1, keepdims=True)
        is_max = dist == row_max
        idx = jnp.min(jnp.where(is_max, col_f, jnp.float32(N)),
                      axis=-1, keepdims=True)                    # lowest tied index
        sel = col_f == idx                                       # exact one-hot per row
        if m % dilation == 0:                                    # dilated selection
            zj = jnp.dot(sel.astype(jnp.bfloat16), z_bf,
                         preferred_element_type=jnp.float32)     # == Z[nn_idx[:, m]]
            zmax = zj if zmax is None else jnp.maximum(zmax, zj)
        dist = jnp.where(sel, neg, dist)                         # mask the picked column

    o_ref[0] = jnp.maximum(base + zmax, 0.0).astype(o_ref.dtype)


def dy_graph_conv2d_forward(x_nchw, params, *, k=9, dilation=1):
    """DyGraphConv2d.forward for the r=1, H=W=14, C=192 branch (conv='edge')."""
    B, C, H, W = x_nchw.shape
    N = H * W
    Cout = params["w_edge"].shape[1]
    Ccode = params["w_down"].shape[1]

    # NCHW -> (B, N, C) node layout, bf16 at the MXU boundary (one fused XLA op).
    x_bnc = jnp.transpose(x_nchw.reshape(B, C, N), (0, 2, 1)).astype(jnp.bfloat16)

    wd_bf = params["w_down"].astype(jnp.bfloat16)
    w1 = params["w_edge"][:C, :]
    w2 = params["w_edge"][C:, :]
    w1m2_bf = (w1 - w2).astype(jnp.bfloat16)
    w2_bf = w2.astype(jnp.bfloat16)

    kernel = functools.partial(_dygconv_kernel, k=k, dilation=dilation)
    out_bnc = pl.pallas_call(
        kernel,
        out_shape=jax.ShapeDtypeStruct((B, N, Cout), jnp.float32),
        grid=(B,),
        in_specs=[
            pl.BlockSpec((1, N, C), lambda b: (b, 0, 0)),
            pl.BlockSpec((C, Ccode), lambda b: (0, 0)),
            pl.BlockSpec((1, Ccode), lambda b: (0, 0)),
            pl.BlockSpec((1, Ccode), lambda b: (0, 0)),
            pl.BlockSpec((C, Cout), lambda b: (0, 0)),
            pl.BlockSpec((C, Cout), lambda b: (0, 0)),
            pl.BlockSpec((1, Cout), lambda b: (0, 0)),
        ],
        out_specs=pl.BlockSpec((1, N, Cout), lambda b: (b, 0, 0)),
        compiler_params=pltpu.CompilerParams(dimension_semantics=("parallel",)),
    )(x_bnc, wd_bf, params["bn_scale"], params["bn_shift"], w1m2_bf, w2_bf,
      params["b_edge"])

    # (B, N, Cout) -> (B, Cout, H, W)
    out = jnp.transpose(out_bnc, (0, 2, 1)).reshape(B, Cout, H, W)

    # TODO(synk): DenseDilatedKnnGraph's Discriminative_Reorganization_Loss source
    # is not part of the provided module; loss is returned as 0.0.
    loss = jnp.float32(0.0)
    return out, loss


def init_params(key, in_channels, out_channels, code_channels=32):
    k1, k2, k3 = jax.random.split(key, 3)
    w_down = jax.random.normal(k1, (in_channels, code_channels), jnp.float32) * 0.05
    # BatchNorm2d(32) in eval mode, default init (gamma=1, beta=0, rm=0, rv=1), folded.
    eps = 1e-5
    gamma = jnp.ones((code_channels,), jnp.float32)
    beta = jnp.zeros((code_channels,), jnp.float32)
    rm = jnp.zeros((code_channels,), jnp.float32)
    rv = jnp.ones((code_channels,), jnp.float32)
    bn_scale = (gamma / jnp.sqrt(rv + eps)).reshape(1, code_channels)
    bn_shift = (beta - rm * gamma / jnp.sqrt(rv + eps)).reshape(1, code_channels)
    # EdgeConv2d nn = BasicConv([2*in, out], 'relu', norm=None, bias=True)
    w_edge = jax.random.normal(k2, (2 * in_channels, out_channels), jnp.float32) * 0.05
    b_edge = jax.random.normal(k3, (1, out_channels), jnp.float32) * 0.01
    return {
        "w_down": w_down,
        "bn_scale": bn_scale,
        "bn_shift": bn_shift,
        "w_edge": w_edge,
        "b_edge": b_edge,
    }


if __name__ == "__main__":
    # Shapes implied by the r==1 / H==14 / C==192 branch of DyGraphConv2d.forward
    B, C, H, W = 2, 192, 14, 14
    out_channels = 192
    key = jax.random.PRNGKey(0)
    kx, kp = jax.random.split(key)
    x = jax.random.normal(kx, (B, C, H, W), dtype=jnp.float32)
    params = init_params(kp, C, out_channels)

    fwd = jax.jit(functools.partial(dy_graph_conv2d_forward, k=9, dilation=1))
    out, loss = fwd(x, params)
    jax.block_until_ready(out)
    jax.block_until_ready(loss)
    assert out.shape == (B, out_channels, H, W), out.shape
    print("KERNEL_OK")
</pallas_src>

<mosaic_0001>
module attributes {stable_mosaic.version = 11 : i64} {
  func.func @_dygconv_kernel(%arg0: i32, %arg1: memref<1x196x192xbf16, #tpu.memory_space<vmem>>, %arg2: memref<192x32xbf16, #tpu.memory_space<vmem>>, %arg3: memref<1x32xf32, #tpu.memory_space<vmem>>, %arg4: memref<1x32xf32, #tpu.memory_space<vmem>>, %arg5: memref<192x192xbf16, #tpu.memory_space<vmem>>, %arg6: memref<192x192xbf16, #tpu.memory_space<vmem>>, %arg7: memref<1x192xf32, #tpu.memory_space<vmem>>, %arg8: memref<1x196x192xf32, #tpu.memory_space<vmem>>) attributes {dimension_semantics = [#tpu.dimension_semantics<parallel>], iteration_bounds = array<i64: 2>, scalar_prefetch = 0 : i64, scratch_operands = 0 : i64, tpu.core_type = #tpu.core_type<tc>, window_params = [{transform_indices = @transform_0, window_bounds = array<i64: 1, 196, 192>}, {pipeline_mode = #tpu.pipeline_mode<synchronous>, transform_indices = @transform_1, window_bounds = array<i64: 192, 32>}, {pipeline_mode = #tpu.pipeline_mode<synchronous>, transform_indices = @transform_2, window_bounds = array<i64: 1, 32>}, {pipeline_mode = #tpu.pipeline_mode<synchronous>, transform_indices = @transform_3, window_bounds = array<i64: 1, 32>}, {pipeline_mode = #tpu.pipeline_mode<synchronous>, transform_indices = @transform_4, window_bounds = array<i64: 192, 192>}, {pipeline_mode = #tpu.pipeline_mode<synchronous>, transform_indices = @transform_5, window_bounds = array<i64: 192, 192>}, {pipeline_mode = #tpu.pipeline_mode<synchronous>, transform_indices = @transform_6, window_bounds = array<i64: 1, 192>}, {transform_indices = @transform_7, window_bounds = array<i64: 1, 196, 192>}]} {
    %c0 = arith.constant 0 : index
    %c0_0 = arith.constant 0 : index
    %c0_1 = arith.constant 0 : index
    %0 = vector.load %arg1[%c0, %c0_0, %c0_1] : memref<1x196x192xbf16, #tpu.memory_space<vmem>>, vector<1x196x192xbf16>
    %1 = vector.shape_cast %0 : vector<1x196x192xbf16> to vector<196x192xbf16>
    %c0_2 = arith.constant 0 : index
    %c0_3 = arith.constant 0 : index
    %2 = vector.load %arg2[%c0_2, %c0_3] : memref<192x32xbf16, #tpu.memory_space<vmem>>, vector<192x32xbf16>
    %cst = arith.constant dense<0.000000e+00> : vector<196x32xf32>
    %3 = tpu.matmul %1, %2, %cst {dimension_numbers = #tpu.dot_dimension_numbers<[1], [0], [0], [1], [0, 0, 1, 1], [], []>} : vector<196x192xbf16>, vector<192x32xbf16>, vector<196x32xf32> -> vector<196x32xf32>
    %c0_4 = arith.constant 0 : index
    %c0_5 = arith.constant 0 : index
    %4 = vector.load %arg3[%c0_4, %c0_5] : memref<1x32xf32, #tpu.memory_space<vmem>>, vector<1x32xf32>
    %5 = vector.broadcast %4 : vector<1x32xf32> to vector<196x32xf32>
    %6 = arith.mulf %3, %5 : vector<196x32xf32>
    %c0_6 = arith.constant 0 : index
    %c0_7 = arith.constant 0 : index
    %7 = vector.load %arg4[%c0_6, %c0_7] : memref<1x32xf32, #tpu.memory_space<vmem>>, vector<1x32xf32>
    %8 = vector.broadcast %7 : vector<1x32xf32> to vector<196x32xf32>
    %9 = arith.addf %6, %8 : vector<196x32xf32>
    %cst_8 = arith.constant 0.000000e+00 : f32
    %10 = vector.broadcast %cst_8 : f32 to vector<196x32xf32>
    %11 = arith.maximumf %9, %10 : vector<196x32xf32>
    %12 = arith.mulf %11, %11 : vector<196x32xf32>
    %cst_9 = arith.constant dense<0.000000e+00> : vector<196xf32>
    %13 = vector.multi_reduction <add>, %12, %cst_9 [1] : vector<196x32xf32> to vector<196xf32>
    %14 = vector.shape_cast %13 : vector<196xf32> to vector<196x1xf32>
    %cst_10 = arith.constant 1.000000e-24 : f32
    %15 = vector.broadcast %cst_10 : f32 to vector<196x1xf32>
    %16 = arith.maximumf %14, %15 : vector<196x1xf32>
    %17 = math.rsqrt %16 : vector<196x1xf32>
    %18 = vector.broadcast %17 : vector<196x1xf32> to vector<196x32xf32>
    %19 = arith.mulf %11, %18 : vector<196x32xf32>
    %20 = arith.truncf %19 : vector<196x32xf32> to vector<196x32xbf16>
    %cst_11 = arith.constant dense<0.000000e+00> : vector<196x196xf32>
    %21 = tpu.matmul %20, %20, %cst_11 {dimension_numbers = #tpu.dot_dimension_numbers<[1], [1], [0], [0], [0, 0, 1, 0], [], []>} : vector<196x32xbf16>, vector<196x32xbf16>, vector<196x196xf32> -> vector<196x196xf32>
    %cst_12 = arith.constant 2.000000e+00 : f32
    %22 = vector.broadcast %cst_12 : f32 to vector<196x196xf32>
    %23 = arith.mulf %22, %21 : vector<196x196xf32>
    %cst_13 = arith.constant 2.000000e+00 : f32
    %24 = vector.broadcast %cst_13 : f32 to vector<196x196xf32>
    %25 = arith.subf %23, %24 : vector<196x196xf32>
    %26 = tpu.iota {dimensions = array<i32: 0>} : vector<196x196xi32>
    %27 = tpu.iota {dimensions = array<i32: 1>} : vector<196x196xi32>
    %28 = arith.cmpi eq, %26, %27 : vector<196x196xi32>
    %cst_14 = arith.constant 1.000000e+00 : f32
    %29 = vector.broadcast %cst_14 : f32 to vector<196x196xf32>
    %30 = arith.select %28, %29, %25 : vector<196x196xi1>, vector<196x196xf32>
    %31 = arith.sitofp %27 : vector<196x196xi32> to vector<196x196xf32>
    %c0_15 = arith.constant 0 : index
    %c0_16 = arith.constant 0 : index
    %32 = vector.load %arg5[%c0_15, %c0_16] : memref<192x192xbf16, #tpu.memory_space<vmem>>, vector<192x192xbf16>
    %cst_17 = arith.constant dense<0.000000e+00> : vector<196x192xf32>
    %33 = tpu.matmul %1, %32, %cst_17 {dimension_numbers = #tpu.dot_dimension_numbers<[1], [0], [0], [1], [0, 0, 1, 1], [], []>} : vector<196x192xbf16>, vector<192x192xbf16>, vector<196x192xf32> -> vector<196x192xf32>
    %c0_18 = arith.constant 0 : index
    %c0_19 = arith.constant 0 : index
    %34 = vector.load %arg7[%c0_18, %c0_19] : memref<1x192xf32, #tpu.memory_space<vmem>>, vector<1x192xf32>
    %35 = vector.broadcast %34 : vector<1x192xf32> to vector<196x192xf32>
    %36 = arith.addf %33, %35 : vector<196x192xf32>
    %c0_20 = arith.constant 0 : index
    %c0_21 = arith.constant 0 : index
    %37 = vector.load %arg6[%c0_20, %c0_21] : memref<192x192xbf16, #tpu.memory_space<vmem>>, vector<192x192xbf16>
    %cst_22 = arith.constant dense<0.000000e+00> : vector<196x192xf32>
    %38 = tpu.matmul %1, %37, %cst_22 {dimension_numbers = #tpu.dot_dimension_numbers<[1], [0], [0], [1], [0, 0, 1, 1], [], []>} : vector<196x192xbf16>, vector<192x192xbf16>, vector<196x192xf32> -> vector<196x192xf32>
    %39 = arith.truncf %38 : vector<196x192xf32> to vector<196x192xbf16>
    %cst_23 = arith.constant dense<0xFF800000> : vector<196xf32>
    %40 = vector.multi_reduction <maximumf>, %30, %cst_23 [1] : vector<196x196xf32> to vector<196xf32>
    %41 = vector.shape_cast %40 : vector<196xf32> to vector<196x1xf32>
    %42 = vector.broadcast %41 : vector<196x1xf32> to vector<196x196xf32>
    %43 = arith.cmpf oeq, %30, %42 : vector<196x196xf32>
    %cst_24 = arith.constant 1.960000e+02 : f32
    %44 = vector.broadcast %cst_24 : f32 to vector<196x196xf32>
    %45 = arith.select %43, %31, %44 : vector<196x196xi1>, vector<196x196xf32>
    %cst_25 = arith.constant dense<0x7F800000> : vector<196xf32>
    %46 = vector.multi_reduction <minimumf>, %45, %cst_25 [1] : vector<196x196xf32> to vector<196xf32>
    %47 = vector.shape_cast %46 : vector<196xf32> to vector<196x1xf32>
    %48 = vector.broadcast %47 : vector<196x1xf32> to vector<196x196xf32>
    %49 = arith.cmpf oeq, %31, %48 : vector<196x196xf32>
    %50 = arith.extui %49 : vector<196x196xi1> to vector<196x196xi32>
    %51 = arith.sitofp %50 : vector<196x196xi32> to vector<196x196xf32>
    %52 = arith.truncf %51 : vector<196x196xf32> to vector<196x196xbf16>
    %cst_26 = arith.constant dense<0.000000e+00> : vector<196x192xf32>
    %53 = tpu.matmul %52, %39, %cst_26 {dimension_numbers = #tpu.dot_dimension_numbers<[1], [0], [0], [1], [0, 0, 1, 1], [], []>} : vector<196x196xbf16>, vector<196x192xbf16>, vector<196x192xf32> -> vector<196x192xf32>
    %cst_27 = arith.constant -1.000000e+30 : f32
    %54 = vector.broadcast %cst_27 : f32 to vector<196x196xf32>
    %55 = arith.select %49, %54, %30 : vector<196x196xi1>, vector<196x196xf32>
    %cst_28 = arith.constant dense<0xFF800000> : vector<196xf32>
    %56 = vector.multi_reduction <maximumf>, %55, %cst_28 [1] : vector<196x196xf32> to vector<196xf32>
    %57 = vector.shape_cast %56 : vector<196xf32> to vector<196x1xf32>
    %58 = vector.broadcast %57 : vector<196x1xf32> to vector<196x196xf32>
    %59 = arith.cmpf oeq, %55, %58 : vector<196x196xf32>
    %cst_29 = arith.constant 1.960000e+02 : f32
    %60 = vector.broadcast %cst_29 : f32 to vector<196x196xf32>
    %61 = arith.select %59, %31, %60 : vector<196x196xi1>, vector<196x196xf32>
    %cst_30 = arith.constant dense<0x7F800000> : vector<196xf32>
    %62 = vector.multi_reduction <minimumf>, %61, %cst_30 [1] : vector<196x196xf32> to vector<196xf32>
    %63 = vector.shape_cast %62 : vector<196xf32> to vector<196x1xf32>
    %64 = vector.broadcast %63 : vector<196x1xf32> to vector<196x196xf32>
    %65 = arith.cmpf oeq, %31, %64 : vector<196x196xf32>
    %66 = arith.extui %65 : vector<196x196xi1> to vector<196x196xi32>
    %67 = arith.sitofp %66 : vector<196x196xi32> to vector<196x196xf32>
    %68 = arith.truncf %67 : vector<196x196xf32> to vector<196x196xbf16>
    %cst_31 = arith.constant dense<0.000000e+00> : vector<196x192xf32>
    %69 = tpu.matmul %68, %39, %cst_31 {dimension_numbers = #tpu.dot_dimension_numbers<[1], [0], [0], [1], [0, 0, 1, 1], [], []>} : vector<196x196xbf16>, vector<196x192xbf16>, vector<196x192xf32> -> vector<196x192xf32>
    %70 = arith.maximumf %53, %69 : vector<196x192xf32>
    %cst_32 = arith.constant -1.000000e+30 : f32
    %71 = vector.broadcast %cst_32 : f32 to vector<196x196xf32>
    %72 = arith.select %65, %71, %55 : vector<196x196xi1>, vector<196x196xf32>
    %cst_33 = arith.constant dense<0xFF800000> : vector<196xf32>
    %73 = vector.multi_reduction <maximumf>, %72, %cst_33 [1] : vector<196x196xf32> to vector<196xf32>
    %74 = vector.shape_cast %73 : vector<196xf32> to vector<196x1xf32>
    %75 = vector.broadcast %74 : vector<196x1xf32> to vector<196x196xf32>
    %76 = arith.cmpf oeq, %72, %75 : vector<196x196xf32>
    %cst_34 = arith.constant 1.960000e+02 : f32
    %77 = vector.broadcast %cst_34 : f32 to vector<196x196xf32>
    %78 = arith.select %76, %31, %77 : vector<196x196xi1>, vector<196x196xf32>
    %cst_35 = arith.constant dense<0x7F800000> : vector<196xf32>
    %79 = vector.multi_reduction <minimumf>, %78, %cst_35 [1] : vector<196x196xf32> to vector<196xf32>
    %80 = vector.shape_cast %79 : vector<196xf32> to vector<196x1xf32>
    %81 = vector.broadcast %80 : vector<196x1xf32> to vector<196x196xf32>
    %82 = arith.cmpf oeq, %31, %81 : vector<196x196xf32>
    %83 = arith.extui %82 : vector<196x196xi1> to vector<196x196xi32>
    %84 = arith.sitofp %83 : vector<196x196xi32> to vector<196x196xf32>
    %85 = arith.truncf %84 : vector<196x196xf32> to vector<196x196xbf16>
    %cst_36 = arith.constant dense<0.000000e+00> : vector<196x192xf32>
    %86 = tpu.matmul %85, %39, %cst_36 {dimension_numbers = #tpu.dot_dimension_numbers<[1], [0], [0], [1], [0, 0, 1, 1], [], []>} : vector<196x196xbf16>, vector<196x192xbf16>, vector<196x192xf32> -> vector<196x192xf32>
    %87 = arith.maximumf %70, %86 : vector<196x192xf32>
    %cst_37 = arith.constant -1.000000e+30 : f32
    %88 = vector.broadcast %cst_37 : f32 to vector<196x196xf32>
    %89 = arith.select %82, %88, %72 : vector<196x196xi1>, vector<196x196xf32>
    %cst_38 = arith.constant dense<0xFF800000> : vector<196xf32>
    %90 = vector.multi_reduction <maximumf>, %89, %cst_38 [1] : vector<196x196xf32> to vector<196xf32>
    %91 = vector.shape_cast %90 : vector<196xf32> to vector<196x1xf32>
    %92 = vector.broadcast %91 : vector<196x1xf32> to vector<196x196xf32>
    %93 = arith.cmpf oeq, %89, %92 : vector<196x196xf32>
    %cst_39 = arith.constant 1.960000e+02 : f32
    %94 = vector.broadcast %cst_39 : f32 to vector<196x196xf32>
    %95 = arith.select %93, %31, %94 : vector<196x196xi1>, vector<196x196xf32>
    %cst_40 = arith.constant dense<0x7F800000> : vector<196xf32>
    %96 = vector.multi_reduction <minimumf>, %95, %cst_40 [1] : vector<196x196xf32> to vector<196xf32>
    %97 = vector.shape_cast %96 : vector<196xf32> to vector<196x1xf32>
    %98 = vector.broadcast %97 : vector<196x1xf32> to vector<196x196xf32>
    %99 = arith.cmpf oeq, %31, %98 : vector<196x196xf32>
    %100 = arith.extui %99 : vector<196x196xi1> to vector<196x196xi32>
    %101 = arith.sitofp %100 : vector<196x196xi32> to vector<196x196xf32>
    %102 = arith.truncf %101 : vector<196x196xf32> to vector<196x196xbf16>
    %cst_41 = arith.constant dense<0.000000e+00> : vector<196x192xf32>
    %103 = tpu.matmul %102, %39, %cst_41 {dimension_numbers = #tpu.dot_dimension_numbers<[1], [0], [0], [1], [0, 0, 1, 1], [], []>} : vector<196x196xbf16>, vector<196x192xbf16>, vector<196x192xf32> -> vector<196x192xf32>
    %104 = arith.maximumf %87, %103 : vector<196x192xf32>
    %cst_42 = arith.constant -1.000000e+30 : f32
    %105 = vector.broadcast %cst_42 : f32 to vector<196x196xf32>
    %106 = arith.select %99, %105, %89 : vector<196x196xi1>, vector<196x196xf32>
    %cst_43 = arith.constant dense<0xFF800000> : vector<196xf32>
    %107 = vector.multi_reduction <maximumf>, %106, %cst_43 [1] : vector<196x196xf32> to vector<196xf32>
    %108 = vector.shape_cast %107 : vector<196xf32> to vector<196x1xf32>
    %109 = vector.broadcast %108 : vector<196x1xf32> to vector<196x196xf32>
    %110 = arith.cmpf oeq, %106, %109 : vector<196x196xf32>
    %cst_44 = arith.constant 1.960000e+02 : f32
    %111 = vector.broadcast %cst_44 : f32 to vector<196x196xf32>
    %112 = arith.select %110, %31, %111 : vector<196x196xi1>, vector<196x196xf32>
    %cst_45 = arith.constant dense<0x7F800000> : vector<196xf32>
    %113 = vector.multi_reduction <minimumf>, %112, %cst_45 [1] : vector<196x196xf32> to vector<196xf32>
    %114 = vector.shape_cast %113 : vector<196xf32> to vector<196x1xf32>
    %115 = vector.broadcast %114 : vector<196x1xf32> to vector<196x196xf32>
    %116 = arith.cmpf oeq, %31, %115 : vector<196x196xf32>
    %117 = arith.extui %116 : vector<196x196xi1> to vector<196x196xi32>
    %118 = arith.sitofp %117 : vector<196x196xi32> to vector<196x196xf32>
    %119 = arith.truncf %118 : vector<196x196xf32> to vector<196x196xbf16>
    %cst_46 = arith.constant dense<0.000000e+00> : vector<196x192xf32>
    %120 = tpu.matmul %119, %39, %cst_46 {dimension_numbers = #tpu.dot_dimension_numbers<[1], [0], [0], [1], [0, 0, 1, 1], [], []>} : vector<196x196xbf16>, vector<196x192xbf16>, vector<196x192xf32> -> vector<196x192xf32>
    %121 = arith.maximumf %104, %120 : vector<196x192xf32>
    %cst_47 = arith.constant -1.000000e+30 : f32
    %122 = vector.broadcast %cst_47 : f32 to vector<196x196xf32>
    %123 = arith.select %116, %122, %106 : vector<196x196xi1>, vector<196x196xf32>
    %cst_48 = arith.constant dense<0xFF800000> : vector<196xf32>
    %124 = vector.multi_reduction <maximumf>, %123, %cst_48 [1] : vector<196x196xf32> to vector<196xf32>
    %125 = vector.shape_cast %124 : vector<196xf32> to vector<196x1xf32>
    %126 = vector.broadcast %125 : vector<196x1xf32> to vector<196x196xf32>
    %127 = arith.cmpf oeq, %123, %126 : vector<196x196xf32>
    %cst_49 = arith.constant 1.960000e+02 : f32
    %128 = vector.broadcast %cst_49 : f32 to vector<196x196xf32>
    %129 = arith.select %127, %31, %128 : vector<196x196xi1>, vector<196x196xf32>
    %cst_50 = arith.constant dense<0x7F800000> : vector<196xf32>
    %130 = vector.multi_reduction <minimumf>, %129, %cst_50 [1] : vector<196x196xf32> to vector<196xf32>
    %131 = vector.shape_cast %130 : vector<196xf32> to vector<196x1xf32>
    %132 = vector.broadcast %131 : vector<196x1xf32> to vector<196x196xf32>
    %133 = arith.cmpf oeq, %31, %132 : vector<196x196xf32>
    %134 = arith.extui %133 : vector<196x196xi1> to vector<196x196xi32>
    %135 = arith.sitofp %134 : vector<196x196xi32> to vector<196x196xf32>
    %136 = arith.truncf %135 : vector<196x196xf32> to vector<196x196xbf16>
    %cst_51 = arith.constant dense<0.000000e+00> : vector<196x192xf32>
    %137 = tpu.matmul %136, %39, %cst_51 {dimension_numbers = #tpu.dot_dimension_numbers<[1], [0], [0], [1], [0, 0, 1, 1], [], []>} : vector<196x196xbf16>, vector<196x192xbf16>, vector<196x192xf32> -> vector<196x192xf32>
    %138 = arith.maximumf %121, %137 : vector<196x192xf32>
    %cst_52 = arith.constant -1.000000e+30 : f32
    %139 = vector.broadcast %cst_52 : f32 to vector<196x196xf32>
    %140 = arith.select %133, %139, %123 : vector<196x196xi1>, vector<196x196xf32>
    %cst_53 = arith.constant dense<0xFF800000> : vector<196xf32>
    %141 = vector.multi_reduction <maximumf>, %140, %cst_53 [1] : vector<196x196xf32> to vector<196xf32>
    %142 = vector.shape_cast %141 : vector<196xf32> to vector<196x1xf32>
    %143 = vector.broadcast %142 : vector<196x1xf32> to vector<196x196xf32>
    %144 = arith.cmpf oeq, %140, %143 : vector<196x196xf32>
    %cst_54 = arith.constant 1.960000e+02 : f32
    %145 = vector.broadcast %cst_54 : f32 to vector<196x196xf32>
    %146 = arith.select %144, %31, %145 : vector<196x196xi1>, vector<196x196xf32>
    %cst_55 = arith.constant dense<0x7F800000> : vector<196xf32>
    %147 = vector.multi_reduction <minimumf>, %146, %cst_55 [1] : vector<196x196xf32> to vector<196xf32>
    %148 = vector.shape_cast %147 : vector<196xf32> to vector<196x1xf32>
    %149 = vector.broadcast %148 : vector<196x1xf32> to vector<196x196xf32>
    %150 = arith.cmpf oeq, %31, %149 : vector<196x196xf32>
    %151 = arith.extui %150 : vector<196x196xi1> to vector<196x196xi32>
    %152 = arith.sitofp %151 : vector<196x196xi32> to vector<196x196xf32>
    %153 = arith.truncf %152 : vector<196x196xf32> to vector<196x196xbf16>
    %cst_56 = arith.constant dense<0.000000e+00> : vector<196x192xf32>
    %154 = tpu.matmul %153, %39, %cst_56 {dimension_numbers = #tpu.dot_dimension_numbers<[1], [0], [0], [1], [0, 0, 1, 1], [], []>} : vector<196x196xbf16>, vector<196x192xbf16>, vector<196x192xf32> -> vector<196x192xf32>
    %155 = arith.maximumf %138, %154 : vector<196x192xf32>
    %cst_57 = arith.constant -1.000000e+30 : f32
    %156 = vector.broadcast %cst_57 : f32 to vector<196x196xf32>
    %157 = arith.select %150, %156, %140 : vector<196x196xi1>, vector<196x196xf32>
    %cst_58 = arith.constant dense<0xFF800000> : vector<196xf32>
    %158 = vector.multi_reduction <maximumf>, %157, %cst_58 [1] : vector<196x196xf32> to vector<196xf32>
    %159 = vector.shape_cast %158 : vector<196xf32> to vector<196x1xf32>
    %160 = vector.broadcast %159 : vector<196x1xf32> to vector<196x196xf32>
    %161 = arith.cmpf oeq, %157, %160 : vector<196x196xf32>
    %cst_59 = arith.constant 1.960000e+02 : f32
    %162 = vector.broadcast %cst_59 : f32 to vector<196x196xf32>
    %163 = arith.select %161, %31, %162 : vector<196x196xi1>, vector<196x196xf32>
    %cst_60 = arith.constant dense<0x7F800000> : vector<196xf32>
    %164 = vector.multi_reduction <minimumf>, %163, %cst_60 [1] : vector<196x196xf32> to vector<196xf32>
    %165 = vector.shape_cast %164 : vector<196xf32> to vector<196x1xf32>
    %166 = vector.broadcast %165 : vector<196x1xf32> to vector<196x196xf32>
    %167 = arith.cmpf oeq, %31, %166 : vector<196x196xf32>
    %168 = arith.extui %167 : vector<196x196xi1> to vector<196x196xi32>
    %169 = arith.sitofp %168 : vector<196x196xi32> to vector<196x196xf32>
    %170 = arith.truncf %169 : vector<196x196xf32> to vector<196x196xbf16>
    %cst_61 = arith.constant dense<0.000000e+00> : vector<196x192xf32>
    %171 = tpu.matmul %170, %39, %cst_61 {dimension_numbers = #tpu.dot_dimension_numbers<[1], [0], [0], [1], [0, 0, 1, 1], [], []>} : vector<196x196xbf16>, vector<196x192xbf16>, vector<196x192xf32> -> vector<196x192xf32>
    %172 = arith.maximumf %155, %171 : vector<196x192xf32>
    %cst_62 = arith.constant -1.000000e+30 : f32
    %173 = vector.broadcast %cst_62 : f32 to vector<196x196xf32>
    %174 = arith.select %167, %173, %157 : vector<196x196xi1>, vector<196x196xf32>
    %cst_63 = arith.constant dense<0xFF800000> : vector<196xf32>
    %175 = vector.multi_reduction <maximumf>, %174, %cst_63 [1] : vector<196x196xf32> to vector<196xf32>
    %176 = vector.shape_cast %175 : vector<196xf32> to vector<196x1xf32>
    %177 = vector.broadcast %176 : vector<196x1xf32> to vector<196x196xf32>
    %178 = arith.cmpf oeq, %174, %177 : vector<196x196xf32>
    %cst_64 = arith.constant 1.960000e+02 : f32
    %179 = vector.broadcast %cst_64 : f32 to vector<196x196xf32>
    %180 = arith.select %178, %31, %179 : vector<196x196xi1>, vector<196x196xf32>
    %cst_65 = arith.constant dense<0x7F800000> : vector<196xf32>
    %181 = vector.multi_reduction <minimumf>, %180, %cst_65 [1] : vector<196x196xf32> to vector<196xf32>
    %182 = vector.shape_cast %181 : vector<196xf32> to vector<196x1xf32>
    %183 = vector.broadcast %182 : vector<196x1xf32> to vector<196x196xf32>
    %184 = arith.cmpf oeq, %31, %183 : vector<196x196xf32>
    %185 = arith.extui %184 : vector<196x196xi1> to vector<196x196xi32>
    %186 = arith.sitofp %185 : vector<196x196xi32> to vector<196x196xf32>
    %187 = arith.truncf %186 : vector<196x196xf32> to vector<196x196xbf16>
    %cst_66 = arith.constant dense<0.000000e+00> : vector<196x192xf32>
    %188 = tpu.matmul %187, %39, %cst_66 {dimension_numbers = #tpu.dot_dimension_numbers<[1], [0], [0], [1], [0, 0, 1, 1], [], []>} : vector<196x196xbf16>, vector<196x192xbf16>, vector<196x192xf32> -> vector<196x192xf32>
    %189 = arith.maximumf %172, %188 : vector<196x192xf32>
    %190 = arith.addf %36, %189 : vector<196x192xf32>
    %cst_67 = arith.constant 0.000000e+00 : f32
    %191 = vector.broadcast %cst_67 : f32 to vector<196x192xf32>
    %192 = arith.maximumf %190, %191 : vector<196x192xf32>
    %c0_68 = arith.constant 0 : index
    %c0_69 = arith.constant 0 : index
    %c0_70 = arith.constant 0 : index
    %193 = vector.load %arg8[%c0_68, %c0_69, %c0_70] : memref<1x196x192xf32, #tpu.memory_space<vmem>>, vector<1x196x192xf32>
    %194 = vector.shape_cast %193 : vector<1x196x192xf32> to vector<196x192xf32>
    %195 = vector.shape_cast %192 : vector<196x192xf32> to vector<1x196x192xf32>
    tpu.vector_store %arg8[%c0_68, %c0_69, %c0_70], %195 {strides = array<i32>} : memref<1x196x192xf32, #tpu.memory_space<vmem>>, vector<1x196x192xf32>,
    return
  }
  func.func @transform_0(%arg0: i32) -> (i32, i32, i32) {
    %c0_i32 = arith.constant 0 : i32
    %c0_i32_0 = arith.constant 0 : i32
    %c0_i32_1 = arith.constant 0 : i32
    return %arg0, %c0_i32, %c0_i32_0 : i32, i32, i32
  }
  func.func @transform_1(%arg0: i32) -> (i32, i32) {
    %c0_i32 = arith.constant 0 : i32
    %c0_i32_0 = arith.constant 0 : i32
    %c0_i32_1 = arith.constant 0 : i32
    return %c0_i32, %c0_i32_0 : i32, i32
  }
  func.func @transform_2(%arg0: i32) -> (i32, i32) {
    %c0_i32 = arith.constant 0 : i32
    %c0_i32_0 = arith.constant 0 : i32
    %c0_i32_1 = arith.constant 0 : i32
    return %c0_i32, %c0_i32_0 : i32, i32
  }
  func.func @transform_3(%arg0: i32) -> (i32, i32) {
    %c0_i32 = arith.constant 0 : i32
    %c0_i32_0 = arith.constant 0 : i32
    %c0_i32_1 = arith.constant 0 : i32
    return %c0_i32, %c0_i32_0 : i32, i32
  }
  func.func @transform_4(%arg0: i32) -> (i32, i32) {
    %c0_i32 = arith.constant 0 : i32
    %c0_i32_0 = arith.constant 0 : i32
    %c0_i32_1 = arith.constant 0 : i32
    return %c0_i32, %c0_i32_0 : i32, i32
  }
  func.func @transform_5(%arg0: i32) -> (i32, i32) {
    %c0_i32 = arith.constant 0 : i32
    %c0_i32_0 = arith.constant 0 : i32
    %c0_i32_1 = arith.constant 0 : i32
    return %c0_i32, %c0_i32_0 : i32, i32
  }
  func.func @transform_6(%arg0: i32) -> (i32, i32) {
    %c0_i32 = arith.constant 0 : i32
    %c0_i32_0 = arith.constant 0 : i32
    %c0_i32_1 = arith.constant 0 : i32
    return %c0_i32, %c0_i32_0 : i32, i32
  }
  func.func @transform_7(%arg0: i32) -> (i32, i32, i32) {
    %c0_i32 = arith.constant 0 : i32
    %c0_i32_0 = arith.constant 0 : i32
    %c0_i32_1 = arith.constant 0 : i32
    return %arg0, %c0_i32, %c0_i32_0 : i32, i32, i32
  }
}

</mosaic_0001>

<llo_original>
// kernel: dy_graph_conv2d_forward.1
$region0: #{dy_graph_conv2d_forward.1}
  #allocation0 [shape = 'u32[]', space=smem, size = 0x4, offset = 0x4, fixed_abs, tag = 'smem constant byte address 0x4 - core index']
  #allocation1 [shape = 'u32[72,128]{1,0:T(1,128)}', space=vmem, size = 0x9000, scoped, tag = 'internal scratch']
  %s0 = inlined_call_operand.vmem [shape: bf16[2,196,192], index: 0, kind: input, shape index: {}]
  %s1 = inlined_call_operand.vmem [shape: bf16[192,32], index: 1, kind: input, shape index: {}]
  %s2 = inlined_call_operand.vmem [shape: f32[1,32], index: 2, kind: input, shape index: {}]
  %s3 = inlined_call_operand.vmem [shape: f32[1,32], index: 3, kind: input, shape index: {}]
  %s4 = inlined_call_operand.vmem [shape: bf16[192,192], index: 4, kind: input, shape index: {}]
  %s5 = inlined_call_operand.vmem [shape: bf16[192,192], index: 5, kind: input, shape index: {}]
  %s6 = inlined_call_operand.vmem [shape: f32[1,192], index: 6, kind: input, shape index: {}]
  %s7 = inlined_call_operand.vmem [shape: f32[2,196,192], index: 7, kind: output, shape index: {}]
  %s8 = sld [smem:[#allocation0]]
  $region61: #{dy_graph_conv2d_forward.1} parent=0
    _
  %s10 = ssub.s32 1, %s8
  %s11 = scalar_select 0, %s10, %s8
  loop: start=0, step=1, limit=4
  $region2: #{dy_graph_conv2d_forward.1} parent=0 // loop_pre_header
    _
  $region3: #{dy_graph_conv2d_forward.1} parent=0 // loop_header
    %s13 = sphi 0, %s17
    %p14 = scmp.ge.s32.totalorder %s13, 4
    %s23 = sphi 0, %s25
    %s26 = sphi 0, %s23
    %s27 = sphi 0, %s26
    %s43 = sphi 0, %s27
    %s47 = sphi 0, %s47
    %s49 = sphi 0, %s47
    %s50 = sphi 0, %s49
    %s64 = sphi 0, %s50
    %s68 = sphi 0, %s68
    %s70 = sphi 0, %s68
    %s71 = sphi 0, %s70
    %s85 = sphi 0, %s71
    %s89 = sphi 0, %s89
    %s91 = sphi 0, %s89
    %s92 = sphi 0, %s91
    %s106 = sphi 0, %s92
    %s110 = sphi 0, %s110
    %s112 = sphi 0, %s110
    %s113 = sphi 0, %s112
    %s127 = sphi 0, %s113
    %s131 = sphi 0, %s131
    %s133 = sphi 0, %s131
    %s134 = sphi 0, %s133
    %s148 = sphi 0, %s134
    %s152 = sphi 0, %s152
    %s154 = sphi 0, %s152
    %s155 = sphi 0, %s154
    %s169 = sphi 0, %s155
    %s175 = sphi 0, %s177
    %s178 = sphi 0, %s175
    %s179 = sphi 0, %s178
    %s195 = sphi 0, %s179
  $region4: #{dy_graph_conv2d_forward.1} parent=0 // loop_header_branch
    %16 = sbr.rel (%p14) target = $region8
  $region5: #{dy_graph_conv2d_forward.1} parent=0 // loop_body
    %s18 = ssub.s32 %s13, 1
    %s19 = ssub.s32 %s13, 2
    %s20 = sadd.s32 %s13, 1
    %s21 = ssub.s32 %s13, %s20
    %p22 = scmp.eq.s32.totalorder %s21, 0
    %s24 = sadd.s32 %s23, 1
    %s25 = scalar_select %p22, %s23, %s24
    %p28 = pneg %p22
    %p29 = scmp.eq.s32.totalorder %s13, 1
    %p30 = por %p28, %p29
    %p31 = scmp.ne.s32.totalorder %s23, %s26
    %p32 = scmp.eq.s32.totalorder %s13, 0
    %p33 = por %p31, %p32
    %p34 = scmp.ne.s32.totalorder %s23, %s26
    %p35 = scmp.eq.s32.totalorder %s18, 1
    %p36 = por %p34, %p35
    %p37 = scmp.ne.s32.totalorder %s26, %s27
    %p38 = scmp.eq.s32.totalorder %s18, 0
    %p39 = por %p37, %p38
    %p40 = scmp.ne.s32.totalorder %s26, %s27
    %p41 = scmp.eq.s32.totalorder %s19, 1
    %p42 = por %p40, %p41
    %p44 = scmp.ne.s32.totalorder %s27, %s43
    %p45 = scmp.eq.s32.totalorder %s19, 0
    %p46 = por %p44, %p45
    %s48 = sadd.s32 %s47, 1
    %p51 = scmp.eq.s32.totalorder %s13, 1
    %p52 = scmp.ne.s32.totalorder %s47, %s49
    %p53 = scmp.eq.s32.totalorder %s13, 0
    %p54 = por %p52, %p53
    %p55 = scmp.ne.s32.totalorder %s47, %s49
    %p56 = scmp.eq.s32.totalorder %s18, 1
    %p57 = por %p55, %p56
    %p58 = scmp.ne.s32.totalorder %s49, %s50
    %p59 = scmp.eq.s32.totalorder %s18, 0
    %p60 = por %p58, %p59
    %p61 = scmp.ne.s32.totalorder %s49, %s50
    %p62 = scmp.eq.s32.totalorder %s19, 1
    %p63 = por %p61, %p62
    %p65 = scmp.ne.s32.totalorder %s50, %s64
    %p66 = scmp.eq.s32.totalorder %s19, 0
    %p67 = por %p65, %p66
    %s69 = sadd.s32 %s68, 1
    %p72 = scmp.eq.s32.totalorder %s13, 1
    %p73 = scmp.ne.s32.totalorder %s68, %s70
    %p74 = scmp.eq.s32.totalorder %s13, 0
    %p75 = por %p73, %p74
    %p76 = scmp.ne.s32.totalorder %s68, %s70
    %p77 = scmp.eq.s32.totalorder %s18, 1
    %p78 = por %p76, %p77
    %p79 = scmp.ne.s32.totalorder %s70, %s71
    %p80 = scmp.eq.s32.totalorder %s18, 0
    %p81 = por %p79, %p80
    %p82 = scmp.ne.s32.totalorder %s70, %s71
    %p83 = scmp.eq.s32.totalorder %s19, 1
    %p84 = por %p82, %p83
    %p86 = scmp.ne.s32.totalorder %s71, %s85
    %p87 = scmp.eq.s32.totalorder %s19, 0
    %p88 = por %p86, %p87
    %s90 = sadd.s32 %s89, 1
    %p93 = scmp.eq.s32.totalorder %s13, 1
    %p94 = scmp.ne.s32.totalorder %s89, %s91
    %p95 = scmp.eq.s32.totalorder %s13, 0
    %p96 = por %p94, %p95
    %p97 = scmp.ne.s32.totalorder %s89, %s91
    %p98 = scmp.eq.s32.totalorder %s18, 1
    %p99 = por %p97, %p98
    %p100 = scmp.ne.s32.totalorder %s91, %s92
    %p101 = scmp.eq.s32.totalorder %s18, 0
    %p102 = por %p100, %p101
    %p103 = scmp.ne.s32.totalorder %s91, %s92
    %p104 = scmp.eq.s32.totalorder %s19, 1
    %p105 = por %p103, %p104
    %p107 = scmp.ne.s32.totalorder %s92, %s106
    %p108 = scmp.eq.s32.totalorder %s19, 0
    %p109 = por %p107, %p108
    %s111 = sadd.s32 %s110, 1
    %p114 = scmp.eq.s32.totalorder %s13, 1
    %p115 = scmp.ne.s32.totalorder %s110, %s112
    %p116 = scmp.eq.s32.totalorder %s13, 0
    %p117 = por %p115, %p116
    %p118 = scmp.ne.s32.totalorder %s110, %s112
    %p119 = scmp.eq.s32.totalorder %s18, 1
    %p120 = por %p118, %p119
    %p121 = scmp.ne.s32.totalorder %s112, %s113
    %p122 = scmp.eq.s32.totalorder %s18, 0
    %p123 = por %p121, %p122
    %p124 = scmp.ne.s32.totalorder %s112, %s113
    %p125 = scmp.eq.s32.totalorder %s19, 1
    %p126 = por %p124, %p125
    %p128 = scmp.ne.s32.totalorder %s113, %s127
    %p129 = scmp.eq.s32.totalorder %s19, 0
    %p130 = por %p128, %p129
    %s132 = sadd.s32 %s131, 1
    %p135 = scmp.eq.s32.totalorder %s13, 1
    %p136 = scmp.ne.s32.totalorder %s131, %s133
    %p137 = scmp.eq.s32.totalorder %s13, 0
    %p138 = por %p136, %p137
    %p139 = scmp.ne.s32.totalorder %s131, %s133
    %p140 = scmp.eq.s32.totalorder %s18, 1
    %p141 = por %p139, %p140
    %p142 = scmp.ne.s32.totalorder %s133, %s134
    %p143 = scmp.eq.s32.totalorder %s18, 0
    %p144 = por %p142, %p143
    %p145 = scmp.ne.s32.totalorder %s133, %s134
    %p146 = scmp.eq.s32.totalorder %s19, 1
    %p147 = por %p145, %p146
    %p149 = scmp.ne.s32.totalorder %s134, %s148
    %p150 = scmp.eq.s32.totalorder %s19, 0
    %p151 = por %p149, %p150
    %s153 = sadd.s32 %s152, 1
    %p156 = scmp.eq.s32.totalorder %s13, 1
    %p157 = scmp.ne.s32.totalorder %s152, %s154
    %p158 = scmp.eq.s32.totalorder %s13, 0
    %p159 = por %p157, %p158
    %p160 = scmp.ne.s32.totalorder %s152, %s154
    %p161 = scmp.eq.s32.totalorder %s18, 1
    %p162 = por %p160, %p161
    %p163 = scmp.ne.s32.totalorder %s154, %s155
    %p164 = scmp.eq.s32.totalorder %s18, 0
    %p165 = por %p163, %p164
    %p166 = scmp.ne.s32.totalorder %s154, %s155
    %p167 = scmp.eq.s32.totalorder %s19, 1
    %p168 = por %p166, %p167
    %p170 = scmp.ne.s32.totalorder %s155, %s169
    %p171 = scmp.eq.s32.totalorder %s19, 0
    %p172 = por %p170, %p171
    %s173 = ssub.s32 %s13, %s20
    %p174 = scmp.eq.s32.totalorder %s173, 0
    %s176 = sadd.s32 %s175, 1
    %s177 = scalar_select %p174, %s175, %s176
    %p180 = pneg %p174
    %p181 = scmp.eq.s32.totalorder %s13, 1
    %p182 = por %p180, %p181
    %p183 = scmp.ne.s32.totalorder %s175, %s178
    %p184 = scmp.eq.s32.totalorder %s13, 0
    %p185 = por %p183, %p184
    %p186 = scmp.ne.s32.totalorder %s175, %s178
    %p187 = scmp.eq.s32.totalorder %s18, 1
    %p188 = por %p186, %p187
    %p189 = scmp.ne.s32.totalorder %s178, %s179
    %p190 = scmp.eq.s32.totalorder %s18, 0
    %p191 = por %p189, %p190
    %p192 = scmp.ne.s32.totalorder %s178, %s179
    %p193 = scmp.eq.s32.totalorder %s19, 1
    %p194 = por %p192, %p193
    %p196 = scmp.ne.s32.totalorder %s179, %s195
    %p197 = scmp.eq.s32.totalorder %s19, 0
    %p198 = por %p196, %p197
    %p199 = scmp.le.s32.totalorder 1, %s13
    %p200 = scmp.lt.s32.totalorder %s13, 3
    %p201 = pnand %p199, %p200
    %p202 = pneg %p201
    // Predicated region
    $region9: #{dy_graph_conv2d_forward.1} parent=5 // pred_check
      _
    $region10: #{dy_graph_conv2d_forward.1} parent=5 // pred_check_branch
      %204 = sbr.rel (%p201) target = $region12
    $region11: #{dy_graph_conv2d_forward.1} parent=5 // pred_region
      %s205 = ssub.s32 %s13, 1
      // Predicated region
      $region13: #{dy_graph_conv2d_forward.1} parent=11 // pred_check
        %p206 = pneg %p60
      $region14: #{dy_graph_conv2d_forward.1} parent=11 // pred_check_branch
        %208 = sbr.rel (%p206) target = $region16
      $region15: #{dy_graph_conv2d_forward.1} parent=11 // pred_region
        _
      $region16: #{dy_graph_conv2d_forward.1} parent=11 // pred_fallthru
        _
      // Predicated region
      $region17: #{dy_graph_conv2d_forward.1} parent=11 // pred_check
        %p209 = pneg %p81
      $region18: #{dy_graph_conv2d_forward.1} parent=11 // pred_check_branch
        %211 = sbr.rel (%p209) target = $region20
      $region19: #{dy_graph_conv2d_forward.1} parent=11 // pred_region
        _
      $region20: #{dy_graph_conv2d_forward.1} parent=11 // pred_fallthru
        _
      // Predicated region
      $region21: #{dy_graph_conv2d_forward.1} parent=11 // pred_check
        %p212 = pneg %p102
      $region22: #{dy_graph_conv2d_forward.1} parent=11 // pred_check_branch
        %214 = sbr.rel (%p212) target = $region24
      $region23: #{dy_graph_conv2d_forward.1} parent=11 // pred_region
        _
      $region24: #{dy_graph_conv2d_forward.1} parent=11 // pred_fallthru
        _
      // Predicated region
      $region25: #{dy_graph_conv2d_forward.1} parent=11 // pred_check
        %p215 = pneg %p123
      $region26: #{dy_graph_conv2d_forward.1} parent=11 // pred_check_branch
        %217 = sbr.rel (%p215) target = $region28
      $region27: #{dy_graph_conv2d_forward.1} parent=11 // pred_region
        _
      $region28: #{dy_graph_conv2d_forward.1} parent=11 // pred_fallthru
        _
      // Predicated region
      $region29: #{dy_graph_conv2d_forward.1} parent=11 // pred_check
        %p218 = pneg %p144
      $region30: #{dy_graph_conv2d_forward.1} parent=11 // pred_check_branch
        %220 = sbr.rel (%p218) target = $region32
      $region31: #{dy_graph_conv2d_forward.1} parent=11 // pred_region
        _
      $region32: #{dy_graph_conv2d_forward.1} parent=11 // pred_fallthru
        _
      // Predicated region
      $region33: #{dy_graph_conv2d_forward.1} parent=11 // pred_check
        %p221 = pneg %p165
      $region34: #{dy_graph_conv2d_forward.1} parent=11 // pred_check_branch
        %223 = sbr.rel (%p221) target = $region36
      $region35: #{dy_graph_conv2d_forward.1} parent=11 // pred_region
        _
      $region36: #{dy_graph_conv2d_forward.1} parent=11 // pred_fallthru
        _
    $region12: #{dy_graph_conv2d_forward.1} parent=5 // pred_fallthru
      _
    %p224 = scmp.lt.s32.totalorder %s13, 2
    // Predicated region
    $region37: #{dy_graph_conv2d_forward.1} parent=5 // pred_check
      %p225 = pneg %p224
    $region38: #{dy_graph_conv2d_forward.1} parent=5 // pred_check_branch
      %227 = sbr.rel (%p225) target = $region40
    $region39: #{dy_graph_conv2d_forward.1} parent=5 // pred_region
      // Predicated region
      $region41: #{dy_graph_conv2d_forward.1} parent=39 // pred_check
        %p228 = pneg %p33
      $region42: #{dy_graph_conv2d_forward.1} parent=39 // pred_check_branch
        %230 = sbr.rel (%p228) target = $region44
      $region43: #{dy_graph_conv2d_forward.1} parent=39 // pred_region
        %p231 = scmp.lt.s32.totalorder %s13, 1
        %s232 = scalar_select %p231, %s13, 1
        %s233 = smul.addr %s232, 50
        %s234 = smul.addr %s233, 4
        %s235 = scalar_lea.vmem %s0, %s234
      $region44: #{dy_graph_conv2d_forward.1} parent=39 // pred_fallthru
        _
    $region40: #{dy_graph_conv2d_forward.1} parent=5 // pred_fallthru
      _
    %p236 = scmp.le.s32.totalorder 1, %s13
    %p237 = scmp.lt.s32.totalorder %s13, 3
    %p238 = pnand %p236, %p237
    %p239 = pneg %p238
    // Predicated region
    $region45: #{dy_graph_conv2d_forward.1} parent=5 // pred_check
      _
    $region46: #{dy_graph_conv2d_forward.1} parent=5 // pred_check_branch
      %241 = sbr.rel (%p238) target = $region48
    $region47: #{dy_graph_conv2d_forward.1} parent=5 // pred_region
      %s242 = ssub.s32 %s13, 1
      %p243 = scmp.lt.s32.totalorder %s18, 1
      %s244 = scalar_select %p243, %s18, 1
      %s245 = smul.addr %s244, 50
      %s246 = smul.addr %s245, 4
      %s247 = scalar_lea.vmem %s0, %s246
      %p248 = pneg %p39
      %p249 = pneg %p36
      %p250 = pneg %p60
      %p251 = pneg %p57
      %p252 = pneg %p81
      %p253 = pneg %p78
      %p254 = pneg %p102
      %p255 = pneg %p99
      %p256 = pneg %p123
      %p257 = pneg %p120
      %p258 = pneg %p144
      %p259 = pneg %p141
      %p260 = pneg %p165
      %p261 = pneg %p162
      %p262 = pneg %p191
      %p263 = pneg %p188
      %p264 = scmp.lt.s32.totalorder %s18, 1
      %s265 = scalar_select %p264, %s18, 1
      %s266 = smul.addr %s265, 50
      %s267 = smul.addr %s266, 8
      %s268 = scalar_lea.vmem %s7, %s267
      %p269 = scmp.lt.s32.totalorder %s18, 1
      %s270 = scalar_select %p269, %s18, 1
      %s271 = smul.addr %s270, 50
      %s272 = smul.addr %s271, 4
      %s273 = scalar_lea.vmem %s0, %s272
      %p274 = scmp.lt.s32.totalorder %s18, 1
      %s275 = scalar_select %p274, %s18, 1
      %s276 = smul.addr %s275, 50
      %s277 = smul.addr %s276, 8
      %s278 = scalar_lea.vmem %s7, %s277
      %v280 = vld [vmem:[%s273] sm:$0xff]
      %v281 = vld [vmem:[%s273 + $0x8] sm:$0xff]
      %v282 = vld [vmem:[%s273 + $0x10] sm:$0xff]
      %v283 = vld [vmem:[%s273 + $0x18] sm:$0xff]
      %v284 = vld [vmem:[%s273 + $0x20] sm:$0xff]
      %v285 = vld [vmem:[%s273 + $0x28] sm:$0xff]
      %v286 = vld [vmem:[%s273 + $0x30] sm:$0xff]
      %v287 = vld [vmem:[%s273 + $0x38] sm:$0xff]
      %v288 = vld [vmem:[%s273 + $0x40] sm:$0xff]
      %v289 = vld [vmem:[%s273 + $0x48] sm:$0xff]
      %v290 = vld [vmem:[%s273 + $0x50] sm:$0xff]
      %v291 = vld [vmem:[%s273 + $0x58] sm:$0xff]
      %v292 = vld [vmem:[%s273 + $0x60] sm:$0xff]
      %v293 = vld [vmem:[%s273 + $0x68] sm:$0xff]
      %v294 = vld [vmem:[%s273 + $0x70] sm:$0xff]
      %v295 = vld [vmem:[%s273 + $0x78] sm:$0xff]
      %v296 = vld [vmem:[%s273 + $0x80] sm:$0xff]
      %v297 = vld [vmem:[%s273 + $0x88] sm:$0xff]
      %v298 = vld [vmem:[%s273 + $0x90] sm:$0xff]
      %v299 = vld [vmem:[%s273 + $0x98] sm:$0xff]
      %v300 = vld [vmem:[%s273 + $0xa0] sm:$0xff]
      %v301 = vld [vmem:[%s273 + $0xa8] sm:$0xff]
      %v302 = vld [vmem:[%s273 + $0xb0] sm:$0xff]
      %v303 = vld [vmem:[%s273 + $0xb8] sm:$0xff]
      %v304 = vld [vmem:[%s273 + $0xc0] sm:$0x33]
      %v305 = vld [vmem:[%s1] sm:$0xf]
      %v306 = vld [vmem:[%s1 + $0x4] sm:$0xf]
      %v307 = vld [vmem:[%s1 + $0x8] sm:$0xf]
      %v308 = vld [vmem:[%s1 + $0xc] sm:$0xf]
      %v309 = vld [vmem:[%s1 + $0x10] sm:$0xf]
      %v310 = vld [vmem:[%s1 + $0x14] sm:$0xf]
      %v311 = vld [vmem:[%s1 + $0x18] sm:$0xf]
      %v312 = vld [vmem:[%s1 + $0x1c] sm:$0xf]
      %v313 = vld [vmem:[%s1 + $0x20] sm:$0xf]
      %v314 = vld [vmem:[%s1 + $0x24] sm:$0xf]
      %v315 = vld [vmem:[%s1 + $0x28] sm:$0xf]
      %v316 = vld [vmem:[%s1 + $0x2c] sm:$0xf]
      %v317 = vld [vmem:[%s1 + $0x30] sm:$0xf]
      %v318 = vld [vmem:[%s1 + $0x34] sm:$0xf]
      %v319 = vld [vmem:[%s1 + $0x38] sm:$0xf]
      %v320 = vld [vmem:[%s1 + $0x3c] sm:$0xf]
      %v321 = vld [vmem:[%s1 + $0x40] sm:$0xf]
      %v322 = vld [vmem:[%s1 + $0x44] sm:$0xf]
      %v323 = vld [vmem:[%s1 + $0x48] sm:$0xf]
      %v324 = vld [vmem:[%s1 + $0x4c] sm:$0xf]
      %v325 = vld [vmem:[%s1 + $0x50] sm:$0xf]
      %v326 = vld [vmem:[%s1 + $0x54] sm:$0xf]
      %v327 = vld [vmem:[%s1 + $0x58] sm:$0xf]
      %v328 = vld [vmem:[%s1 + $0x5c] sm:$0xf]
      %v354 = vunpack.c.l.b16 %v280
      %v355 = vunpack.c.h.b16 %v280
      %v356 = vunpack.c.l.b16 %v281
      %v357 = vunpack.c.h.b16 %v281
      %v358 = vunpack.c.l.b16 %v282
      %v359 = vunpack.c.h.b16 %v282
      %v360 = vunpack.c.l.b16 %v283
      %v361 = vunpack.c.h.b16 %v283
      %v362 = vunpack.c.l.b16 %v284
      %v363 = vunpack.c.h.b16 %v284
      %v364 = vunpack.c.l.b16 %v285
      %v365 = vunpack.c.h.b16 %v285
      %v366 = vunpack.c.l.b16 %v286
      %v367 = vunpack.c.h.b16 %v286
      %v368 = vunpack.c.l.b16 %v287
      %v369 = vunpack.c.h.b16 %v287
      %v370 = vunpack.c.l.b16 %v288
      %v371 = vunpack.c.h.b16 %v288
      %v372 = vunpack.c.l.b16 %v289
      %v373 = vunpack.c.h.b16 %v289
      %v374 = vunpack.c.l.b16 %v290
      %v375 = vunpack.c.h.b16 %v290
      %v376 = vunpack.c.l.b16 %v291
      %v377 = vunpack.c.h.b16 %v291
      %v378 = vunpack.c.l.b16 %v292
      %v379 = vunpack.c.h.b16 %v292
      %v380 = vunpack.c.l.b16 %v293
      %v381 = vunpack.c.h.b16 %v293
      %v382 = vunpack.c.l.b16 %v294
      %v383 = vunpack.c.h.b16 %v294
      %v384 = vunpack.c.l.b16 %v295
      %v385 = vunpack.c.h.b16 %v295
      %v386 = vunpack.c.l.b16 %v296
      %v387 = vunpack.c.h.b16 %v296
      %v388 = vunpack.c.l.b16 %v297
      %v389 = vunpack.c.h.b16 %v297
      %v390 = vunpack.c.l.b16 %v298
      %v391 = vunpack.c.h.b16 %v298
      %v392 = vunpack.c.l.b16 %v299
      %v393 = vunpack.c.h.b16 %v299
      %v394 = vunpack.c.l.b16 %v300
      %v395 = vunpack.c.h.b16 %v300
      %v396 = vunpack.c.l.b16 %v301
      %v397 = vunpack.c.h.b16 %v301
      %v398 = vunpack.c.l.b16 %v302
      %v399 = vunpack.c.h.b16 %v302
      %v400 = vunpack.c.l.b16 %v303
      %v401 = vunpack.c.h.b16 %v303
      %v402 = vunpack.c.l.b16 %v304
      %v403 = vunpack.c.h.b16 %v304
      %v404 = vpack.c.b16 %v356, %v354
      %v405 = vpack.c.b16 %v357, %v355
      %v406 = vpack.c.b16 %v360, %v358
      %v407 = vpack.c.b16 %v361, %v359
      %v408 = vpack.c.b16 %v364, %v362
      %v409 = vpack.c.b16 %v365, %v363
      %v410 = vpack.c.b16 %v368, %v366
      %v411 = vpack.c.b16 %v369, %v367
      %v412 = vpack.c.b16 %v372, %v370
      %v413 = vpack.c.b16 %v373, %v371
      %v414 = vpack.c.b16 %v376, %v374
      %v415 = vpack.c.b16 %v377, %v375
      %v416 = vpack.c.b16 %v380, %v378
      %v417 = vpack.c.b16 %v381, %v379
      %v418 = vpack.c.b16 %v384, %v382
      %v419 = vpack.c.b16 %v385, %v383
      %v420 = vpack.c.b16 %v388, %v386
      %v421 = vpack.c.b16 %v389, %v387
      %v422 = vpack.c.b16 %v392, %v390
      %v423 = vpack.c.b16 %v393, %v391
      %v424 = vpack.c.b16 %v396, %v394
      %v425 = vpack.c.b16 %v397, %v395
      %v426 = vpack.c.b16 %v400, %v398
      %v427 = vpack.c.b16 %v401, %v399
      %v428 = vpack.c.b16 %v402, %v402
      %v429 = vpack.c.b16 %v403, %v403
      %v467 = vunpack.c.l.b16 %v305
      %v468 = vunpack.c.l.b16 %v306
      %v469 = vunpack.c.l.b16 %v307
      %v470 = vunpack.c.l.b16 %v308
      %v471 = vunpack.c.l.b16 %v309
      %v472 = vunpack.c.l.b16 %v310
      %v473 = vunpack.c.l.b16 %v311
      %v474 = vunpack.c.l.b16 %v312
      %v475 = vunpack.c.l.b16 %v313
      %v476 = vunpack.c.l.b16 %v314
      %v477 = vunpack.c.l.b16 %v315
      %v478 = vunpack.c.l.b16 %v316
      %v479 = vunpack.c.l.b16 %v317
      %v480 = vunpack.c.l.b16 %v318
      %v481 = vunpack.c.l.b16 %v319
      %v482 = vunpack.c.l.b16 %v320
      %v483 = vunpack.c.l.b16 %v321
      %v484 = vunpack.c.l.b16 %v322
      %v485 = vunpack.c.l.b16 %v323
      %v486 = vunpack.c.l.b16 %v324
      %v487 = vunpack.c.l.b16 %v325
      %v488 = vunpack.c.l.b16 %v326
      %v489 = vunpack.c.l.b16 %v327
      %v490 = vunpack.c.l.b16 %v328
      %v491 = vpack.c.b16 %v468, %v467
      %v492 = vpack.c.b16 %v470, %v469
      %v493 = vpack.c.b16 %v472, %v471
      %v494 = vpack.c.b16 %v474, %v473
      %v495 = vpack.c.b16 %v476, %v475
      %v496 = vpack.c.b16 %v478, %v477
      %v497 = vpack.c.b16 %v480, %v479
      %v498 = vpack.c.b16 %v482, %v481
      %v499 = vpack.c.b16 %v484, %v483
      %v500 = vpack.c.b16 %v486, %v485
      %v501 = vpack.c.b16 %v488, %v487
      %v502 = vpack.c.b16 %v490, %v489
      %vm515 = vcmask 523264
      %v517 = vsel %vm515, %v405, 0
      %v520 = vsel %vm515, %v407, 0
      %v523 = vsel %vm515, %v409, 0
      %v526 = vsel %vm515, %v411, 0
      %v529 = vsel %vm515, %v413, 0
      %v532 = vsel %vm515, %v415, 0
      %v535 = vsel %vm515, %v417, 0
      %v538 = vsel %vm515, %v419, 0
      %v541 = vsel %vm515, %v421, 0
      %v544 = vsel %vm515, %v423, 0
      %v547 = vsel %vm515, %v425, 0
      %v550 = vsel %vm515, %v427, 0
      %v553 = vsel %vm515, %v429, 0
      %555 = vmatpush.bf16.msra.mxu0 %v498
      %556 = vmatpush.bf16.msra.mxu0 %v497
      %557 = vmatpush.bf16.msra.mxu0 %v496
      %558 = vmatpush.bf16.msra.mxu0 %v495
      %559 = vmatpush.bf16.msra.mxu0 %v494
      %560 = vmatpush.bf16.msra.mxu0 %v493
      %561 = vmatpush.bf16.msra.mxu0 %v492
      %562 = vmatpush.bf16.msra.mxu0 %v491
      %563 = vmatmul.bf16.gmra.mxu0 %v404
      %v564 = vpop.f32.mrf.mxu0
      %v565 = vadd.f32 0.0, %v564
      %v566 = vpop.f32.mrf.mxu0
      %v567 = vadd.f32 0.0, %v566
      %568 = vmatmul.bf16.gmra.mxu0 %v406
      %v569 = vpop.f32.mrf.mxu0
      %v570 = vadd.f32 0.0, %v569
      %v571 = vpop.f32.mrf.mxu0
      %v572 = vadd.f32 0.0, %v571
      %573 = vmatmul.bf16.gmra.mxu0 %v408
      %v574 = vpop.f32.mrf.mxu0
      %v575 = vadd.f32 0.0, %v574
      %v576 = vpop.f32.mrf.mxu0
      %v577 = vadd.f32 0.0, %v576
      %578 = vmatmul.bf16.gmra.mxu0 %v410
      %v579 = vpop.f32.mrf.mxu0
      %v580 = vadd.f32 0.0, %v579
      %v581 = vpop.f32.mrf.mxu0
      %v582 = vadd.f32 0.0, %v581
      %583 = vmatmul.bf16.gmra.mxu0 %v412
      %v584 = vpop.f32.mrf.mxu0
      %v585 = vadd.f32 0.0, %v584
      %v586 = vpop.f32.mrf.mxu0
      %v587 = vadd.f32 0.0, %v586
      %588 = vmatmul.bf16.gmra.mxu0 %v414
      %v589 = vpop.f32.mrf.mxu0
      %v590 = vadd.f32 0.0, %v589
      %v591 = vpop.f32.mrf.mxu0
      %v592 = vadd.f32 0.0, %v591
      %593 = vmatmul.bf16.gmra.mxu0 %v416
      %v594 = vpop.f32.mrf.mxu0
      %v595 = vadd.f32 0.0, %v594
      %v596 = vpop.f32.mrf.mxu0
      %v597 = vadd.f32 0.0, %v596
      %598 = vmatmul.bf16.gmra.mxu0 %v418
      %v599 = vpop.f32.mrf.mxu0
      %v600 = vadd.f32 0.0, %v599
      %v601 = vpop.f32.mrf.mxu0
      %v602 = vadd.f32 0.0, %v601
      %603 = vmatmul.bf16.gmra.mxu0 %v420
      %v604 = vpop.f32.mrf.mxu0
      %v605 = vadd.f32 0.0, %v604
      %v606 = vpop.f32.mrf.mxu0
      %v607 = vadd.f32 0.0, %v606
      %608 = vmatmul.bf16.gmra.mxu0 %v422
      %v609 = vpop.f32.mrf.mxu0
      %v610 = vadd.f32 0.0, %v609
      %v611 = vpop.f32.mrf.mxu0
      %v612 = vadd.f32 0.0, %v611
      %613 = vmatmul.bf16.gmra.mxu0 %v424
      %v614 = vpop.f32.mrf.mxu0
      %v615 = vadd.f32 0.0, %v614
      %v616 = vpop.f32.mrf.mxu0
      %v617 = vadd.f32 0.0, %v616
      %618 = vmatmul.bf16.gmra.mxu0 %v426
      %v619 = vpop.f32.mrf.mxu0
      %v620 = vadd.f32 0.0, %v619
      %v621 = vpop.f32.mrf.mxu0
      %v622 = vadd.f32 0.0, %v621
      %623 = vmatmul.bf16.gmra.mxu0 %v428
      %v624 = vpop.f32.mrf.mxu0
      %v625 = vadd.f32 0.0, %v624
      %v626 = vpop.f32.mrf.mxu0
      %627 = vdwg.mxu0
      %628 = vmatpush.bf16.msra.mxu0 0
      %629 = vmatpush.bf16.msra.mxu0 0
      %630 = vmatpush.bf16.msra.mxu0 0
      %631 = vmatpush.bf16.msra.mxu0 0
      %632 = vmatpush.bf16.msra.mxu0 %v502
      %633 = vmatpush.bf16.msra.mxu0 %v501
      %634 = vmatpush.bf16.msra.mxu0 %v500
      %635 = vmatpush.bf16.msra.mxu0 %v499
      %636 = vmatmul.bf16.gmra.mxu0 %v517
      %v637 = vpop.f32.mrf.mxu0
      %v638 = vadd.f32 %v565, %v637
      %v639 = vpop.f32.mrf.mxu0
      %v640 = vadd.f32 %v567, %v639
      %641 = vmatmul.bf16.gmra.mxu0 %v520
      %v642 = vpop.f32.mrf.mxu0
      %v643 = vadd.f32 %v570, %v642
      %v644 = vpop.f32.mrf.mxu0
      %v645 = vadd.f32 %v572, %v644
      %646 = vmatmul.bf16.gmra.mxu0 %v523
      %v647 = vpop.f32.mrf.mxu0
      %v648 = vadd.f32 %v575, %v647
      %v649 = vpop.f32.mrf.mxu0
      %v650 = vadd.f32 %v577, %v649
      %651 = vmatmul.bf16.gmra.mxu0 %v526
      %v652 = vpop.f32.mrf.mxu0
      %v653 = vadd.f32 %v580, %v652
      %v654 = vpop.f32.mrf.mxu0
      %v655 = vadd.f32 %v582, %v654
      %656 = vmatmul.bf16.gmra.mxu0 %v529
      %v657 = vpop.f32.mrf.mxu0
      %v658 = vadd.f32 %v585, %v657
      %v659 = vpop.f32.mrf.mxu0
      %v660 = vadd.f32 %v587, %v659
      %661 = vmatmul.bf16.gmra.mxu0 %v532
      %v662 = vpop.f32.mrf.mxu0
      %v663 = vadd.f32 %v590, %v662
      %v664 = vpop.f32.mrf.mxu0
      %v665 = vadd.f32 %v592, %v664
      %666 = vmatmul.bf16.gmra.mxu0 %v535
      %v667 = vpop.f32.mrf.mxu0
      %v668 = vadd.f32 %v595, %v667
      %v669 = vpop.f32.mrf.mxu0
      %v670 = vadd.f32 %v597, %v669
      %671 = vmatmul.bf16.gmra.mxu0 %v538
      %v672 = vpop.f32.mrf.mxu0
      %v673 = vadd.f32 %v600, %v672
      %v674 = vpop.f32.mrf.mxu0
      %v675 = vadd.f32 %v602, %v674
      %676 = vmatmul.bf16.gmra.mxu0 %v541
      %v677 = vpop.f32.mrf.mxu0
      %v678 = vadd.f32 %v605, %v677
      %v679 = vpop.f32.mrf.mxu0
      %v680 = vadd.f32 %v607, %v679
      %681 = vmatmul.bf16.gmra.mxu0 %v544
      %v682 = vpop.f32.mrf.mxu0
      %v683 = vadd.f32 %v610, %v682
      %v684 = vpop.f32.mrf.mxu0
      %v685 = vadd.f32 %v612, %v684
      %686 = vmatmul.bf16.gmra.mxu0 %v547
      %v687 = vpop.f32.mrf.mxu0
      %v688 = vadd.f32 %v615, %v687
      %v689 = vpop.f32.mrf.mxu0
      %v690 = vadd.f32 %v617, %v689
      %691 = vmatmul.bf16.gmra.mxu0 %v550
      %v692 = vpop.f32.mrf.mxu0
      %v693 = vadd.f32 %v620, %v692
      %v694 = vpop.f32.mrf.mxu0
      %v695 = vadd.f32 %v622, %v694
      %696 = vmatmul.bf16.gmra.mxu0 %v553
      %v697 = vpop.f32.mrf.mxu0
      %v698 = vadd.f32 %v625, %v697
      %v699 = vpop.f32.mrf.mxu0
      %700 = vdwg.mxu0
      %v701 = vld [vmem:[%s2] sm:$0x1]
      %v703 = vperm.slane %v701, 0
      %v705 = vmul.f32 %v638, %v703
      %v706 = vmul.f32 %v640, %v703
      %v707 = vmul.f32 %v643, %v703
      %v708 = vmul.f32 %v645, %v703
      %v709 = vmul.f32 %v648, %v703
      %v710 = vmul.f32 %v650, %v703
      %v711 = vmul.f32 %v653, %v703
      %v712 = vmul.f32 %v655, %v703
      %v713 = vmul.f32 %v658, %v703
      %v714 = vmul.f32 %v660, %v703
      %v715 = vmul.f32 %v663, %v703
      %v716 = vmul.f32 %v665, %v703
      %v717 = vmul.f32 %v668, %v703
      %v718 = vmul.f32 %v670, %v703
      %v719 = vmul.f32 %v673, %v703
      %v720 = vmul.f32 %v675, %v703
      %v721 = vmul.f32 %v678, %v703
      %v722 = vmul.f32 %v680, %v703
      %v723 = vmul.f32 %v683, %v703
      %v724 = vmul.f32 %v685, %v703
      %v725 = vmul.f32 %v688, %v703
      %v726 = vmul.f32 %v690, %v703
      %v727 = vmul.f32 %v693, %v703
      %v728 = vmul.f32 %v695, %v703
      %v729 = vmul.f32 %v698, %v703
      %v730 = vld [vmem:[%s3] sm:$0x1]
      %v732 = vperm.slane %v730, 0
      %v734 = vadd.f32 %v705, %v732
      %v735 = vadd.f32 %v706, %v732
      %v736 = vadd.f32 %v707, %v732
      %v737 = vadd.f32 %v708, %v732
      %v738 = vadd.f32 %v709, %v732
      %v739 = vadd.f32 %v710, %v732
      %v740 = vadd.f32 %v711, %v732
      %v741 = vadd.f32 %v712, %v732
      %v742 = vadd.f32 %v713, %v732
      %v743 = vadd.f32 %v714, %v732
      %v744 = vadd.f32 %v715, %v732
      %v745 = vadd.f32 %v716, %v732
      %v746 = vadd.f32 %v717, %v732
      %v747 = vadd.f32 %v718, %v732
      %v748 = vadd.f32 %v719, %v732
      %v749 = vadd.f32 %v720, %v732
      %v750 = vadd.f32 %v721, %v732
      %v751 = vadd.f32 %v722, %v732
      %v752 = vadd.f32 %v723, %v732
      %v753 = vadd.f32 %v724, %v732
      %v754 = vadd.f32 %v725, %v732
      %v755 = vadd.f32 %v726, %v732
      %v756 = vadd.f32 %v727, %v732
      %v757 = vadd.f32 %v728, %v732
      %v758 = vadd.f32 %v729, %v732
      %v759 = vmax.f32 %v734, 0.0
      %v760 = vmax.f32 %v735, 0.0
      %v761 = vmax.f32 %v736, 0.0
      %v762 = vmax.f32 %v737, 0.0
      %v763 = vmax.f32 %v738, 0.0
      %v764 = vmax.f32 %v739, 0.0
      %v765 = vmax.f32 %v740, 0.0
      %v766 = vmax.f32 %v741, 0.0
      %v767 = vmax.f32 %v742, 0.0
      %v768 = vmax.f32 %v743, 0.0
      %v769 = vmax.f32 %v744, 0.0
      %v770 = vmax.f32 %v745, 0.0
      %v771 = vmax.f32 %v746, 0.0
      %v772 = vmax.f32 %v747, 0.0
      %v773 = vmax.f32 %v748, 0.0
      %v774 = vmax.f32 %v749, 0.0
      %v775 = vmax.f32 %v750, 0.0
      %v776 = vmax.f32 %v751, 0.0
      %v777 = vmax.f32 %v752, 0.0
      %v778 = vmax.f32 %v753, 0.0
      %v779 = vmax.f32 %v754, 0.0
      %v780 = vmax.f32 %v755, 0.0
      %v781 = vmax.f32 %v756, 0.0
      %v782 = vmax.f32 %v757, 0.0
      %v783 = vmax.f32 %v758, 0.0
      %v784 = vmul.f32 %v759, %v759
      %v785 = vmul.f32 %v760, %v760
      %v786 = vmul.f32 %v761, %v761
      %v787 = vmul.f32 %v762, %v762
      %v788 = vmul.f32 %v763, %v763
      %v789 = vmul.f32 %v764, %v764
      %v790 = vmul.f32 %v765, %v765
      %v791 = vmul.f32 %v766, %v766
      %v792 = vmul.f32 %v767, %v767
      %v793 = vmul.f32 %v768, %v768
      %v794 = vmul.f32 %v769, %v769
      %v795 = vmul.f32 %v770, %v770
      %v796 = vmul.f32 %v771, %v771
      %v797 = vmul.f32 %v772, %v772
      %v798 = vmul.f32 %v773, %v773
      %v799 = vmul.f32 %v774, %v774
      %v800 = vmul.f32 %v775, %v775
      %v801 = vmul.f32 %v776, %v776
      %v802 = vmul.f32 %v777, %v777
      %v803 = vmul.f32 %v778, %v778
      %v804 = vmul.f32 %v779, %v779
      %v805 = vmul.f32 %v780, %v780
      %v806 = vmul.f32 %v781, %v781
      %v807 = vmul.f32 %v782, %v782
      %v808 = vmul.f32 %v783, %v783
      %vm809 = vcmask 261120
      %v810 = vsel %vm809, %v784, 0.0
      %811 = vadd.xlane.f32.xlu0 %v810
      %v812 = vpop.xlane.xlu0 %811
      %v813 = vsel %vm809, %v785, 0.0
      %814 = vadd.xlane.f32.xlu0 %v813
      %v815 = vpop.xlane.xlu0 %814
      %v816 = vsel %vm809, %v786, 0.0
      %817 = vadd.xlane.f32.xlu0 %v816
      %v818 = vpop.xlane.xlu0 %817
      %v819 = vsel %vm809, %v787, 0.0
      %820 = vadd.xlane.f32.xlu0 %v819
      %v821 = vpop.xlane.xlu0 %820
      %v822 = vsel %vm809, %v788, 0.0
      %823 = vadd.xlane.f32.xlu0 %v822
      %v824 = vpop.xlane.xlu0 %823
      %v825 = vsel %vm809, %v789, 0.0
      %826 = vadd.xlane.f32.xlu0 %v825
      %v827 = vpop.xlane.xlu0 %826
      %v828 = vsel %vm809, %v790, 0.0
      %829 = vadd.xlane.f32.xlu0 %v828
      %v830 = vpop.xlane.xlu0 %829
      %v831 = vsel %vm809, %v791, 0.0
      %832 = vadd.xlane.f32.xlu0 %v831
      %v833 = vpop.xlane.xlu0 %832
      %v834 = vsel %vm809, %v792, 0.0
      %835 = vadd.xlane.f32.xlu0 %v834
      %v836 = vpop.xlane.xlu0 %835
      %v837 = vsel %vm809, %v793, 0.0
      %838 = vadd.xlane.f32.xlu0 %v837
      %v839 = vpop.xlane.xlu0 %838
      %v840 = vsel %vm809, %v794, 0.0
      %841 = vadd.xlane.f32.xlu0 %v840
      %v842 = vpop.xlane.xlu0 %841
      %v843 = vsel %vm809, %v795, 0.0
      %844 = vadd.xlane.f32.xlu0 %v843
      %v845 = vpop.xlane.xlu0 %844
      %v846 = vsel %vm809, %v796, 0.0
      %847 = vadd.xlane.f32.xlu0 %v846
      %v848 = vpop.xlane.xlu0 %847
      %v849 = vsel %vm809, %v797, 0.0
      %850 = vadd.xlane.f32.xlu0 %v849
      %v851 = vpop.xlane.xlu0 %850
      %v852 = vsel %vm809, %v798, 0.0
      %853 = vadd.xlane.f32.xlu0 %v852
      %v854 = vpop.xlane.xlu0 %853
      %v855 = vsel %vm809, %v799, 0.0
      %856 = vadd.xlane.f32.xlu0 %v855
      %v857 = vpop.xlane.xlu0 %856
      %v858 = vsel %vm809, %v800, 0.0
      %859 = vadd.xlane.f32.xlu0 %v858
      %v860 = vpop.xlane.xlu0 %859
      %v861 = vsel %vm809, %v801, 0.0
      %862 = vadd.xlane.f32.xlu0 %v861
      %v863 = vpop.xlane.xlu0 %862
      %v864 = vsel %vm809, %v802, 0.0
      %865 = vadd.xlane.f32.xlu0 %v864
      %v866 = vpop.xlane.xlu0 %865
      %v867 = vsel %vm809, %v803, 0.0
      %868 = vadd.xlane.f32.xlu0 %v867
      %v869 = vpop.xlane.xlu0 %868
      %v870 = vsel %vm809, %v804, 0.0
      %871 = vadd.xlane.f32.xlu0 %v870
      %v872 = vpop.xlane.xlu0 %871
      %v873 = vsel %vm809, %v805, 0.0
      %874 = vadd.xlane.f32.xlu0 %v873
      %v875 = vpop.xlane.xlu0 %874
      %v876 = vsel %vm809, %v806, 0.0
      %877 = vadd.xlane.f32.xlu0 %v876
      %v878 = vpop.xlane.xlu0 %877
      %v879 = vsel %vm809, %v807, 0.0
      %880 = vadd.xlane.f32.xlu0 %v879
      %v881 = vpop.xlane.xlu0 %880
      %vm882 = vcmask 257024
      %v883 = vsel %vm882, %v808, 0.0
      %884 = vadd.xlane.f32.xlu0 %v883
      %v885 = vpop.xlane.xlu0 %884
      %v886 = vmax.f32 %v812, 1e-24
      %v887 = vmax.f32 %v815, 1e-24
      %v888 = vmax.f32 %v818, 1e-24
      %v889 = vmax.f32 %v821, 1e-24
      %v890 = vmax.f32 %v824, 1e-24
      %v891 = vmax.f32 %v827, 1e-24
      %v892 = vmax.f32 %v830, 1e-24
      %v893 = vmax.f32 %v833, 1e-24
      %v894 = vmax.f32 %v836, 1e-24
      %v895 = vmax.f32 %v839, 1e-24
      %v896 = vmax.f32 %v842, 1e-24
      %v897 = vmax.f32 %v845, 1e-24
      %v898 = vmax.f32 %v848, 1e-24
      %v899 = vmax.f32 %v851, 1e-24
      %v900 = vmax.f32 %v854, 1e-24
      %v901 = vmax.f32 %v857, 1e-24
      %v902 = vmax.f32 %v860, 1e-24
      %v903 = vmax.f32 %v863, 1e-24
      %v904 = vmax.f32 %v866, 1e-24
      %v905 = vmax.f32 %v869, 1e-24
      %v906 = vmax.f32 %v872, 1e-24
      %v907 = vmax.f32 %v875, 1e-24
      %v908 = vmax.f32 %v878, 1e-24
      %v909 = vmax.f32 %v881, 1e-24
      %v910 = vmax.f32 %v885, 1e-24
      %v911 = vrsqrt.pop %v886
      %v912 = vmul.f32 %v911, %v886
      %v913 = vmul.f32 %v912, %v911
      %v914 = vmul.f32 0.5, %v913
      %v915 = vsub.f32 1.5, %v914
      %v916 = vmul.f32 %v911, %v915
      %vm917 = vweird.f32 %v886
      %vm918 = vweird.f32 %v911
      %vm919 = vmor %vm917, %vm918
      %v920 = vsel %vm919, %v911, %v916
      %v921 = vrsqrt.pop %v887
      %v922 = vmul.f32 %v921, %v887
      %v923 = vmul.f32 %v922, %v921
      %v924 = vmul.f32 0.5, %v923
      %v925 = vsub.f32 1.5, %v924
      %v926 = vmul.f32 %v921, %v925
      %vm927 = vweird.f32 %v887
      %vm928 = vweird.f32 %v921
      %vm929 = vmor %vm927, %vm928
      %v930 = vsel %vm929, %v921, %v926
      %v931 = vrsqrt.pop %v888
      %v932 = vmul.f32 %v931, %v888
      %v933 = vmul.f32 %v932, %v931
      %v934 = vmul.f32 0.5, %v933
      %v935 = vsub.f32 1.5, %v934
      %v936 = vmul.f32 %v931, %v935
      %vm937 = vweird.f32 %v888
      %vm938 = vweird.f32 %v931
      %vm939 = vmor %vm937, %vm938
      %v940 = vsel %vm939, %v931, %v936
      %v941 = vrsqrt.pop %v889
      %v942 = vmul.f32 %v941, %v889
      %v943 = vmul.f32 %v942, %v941
      %v944 = vmul.f32 0.5, %v943
      %v945 = vsub.f32 1.5, %v944
      %v946 = vmul.f32 %v941, %v945
      %vm947 = vweird.f32 %v889
      %vm948 = vweird.f32 %v941
      %vm949 = vmor %vm947, %vm948
      %v950 = vsel %vm949, %v941, %v946
      %v951 = vrsqrt.pop %v890
      %v952 = vmul.f32 %v951, %v890
      %v953 = vmul.f32 %v952, %v951
      %v954 = vmul.f32 0.5, %v953
      %v955 = vsub.f32 1.5, %v954
      %v956 = vmul.f32 %v951, %v955
      %vm957 = vweird.f32 %v890
      %vm958 = vweird.f32 %v951
      %vm959 = vmor %vm957, %vm958
      %v960 = vsel %vm959, %v951, %v956
      %v961 = vrsqrt.pop %v891
      %v962 = vmul.f32 %v961, %v891
      %v963 = vmul.f32 %v962, %v961
      %v964 = vmul.f32 0.5, %v963
      %v965 = vsub.f32 1.5, %v964
      %v966 = vmul.f32 %v961, %v965
      %vm967 = vweird.f32 %v891
      %vm968 = vweird.f32 %v961
      %vm969 = vmor %vm967, %vm968
      %v970 = vsel %vm969, %v961, %v966
      %v971 = vrsqrt.pop %v892
      %v972 = vmul.f32 %v971, %v892
      %v973 = vmul.f32 %v972, %v971
      %v974 = vmul.f32 0.5, %v973
      %v975 = vsub.f32 1.5, %v974
      %v976 = vmul.f32 %v971, %v975
      %vm977 = vweird.f32 %v892
      %vm978 = vweird.f32 %v971
      %vm979 = vmor %vm977, %vm978
      %v980 = vsel %vm979, %v971, %v976
      %v981 = vrsqrt.pop %v893
      %v982 = vmul.f32 %v981, %v893
      %v983 = vmul.f32 %v982, %v981
      %v984 = vmul.f32 0.5, %v983
      %v985 = vsub.f32 1.5, %v984
      %v986 = vmul.f32 %v981, %v985
      %vm987 = vweird.f32 %v893
      %vm988 = vweird.f32 %v981
      %vm989 = vmor %vm987, %vm988
      %v990 = vsel %vm989, %v981, %v986
      %v991 = vrsqrt.pop %v894
      %v992 = vmul.f32 %v991, %v894
      %v993 = vmul.f32 %v992, %v991
      %v994 = vmul.f32 0.5, %v993
      %v995 = vsub.f32 1.5, %v994
      %v996 = vmul.f32 %v991, %v995
      %vm997 = vweird.f32 %v894
      %vm998 = vweird.f32 %v991
      %vm999 = vmor %vm997, %vm998
      %v1000 = vsel %vm999, %v991, %v996
      %v1001 = vrsqrt.pop %v895
      %v1002 = vmul.f32 %v1001, %v895
      %v1003 = vmul.f32 %v1002, %v1001
      %v1004 = vmul.f32 0.5, %v1003
      %v1005 = vsub.f32 1.5, %v1004
      %v1006 = vmul.f32 %v1001, %v1005
      %vm1007 = vweird.f32 %v895
      %vm1008 = vweird.f32 %v1001
      %vm1009 = vmor %vm1007, %vm1008
      %v1010 = vsel %vm1009, %v1001, %v1006
      %v1011 = vrsqrt.pop %v896
      %v1012 = vmul.f32 %v1011, %v896
      %v1013 = vmul.f32 %v1012, %v1011
      %v1014 = vmul.f32 0.5, %v1013
      %v1015 = vsub.f32 1.5, %v1014
      %v1016 = vmul.f32 %v1011, %v1015
      %vm1017 = vweird.f32 %v896
      %vm1018 = vweird.f32 %v1011
      %vm1019 = vmor %vm1017, %vm1018
      %v1020 = vsel %vm1019, %v1011, %v1016
      %v1021 = vrsqrt.pop %v897
      %v1022 = vmul.f32 %v1021, %v897
      %v1023 = vmul.f32 %v1022, %v1021
      %v1024 = vmul.f32 0.5, %v1023
      %v1025 = vsub.f32 1.5, %v1024
      %v1026 = vmul.f32 %v1021, %v1025
      %vm1027 = vweird.f32 %v897
      %vm1028 = vweird.f32 %v1021
      %vm1029 = vmor %vm1027, %vm1028
      %v1030 = vsel %vm1029, %v1021, %v1026
      %v1031 = vrsqrt.pop %v898
      %v1032 = vmul.f32 %v1031, %v898
      %v1033 = vmul.f32 %v1032, %v1031
      %v1034 = vmul.f32 0.5, %v1033
      %v1035 = vsub.f32 1.5, %v1034
      %v1036 = vmul.f32 %v1031, %v1035
      %vm1037 = vweird.f32 %v898
      %vm1038 = vweird.f32 %v1031
      %vm1039 = vmor %vm1037, %vm1038
      %v1040 = vsel %vm1039, %v1031, %v1036
      %v1041 = vrsqrt.pop %v899
      %v1042 = vmul.f32 %v1041, %v899
      %v1043 = vmul.f32 %v1042, %v1041
      %v1044 = vmul.f32 0.5, %v1043
      %v1045 = vsub.f32 1.5, %v1044
      %v1046 = vmul.f32 %v1041, %v1045
      %vm1047 = vweird.f32 %v899
      %vm1048 = vweird.f32 %v1041
      %vm1049 = vmor %vm1047, %vm1048
      %v1050 = vsel %vm1049, %v1041, %v1046
      %v1051 = vrsqrt.pop %v900
      %v1052 = vmul.f32 %v1051, %v900
      %v1053 = vmul.f32 %v1052, %v1051
      %v1054 = vmul.f32 0.5, %v1053
      %v1055 = vsub.f32 1.5, %v1054
      %v1056 = vmul.f32 %v1051, %v1055
      %vm1057 = vweird.f32 %v900
      %vm1058 = vweird.f32 %v1051
      %vm1059 = vmor %vm1057, %vm1058
      %v1060 = vsel %vm1059, %v1051, %v1056
      %v1061 = vrsqrt.pop %v901
      %v1062 = vmul.f32 %v1061, %v901
      %v1063 = vmul.f32 %v1062, %v1061
      %v1064 = vmul.f32 0.5, %v1063
      %v1065 = vsub.f32 1.5, %v1064
      %v1066 = vmul.f32 %v1061, %v1065
      %vm1067 = vweird.f32 %v901
      %vm1068 = vweird.f32 %v1061
      %vm1069 = vmor %vm1067, %vm1068
      %v1070 = vsel %vm1069, %v1061, %v1066
      %v1071 = vrsqrt.pop %v902
      %v1072 = vmul.f32 %v1071, %v902
      %v1073 = vmul.f32 %v1072, %v1071
      %v1074 = vmul.f32 0.5, %v1073
      %v1075 = vsub.f32 1.5, %v1074
      %v1076 = vmul.f32 %v1071, %v1075
      %vm1077 = vweird.f32 %v902
      %vm1078 = vweird.f32 %v1071
      %vm1079 = vmor %vm1077, %vm1078
      %v1080 = vsel %vm1079, %v1071, %v1076
      %v1081 = vrsqrt.pop %v903
      %v1082 = vmul.f32 %v1081, %v903
      %v1083 = vmul.f32 %v1082, %v1081
      %v1084 = vmul.f32 0.5, %v1083
      %v1085 = vsub.f32 1.5, %v1084
      %v1086 = vmul.f32 %v1081, %v1085
      %vm1087 = vweird.f32 %v903
      %vm1088 = vweird.f32 %v1081
      %vm1089 = vmor %vm1087, %vm1088
      %v1090 = vsel %vm1089, %v1081, %v1086
      %v1091 = vrsqrt.pop %v904
      %v1092 = vmul.f32 %v1091, %v904
      %v1093 = vmul.f32 %v1092, %v1091
      %v1094 = vmul.f32 0.5, %v1093
      %v1095 = vsub.f32 1.5, %v1094
      %v1096 = vmul.f32 %v1091, %v1095
      %vm1097 = vweird.f32 %v904
      %vm1098 = vweird.f32 %v1091
      %vm1099 = vmor %vm1097, %vm1098
      %v1100 = vsel %vm1099, %v1091, %v1096
      %v1101 = vrsqrt.pop %v905
      %v1102 = vmul.f32 %v1101, %v905
      %v1103 = vmul.f32 %v1102, %v1101
      %v1104 = vmul.f32 0.5, %v1103
      %v1105 = vsub.f32 1.5, %v1104
      %v1106 = vmul.f32 %v1101, %v1105
      %vm1107 = vweird.f32 %v905
      %vm1108 = vweird.f32 %v1101
      %vm1109 = vmor %vm1107, %vm1108
      %v1110 = vsel %vm1109, %v1101, %v1106
      %v1111 = vrsqrt.pop %v906
      %v1112 = vmul.f32 %v1111, %v906
      %v1113 = vmul.f32 %v1112, %v1111
      %v1114 = vmul.f32 0.5, %v1113
      %v1115 = vsub.f32 1.5, %v1114
      %v1116 = vmul.f32 %v1111, %v1115
      %vm1117 = vweird.f32 %v906
      %vm1118 = vweird.f32 %v1111
      %vm1119 = vmor %vm1117, %vm1118
      %v1120 = vsel %vm1119, %v1111, %v1116
      %v1121 = vrsqrt.pop %v907
      %v1122 = vmul.f32 %v1121, %v907
      %v1123 = vmul.f32 %v1122, %v1121
      %v1124 = vmul.f32 0.5, %v1123
      %v1125 = vsub.f32 1.5, %v1124
      %v1126 = vmul.f32 %v1121, %v1125
      %vm1127 = vweird.f32 %v907
      %vm1128 = vweird.f32 %v1121
      %vm1129 = vmor %vm1127, %vm1128
      %v1130 = vsel %vm1129, %v1121, %v1126
      %v1131 = vrsqrt.pop %v908
      %v1132 = vmul.f32 %v1131, %v908
      %v1133 = vmul.f32 %v1132, %v1131
      %v1134 = vmul.f32 0.5, %v1133
      %v1135 = vsub.f32 1.5, %v1134
      %v1136 = vmul.f32 %v1131, %v1135
      %vm1137 = vweird.f32 %v908
      %vm1138 = vweird.f32 %v1131
      %vm1139 = vmor %vm1137, %vm1138
      %v1140 = vsel %vm1139, %v1131, %v1136
      %v1141 = vrsqrt.pop %v909
      %v1142 = vmul.f32 %v1141, %v909
      %v1143 = vmul.f32 %v1142, %v1141
      %v1144 = vmul.f32 0.5, %v1143
      %v1145 = vsub.f32 1.5, %v1144
      %v1146 = vmul.f32 %v1141, %v1145
      %vm1147 = vweird.f32 %v909
      %vm1148 = vweird.f32 %v1141
      %vm1149 = vmor %vm1147, %vm1148
      %v1150 = vsel %vm1149, %v1141, %v1146
      %v1151 = vrsqrt.pop %v910
      %v1152 = vmul.f32 %v1151, %v910
      %v1153 = vmul.f32 %v1152, %v1151
      %v1154 = vmul.f32 0.5, %v1153
      %v1155 = vsub.f32 1.5, %v1154
      %v1156 = vmul.f32 %v1151, %v1155
      %vm1157 = vweird.f32 %v910
      %vm1158 = vweird.f32 %v1151
      %vm1159 = vmor %vm1157, %vm1158
      %v1160 = vsel %vm1159, %v1151, %v1156
      %v1161 = vmul.f32 %v759, %v920
      %v1162 = vmul.f32 %v760, %v930
      %v1163 = vmul.f32 %v761, %v940
      %v1164 = vmul.f32 %v762, %v950
      %v1165 = vmul.f32 %v763, %v960
      %v1166 = vmul.f32 %v764, %v970
      %v1167 = vmul.f32 %v765, %v980
      %v1168 = vmul.f32 %v766, %v990
      %v1169 = vmul.f32 %v767, %v1000
      %v1170 = vmul.f32 %v768, %v1010
      %v1171 = vmul.f32 %v769, %v1020
      %v1172 = vmul.f32 %v770, %v1030
      %v1173 = vmul.f32 %v771, %v1040
      %v1174 = vmul.f32 %v772, %v1050
      %v1175 = vmul.f32 %v773, %v1060
      %v1176 = vmul.f32 %v774, %v1070
      %v1177 = vmul.f32 %v775, %v1080
      %v1178 = vmul.f32 %v776, %v1090
      %v1179 = vmul.f32 %v777, %v1100
      %v1180 = vmul.f32 %v778, %v1110
      %v1181 = vmul.f32 %v779, %v1120
      %v1182 = vmul.f32 %v780, %v1130
      %v1183 = vmul.f32 %v781, %v1140
      %v1184 = vmul.f32 %v782, %v1150
      %v1185 = vmul.f32 %v783, %v1160
      %v1186 = vpack.c.bf16 %v1162, %v1161
      %v1187 = vpack.c.bf16 %v1164, %v1163
      %v1188 = vpack.c.bf16 %v1166, %v1165
      %v1189 = vpack.c.bf16 %v1168, %v1167
      %v1190 = vpack.c.bf16 %v1170, %v1169
      %v1191 = vpack.c.bf16 %v1172, %v1171
      %v1192 = vpack.c.bf16 %v1174, %v1173
      %v1193 = vpack.c.bf16 %v1176, %v1175
      %v1194 = vpack.c.bf16 %v1178, %v1177
      %v1195 = vpack.c.bf16 %v1180, %v1179
      %v1196 = vpack.c.bf16 %v1182, %v1181
      %v1197 = vpack.c.bf16 %v1184, %v1183
      %v1198 = vpack.c.bf16 %v1185, %v1185
      %v1200 = vsel %vm809, %v1186, 0
      %v1203 = vsel %vm809, %v1187, 0
      %v1206 = vsel %vm809, %v1188, 0
      %v1209 = vsel %vm809, %v1189, 0
      %v1212 = vsel %vm809, %v1190, 0
      %v1215 = vsel %vm809, %v1191, 0
      %v1218 = vsel %vm809, %v1192, 0
      %v1221 = vsel %vm809, %v1193, 0
      %v1224 = vsel %vm809, %v1194, 0
      %v1227 = vsel %vm809, %v1195, 0
      %v1230 = vsel %vm809, %v1196, 0
      %v1233 = vsel %vm809, %v1197, 0
      %v1236 = vsel %vm809, %v1198, 0
      %1238 = vmatpush.bf16.xpose.msra.mxu0 %v1221
      %1239 = vmatpush.bf16.xpose.msra.mxu0 %v1218
      %1240 = vmatpush.bf16.xpose.msra.mxu0 %v1215
      %1241 = vmatpush.bf16.xpose.msra.mxu0 %v1212
      %1242 = vmatpush.bf16.xpose.msra.mxu0 %v1209
      %1243 = vmatpush.bf16.xpose.msra.mxu0 %v1206
      %1244 = vmatpush.bf16.xpose.msra.mxu0 %v1203
      %1245 = vmatpush.bf16.xpose.msra.mxu0 %v1200
      %1246 = vmatmul.bf16.gmra.mxu0 %v1200
      %v1247 = vpop.f32.mrf.mxu0
      %v1248 = vadd.f32 0.0, %v1247
      %v1249 = vpop.f32.mrf.mxu0
      %v1250 = vadd.f32 0.0, %v1249
      %1251 = vmatmul.bf16.gmra.mxu0 %v1203
      %v1252 = vpop.f32.mrf.mxu0
      %v1253 = vadd.f32 0.0, %v1252
      %v1254 = vpop.f32.mrf.mxu0
      %v1255 = vadd.f32 0.0, %v1254
      %1256 = vmatmul.bf16.gmra.mxu0 %v1206
      %v1257 = vpop.f32.mrf.mxu0
      %v1258 = vadd.f32 0.0, %v1257
      %v1259 = vpop.f32.mrf.mxu0
      %v1260 = vadd.f32 0.0, %v1259
      %1261 = vmatmul.bf16.gmra.mxu0 %v1209
      %v1262 = vpop.f32.mrf.mxu0
      %v1263 = vadd.f32 0.0, %v1262
      %v1264 = vpop.f32.mrf.mxu0
      %v1265 = vadd.f32 0.0, %v1264
      %1266 = vmatmul.bf16.gmra.mxu0 %v1212
      %v1267 = vpop.f32.mrf.mxu0
      %v1268 = vadd.f32 0.0, %v1267
      %v1269 = vpop.f32.mrf.mxu0
      %v1270 = vadd.f32 0.0, %v1269
      %1271 = vmatmul.bf16.gmra.mxu0 %v1215
      %v1272 = vpop.f32.mrf.mxu0
      %v1273 = vadd.f32 0.0, %v1272
      %v1274 = vpop.f32.mrf.mxu0
      %v1275 = vadd.f32 0.0, %v1274
      %1276 = vmatmul.bf16.gmra.mxu0 %v1218
      %v1277 = vpop.f32.mrf.mxu0
      %v1278 = vadd.f32 0.0, %v1277
      %v1279 = vpop.f32.mrf.mxu0
      %v1280 = vadd.f32 0.0, %v1279
      %1281 = vmatmul.bf16.gmra.mxu0 %v1221
      %v1282 = vpop.f32.mrf.mxu0
      %v1283 = vadd.f32 0.0, %v1282
      %v1284 = vpop.f32.mrf.mxu0
      %v1285 = vadd.f32 0.0, %v1284
      %1286 = vmatmul.bf16.gmra.mxu0 %v1224
      %v1287 = vpop.f32.mrf.mxu0
      %v1288 = vadd.f32 0.0, %v1287
      %v1289 = vpop.f32.mrf.mxu0
      %v1290 = vadd.f32 0.0, %v1289
      %1291 = vmatmul.bf16.gmra.mxu0 %v1227
      %v1292 = vpop.f32.mrf.mxu0
      %v1293 = vadd.f32 0.0, %v1292
      %v1294 = vpop.f32.mrf.mxu0
      %v1295 = vadd.f32 0.0, %v1294
      %1296 = vmatmul.bf16.gmra.mxu0 %v1230
      %v1297 = vpop.f32.mrf.mxu0
      %v1298 = vadd.f32 0.0, %v1297
      %v1299 = vpop.f32.mrf.mxu0
      %v1300 = vadd.f32 0.0, %v1299
      %1301 = vmatmul.bf16.gmra.mxu0 %v1233
      %v1302 = vpop.f32.mrf.mxu0
      %v1303 = vadd.f32 0.0, %v1302
      %v1304 = vpop.f32.mrf.mxu0
      %v1305 = vadd.f32 0.0, %v1304
      %1306 = vmatmul.bf16.gmra.mxu0 %v1236
      %v1307 = vpop.f32.mrf.mxu0
      %v1308 = vadd.f32 0.0, %v1307
      %v1309 = vpop.f32.mrf.mxu0
      %1310 = vdwg.mxu0
      %1311 = vmatpush.bf16.xpose.msra.mxu0 0
      %1312 = vmatpush.bf16.xpose.msra.mxu0 0
      %1313 = vmatpush.bf16.xpose.msra.mxu0 0
      %1314 = vmatpush.bf16.xpose.msra.mxu0 %v1236
      %1315 = vmatpush.bf16.xpose.msra.mxu0 %v1233
      %1316 = vmatpush.bf16.xpose.msra.mxu0 %v1230
      %1317 = vmatpush.bf16.xpose.msra.mxu0 %v1227
      %1318 = vmatpush.bf16.xpose.msra.mxu0 %v1224
      %1319 = vmatmul.bf16.gmra.mxu0 %v1200
      %v1320 = vpop.f32.mrf.mxu0
      %v1321 = vadd.f32 0.0, %v1320
      %v1322 = vpop.f32.mrf.mxu0
      %v1323 = vadd.f32 0.0, %v1322
      %1324 = vmatmul.bf16.gmra.mxu0 %v1203
      %v1325 = vpop.f32.mrf.mxu0
      %v1326 = vadd.f32 0.0, %v1325
      %v1327 = vpop.f32.mrf.mxu0
      %v1328 = vadd.f32 0.0, %v1327
      %1329 = vmatmul.bf16.gmra.mxu0 %v1206
      %v1330 = vpop.f32.mrf.mxu0
      %v1331 = vadd.f32 0.0, %v1330
      %v1332 = vpop.f32.mrf.mxu0
      %v1333 = vadd.f32 0.0, %v1332
      %1334 = vmatmul.bf16.gmra.mxu0 %v1209
      %v1335 = vpop.f32.mrf.mxu0
      %v1336 = vadd.f32 0.0, %v1335
      %v1337 = vpop.f32.mrf.mxu0
      %v1338 = vadd.f32 0.0, %v1337
      %1339 = vmatmul.bf16.gmra.mxu0 %v1212
      %v1340 = vpop.f32.mrf.mxu0
      %v1341 = vadd.f32 0.0, %v1340
      %v1342 = vpop.f32.mrf.mxu0
      %v1343 = vadd.f32 0.0, %v1342
      %1344 = vmatmul.bf16.gmra.mxu0 %v1215
      %v1345 = vpop.f32.mrf.mxu0
      %v1346 = vadd.f32 0.0, %v1345
      %v1347 = vpop.f32.mrf.mxu0
      %v1348 = vadd.f32 0.0, %v1347
      %1349 = vmatmul.bf16.gmra.mxu0 %v1218
      %v1350 = vpop.f32.mrf.mxu0
      %v1351 = vadd.f32 0.0, %v1350
      %v1352 = vpop.f32.mrf.mxu0
      %v1353 = vadd.f32 0.0, %v1352
      %1354 = vmatmul.bf16.gmra.mxu0 %v1221
      %v1355 = vpop.f32.mrf.mxu0
      %v1356 = vadd.f32 0.0, %v1355
      %v1357 = vpop.f32.mrf.mxu0
      %v1358 = vadd.f32 0.0, %v1357
      %1359 = vmatmul.bf16.gmra.mxu0 %v1224
      %v1360 = vpop.f32.mrf.mxu0
      %v1361 = vadd.f32 0.0, %v1360
      %v1362 = vpop.f32.mrf.mxu0
      %v1363 = vadd.f32 0.0, %v1362
      %1364 = vmatmul.bf16.gmra.mxu0 %v1227
      %v1365 = vpop.f32.mrf.mxu0
      %v1366 = vadd.f32 0.0, %v1365
      %v1367 = vpop.f32.mrf.mxu0
      %v1368 = vadd.f32 0.0, %v1367
      %1369 = vmatmul.bf16.gmra.mxu0 %v1230
      %v1370 = vpop.f32.mrf.mxu0
      %v1371 = vadd.f32 0.0, %v1370
      %v1372 = vpop.f32.mrf.mxu0
      %v1373 = vadd.f32 0.0, %v1372
      %1374 = vmatmul.bf16.gmra.mxu0 %v1233
      %v1375 = vpop.f32.mrf.mxu0
      %v1376 = vadd.f32 0.0, %v1375
      %v1377 = vpop.f32.mrf.mxu0
      %v1378 = vadd.f32 0.0, %v1377
      %1379 = vmatmul.bf16.gmra.mxu0 %v1236
      %v1380 = vpop.f32.mrf.mxu0
      %v1381 = vadd.f32 0.0, %v1380
      %v1382 = vpop.f32.mrf.mxu0
      %1383 = vdwg.mxu0
      %v1384 = vmul.f32 %v1248, 2.0
      %v1385 = vmul.f32 %v1321, 2.0
      %v1386 = vmul.f32 %v1250, 2.0
      %v1387 = vmul.f32 %v1323, 2.0
      %v1388 = vmul.f32 %v1253, 2.0
      %v1389 = vmul.f32 %v1326, 2.0
      %v1390 = vmul.f32 %v1255, 2.0
      %v1391 = vmul.f32 %v1328, 2.0
      %v1392 = vmul.f32 %v1258, 2.0
      %v1393 = vmul.f32 %v1331, 2.0
      %v1394 = vmul.f32 %v1260, 2.0
      %v1395 = vmul.f32 %v1333, 2.0
      %v1396 = vmul.f32 %v1263, 2.0
      %v1397 = vmul.f32 %v1336, 2.0
      %v1398 = vmul.f32 %v1265, 2.0
      %v1399 = vmul.f32 %v1338, 2.0
      %v1400 = vmul.f32 %v1268, 2.0
      %v1401 = vmul.f32 %v1341, 2.0
      %v1402 = vmul.f32 %v1270, 2.0
      %v1403 = vmul.f32 %v1343, 2.0
      %v1404 = vmul.f32 %v1273, 2.0
      %v1405 = vmul.f32 %v1346, 2.0
      %v1406 = vmul.f32 %v1275, 2.0
      %v1407 = vmul.f32 %v1348, 2.0
      %v1408 = vmul.f32 %v1278, 2.0
      %v1409 = vmul.f32 %v1351, 2.0
      %v1410 = vmul.f32 %v1280, 2.0
      %v1411 = vmul.f32 %v1353, 2.0
      %v1412 = vmul.f32 %v1283, 2.0
      %v1413 = vmul.f32 %v1356, 2.0
      %v1414 = vmul.f32 %v1285, 2.0
      %v1415 = vmul.f32 %v1358, 2.0
      %v1416 = vmul.f32 %v1288, 2.0
      %v1417 = vmul.f32 %v1361, 2.0
      %v1418 = vmul.f32 %v1290, 2.0
      %v1419 = vmul.f32 %v1363, 2.0
      %v1420 = vmul.f32 %v1293, 2.0
      %v1421 = vmul.f32 %v1366, 2.0
      %v1422 = vmul.f32 %v1295, 2.0
      %v1423 = vmul.f32 %v1368, 2.0
      %v1424 = vmul.f32 %v1298, 2.0
      %v1425 = vmul.f32 %v1371, 2.0
      %v1426 = vmul.f32 %v1300, 2.0
      %v1427 = vmul.f32 %v1373, 2.0
      %v1428 = vmul.f32 %v1303, 2.0
      %v1429 = vmul.f32 %v1376, 2.0
      %v1430 = vmul.f32 %v1305, 2.0
      %v1431 = vmul.f32 %v1378, 2.0
      %v1432 = vmul.f32 %v1308, 2.0
      %v1433 = vmul.f32 %v1381, 2.0
      %v1434 = vsub.f32 %v1384, 2.0
      %v1435 = vsub.f32 %v1385, 2.0
      %v1436 = vsub.f32 %v1386, 2.0
      %v1437 = vsub.f32 %v1387, 2.0
      %v1438 = vsub.f32 %v1388, 2.0
      %v1439 = vsub.f32 %v1389, 2.0
      %v1440 = vsub.f32 %v1390, 2.0
      %v1441 = vsub.f32 %v1391, 2.0
      %v1442 = vsub.f32 %v1392, 2.0
      %v1443 = vsub.f32 %v1393, 2.0
      %v1444 = vsub.f32 %v1394, 2.0
      %v1445 = vsub.f32 %v1395, 2.0
      %v1446 = vsub.f32 %v1396, 2.0
      %v1447 = vsub.f32 %v1397, 2.0
      %v1448 = vsub.f32 %v1398, 2.0
      %v1449 = vsub.f32 %v1399, 2.0
      %v1450 = vsub.f32 %v1400, 2.0
      %v1451 = vsub.f32 %v1401, 2.0
      %v1452 = vsub.f32 %v1402, 2.0
      %v1453 = vsub.f32 %v1403, 2.0
      %v1454 = vsub.f32 %v1404, 2.0
      %v1455 = vsub.f32 %v1405, 2.0
      %v1456 = vsub.f32 %v1406, 2.0
      %v1457 = vsub.f32 %v1407, 2.0
      %v1458 = vsub.f32 %v1408, 2.0
      %v1459 = vsub.f32 %v1409, 2.0
      %v1460 = vsub.f32 %v1410, 2.0
      %v1461 = vsub.f32 %v1411, 2.0
      %v1462 = vsub.f32 %v1412, 2.0
      %v1463 = vsub.f32 %v1413, 2.0
      %v1464 = vsub.f32 %v1414, 2.0
      %v1465 = vsub.f32 %v1415, 2.0
      %v1466 = vsub.f32 %v1416, 2.0
      %v1467 = vsub.f32 %v1417, 2.0
      %v1468 = vsub.f32 %v1418, 2.0
      %v1469 = vsub.f32 %v1419, 2.0
      %v1470 = vsub.f32 %v1420, 2.0
      %v1471 = vsub.f32 %v1421, 2.0
      %v1472 = vsub.f32 %v1422, 2.0
      %v1473 = vsub.f32 %v1423, 2.0
      %v1474 = vsub.f32 %v1424, 2.0
      %v1475 = vsub.f32 %v1425, 2.0
      %v1476 = vsub.f32 %v1426, 2.0
      %v1477 = vsub.f32 %v1427, 2.0
      %v1478 = vsub.f32 %v1428, 2.0
      %v1479 = vsub.f32 %v1429, 2.0
      %v1480 = vsub.f32 %v1430, 2.0
      %v1481 = vsub.f32 %v1431, 2.0
      %v1482 = vsub.f32 %v1432, 2.0
      %v1483 = vsub.f32 %v1433, 2.0
      %v1484 = vlaneseq
      %v1485 = vshrl.u32 %v1484, 7
      %v1486 = vadd.s32 %v1485, 8
      %v1487 = vadd.s32 %v1485, 16
      %v1488 = vadd.s32 %v1485, 24
      %v1489 = vadd.s32 %v1485, 32
      %v1490 = vadd.s32 %v1485, 40
      %v1491 = vadd.s32 %v1485, 48
      %v1492 = vadd.s32 %v1485, 56
      %v1493 = vadd.s32 %v1485, 64
      %v1494 = vadd.s32 %v1485, 72
      %v1495 = vadd.s32 %v1485, 80
      %v1496 = vadd.s32 %v1485, 88
      %v1497 = vadd.s32 %v1485, 96
      %v1498 = vadd.s32 %v1485, 104
      %v1499 = vadd.s32 %v1485, 112
      %v1500 = vadd.s32 %v1485, 120
      %v1501 = vadd.s32 %v1485, 128
      %v1502 = vadd.s32 %v1485, 136
      %v1503 = vadd.s32 %v1485, 144
      %v1504 = vadd.s32 %v1485, 152
      %v1505 = vadd.s32 %v1485, 160
      %v1506 = vadd.s32 %v1485, 168
      %v1507 = vadd.s32 %v1485, 176
      %v1508 = vadd.s32 %v1485, 184
      %v1509 = vadd.s32 %v1485, 192
      %v1510 = vlaneseq
      %v1511 = vand.u32 %v1510, 127
      %v1512 = vadd.s32 %v1511, 128
      %vm1513 = vcmp.eq.s32.totalorder %v1485, %v1511
      %vm1514 = vcmp.eq.s32.totalorder %v1485, %v1512
      %vm1515 = vcmp.eq.s32.totalorder %v1486, %v1511
      %vm1516 = vcmp.eq.s32.totalorder %v1486, %v1512
      %vm1517 = vcmp.eq.s32.totalorder %v1487, %v1511
      %vm1518 = vcmp.eq.s32.totalorder %v1487, %v1512
      %vm1519 = vcmp.eq.s32.totalorder %v1488, %v1511
      %vm1520 = vcmp.eq.s32.totalorder %v1488, %v1512
      %vm1521 = vcmp.eq.s32.totalorder %v1489, %v1511
      %vm1522 = vcmp.eq.s32.totalorder %v1489, %v1512
      %vm1523 = vcmp.eq.s32.totalorder %v1490, %v1511
      %vm1524 = vcmp.eq.s32.totalorder %v1490, %v1512
      %vm1525 = vcmp.eq.s32.totalorder %v1491, %v1511
      %vm1526 = vcmp.eq.s32.totalorder %v1491, %v1512
      %vm1527 = vcmp.eq.s32.totalorder %v1492, %v1511
      %vm1528 = vcmp.eq.s32.totalorder %v1492, %v1512
      %vm1529 = vcmp.eq.s32.totalorder %v1493, %v1511
      %vm1530 = vcmp.eq.s32.totalorder %v1493, %v1512
      %vm1531 = vcmp.eq.s32.totalorder %v1494, %v1511
      %vm1532 = vcmp.eq.s32.totalorder %v1494, %v1512
      %vm1533 = vcmp.eq.s32.totalorder %v1495, %v1511
      %vm1534 = vcmp.eq.s32.totalorder %v1495, %v1512
      %vm1535 = vcmp.eq.s32.totalorder %v1496, %v1511
      %vm1536 = vcmp.eq.s32.totalorder %v1496, %v1512
      %vm1537 = vcmp.eq.s32.totalorder %v1497, %v1511
      %vm1538 = vcmp.eq.s32.totalorder %v1497, %v1512
      %vm1539 = vcmp.eq.s32.totalorder %v1498, %v1511
      %vm1540 = vcmp.eq.s32.totalorder %v1498, %v1512
      %vm1541 = vcmp.eq.s32.totalorder %v1499, %v1511
      %vm1542 = vcmp.eq.s32.totalorder %v1499, %v1512
      %vm1543 = vcmp.eq.s32.totalorder %v1500, %v1511
      %vm1544 = vcmp.eq.s32.totalorder %v1500, %v1512
      %vm1545 = vcmp.eq.s32.totalorder %v1501, %v1511
      %vm1546 = vcmp.eq.s32.totalorder %v1501, %v1512
      %vm1547 = vcmp.eq.s32.totalorder %v1502, %v1511
      %vm1548 = vcmp.eq.s32.totalorder %v1502, %v1512
      %vm1549 = vcmp.eq.s32.totalorder %v1503, %v1511
      %vm1550 = vcmp.eq.s32.totalorder %v1503, %v1512
      %vm1551 = vcmp.eq.s32.totalorder %v1504, %v1511
      %vm1552 = vcmp.eq.s32.totalorder %v1504, %v1512
      %vm1553 = vcmp.eq.s32.totalorder %v1505, %v1511
      %vm1554 = vcmp.eq.s32.totalorder %v1505, %v1512
      %vm1555 = vcmp.eq.s32.totalorder %v1506, %v1511
      %vm1556 = vcmp.eq.s32.totalorder %v1506, %v1512
      %vm1557 = vcmp.eq.s32.totalorder %v1507, %v1511
      %vm1558 = vcmp.eq.s32.totalorder %v1507, %v1512
      %vm1559 = vcmp.eq.s32.totalorder %v1508, %v1511
      %vm1560 = vcmp.eq.s32.totalorder %v1508, %v1512
      %vm1561 = vcmp.eq.s32.totalorder %v1509, %v1511
      %vm1562 = vcmp.eq.s32.totalorder %v1509, %v1512
      %v1563 = vsel %vm1513, 1.0, %v1434
      %v1564 = vsel %vm1514, 1.0, %v1435
      %v1565 = vsel %vm1515, 1.0, %v1436
      %v1566 = vsel %vm1516, 1.0, %v1437
      %v1567 = vsel %vm1517, 1.0, %v1438
      %v1568 = vsel %vm1518, 1.0, %v1439
      %v1569 = vsel %vm1519, 1.0, %v1440
      %v1570 = vsel %vm1520, 1.0, %v1441
      %v1571 = vsel %vm1521, 1.0, %v1442
      %v1572 = vsel %vm1522, 1.0, %v1443
      %v1573 = vsel %vm1523, 1.0, %v1444
      %v1574 = vsel %vm1524, 1.0, %v1445
      %v1575 = vsel %vm1525, 1.0, %v1446
      %v1576 = vsel %vm1526, 1.0, %v1447
      %v1577 = vsel %vm1527, 1.0, %v1448
      %v1578 = vsel %vm1528, 1.0, %v1449
      %v1579 = vsel %vm1529, 1.0, %v1450
      %v1580 = vsel %vm1530, 1.0, %v1451
      %v1581 = vsel %vm1531, 1.0, %v1452
      %v1582 = vsel %vm1532, 1.0, %v1453
      %v1583 = vsel %vm1533, 1.0, %v1454
      %v1584 = vsel %vm1534, 1.0, %v1455
      %v1585 = vsel %vm1535, 1.0, %v1456
      %v1586 = vsel %vm1536, 1.0, %v1457
      %v1587 = vsel %vm1537, 1.0, %v1458
      %v1588 = vsel %vm1538, 1.0, %v1459
      %v1589 = vsel %vm1539, 1.0, %v1460
      %v1590 = vsel %vm1540, 1.0, %v1461
      %v1591 = vsel %vm1541, 1.0, %v1462
      %v1592 = vsel %vm1542, 1.0, %v1463
      %v1593 = vsel %vm1543, 1.0, %v1464
      %v1594 = vsel %vm1544, 1.0, %v1465
      %v1595 = vsel %vm1545, 1.0, %v1466
      %v1596 = vsel %vm1546, 1.0, %v1467
      %v1597 = vsel %vm1547, 1.0, %v1468
      %v1598 = vsel %vm1548, 1.0, %v1469
      %v1599 = vsel %vm1549, 1.0, %v1470
      %v1600 = vsel %vm1550, 1.0, %v1471
      %v1601 = vsel %vm1551, 1.0, %v1472
      %v1602 = vsel %vm1552, 1.0, %v1473
      %v1603 = vsel %vm1553, 1.0, %v1474
      %v1604 = vsel %vm1554, 1.0, %v1475
      %v1605 = vsel %vm1555, 1.0, %v1476
      %v1606 = vsel %vm1556, 1.0, %v1477
      %v1607 = vsel %vm1557, 1.0, %v1478
      %v1608 = vsel %vm1558, 1.0, %v1479
      %v1609 = vsel %vm1559, 1.0, %v1480
      %v1610 = vsel %vm1560, 1.0, %v1481
      %v1611 = vsel %vm1561, 1.0, %v1482
      %v1612 = vsel %vm1562, 1.0, %v1483
      %v1613 = vcvt.s32.f32 %v1511
      %v1614 = vcvt.s32.f32 %v1512
      %v1615 = vld [vmem:[%s4] sm:$0xff]
      %v1616 = vld [vmem:[%s4 + $0x8] sm:$0xff]
      %v1617 = vld [vmem:[%s4 + $0x10] sm:$0xff]
      %v1618 = vld [vmem:[%s4 + $0x18] sm:$0xff]
      %v1619 = vld [vmem:[%s4 + $0x20] sm:$0xff]
      %v1620 = vld [vmem:[%s4 + $0x28] sm:$0xff]
      %v1621 = vld [vmem:[%s4 + $0x30] sm:$0xff]
      %v1622 = vld [vmem:[%s4 + $0x38] sm:$0xff]
      %v1623 = vld [vmem:[%s4 + $0x40] sm:$0xff]
      %v1624 = vld [vmem:[%s4 + $0x48] sm:$0xff]
      %v1625 = vld [vmem:[%s4 + $0x50] sm:$0xff]
      %v1626 = vld [vmem:[%s4 + $0x58] sm:$0xff]
      %v1627 = vld [vmem:[%s4 + $0x60] sm:$0xff]
      %v1628 = vld [vmem:[%s4 + $0x68] sm:$0xff]
      %v1629 = vld [vmem:[%s4 + $0x70] sm:$0xff]
      %v1630 = vld [vmem:[%s4 + $0x78] sm:$0xff]
      %v1631 = vld [vmem:[%s4 + $0x80] sm:$0xff]
      %v1632 = vld [vmem:[%s4 + $0x88] sm:$0xff]
      %v1633 = vld [vmem:[%s4 + $0x90] sm:$0xff]
      %v1634 = vld [vmem:[%s4 + $0x98] sm:$0xff]
      %v1635 = vld [vmem:[%s4 + $0xa0] sm:$0xff]
      %v1636 = vld [vmem:[%s4 + $0xa8] sm:$0xff]
      %v1637 = vld [vmem:[%s4 + $0xb0] sm:$0xff]
      %v1638 = vld [vmem:[%s4 + $0xb8] sm:$0xff]
      %v1639 = vld [vmem:[%s6] sm:$0x3]
      %v1641 = vperm.slane %v1639, 0
      %v1642 = vperm.slane %v1639, 1
      %v1669 = vunpack.c.l.b16 %v1615
      %v1670 = vunpack.c.h.b16 %v1615
      %v1671 = vunpack.c.l.b16 %v1616
      %v1672 = vunpack.c.h.b16 %v1616
      %v1673 = vunpack.c.l.b16 %v1617
      %v1674 = vunpack.c.h.b16 %v1617
      %v1675 = vunpack.c.l.b16 %v1618
      %v1676 = vunpack.c.h.b16 %v1618
      %v1677 = vunpack.c.l.b16 %v1619
      %v1678 = vunpack.c.h.b16 %v1619
      %v1679 = vunpack.c.l.b16 %v1620
      %v1680 = vunpack.c.h.b16 %v1620
      %v1681 = vunpack.c.l.b16 %v1621
      %v1682 = vunpack.c.h.b16 %v1621
      %v1683 = vunpack.c.l.b16 %v1622
      %v1684 = vunpack.c.h.b16 %v1622
      %v1685 = vunpack.c.l.b16 %v1623
      %v1686 = vunpack.c.h.b16 %v1623
      %v1687 = vunpack.c.l.b16 %v1624
      %v1688 = vunpack.c.h.b16 %v1624
      %v1689 = vunpack.c.l.b16 %v1625
      %v1690 = vunpack.c.h.b16 %v1625
      %v1691 = vunpack.c.l.b16 %v1626
      %v1692 = vunpack.c.h.b16 %v1626
      %v1693 = vunpack.c.l.b16 %v1627
      %v1694 = vunpack.c.h.b16 %v1627
      %v1695 = vunpack.c.l.b16 %v1628
      %v1696 = vunpack.c.h.b16 %v1628
      %v1697 = vunpack.c.l.b16 %v1629
      %v1698 = vunpack.c.h.b16 %v1629
      %v1699 = vunpack.c.l.b16 %v1630
      %v1700 = vunpack.c.h.b16 %v1630
      %v1701 = vunpack.c.l.b16 %v1631
      %v1702 = vunpack.c.h.b16 %v1631
      %v1703 = vunpack.c.l.b16 %v1632
      %v1704 = vunpack.c.h.b16 %v1632
      %v1705 = vunpack.c.l.b16 %v1633
      %v1706 = vunpack.c.h.b16 %v1633
      %v1707 = vunpack.c.l.b16 %v1634
      %v1708 = vunpack.c.h.b16 %v1634
      %v1709 = vunpack.c.l.b16 %v1635
      %v1710 = vunpack.c.h.b16 %v1635
      %v1711 = vunpack.c.l.b16 %v1636
      %v1712 = vunpack.c.h.b16 %v1636
      %v1713 = vunpack.c.l.b16 %v1637
      %v1714 = vunpack.c.h.b16 %v1637
      %v1715 = vunpack.c.l.b16 %v1638
      %v1716 = vunpack.c.h.b16 %v1638
      %v1717 = vpack.c.b16 %v1671, %v1669
      %v1718 = vpack.c.b16 %v1672, %v1670
      %v1719 = vpack.c.b16 %v1675, %v1673
      %v1720 = vpack.c.b16 %v1676, %v1674
      %v1721 = vpack.c.b16 %v1679, %v1677
      %v1722 = vpack.c.b16 %v1680, %v1678
      %v1723 = vpack.c.b16 %v1683, %v1681
      %v1724 = vpack.c.b16 %v1684, %v1682
      %v1725 = vpack.c.b16 %v1687, %v1685
      %v1726 = vpack.c.b16 %v1688, %v1686
      %v1727 = vpack.c.b16 %v1691, %v1689
      %v1728 = vpack.c.b16 %v1692, %v1690
      %v1729 = vpack.c.b16 %v1695, %v1693
      %v1730 = vpack.c.b16 %v1696, %v1694
      %v1731 = vpack.c.b16 %v1699, %v1697
      %v1732 = vpack.c.b16 %v1700, %v1698
      %v1733 = vpack.c.b16 %v1703, %v1701
      %v1734 = vpack.c.b16 %v1704, %v1702
      %v1735 = vpack.c.b16 %v1707, %v1705
      %v1736 = vpack.c.b16 %v1708, %v1706
      %v1737 = vpack.c.b16 %v1711, %v1709
      %v1738 = vpack.c.b16 %v1712, %v1710
      %v1739 = vpack.c.b16 %v1715, %v1713
      %v1740 = vpack.c.b16 %v1716, %v1714
      %1765 = vmatpush.bf16.msra.mxu0 %v1731
      %1766 = vmatpush.bf16.msra.mxu0 %v1729
      %1767 = vmatpush.bf16.msra.mxu0 %v1727
      %1768 = vmatpush.bf16.msra.mxu0 %v1725
      %1769 = vmatpush.bf16.msra.mxu0 %v1723
      %1770 = vmatpush.bf16.msra.mxu0 %v1721
      %1771 = vmatpush.bf16.msra.mxu0 %v1719
      %1772 = vmatpush.bf16.msra.mxu0 %v1717
      %1773 = vmatmul.bf16.gmra.mxu0 %v404
      %v1774 = vpop.f32.mrf.mxu0
      %v1775 = vadd.f32 %v1641, %v1774
      %v1776 = vpop.f32.mrf.mxu0
      %v1777 = vadd.f32 %v1641, %v1776
      %1778 = vmatmul.bf16.gmra.mxu0 %v406
      %v1779 = vpop.f32.mrf.mxu0
      %v1780 = vadd.f32 %v1641, %v1779
      %v1781 = vpop.f32.mrf.mxu0
      %v1782 = vadd.f32 %v1641, %v1781
      %1783 = vmatmul.bf16.gmra.mxu0 %v408
      %v1784 = vpop.f32.mrf.mxu0
      %v1785 = vadd.f32 %v1641, %v1784
      %v1786 = vpop.f32.mrf.mxu0
      %v1787 = vadd.f32 %v1641, %v1786
      %1788 = vmatmul.bf16.gmra.mxu0 %v410
      %v1789 = vpop.f32.mrf.mxu0
      %v1790 = vadd.f32 %v1641, %v1789
      %v1791 = vpop.f32.mrf.mxu0
      %v1792 = vadd.f32 %v1641, %v1791
      %1793 = vmatmul.bf16.gmra.mxu0 %v412
      %v1794 = vpop.f32.mrf.mxu0
      %v1795 = vadd.f32 %v1641, %v1794
      %v1796 = vpop.f32.mrf.mxu0
      %v1797 = vadd.f32 %v1641, %v1796
      %1798 = vmatmul.bf16.gmra.mxu0 %v414
      %v1799 = vpop.f32.mrf.mxu0
      %v1800 = vadd.f32 %v1641, %v1799
      %v1801 = vpop.f32.mrf.mxu0
      %v1802 = vadd.f32 %v1641, %v1801
      %1803 = vmatmul.bf16.gmra.mxu0 %v416
      %v1804 = vpop.f32.mrf.mxu0
      %v1805 = vadd.f32 %v1641, %v1804
      %v1806 = vpop.f32.mrf.mxu0
      %v1807 = vadd.f32 %v1641, %v1806
      %1808 = vmatmul.bf16.gmra.mxu0 %v418
      %v1809 = vpop.f32.mrf.mxu0
      %v1810 = vadd.f32 %v1641, %v1809
      %v1811 = vpop.f32.mrf.mxu0
      %v1812 = vadd.f32 %v1641, %v1811
      %1813 = vmatmul.bf16.gmra.mxu0 %v420
      %v1814 = vpop.f32.mrf.mxu0
      %v1815 = vadd.f32 %v1641, %v1814
      %v1816 = vpop.f32.mrf.mxu0
      %v1817 = vadd.f32 %v1641, %v1816
      %1818 = vmatmul.bf16.gmra.mxu0 %v422
      %v1819 = vpop.f32.mrf.mxu0
      %v1820 = vadd.f32 %v1641, %v1819
      %v1821 = vpop.f32.mrf.mxu0
      %v1822 = vadd.f32 %v1641, %v1821
      %1823 = vmatmul.bf16.gmra.mxu0 %v424
      %v1824 = vpop.f32.mrf.mxu0
      %v1825 = vadd.f32 %v1641, %v1824
      %v1826 = vpop.f32.mrf.mxu0
      %v1827 = vadd.f32 %v1641, %v1826
      %1828 = vmatmul.bf16.gmra.mxu0 %v426
      %v1829 = vpop.f32.mrf.mxu0
      %v1830 = vadd.f32 %v1641, %v1829
      %v1831 = vpop.f32.mrf.mxu0
      %v1832 = vadd.f32 %v1641, %v1831
      %1833 = vmatmul.bf16.gmra.mxu0 %v428
      %v1834 = vpop.f32.mrf.mxu0
      %v1835 = vadd.f32 %v1641, %v1834
      %v1836 = vpop.f32.mrf.mxu0
      %1837 = vdwg.mxu0
      %1838 = vmatpush.bf16.msra.mxu0 0
      %1839 = vmatpush.bf16.msra.mxu0 0
      %1840 = vmatpush.bf16.msra.mxu0 0
      %1841 = vmatpush.bf16.msra.mxu0 0
      %1842 = vmatpush.bf16.msra.mxu0 %v1739
      %1843 = vmatpush.bf16.msra.mxu0 %v1737
      %1844 = vmatpush.bf16.msra.mxu0 %v1735
      %1845 = vmatpush.bf16.msra.mxu0 %v1733
      %1846 = vmatmul.bf16.gmra.mxu0 %v517
      %v1847 = vpop.f32.mrf.mxu0
      %v1848 = vadd.f32 %v1775, %v1847
      %v1849 = vpop.f32.mrf.mxu0
      %v1850 = vadd.f32 %v1777, %v1849
      %1851 = vmatmul.bf16.gmra.mxu0 %v520
      %v1852 = vpop.f32.mrf.mxu0
      %v1853 = vadd.f32 %v1780, %v1852
      %v1854 = vpop.f32.mrf.mxu0
      %v1855 = vadd.f32 %v1782, %v1854
      %1856 = vmatmul.bf16.gmra.mxu0 %v523
      %v1857 = vpop.f32.mrf.mxu0
      %v1858 = vadd.f32 %v1785, %v1857
      %v1859 = vpop.f32.mrf.mxu0
      %v1860 = vadd.f32 %v1787, %v1859
      %1861 = vmatmul.bf16.gmra.mxu0 %v526
      %v1862 = vpop.f32.mrf.mxu0
      %v1863 = vadd.f32 %v1790, %v1862
      %v1864 = vpop.f32.mrf.mxu0
      %v1865 = vadd.f32 %v1792, %v1864
      %1866 = vmatmul.bf16.gmra.mxu0 %v529
      %v1867 = vpop.f32.mrf.mxu0
      %v1868 = vadd.f32 %v1795, %v1867
      %v1869 = vpop.f32.mrf.mxu0
      %v1870 = vadd.f32 %v1797, %v1869
      %1871 = vmatmul.bf16.gmra.mxu0 %v532
      %v1872 = vpop.f32.mrf.mxu0
      %v1873 = vadd.f32 %v1800, %v1872
      %v1874 = vpop.f32.mrf.mxu0
      %v1875 = vadd.f32 %v1802, %v1874
      %1876 = vmatmul.bf16.gmra.mxu0 %v535
      %v1877 = vpop.f32.mrf.mxu0
      %v1878 = vadd.f32 %v1805, %v1877
      %v1879 = vpop.f32.mrf.mxu0
      %v1880 = vadd.f32 %v1807, %v1879
      %1881 = vmatmul.bf16.gmra.mxu0 %v538
      %v1882 = vpop.f32.mrf.mxu0
      %v1883 = vadd.f32 %v1810, %v1882
      %v1884 = vpop.f32.mrf.mxu0
      %v1885 = vadd.f32 %v1812, %v1884
      %1886 = vmatmul.bf16.gmra.mxu0 %v541
      %v1887 = vpop.f32.mrf.mxu0
      %v1888 = vadd.f32 %v1815, %v1887
      %v1889 = vpop.f32.mrf.mxu0
      %v1890 = vadd.f32 %v1817, %v1889
      %1891 = vmatmul.bf16.gmra.mxu0 %v544
      %v1892 = vpop.f32.mrf.mxu0
      %v1893 = vadd.f32 %v1820, %v1892
      %v1894 = vpop.f32.mrf.mxu0
      %v1895 = vadd.f32 %v1822, %v1894
      %1896 = vmatmul.bf16.gmra.mxu0 %v547
      %v1897 = vpop.f32.mrf.mxu0
      %v1898 = vadd.f32 %v1825, %v1897
      %v1899 = vpop.f32.mrf.mxu0
      %v1900 = vadd.f32 %v1827, %v1899
      %1901 = vmatmul.bf16.gmra.mxu0 %v550
      %v1902 = vpop.f32.mrf.mxu0
      %v1903 = vadd.f32 %v1830, %v1902
      %v1904 = vpop.f32.mrf.mxu0
      %v1905 = vadd.f32 %v1832, %v1904
      %1906 = vmatmul.bf16.gmra.mxu0 %v553
      %v1907 = vpop.f32.mrf.mxu0
      %v1908 = vadd.f32 %v1835, %v1907
      %v1909 = vpop.f32.mrf.mxu0
      %1910 = vdwg.mxu0
      %1911 = vmatpush.bf16.msra.mxu0 %v1732
      %1912 = vmatpush.bf16.msra.mxu0 %v1730
      %1913 = vmatpush.bf16.msra.mxu0 %v1728
      %1914 = vmatpush.bf16.msra.mxu0 %v1726
      %1915 = vmatpush.bf16.msra.mxu0 %v1724
      %1916 = vmatpush.bf16.msra.mxu0 %v1722
      %1917 = vmatpush.bf16.msra.mxu0 %v1720
      %1918 = vmatpush.bf16.msra.mxu0 %v1718
      %1919 = vmatmul.bf16.gmra.mxu0 %v404
      %v1920 = vpop.f32.mrf.mxu0
      %v1921 = vadd.f32 %v1642, %v1920
      %v1922 = vpop.f32.mrf.mxu0
      %v1923 = vadd.f32 %v1642, %v1922
      %1924 = vmatmul.bf16.gmra.mxu0 %v406
      %v1925 = vpop.f32.mrf.mxu0
      %v1926 = vadd.f32 %v1642, %v1925
      %v1927 = vpop.f32.mrf.mxu0
      %v1928 = vadd.f32 %v1642, %v1927
      %1929 = vmatmul.bf16.gmra.mxu0 %v408
      %v1930 = vpop.f32.mrf.mxu0
      %v1931 = vadd.f32 %v1642, %v1930
      %v1932 = vpop.f32.mrf.mxu0
      %v1933 = vadd.f32 %v1642, %v1932
      %1934 = vmatmul.bf16.gmra.mxu0 %v410
      %v1935 = vpop.f32.mrf.mxu0
      %v1936 = vadd.f32 %v1642, %v1935
      %v1937 = vpop.f32.mrf.mxu0
      %v1938 = vadd.f32 %v1642, %v1937
      %1939 = vmatmul.bf16.gmra.mxu0 %v412
      %v1940 = vpop.f32.mrf.mxu0
      %v1941 = vadd.f32 %v1642, %v1940
      %v1942 = vpop.f32.mrf.mxu0
      %v1943 = vadd.f32 %v1642, %v1942
      %1944 = vmatmul.bf16.gmra.mxu0 %v414
      %v1945 = vpop.f32.mrf.mxu0
      %v1946 = vadd.f32 %v1642, %v1945
      %v1947 = vpop.f32.mrf.mxu0
      %v1948 = vadd.f32 %v1642, %v1947
      %1949 = vmatmul.bf16.gmra.mxu0 %v416
      %v1950 = vpop.f32.mrf.mxu0
      %v1951 = vadd.f32 %v1642, %v1950
      %v1952 = vpop.f32.mrf.mxu0
      %v1953 = vadd.f32 %v1642, %v1952
      %1954 = vmatmul.bf16.gmra.mxu0 %v418
      %v1955 = vpop.f32.mrf.mxu0
      %v1956 = vadd.f32 %v1642, %v1955
      %v1957 = vpop.f32.mrf.mxu0
      %v1958 = vadd.f32 %v1642, %v1957
      %1959 = vmatmul.bf16.gmra.mxu0 %v420
      %v1960 = vpop.f32.mrf.mxu0
      %v1961 = vadd.f32 %v1642, %v1960
      %v1962 = vpop.f32.mrf.mxu0
      %v1963 = vadd.f32 %v1642, %v1962
      %1964 = vmatmul.bf16.gmra.mxu0 %v422
      %v1965 = vpop.f32.mrf.mxu0
      %v1966 = vadd.f32 %v1642, %v1965
      %v1967 = vpop.f32.mrf.mxu0
      %v1968 = vadd.f32 %v1642, %v1967
      %1969 = vmatmul.bf16.gmra.mxu0 %v424
      %v1970 = vpop.f32.mrf.mxu0
      %v1971 = vadd.f32 %v1642, %v1970
      %v1972 = vpop.f32.mrf.mxu0
      %v1973 = vadd.f32 %v1642, %v1972
      %1974 = vmatmul.bf16.gmra.mxu0 %v426
      %v1975 = vpop.f32.mrf.mxu0
      %v1976 = vadd.f32 %v1642, %v1975
      %v1977 = vpop.f32.mrf.mxu0
      %v1978 = vadd.f32 %v1642, %v1977
      %1979 = vmatmul.bf16.gmra.mxu0 %v428
      %v1980 = vpop.f32.mrf.mxu0
      %v1981 = vadd.f32 %v1642, %v1980
      %v1982 = vpop.f32.mrf.mxu0
      %1983 = vdwg.mxu0
      %1984 = vmatpush.bf16.msra.mxu0 0
      %1985 = vmatpush.bf16.msra.mxu0 0
      %1986 = vmatpush.bf16.msra.mxu0 0
      %1987 = vmatpush.bf16.msra.mxu0 0
      %1988 = vmatpush.bf16.msra.mxu0 %v1740
      %1989 = vmatpush.bf16.msra.mxu0 %v1738
      %1990 = vmatpush.bf16.msra.mxu0 %v1736
      %1991 = vmatpush.bf16.msra.mxu0 %v1734
      %1992 = vmatmul.bf16.gmra.mxu0 %v517
      %v1993 = vpop.f32.mrf.mxu0
      %v1994 = vadd.f32 %v1921, %v1993
      %v1995 = vpop.f32.mrf.mxu0
      %v1996 = vadd.f32 %v1923, %v1995
      %1997 = vmatmul.bf16.gmra.mxu0 %v520
      %v1998 = vpop.f32.mrf.mxu0
      %v1999 = vadd.f32 %v1926, %v1998
      %v2000 = vpop.f32.mrf.mxu0
      %v2001 = vadd.f32 %v1928, %v2000
      %2002 = vmatmul.bf16.gmra.mxu0 %v523
      %v2003 = vpop.f32.mrf.mxu0
      %v2004 = vadd.f32 %v1931, %v2003
      %v2005 = vpop.f32.mrf.mxu0
      %v2006 = vadd.f32 %v1933, %v2005
      %2007 = vmatmul.bf16.gmra.mxu0 %v526
      %v2008 = vpop.f32.mrf.mxu0
      %v2009 = vadd.f32 %v1936, %v2008
      %v2010 = vpop.f32.mrf.mxu0
      %v2011 = vadd.f32 %v1938, %v2010
      %2012 = vmatmul.bf16.gmra.mxu0 %v529
      %v2013 = vpop.f32.mrf.mxu0
      %v2014 = vadd.f32 %v1941, %v2013
      %v2015 = vpop.f32.mrf.mxu0
      %v2016 = vadd.f32 %v1943, %v2015
      %2017 = vmatmul.bf16.gmra.mxu0 %v532
      %v2018 = vpop.f32.mrf.mxu0
      %v2019 = vadd.f32 %v1946, %v2018
      %v2020 = vpop.f32.mrf.mxu0
      %v2021 = vadd.f32 %v1948, %v2020
      %2022 = vmatmul.bf16.gmra.mxu0 %v535
      %v2023 = vpop.f32.mrf.mxu0
      %v2024 = vadd.f32 %v1951, %v2023
      %v2025 = vpop.f32.mrf.mxu0
      %v2026 = vadd.f32 %v1953, %v2025
      %2027 = vmatmul.bf16.gmra.mxu0 %v538
      %v2028 = vpop.f32.mrf.mxu0
      %v2029 = vadd.f32 %v1956, %v2028
      %v2030 = vpop.f32.mrf.mxu0
      %v2031 = vadd.f32 %v1958, %v2030
      %2032 = vmatmul.bf16.gmra.mxu0 %v541
      %v2033 = vpop.f32.mrf.mxu0
      %v2034 = vadd.f32 %v1961, %v2033
      %v2035 = vpop.f32.mrf.mxu0
      %v2036 = vadd.f32 %v1963, %v2035
      %2037 = vmatmul.bf16.gmra.mxu0 %v544
      %v2038 = vpop.f32.mrf.mxu0
      %v2039 = vadd.f32 %v1966, %v2038
      %v2040 = vpop.f32.mrf.mxu0
      %v2041 = vadd.f32 %v1968, %v2040
      %2042 = vmatmul.bf16.gmra.mxu0 %v547
      %v2043 = vpop.f32.mrf.mxu0
      %v2044 = vadd.f32 %v1971, %v2043
      %v2045 = vpop.f32.mrf.mxu0
      %v2046 = vadd.f32 %v1973, %v2045
      %2047 = vmatmul.bf16.gmra.mxu0 %v550
      %v2048 = vpop.f32.mrf.mxu0
      %v2049 = vadd.f32 %v1976, %v2048
      %v2050 = vpop.f32.mrf.mxu0
      %v2051 = vadd.f32 %v1978, %v2050
      %2052 = vmatmul.bf16.gmra.mxu0 %v553
      %v2053 = vpop.f32.mrf.mxu0
      %v2054 = vadd.f32 %v1981, %v2053
      %v2055 = vpop.f32.mrf.mxu0
      %2056 = vdwg.mxu0
      %v2057 = vld [vmem:[%s5] sm:$0xff]
      %v2058 = vld [vmem:[%s5 + $0x8] sm:$0xff]
      %v2059 = vld [vmem:[%s5 + $0x10] sm:$0xff]
      %v2060 = vld [vmem:[%s5 + $0x18] sm:$0xff]
      %v2061 = vld [vmem:[%s5 + $0x20] sm:$0xff]
      %v2062 = vld [vmem:[%s5 + $0x28] sm:$0xff]
      %v2063 = vld [vmem:[%s5 + $0x30] sm:$0xff]
      %v2064 = vld [vmem:[%s5 + $0x38] sm:$0xff]
      %v2065 = vld [vmem:[%s5 + $0x40] sm:$0xff]
      %v2066 = vld [vmem:[%s5 + $0x48] sm:$0xff]
      %v2067 = vld [vmem:[%s5 + $0x50] sm:$0xff]
      %v2068 = vld [vmem:[%s5 + $0x58] sm:$0xff]
      %v2069 = vld [vmem:[%s5 + $0x60] sm:$0xff]
      %v2070 = vld [vmem:[%s5 + $0x68] sm:$0xff]
      %v2071 = vld [vmem:[%s5 + $0x70] sm:$0xff]
      %v2072 = vld [vmem:[%s5 + $0x78] sm:$0xff]
      %v2073 = vld [vmem:[%s5 + $0x80] sm:$0xff]
      %v2074 = vld [vmem:[%s5 + $0x88] sm:$0xff]
      %v2075 = vld [vmem:[%s5 + $0x90] sm:$0xff]
      %v2076 = vld [vmem:[%s5 + $0x98] sm:$0xff]
      %v2077 = vld [vmem:[%s5 + $0xa0] sm:$0xff]
      %v2078 = vld [vmem:[%s5 + $0xa8] sm:$0xff]
      %v2079 = vld [vmem:[%s5 + $0xb0] sm:$0xff]
      %v2080 = vld [vmem:[%s5 + $0xb8] sm:$0xff]
      %v2105 = vunpack.c.l.b16 %v2057
      %v2106 = vunpack.c.h.b16 %v2057
      %v2107 = vunpack.c.l.b16 %v2058
      %v2108 = vunpack.c.h.b16 %v2058
      %v2109 = vunpack.c.l.b16 %v2059
      %v2110 = vunpack.c.h.b16 %v2059
      %v2111 = vunpack.c.l.b16 %v2060
      %v2112 = vunpack.c.h.b16 %v2060
      %v2113 = vunpack.c.l.b16 %v2061
      %v2114 = vunpack.c.h.b16 %v2061
      %v2115 = vunpack.c.l.b16 %v2062
      %v2116 = vunpack.c.h.b16 %v2062
      %v2117 = vunpack.c.l.b16 %v2063
      %v2118 = vunpack.c.h.b16 %v2063
      %v2119 = vunpack.c.l.b16 %v2064
      %v2120 = vunpack.c.h.b16 %v2064
      %v2121 = vunpack.c.l.b16 %v2065
      %v2122 = vunpack.c.h.b16 %v2065
      %v2123 = vunpack.c.l.b16 %v2066
      %v2124 = vunpack.c.h.b16 %v2066
      %v2125 = vunpack.c.l.b16 %v2067
      %v2126 = vunpack.c.h.b16 %v2067
      %v2127 = vunpack.c.l.b16 %v2068
      %v2128 = vunpack.c.h.b16 %v2068
      %v2129 = vunpack.c.l.b16 %v2069
      %v2130 = vunpack.c.h.b16 %v2069
      %v2131 = vunpack.c.l.b16 %v2070
      %v2132 = vunpack.c.h.b16 %v2070
      %v2133 = vunpack.c.l.b16 %v2071
      %v2134 = vunpack.c.h.b16 %v2071
      %v2135 = vunpack.c.l.b16 %v2072
      %v2136 = vunpack.c.h.b16 %v2072
      %v2137 = vunpack.c.l.b16 %v2073
      %v2138 = vunpack.c.h.b16 %v2073
      %v2139 = vunpack.c.l.b16 %v2074
      %v2140 = vunpack.c.h.b16 %v2074
      %v2141 = vunpack.c.l.b16 %v2075
      %v2142 = vunpack.c.h.b16 %v2075
      %v2143 = vunpack.c.l.b16 %v2076
      %v2144 = vunpack.c.h.b16 %v2076
      %v2145 = vunpack.c.l.b16 %v2077
      %v2146 = vunpack.c.h.b16 %v2077
      %v2147 = vunpack.c.l.b16 %v2078
      %v2148 = vunpack.c.h.b16 %v2078
      %v2149 = vunpack.c.l.b16 %v2079
      %v2150 = vunpack.c.h.b16 %v2079
      %v2151 = vunpack.c.l.b16 %v2080
      %v2152 = vunpack.c.h.b16 %v2080
      %v2153 = vpack.c.b16 %v2107, %v2105
      %v2154 = vpack.c.b16 %v2108, %v2106
      %v2155 = vpack.c.b16 %v2111, %v2109
      %v2156 = vpack.c.b16 %v2112, %v2110
      %v2157 = vpack.c.b16 %v2115, %v2113
      %v2158 = vpack.c.b16 %v2116, %v2114
      %v2159 = vpack.c.b16 %v2119, %v2117
      %v2160 = vpack.c.b16 %v2120, %v2118
      %v2161 = vpack.c.b16 %v2123, %v2121
      %v2162 = vpack.c.b16 %v2124, %v2122
      %v2163 = vpack.c.b16 %v2127, %v2125
      %v2164 = vpack.c.b16 %v2128, %v2126
      %v2165 = vpack.c.b16 %v2131, %v2129
      %v2166 = vpack.c.b16 %v2132, %v2130
      %v2167 = vpack.c.b16 %v2135, %v2133
      %v2168 = vpack.c.b16 %v2136, %v2134
      %v2169 = vpack.c.b16 %v2139, %v2137
      %v2170 = vpack.c.b16 %v2140, %v2138
      %v2171 = vpack.c.b16 %v2143, %v2141
      %v2172 = vpack.c.b16 %v2144, %v2142
      %v2173 = vpack.c.b16 %v2147, %v2145
      %v2174 = vpack.c.b16 %v2148, %v2146
      %v2175 = vpack.c.b16 %v2151, %v2149
      %v2176 = vpack.c.b16 %v2152, %v2150
      %2201 = vmatpush.bf16.msra.mxu0 %v2167
      %2202 = vmatpush.bf16.msra.mxu0 %v2165
      %2203 = vmatpush.bf16.msra.mxu0 %v2163
      %2204 = vmatpush.bf16.msra.mxu0 %v2161
      %2205 = vmatpush.bf16.msra.mxu0 %v2159
      %2206 = vmatpush.bf16.msra.mxu0 %v2157
      %2207 = vmatpush.bf16.msra.mxu0 %v2155
      %2208 = vmatpush.bf16.msra.mxu0 %v2153
      %2209 = vmatmul.bf16.gmra.mxu0 %v404
      %v2210 = vpop.f32.mrf.mxu0
      %v2211 = vadd.f32 0.0, %v2210
      %v2212 = vpop.f32.mrf.mxu0
      %v2213 = vadd.f32 0.0, %v2212
      %2214 = vmatmul.bf16.gmra.mxu0 %v406
      %v2215 = vpop.f32.mrf.mxu0
      %v2216 = vadd.f32 0.0, %v2215
      %v2217 = vpop.f32.mrf.mxu0
      %v2218 = vadd.f32 0.0, %v2217
      %2219 = vmatmul.bf16.gmra.mxu0 %v408
      %v2220 = vpop.f32.mrf.mxu0
      %v2221 = vadd.f32 0.0, %v2220
      %v2222 = vpop.f32.mrf.mxu0
      %v2223 = vadd.f32 0.0, %v2222
      %2224 = vmatmul.bf16.gmra.mxu0 %v410
      %v2225 = vpop.f32.mrf.mxu0
      %v2226 = vadd.f32 0.0, %v2225
      %v2227 = vpop.f32.mrf.mxu0
      %v2228 = vadd.f32 0.0, %v2227
      %2229 = vmatmul.bf16.gmra.mxu0 %v412
      %v2230 = vpop.f32.mrf.mxu0
      %v2231 = vadd.f32 0.0, %v2230
      %v2232 = vpop.f32.mrf.mxu0
      %v2233 = vadd.f32 0.0, %v2232
      %2234 = vmatmul.bf16.gmra.mxu0 %v414
      %v2235 = vpop.f32.mrf.mxu0
      %v2236 = vadd.f32 0.0, %v2235
      %v2237 = vpop.f32.mrf.mxu0
      %v2238 = vadd.f32 0.0, %v2237
      %2239 = vmatmul.bf16.gmra.mxu0 %v416
      %v2240 = vpop.f32.mrf.mxu0
      %v2241 = vadd.f32 0.0, %v2240
      %v2242 = vpop.f32.mrf.mxu0
      %v2243 = vadd.f32 0.0, %v2242
      %2244 = vmatmul.bf16.gmra.mxu0 %v418
      %v2245 = vpop.f32.mrf.mxu0
      %v2246 = vadd.f32 0.0, %v2245
      %v2247 = vpop.f32.mrf.mxu0
      %v2248 = vadd.f32 0.0, %v2247
      %2249 = vmatmul.bf16.gmra.mxu0 %v420
      %v2250 = vpop.f32.mrf.mxu0
      %v2251 = vadd.f32 0.0, %v2250
      %v2252 = vpop.f32.mrf.mxu0
      %v2253 = vadd.f32 0.0, %v2252
      %2254 = vmatmul.bf16.gmra.mxu0 %v422
      %v2255 = vpop.f32.mrf.mxu0
      %v2256 = vadd.f32 0.0, %v2255
      %v2257 = vpop.f32.mrf.mxu0
      %v2258 = vadd.f32 0.0, %v2257
      %2259 = vmatmul.bf16.gmra.mxu0 %v424
      %v2260 = vpop.f32.mrf.mxu0
      %v2261 = vadd.f32 0.0, %v2260
      %v2262 = vpop.f32.mrf.mxu0
      %v2263 = vadd.f32 0.0, %v2262
      %2264 = vmatmul.bf16.gmra.mxu0 %v426
      %v2265 = vpop.f32.mrf.mxu0
      %v2266 = vadd.f32 0.0, %v2265
      %v2267 = vpop.f32.mrf.mxu0
      %v2268 = vadd.f32 0.0, %v2267
      %2269 = vmatmul.bf16.gmra.mxu0 %v428
      %v2270 = vpop.f32.mrf.mxu0
      %v2271 = vadd.f32 0.0, %v2270
      %v2272 = vpop.f32.mrf.mxu0
      %2273 = vdwg.mxu0
      %2274 = vmatpush.bf16.msra.mxu0 0
      %2275 = vmatpush.bf16.msra.mxu0 0
      %2276 = vmatpush.bf16.msra.mxu0 0
      %2277 = vmatpush.bf16.msra.mxu0 0
      %2278 = vmatpush.bf16.msra.mxu0 %v2175
      %2279 = vmatpush.bf16.msra.mxu0 %v2173
      %2280 = vmatpush.bf16.msra.mxu0 %v2171
      %2281 = vmatpush.bf16.msra.mxu0 %v2169
      %2282 = vmatmul.bf16.gmra.mxu0 %v517
      %v2283 = vpop.f32.mrf.mxu0
      %v2284 = vadd.f32 %v2211, %v2283
      %v2285 = vpop.f32.mrf.mxu0
      %v2286 = vadd.f32 %v2213, %v2285
      %2287 = vmatmul.bf16.gmra.mxu0 %v520
      %v2288 = vpop.f32.mrf.mxu0
      %v2289 = vadd.f32 %v2216, %v2288
      %v2290 = vpop.f32.mrf.mxu0
      %v2291 = vadd.f32 %v2218, %v2290
      %2292 = vmatmul.bf16.gmra.mxu0 %v523
      %v2293 = vpop.f32.mrf.mxu0
      %v2294 = vadd.f32 %v2221, %v2293
      %v2295 = vpop.f32.mrf.mxu0
      %v2296 = vadd.f32 %v2223, %v2295
      %2297 = vmatmul.bf16.gmra.mxu0 %v526
      %v2298 = vpop.f32.mrf.mxu0
      %v2299 = vadd.f32 %v2226, %v2298
      %v2300 = vpop.f32.mrf.mxu0
      %v2301 = vadd.f32 %v2228, %v2300
      %2302 = vmatmul.bf16.gmra.mxu0 %v529
      %v2303 = vpop.f32.mrf.mxu0
      %v2304 = vadd.f32 %v2231, %v2303
      %v2305 = vpop.f32.mrf.mxu0
      %v2306 = vadd.f32 %v2233, %v2305
      %2307 = vmatmul.bf16.gmra.mxu0 %v532
      %v2308 = vpop.f32.mrf.mxu0
      %v2309 = vadd.f32 %v2236, %v2308
      %v2310 = vpop.f32.mrf.mxu0
      %v2311 = vadd.f32 %v2238, %v2310
      %2312 = vmatmul.bf16.gmra.mxu0 %v535
      %v2313 = vpop.f32.mrf.mxu0
      %v2314 = vadd.f32 %v2241, %v2313
      %v2315 = vpop.f32.mrf.mxu0
      %v2316 = vadd.f32 %v2243, %v2315
      %2317 = vmatmul.bf16.gmra.mxu0 %v538
      %v2318 = vpop.f32.mrf.mxu0
      %v2319 = vadd.f32 %v2246, %v2318
      %v2320 = vpop.f32.mrf.mxu0
      %v2321 = vadd.f32 %v2248, %v2320
      %2322 = vmatmul.bf16.gmra.mxu0 %v541
      %v2323 = vpop.f32.mrf.mxu0
      %v2324 = vadd.f32 %v2251, %v2323
      %v2325 = vpop.f32.mrf.mxu0
      %v2326 = vadd.f32 %v2253, %v2325
      %2327 = vmatmul.bf16.gmra.mxu0 %v544
      %v2328 = vpop.f32.mrf.mxu0
      %v2329 = vadd.f32 %v2256, %v2328
      %v2330 = vpop.f32.mrf.mxu0
      %v2331 = vadd.f32 %v2258, %v2330
      %2332 = vmatmul.bf16.gmra.mxu0 %v547
      %v2333 = vpop.f32.mrf.mxu0
      %v2334 = vadd.f32 %v2261, %v2333
      %v2335 = vpop.f32.mrf.mxu0
      %v2336 = vadd.f32 %v2263, %v2335
      %2337 = vmatmul.bf16.gmra.mxu0 %v550
      %v2338 = vpop.f32.mrf.mxu0
      %v2339 = vadd.f32 %v2266, %v2338
      %v2340 = vpop.f32.mrf.mxu0
      %v2341 = vadd.f32 %v2268, %v2340
      %2342 = vmatmul.bf16.gmra.mxu0 %v553
      %v2343 = vpop.f32.mrf.mxu0
      %v2344 = vadd.f32 %v2271, %v2343
      %v2345 = vpop.f32.mrf.mxu0
      %2346 = vdwg.mxu0
      %2347 = vmatpush.bf16.msra.mxu0 %v2168
      %2348 = vmatpush.bf16.msra.mxu0 %v2166
      %2349 = vmatpush.bf16.msra.mxu0 %v2164
      %2350 = vmatpush.bf16.msra.mxu0 %v2162
      %2351 = vmatpush.bf16.msra.mxu0 %v2160
      %2352 = vmatpush.bf16.msra.mxu0 %v2158
      %2353 = vmatpush.bf16.msra.mxu0 %v2156
      %2354 = vmatpush.bf16.msra.mxu0 %v2154
      %2355 = vmatmul.bf16.gmra.mxu0 %v404
      %v2356 = vpop.f32.mrf.mxu0
      %v2357 = vadd.f32 0.0, %v2356
      %v2358 = vpop.f32.mrf.mxu0
      %v2359 = vadd.f32 0.0, %v2358
      %2360 = vmatmul.bf16.gmra.mxu0 %v406
      %v2361 = vpop.f32.mrf.mxu0
      %v2362 = vadd.f32 0.0, %v2361
      %v2363 = vpop.f32.mrf.mxu0
      %v2364 = vadd.f32 0.0, %v2363
      %2365 = vmatmul.bf16.gmra.mxu0 %v408
      %v2366 = vpop.f32.mrf.mxu0
      %v2367 = vadd.f32 0.0, %v2366
      %v2368 = vpop.f32.mrf.mxu0
      %v2369 = vadd.f32 0.0, %v2368
      %2370 = vmatmul.bf16.gmra.mxu0 %v410
      %v2371 = vpop.f32.mrf.mxu0
      %v2372 = vadd.f32 0.0, %v2371
      %v2373 = vpop.f32.mrf.mxu0
      %v2374 = vadd.f32 0.0, %v2373
      %2375 = vmatmul.bf16.gmra.mxu0 %v412
      %v2376 = vpop.f32.mrf.mxu0
      %v2377 = vadd.f32 0.0, %v2376
      %v2378 = vpop.f32.mrf.mxu0
      %v2379 = vadd.f32 0.0, %v2378
      %2380 = vmatmul.bf16.gmra.mxu0 %v414
      %v2381 = vpop.f32.mrf.mxu0
      %v2382 = vadd.f32 0.0, %v2381
      %v2383 = vpop.f32.mrf.mxu0
      %v2384 = vadd.f32 0.0, %v2383
      %2385 = vmatmul.bf16.gmra.mxu0 %v416
      %v2386 = vpop.f32.mrf.mxu0
      %v2387 = vadd.f32 0.0, %v2386
      %v2388 = vpop.f32.mrf.mxu0
      %v2389 = vadd.f32 0.0, %v2388
      %2390 = vmatmul.bf16.gmra.mxu0 %v418
      %v2391 = vpop.f32.mrf.mxu0
      %v2392 = vadd.f32 0.0, %v2391
      %v2393 = vpop.f32.mrf.mxu0
      %v2394 = vadd.f32 0.0, %v2393
      %2395 = vmatmul.bf16.gmra.mxu0 %v420
      %v2396 = vpop.f32.mrf.mxu0
      %v2397 = vadd.f32 0.0, %v2396
      %v2398 = vpop.f32.mrf.mxu0
      %v2399 = vadd.f32 0.0, %v2398
      %2400 = vmatmul.bf16.gmra.mxu0 %v422
      %v2401 = vpop.f32.mrf.mxu0
      %v2402 = vadd.f32 0.0, %v2401
      %v2403 = vpop.f32.mrf.mxu0
      %v2404 = vadd.f32 0.0, %v2403
      %2405 = vmatmul.bf16.gmra.mxu0 %v424
      %v2406 = vpop.f32.mrf.mxu0
      %v2407 = vadd.f32 0.0, %v2406
      %v2408 = vpop.f32.mrf.mxu0
      %v2409 = vadd.f32 0.0, %v2408
      %2410 = vmatmul.bf16.gmra.mxu0 %v426
      %v2411 = vpop.f32.mrf.mxu0
      %v2412 = vadd.f32 0.0, %v2411
      %v2413 = vpop.f32.mrf.mxu0
      %v2414 = vadd.f32 0.0, %v2413
      %2415 = vmatmul.bf16.gmra.mxu0 %v428
      %v2416 = vpop.f32.mrf.mxu0
      %v2417 = vadd.f32 0.0, %v2416
      %v2418 = vpop.f32.mrf.mxu0
      %2419 = vdwg.mxu0
      %2420 = vmatpush.bf16.msra.mxu0 0
      %2421 = vmatpush.bf16.msra.mxu0 0
      %2422 = vmatpush.bf16.msra.mxu0 0
      %2423 = vmatpush.bf16.msra.mxu0 0
      %2424 = vmatpush.bf16.msra.mxu0 %v2176
      %2425 = vmatpush.bf16.msra.mxu0 %v2174
      %2426 = vmatpush.bf16.msra.mxu0 %v2172
      %2427 = vmatpush.bf16.msra.mxu0 %v2170
      %2428 = vmatmul.bf16.gmra.mxu0 %v517
      %v2429 = vpop.f32.mrf.mxu0
      %v2430 = vadd.f32 %v2357, %v2429
      %v2431 = vpop.f32.mrf.mxu0
      %v2432 = vadd.f32 %v2359, %v2431
      %2433 = vmatmul.bf16.gmra.mxu0 %v520
      %v2434 = vpop.f32.mrf.mxu0
      %v2435 = vadd.f32 %v2362, %v2434
      %v2436 = vpop.f32.mrf.mxu0
      %v2437 = vadd.f32 %v2364, %v2436
      %2438 = vmatmul.bf16.gmra.mxu0 %v523
      %v2439 = vpop.f32.mrf.mxu0
      %v2440 = vadd.f32 %v2367, %v2439
      %v2441 = vpop.f32.mrf.mxu0
      %v2442 = vadd.f32 %v2369, %v2441
      %2443 = vmatmul.bf16.gmra.mxu0 %v526
      %v2444 = vpop.f32.mrf.mxu0
      %v2445 = vadd.f32 %v2372, %v2444
      %v2446 = vpop.f32.mrf.mxu0
      %v2447 = vadd.f32 %v2374, %v2446
      %2448 = vmatmul.bf16.gmra.mxu0 %v529
      %v2449 = vpop.f32.mrf.mxu0
      %v2450 = vadd.f32 %v2377, %v2449
      %v2451 = vpop.f32.mrf.mxu0
      %v2452 = vadd.f32 %v2379, %v2451
      %2453 = vmatmul.bf16.gmra.mxu0 %v532
      %v2454 = vpop.f32.mrf.mxu0
      %v2455 = vadd.f32 %v2382, %v2454
      %v2456 = vpop.f32.mrf.mxu0
      %v2457 = vadd.f32 %v2384, %v2456
      %2458 = vmatmul.bf16.gmra.mxu0 %v535
      %v2459 = vpop.f32.mrf.mxu0
      %v2460 = vadd.f32 %v2387, %v2459
      %v2461 = vpop.f32.mrf.mxu0
      %v2462 = vadd.f32 %v2389, %v2461
      %2463 = vmatmul.bf16.gmra.mxu0 %v538
      %v2464 = vpop.f32.mrf.mxu0
      %v2465 = vadd.f32 %v2392, %v2464
      %v2466 = vpop.f32.mrf.mxu0
      %v2467 = vadd.f32 %v2394, %v2466
      %2468 = vmatmul.bf16.gmra.mxu0 %v541
      %v2469 = vpop.f32.mrf.mxu0
      %v2470 = vadd.f32 %v2397, %v2469
      %v2471 = vpop.f32.mrf.mxu0
      %v2472 = vadd.f32 %v2399, %v2471
      %2473 = vmatmul.bf16.gmra.mxu0 %v544
      %v2474 = vpop.f32.mrf.mxu0
      %v2475 = vadd.f32 %v2402, %v2474
      %v2476 = vpop.f32.mrf.mxu0
      %v2477 = vadd.f32 %v2404, %v2476
      %2478 = vmatmul.bf16.gmra.mxu0 %v547
      %v2479 = vpop.f32.mrf.mxu0
      %v2480 = vadd.f32 %v2407, %v2479
      %v2481 = vpop.f32.mrf.mxu0
      %v2482 = vadd.f32 %v2409, %v2481
      %2483 = vmatmul.bf16.gmra.mxu0 %v550
      %v2484 = vpop.f32.mrf.mxu0
      %v2485 = vadd.f32 %v2412, %v2484
      %v2486 = vpop.f32.mrf.mxu0
      %v2487 = vadd.f32 %v2414, %v2486
      %2488 = vmatmul.bf16.gmra.mxu0 %v553
      %v2489 = vpop.f32.mrf.mxu0
      %v2490 = vadd.f32 %v2417, %v2489
      %v2491 = vpop.f32.mrf.mxu0
      %2492 = vdwg.mxu0
      %v2493 = vpack.c.bf16 %v2286, %v2284
      %v2494 = vpack.c.bf16 %v2432, %v2430
      %v2495 = vpack.c.bf16 %v2291, %v2289
      %v2496 = vpack.c.bf16 %v2437, %v2435
      %v2497 = vpack.c.bf16 %v2296, %v2294
      %v2498 = vpack.c.bf16 %v2442, %v2440
      %v2499 = vpack.c.bf16 %v2301, %v2299
      %v2500 = vpack.c.bf16 %v2447, %v2445
      %v2501 = vpack.c.bf16 %v2306, %v2304
      %v2502 = vpack.c.bf16 %v2452, %v2450
      %v2503 = vpack.c.bf16 %v2311, %v2309
      %v2504 = vpack.c.bf16 %v2457, %v2455
      %v2505 = vpack.c.bf16 %v2316, %v2314
      %v2506 = vpack.c.bf16 %v2462, %v2460
      %v2507 = vpack.c.bf16 %v2321, %v2319
      %v2508 = vpack.c.bf16 %v2467, %v2465
      %v2509 = vpack.c.bf16 %v2326, %v2324
      %v2510 = vpack.c.bf16 %v2472, %v2470
      %v2511 = vpack.c.bf16 %v2331, %v2329
      %v2512 = vpack.c.bf16 %v2477, %v2475
      %v2513 = vpack.c.bf16 %v2336, %v2334
      %v2514 = vpack.c.bf16 %v2482, %v2480
      %v2515 = vpack.c.bf16 %v2341, %v2339
      %v2516 = vpack.c.bf16 %v2487, %v2485
      %v2517 = vpack.c.bf16 %v2344, %v2344
      %v2518 = vpack.c.bf16 %v2490, %v2490
      %vm2519 = vcmask 556032
      %v2520 = vsel %vm2519, %v1564, -inf
      %v2521 = vmax.f32 %v1563, %v2520
      %2522 = vmax.xlane.f32.xlu0 %v2521
      %v2523 = vpop.xlane.xlu0 %2522
      %v2524 = vsel %vm2519, %v1566, -inf
      %v2525 = vmax.f32 %v1565, %v2524
      %2526 = vmax.xlane.f32.xlu0 %v2525
      %v2527 = vpop.xlane.xlu0 %2526
      %v2528 = vsel %vm2519, %v1568, -inf
      %v2529 = vmax.f32 %v1567, %v2528
      %2530 = vmax.xlane.f32.xlu0 %v2529
      %v2531 = vpop.xlane.xlu0 %2530
      %v2532 = vsel %vm2519, %v1570, -inf
      %v2533 = vmax.f32 %v1569, %v2532
      %2534 = vmax.xlane.f32.xlu0 %v2533
      %v2535 = vpop.xlane.xlu0 %2534
      %v2536 = vsel %vm2519, %v1572, -inf
      %v2537 = vmax.f32 %v1571, %v2536
      %2538 = vmax.xlane.f32.xlu0 %v2537
      %v2539 = vpop.xlane.xlu0 %2538
      %v2540 = vsel %vm2519, %v1574, -inf
      %v2541 = vmax.f32 %v1573, %v2540
      %2542 = vmax.xlane.f32.xlu0 %v2541
      %v2543 = vpop.xlane.xlu0 %2542
      %v2544 = vsel %vm2519, %v1576, -inf
      %v2545 = vmax.f32 %v1575, %v2544
      %2546 = vmax.xlane.f32.xlu0 %v2545
      %v2547 = vpop.xlane.xlu0 %2546
      %v2548 = vsel %vm2519, %v1578, -inf
      %v2549 = vmax.f32 %v1577, %v2548
      %2550 = vmax.xlane.f32.xlu0 %v2549
      %v2551 = vpop.xlane.xlu0 %2550
      %v2552 = vsel %vm2519, %v1580, -inf
      %v2553 = vmax.f32 %v1579, %v2552
      %2554 = vmax.xlane.f32.xlu0 %v2553
      %v2555 = vpop.xlane.xlu0 %2554
      %v2556 = vsel %vm2519, %v1582, -inf
      %v2557 = vmax.f32 %v1581, %v2556
      %2558 = vmax.xlane.f32.xlu0 %v2557
      %v2559 = vpop.xlane.xlu0 %2558
      %v2560 = vsel %vm2519, %v1584, -inf
      %v2561 = vmax.f32 %v1583, %v2560
      %2562 = vmax.xlane.f32.xlu0 %v2561
      %v2563 = vpop.xlane.xlu0 %2562
      %v2564 = vsel %vm2519, %v1586, -inf
      %v2565 = vmax.f32 %v1585, %v2564
      %2566 = vmax.xlane.f32.xlu0 %v2565
      %v2567 = vpop.xlane.xlu0 %2566
      %v2568 = vsel %vm2519, %v1588, -inf
      %v2569 = vmax.f32 %v1587, %v2568
      %2570 = vmax.xlane.f32.xlu0 %v2569
      %v2571 = vpop.xlane.xlu0 %2570
      %v2572 = vsel %vm2519, %v1590, -inf
      %v2573 = vmax.f32 %v1589, %v2572
      %2574 = vmax.xlane.f32.xlu0 %v2573
      %v2575 = vpop.xlane.xlu0 %2574
      %v2576 = vsel %vm2519, %v1592, -inf
      %v2577 = vmax.f32 %v1591, %v2576
      %2578 = vmax.xlane.f32.xlu0 %v2577
      %v2579 = vpop.xlane.xlu0 %2578
      %v2580 = vsel %vm2519, %v1594, -inf
      %v2581 = vmax.f32 %v1593, %v2580
      %2582 = vmax.xlane.f32.xlu0 %v2581
      %v2583 = vpop.xlane.xlu0 %2582
      %v2584 = vsel %vm2519, %v1596, -inf
      %v2585 = vmax.f32 %v1595, %v2584
      %2586 = vmax.xlane.f32.xlu0 %v2585
      %v2587 = vpop.xlane.xlu0 %2586
      %v2588 = vsel %vm2519, %v1598, -inf
      %v2589 = vmax.f32 %v1597, %v2588
      %2590 = vmax.xlane.f32.xlu0 %v2589
      %v2591 = vpop.xlane.xlu0 %2590
      %v2592 = vsel %vm2519, %v1600, -inf
      %v2593 = vmax.f32 %v1599, %v2592
      %2594 = vmax.xlane.f32.xlu0 %v2593
      %v2595 = vpop.xlane.xlu0 %2594
      %v2596 = vsel %vm2519, %v1602, -inf
      %v2597 = vmax.f32 %v1601, %v2596
      %2598 = vmax.xlane.f32.xlu0 %v2597
      %v2599 = vpop.xlane.xlu0 %2598
      %v2600 = vsel %vm2519, %v1604, -inf
      %v2601 = vmax.f32 %v1603, %v2600
      %2602 = vmax.xlane.f32.xlu0 %v2601
      %v2603 = vpop.xlane.xlu0 %2602
      %v2604 = vsel %vm2519, %v1606, -inf
      %v2605 = vmax.f32 %v1605, %v2604
      %2606 = vmax.xlane.f32.xlu0 %v2605
      %v2607 = vpop.xlane.xlu0 %2606
      %v2608 = vsel %vm2519, %v1608, -inf
      %v2609 = vmax.f32 %v1607, %v2608
      %2610 = vmax.xlane.f32.xlu0 %v2609
      %v2611 = vpop.xlane.xlu0 %2610
      %v2612 = vsel %vm2519, %v1610, -inf
      %v2613 = vmax.f32 %v1609, %v2612
      %2614 = vmax.xlane.f32.xlu0 %v2613
      %v2615 = vpop.xlane.xlu0 %2614
      %vm2616 = vcmask 1043456
      %v2617 = vsel %vm2616, %v1611, -inf
      %vm2618 = vcmask 551936
      %v2619 = vsel %vm2618, %v1612, -inf
      %v2620 = vmax.f32 %v2617, %v2619
      %2621 = vmax.xlane.f32.xlu0 %v2620
      %v2622 = vpop.xlane.xlu0 %2621
      %vm2623 = vcmp.eq.f32.partialorder %v1563, %v2523
      %vm2624 = vcmp.eq.f32.partialorder %v1564, %v2523
      %vm2625 = vcmp.eq.f32.partialorder %v1565, %v2527
      %vm2626 = vcmp.eq.f32.partialorder %v1566, %v2527
      %vm2627 = vcmp.eq.f32.partialorder %v1567, %v2531
      %vm2628 = vcmp.eq.f32.partialorder %v1568, %v2531
      %vm2629 = vcmp.eq.f32.partialorder %v1569, %v2535
      %vm2630 = vcmp.eq.f32.partialorder %v1570, %v2535
      %vm2631 = vcmp.eq.f32.partialorder %v1571, %v2539
      %vm2632 = vcmp.eq.f32.partialorder %v1572, %v2539
      %vm2633 = vcmp.eq.f32.partialorder %v1573, %v2543
      %vm2634 = vcmp.eq.f32.partialorder %v1574, %v2543
      %vm2635 = vcmp.eq.f32.partialorder %v1575, %v2547
      %vm2636 = vcmp.eq.f32.partialorder %v1576, %v2547
      %vm2637 = vcmp.eq.f32.partialorder %v1577, %v2551
      %vm2638 = vcmp.eq.f32.partialorder %v1578, %v2551
      %vm2639 = vcmp.eq.f32.partialorder %v1579, %v2555
      %vm2640 = vcmp.eq.f32.partialorder %v1580, %v2555
      %vm2641 = vcmp.eq.f32.partialorder %v1581, %v2559
      %vm2642 = vcmp.eq.f32.partialorder %v1582, %v2559
      %vm2643 = vcmp.eq.f32.partialorder %v1583, %v2563
      %vm2644 = vcmp.eq.f32.partialorder %v1584, %v2563
      %vm2645 = vcmp.eq.f32.partialorder %v1585, %v2567
      %vm2646 = vcmp.eq.f32.partialorder %v1586, %v2567
      %vm2647 = vcmp.eq.f32.partialorder %v1587, %v2571
      %vm2648 = vcmp.eq.f32.partialorder %v1588, %v2571
      %vm2649 = vcmp.eq.f32.partialorder %v1589, %v2575
      %vm2650 = vcmp.eq.f32.partialorder %v1590, %v2575
      %vm2651 = vcmp.eq.f32.partialorder %v1591, %v2579
      %vm2652 = vcmp.eq.f32.partialorder %v1592, %v2579
      %vm2653 = vcmp.eq.f32.partialorder %v1593, %v2583
      %vm2654 = vcmp.eq.f32.partialorder %v1594, %v2583
      %vm2655 = vcmp.eq.f32.partialorder %v1595, %v2587
      %vm2656 = vcmp.eq.f32.partialorder %v1596, %v2587
      %vm2657 = vcmp.eq.f32.partialorder %v1597, %v2591
      %vm2658 = vcmp.eq.f32.partialorder %v1598, %v2591
      %vm2659 = vcmp.eq.f32.partialorder %v1599, %v2595
      %vm2660 = vcmp.eq.f32.partialorder %v1600, %v2595
      %vm2661 = vcmp.eq.f32.partialorder %v1601, %v2599
      %vm2662 = vcmp.eq.f32.partialorder %v1602, %v2599
      %vm2663 = vcmp.eq.f32.partialorder %v1603, %v2603
      %vm2664 = vcmp.eq.f32.partialorder %v1604, %v2603
      %vm2665 = vcmp.eq.f32.partialorder %v1605, %v2607
      %vm2666 = vcmp.eq.f32.partialorder %v1606, %v2607
      %vm2667 = vcmp.eq.f32.partialorder %v1607, %v2611
      %vm2668 = vcmp.eq.f32.partialorder %v1608, %v2611
      %vm2669 = vcmp.eq.f32.partialorder %v1609, %v2615
      %vm2670 = vcmp.eq.f32.partialorder %v1610, %v2615
      %vm2671 = vcmp.eq.f32.partialorder %v1611, %v2622
      %vm2672 = vcmp.eq.f32.partialorder %v1612, %v2622
      %v2673 = vsel %vm2623, %v1613, 196.0
      %v2674 = vsel %vm2624, %v1614, 196.0
      %v2675 = vsel %vm2625, %v1613, 196.0
      %v2676 = vsel %vm2626, %v1614, 196.0
      %v2677 = vsel %vm2627, %v1613, 196.0
      %v2678 = vsel %vm2628, %v1614, 196.0
      %v2679 = vsel %vm2629, %v1613, 196.0
      %v2680 = vsel %vm2630, %v1614, 196.0
      %v2681 = vsel %vm2631, %v1613, 196.0
      %v2682 = vsel %vm2632, %v1614, 196.0
      %v2683 = vsel %vm2633, %v1613, 196.0
      %v2684 = vsel %vm2634, %v1614, 196.0
      %v2685 = vsel %vm2635, %v1613, 196.0
      %v2686 = vsel %vm2636, %v1614, 196.0
      %v2687 = vsel %vm2637, %v1613, 196.0
      %v2688 = vsel %vm2638, %v1614, 196.0
      %v2689 = vsel %vm2639, %v1613, 196.0
      %v2690 = vsel %vm2640, %v1614, 196.0
      %v2691 = vsel %vm2641, %v1613, 196.0
      %v2692 = vsel %vm2642, %v1614, 196.0
      %v2693 = vsel %vm2643, %v1613, 196.0
      %v2694 = vsel %vm2644, %v1614, 196.0
      %v2695 = vsel %vm2645, %v1613, 196.0
      %v2696 = vsel %vm2646, %v1614, 196.0
      %v2697 = vsel %vm2647, %v1613, 196.0
      %v2698 = vsel %vm2648, %v1614, 196.0
      %v2699 = vsel %vm2649, %v1613, 196.0
      %v2700 = vsel %vm2650, %v1614, 196.0
      %v2701 = vsel %vm2651, %v1613, 196.0
      %v2702 = vsel %vm2652, %v1614, 196.0
      %v2703 = vsel %vm2653, %v1613, 196.0
      %v2704 = vsel %vm2654, %v1614, 196.0
      %v2705 = vsel %vm2655, %v1613, 196.0
      %v2706 = vsel %vm2656, %v1614, 196.0
      %v2707 = vsel %vm2657, %v1613, 196.0
      %v2708 = vsel %vm2658, %v1614, 196.0
      %v2709 = vsel %vm2659, %v1613, 196.0
      %v2710 = vsel %vm2660, %v1614, 196.0
      %v2711 = vsel %vm2661, %v1613, 196.0
      %v2712 = vsel %vm2662, %v1614, 196.0
      %v2713 = vsel %vm2663, %v1613, 196.0
      %v2714 = vsel %vm2664, %v1614, 196.0
      %v2715 = vsel %vm2665, %v1613, 196.0
      %v2716 = vsel %vm2666, %v1614, 196.0
      %v2717 = vsel %vm2667, %v1613, 196.0
      %v2718 = vsel %vm2668, %v1614, 196.0
      %v2719 = vsel %vm2669, %v1613, 196.0
      %v2720 = vsel %vm2670, %v1614, 196.0
      %v2721 = vsel %vm2671, %v1613, 196.0
      %v2722 = vsel %vm2672, %v1614, 196.0
      %v2723 = vsel %vm2519, %v2674, inf
      %v2724 = vmin.f32 %v2673, %v2723
      %2725 = vmin.xlane.f32.xlu0 %v2724
      %v2726 = vpop.xlane.xlu0 %2725
      %v2727 = vsel %vm2519, %v2676, inf
      %v2728 = vmin.f32 %v2675, %v2727
      %2729 = vmin.xlane.f32.xlu0 %v2728
      %v2730 = vpop.xlane.xlu0 %2729
      %v2731 = vsel %vm2519, %v2678, inf
      %v2732 = vmin.f32 %v2677, %v2731
      %2733 = vmin.xlane.f32.xlu0 %v2732
      %v2734 = vpop.xlane.xlu0 %2733
      %v2735 = vsel %vm2519, %v2680, inf
      %v2736 = vmin.f32 %v2679, %v2735
      %2737 = vmin.xlane.f32.xlu0 %v2736
      %v2738 = vpop.xlane.xlu0 %2737
      %v2739 = vsel %vm2519, %v2682, inf
      %v2740 = vmin.f32 %v2681, %v2739
      %2741 = vmin.xlane.f32.xlu0 %v2740
      %v2742 = vpop.xlane.xlu0 %2741
      %v2743 = vsel %vm2519, %v2684, inf
      %v2744 = vmin.f32 %v2683, %v2743
      %2745 = vmin.xlane.f32.xlu0 %v2744
      %v2746 = vpop.xlane.xlu0 %2745
      %v2747 = vsel %vm2519, %v2686, inf
      %v2748 = vmin.f32 %v2685, %v2747
      %2749 = vmin.xlane.f32.xlu0 %v2748
      %v2750 = vpop.xlane.xlu0 %2749
      %v2751 = vsel %vm2519, %v2688, inf
      %v2752 = vmin.f32 %v2687, %v2751
      %2753 = vmin.xlane.f32.xlu0 %v2752
      %v2754 = vpop.xlane.xlu0 %2753
      %v2755 = vsel %vm2519, %v2690, inf
      %v2756 = vmin.f32 %v2689, %v2755
      %2757 = vmin.xlane.f32.xlu0 %v2756
      %v2758 = vpop.xlane.xlu0 %2757
      %v2759 = vsel %vm2519, %v2692, inf
      %v2760 = vmin.f32 %v2691, %v2759
      %2761 = vmin.xlane.f32.xlu0 %v2760
      %v2762 = vpop.xlane.xlu0 %2761
      %v2763 = vsel %vm2519, %v2694, inf
      %v2764 = vmin.f32 %v2693, %v2763
      %2765 = vmin.xlane.f32.xlu0 %v2764
      %v2766 = vpop.xlane.xlu0 %2765
      %v2767 = vsel %vm2519, %v2696, inf
      %v2768 = vmin.f32 %v2695, %v2767
      %2769 = vmin.xlane.f32.xlu0 %v2768
      %v2770 = vpop.xlane.xlu0 %2769
      %v2771 = vsel %vm2519, %v2698, inf
      %v2772 = vmin.f32 %v2697, %v2771
      %2773 = vmin.xlane.f32.xlu0 %v2772
      %v2774 = vpop.xlane.xlu0 %2773
      %v2775 = vsel %vm2519, %v2700, inf
      %v2776 = vmin.f32 %v2699, %v2775
      %2777 = vmin.xlane.f32.xlu0 %v2776
      %v2778 = vpop.xlane.xlu0 %2777
      %v2779 = vsel %vm2519, %v2702, inf
      %v2780 = vmin.f32 %v2701, %v2779
      %2781 = vmin.xlane.f32.xlu0 %v2780
      %v2782 = vpop.xlane.xlu0 %2781
      %v2783 = vsel %vm2519, %v2704, inf
      %v2784 = vmin.f32 %v2703, %v2783
      %2785 = vmin.xlane.f32.xlu0 %v2784
      %v2786 = vpop.xlane.xlu0 %2785
      %v2787 = vsel %vm2519, %v2706, inf
      %v2788 = vmin.f32 %v2705, %v2787
      %2789 = vmin.xlane.f32.xlu0 %v2788
      %v2790 = vpop.xlane.xlu0 %2789
      %v2791 = vsel %vm2519, %v2708, inf
      %v2792 = vmin.f32 %v2707, %v2791
      %2793 = vmin.xlane.f32.xlu0 %v2792
      %v2794 = vpop.xlane.xlu0 %2793
      %v2795 = vsel %vm2519, %v2710, inf
      %v2796 = vmin.f32 %v2709, %v2795
      %2797 = vmin.xlane.f32.xlu0 %v2796
      %v2798 = vpop.xlane.xlu0 %2797
      %v2799 = vsel %vm2519, %v2712, inf
      %v2800 = vmin.f32 %v2711, %v2799
      %2801 = vmin.xlane.f32.xlu0 %v2800
      %v2802 = vpop.xlane.xlu0 %2801
      %v2803 = vsel %vm2519, %v2714, inf
      %v2804 = vmin.f32 %v2713, %v2803
      %2805 = vmin.xlane.f32.xlu0 %v2804
      %v2806 = vpop.xlane.xlu0 %2805
      %v2807 = vsel %vm2519, %v2716, inf
      %v2808 = vmin.f32 %v2715, %v2807
      %2809 = vmin.xlane.f32.xlu0 %v2808
      %v2810 = vpop.xlane.xlu0 %2809
      %v2811 = vsel %vm2519, %v2718, inf
      %v2812 = vmin.f32 %v2717, %v2811
      %2813 = vmin.xlane.f32.xlu0 %v2812
      %v2814 = vpop.xlane.xlu0 %2813
      %v2815 = vsel %vm2519, %v2720, inf
      %v2816 = vmin.f32 %v2719, %v2815
      %2817 = vmin.xlane.f32.xlu0 %v2816
      %v2818 = vpop.xlane.xlu0 %2817
      %v2819 = vsel %vm2616, %v2721, inf
      %v2820 = vsel %vm2618, %v2722, inf
      %v2821 = vmin.f32 %v2819, %v2820
      %2822 = vmin.xlane.f32.xlu0 %v2821
      %v2823 = vpop.xlane.xlu0 %2822
      %vm2824 = vcmp.eq.f32.partialorder %v1613, %v2726
      %vm2825 = vcmp.eq.f32.partialorder %v1614, %v2726
      %vm2826 = vcmp.eq.f32.partialorder %v1613, %v2730
      %vm2827 = vcmp.eq.f32.partialorder %v1614, %v2730
      %vm2828 = vcmp.eq.f32.partialorder %v1613, %v2734
      %vm2829 = vcmp.eq.f32.partialorder %v1614, %v2734
      %vm2830 = vcmp.eq.f32.partialorder %v1613, %v2738
      %vm2831 = vcmp.eq.f32.partialorder %v1614, %v2738
      %vm2832 = vcmp.eq.f32.partialorder %v1613, %v2742
      %vm2833 = vcmp.eq.f32.partialorder %v1614, %v2742
      %vm2834 = vcmp.eq.f32.partialorder %v1613, %v2746
      %vm2835 = vcmp.eq.f32.partialorder %v1614, %v2746
      %vm2836 = vcmp.eq.f32.partialorder %v1613, %v2750
      %vm2837 = vcmp.eq.f32.partialorder %v1614, %v2750
      %vm2838 = vcmp.eq.f32.partialorder %v1613, %v2754
      %vm2839 = vcmp.eq.f32.partialorder %v1614, %v2754
      %vm2840 = vcmp.eq.f32.partialorder %v1613, %v2758
      %vm2841 = vcmp.eq.f32.partialorder %v1614, %v2758
      %vm2842 = vcmp.eq.f32.partialorder %v1613, %v2762
      %vm2843 = vcmp.eq.f32.partialorder %v1614, %v2762
      %vm2844 = vcmp.eq.f32.partialorder %v1613, %v2766
      %vm2845 = vcmp.eq.f32.partialorder %v1614, %v2766
      %vm2846 = vcmp.eq.f32.partialorder %v1613, %v2770
      %vm2847 = vcmp.eq.f32.partialorder %v1614, %v2770
      %vm2848 = vcmp.eq.f32.partialorder %v1613, %v2774
      %vm2849 = vcmp.eq.f32.partialorder %v1614, %v2774
      %vm2850 = vcmp.eq.f32.partialorder %v1613, %v2778
      %vm2851 = vcmp.eq.f32.partialorder %v1614, %v2778
      %vm2852 = vcmp.eq.f32.partialorder %v1613, %v2782
      %vm2853 = vcmp.eq.f32.partialorder %v1614, %v2782
      %vm2854 = vcmp.eq.f32.partialorder %v1613, %v2786
      %vm2855 = vcmp.eq.f32.partialorder %v1614, %v2786
      %vm2856 = vcmp.eq.f32.partialorder %v1613, %v2790
      %vm2857 = vcmp.eq.f32.partialorder %v1614, %v2790
      %vm2858 = vcmp.eq.f32.partialorder %v1613, %v2794
      %vm2859 = vcmp.eq.f32.partialorder %v1614, %v2794
      %vm2860 = vcmp.eq.f32.partialorder %v1613, %v2798
      %vm2861 = vcmp.eq.f32.partialorder %v1614, %v2798
      %vm2862 = vcmp.eq.f32.partialorder %v1613, %v2802
      %vm2863 = vcmp.eq.f32.partialorder %v1614, %v2802
      %vm2864 = vcmp.eq.f32.partialorder %v1613, %v2806
      %vm2865 = vcmp.eq.f32.partialorder %v1614, %v2806
      %vm2866 = vcmp.eq.f32.partialorder %v1613, %v2810
      %vm2867 = vcmp.eq.f32.partialorder %v1614, %v2810
      %vm2868 = vcmp.eq.f32.partialorder %v1613, %v2814
      %vm2869 = vcmp.eq.f32.partialorder %v1614, %v2814
      %vm2870 = vcmp.eq.f32.partialorder %v1613, %v2818
      %vm2871 = vcmp.eq.f32.partialorder %v1614, %v2818
      %vm2872 = vcmp.eq.f32.partialorder %v1613, %v2823
      %vm2873 = vcmp.eq.f32.partialorder %v1614, %v2823
      %v2874 = vsel %vm2824, 1, 0
      %v2875 = vsel %vm2825, 1, 0
      %v2876 = vsel %vm2826, 1, 0
      %v2877 = vsel %vm2827, 1, 0
      %v2878 = vsel %vm2828, 1, 0
      %v2879 = vsel %vm2829, 1, 0
      %v2880 = vsel %vm2830, 1, 0
      %v2881 = vsel %vm2831, 1, 0
      %v2882 = vsel %vm2832, 1, 0
      %v2883 = vsel %vm2833, 1, 0
      %v2884 = vsel %vm2834, 1, 0
      %v2885 = vsel %vm2835, 1, 0
      %v2886 = vsel %vm2836, 1, 0
      %v2887 = vsel %vm2837, 1, 0
      %v2888 = vsel %vm2838, 1, 0
      %v2889 = vsel %vm2839, 1, 0
      %v2890 = vsel %vm2840, 1, 0
      %v2891 = vsel %vm2841, 1, 0
      %v2892 = vsel %vm2842, 1, 0
      %v2893 = vsel %vm2843, 1, 0
      %v2894 = vsel %vm2844, 1, 0
      %v2895 = vsel %vm2845, 1, 0
      %v2896 = vsel %vm2846, 1, 0
      %v2897 = vsel %vm2847, 1, 0
      %v2898 = vsel %vm2848, 1, 0
      %v2899 = vsel %vm2849, 1, 0
      %v2900 = vsel %vm2850, 1, 0
      %v2901 = vsel %vm2851, 1, 0
      %v2902 = vsel %vm2852, 1, 0
      %v2903 = vsel %vm2853, 1, 0
      %v2904 = vsel %vm2854, 1, 0
      %v2905 = vsel %vm2855, 1, 0
      %v2906 = vsel %vm2856, 1, 0
      %v2907 = vsel %vm2857, 1, 0
      %v2908 = vsel %vm2858, 1, 0
      %v2909 = vsel %vm2859, 1, 0
      %v2910 = vsel %vm2860, 1, 0
      %v2911 = vsel %vm2861, 1, 0
      %v2912 = vsel %vm2862, 1, 0
      %v2913 = vsel %vm2863, 1, 0
      %v2914 = vsel %vm2864, 1, 0
      %v2915 = vsel %vm2865, 1, 0
      %v2916 = vsel %vm2866, 1, 0
      %v2917 = vsel %vm2867, 1, 0
      %v2918 = vsel %vm2868, 1, 0
      %v2919 = vsel %vm2869, 1, 0
      %v2920 = vsel %vm2870, 1, 0
      %v2921 = vsel %vm2871, 1, 0
      %v2922 = vsel %vm2872, 1, 0
      %v2923 = vsel %vm2873, 1, 0
      %v2924 = vcvt.s32.f32 %v2874
      %v2925 = vcvt.s32.f32 %v2875
      %v2926 = vcvt.s32.f32 %v2876
      %v2927 = vcvt.s32.f32 %v2877
      %v2928 = vcvt.s32.f32 %v2878
      %v2929 = vcvt.s32.f32 %v2879
      %v2930 = vcvt.s32.f32 %v2880
      %v2931 = vcvt.s32.f32 %v2881
      %v2932 = vcvt.s32.f32 %v2882
      %v2933 = vcvt.s32.f32 %v2883
      %v2934 = vcvt.s32.f32 %v2884
      %v2935 = vcvt.s32.f32 %v2885
      %v2936 = vcvt.s32.f32 %v2886
      %v2937 = vcvt.s32.f32 %v2887
      %v2938 = vcvt.s32.f32 %v2888
      %v2939 = vcvt.s32.f32 %v2889
      %v2940 = vcvt.s32.f32 %v2890
      %v2941 = vcvt.s32.f32 %v2891
      %v2942 = vcvt.s32.f32 %v2892
      %v2943 = vcvt.s32.f32 %v2893
      %v2944 = vcvt.s32.f32 %v2894
      %v2945 = vcvt.s32.f32 %v2895
      %v2946 = vcvt.s32.f32 %v2896
      %v2947 = vcvt.s32.f32 %v2897
      %v2948 = vcvt.s32.f32 %v2898
      %v2949 = vcvt.s32.f32 %v2899
      %v2950 = vcvt.s32.f32 %v2900
      %v2951 = vcvt.s32.f32 %v2901
      %v2952 = vcvt.s32.f32 %v2902
      %v2953 = vcvt.s32.f32 %v2903
      %v2954 = vcvt.s32.f32 %v2904
      %v2955 = vcvt.s32.f32 %v2905
      %v2956 = vcvt.s32.f32 %v2906
      %v2957 = vcvt.s32.f32 %v2907
      %v2958 = vcvt.s32.f32 %v2908
      %v2959 = vcvt.s32.f32 %v2909
      %v2960 = vcvt.s32.f32 %v2910
      %v2961 = vcvt.s32.f32 %v2911
      %v2962 = vcvt.s32.f32 %v2912
      %v2963 = vcvt.s32.f32 %v2913
      %v2964 = vcvt.s32.f32 %v2914
      %v2965 = vcvt.s32.f32 %v2915
      %v2966 = vcvt.s32.f32 %v2916
      %v2967 = vcvt.s32.f32 %v2917
      %v2968 = vcvt.s32.f32 %v2918
      %v2969 = vcvt.s32.f32 %v2919
      %v2970 = vcvt.s32.f32 %v2920
      %v2971 = vcvt.s32.f32 %v2921
      %v2972 = vcvt.s32.f32 %v2922
      %v2973 = vcvt.s32.f32 %v2923
      %v2974 = vpack.c.bf16 %v2926, %v2924
      %v2975 = vpack.c.bf16 %v2927, %v2925
      %v2976 = vpack.c.bf16 %v2930, %v2928
      %v2977 = vpack.c.bf16 %v2931, %v2929
      %v2978 = vpack.c.bf16 %v2934, %v2932
      %v2979 = vpack.c.bf16 %v2935, %v2933
      %v2980 = vpack.c.bf16 %v2938, %v2936
      %v2981 = vpack.c.bf16 %v2939, %v2937
      %v2982 = vpack.c.bf16 %v2942, %v2940
      %v2983 = vpack.c.bf16 %v2943, %v2941
      %v2984 = vpack.c.bf16 %v2946, %v2944
      %v2985 = vpack.c.bf16 %v2947, %v2945
      %v2986 = vpack.c.bf16 %v2950, %v2948
      %v2987 = vpack.c.bf16 %v2951, %v2949
      %v2988 = vpack.c.bf16 %v2954, %v2952
      %v2989 = vpack.c.bf16 %v2955, %v2953
      %v2990 = vpack.c.bf16 %v2958, %v2956
      %v2991 = vpack.c.bf16 %v2959, %v2957
      %v2992 = vpack.c.bf16 %v2962, %v2960
      %v2993 = vpack.c.bf16 %v2963, %v2961
      %v2994 = vpack.c.bf16 %v2966, %v2964
      %v2995 = vpack.c.bf16 %v2967, %v2965
      %v2996 = vpack.c.bf16 %v2970, %v2968
      %v2997 = vpack.c.bf16 %v2971, %v2969
      %v2998 = vpack.c.bf16 %v2972, %v2972
      %v2999 = vpack.c.bf16 %v2973, %v2973
      %v3001 = vsel %vm2519, %v2975, 0
      %v3004 = vsel %vm2519, %v2977, 0
      %v3007 = vsel %vm2519, %v2979, 0
      %v3010 = vsel %vm2519, %v2981, 0
      %v3013 = vsel %vm2519, %v2983, 0
      %v3016 = vsel %vm2519, %v2985, 0
      %v3019 = vsel %vm2519, %v2987, 0
      %v3022 = vsel %vm2519, %v2989, 0
      %v3025 = vsel %vm2519, %v2991, 0
      %v3028 = vsel %vm2519, %v2993, 0
      %v3031 = vsel %vm2519, %v2995, 0
      %v3034 = vsel %vm2519, %v2997, 0
      %v3037 = vsel %vm2519, %v2999, 0
      %vm3039 = vcmask 1041408
      %v3041 = vsel %vm3039, %v2517, 0
      %v3044 = vsel %vm3039, %v2518, 0
      %3046 = vmatpush.bf16.msra.mxu0 %v2507
      %3047 = vmatpush.bf16.msra.mxu0 %v2505
      %3048 = vmatpush.bf16.msra.mxu0 %v2503
      %3049 = vmatpush.bf16.msra.mxu0 %v2501
      %3050 = vmatpush.bf16.msra.mxu0 %v2499
      %3051 = vmatpush.bf16.msra.mxu0 %v2497
      %3052 = vmatpush.bf16.msra.mxu0 %v2495
      %3053 = vmatpush.bf16.msra.mxu0 %v2493
      %3054 = vmatmul.bf16.gmra.mxu0 %v2974
      %v3055 = vpop.f32.mrf.mxu0
      %v3056 = vadd.f32 0.0, %v3055
      %v3057 = vpop.f32.mrf.mxu0
      %v3058 = vadd.f32 0.0, %v3057
      %3059 = vmatmul.bf16.gmra.mxu0 %v2976
      %v3060 = vpop.f32.mrf.mxu0
      %v3061 = vadd.f32 0.0, %v3060
      %v3062 = vpop.f32.mrf.mxu0
      %v3063 = vadd.f32 0.0, %v3062
      %3064 = vmatmul.bf16.gmra.mxu0 %v2978
      %v3065 = vpop.f32.mrf.mxu0
      %v3066 = vadd.f32 0.0, %v3065
      %v3067 = vpop.f32.mrf.mxu0
      %v3068 = vadd.f32 0.0, %v3067
      %3069 = vmatmul.bf16.gmra.mxu0 %v2980
      %v3070 = vpop.f32.mrf.mxu0
      %v3071 = vadd.f32 0.0, %v3070
      %v3072 = vpop.f32.mrf.mxu0
      %v3073 = vadd.f32 0.0, %v3072
      %3074 = vmatmul.bf16.gmra.mxu0 %v2982
      %v3075 = vpop.f32.mrf.mxu0
      %v3076 = vadd.f32 0.0, %v3075
      %v3077 = vpop.f32.mrf.mxu0
      %v3078 = vadd.f32 0.0, %v3077
      %3079 = vmatmul.bf16.gmra.mxu0 %v2984
      %v3080 = vpop.f32.mrf.mxu0
      %v3081 = vadd.f32 0.0, %v3080
      %v3082 = vpop.f32.mrf.mxu0
      %v3083 = vadd.f32 0.0, %v3082
      %3084 = vmatmul.bf16.gmra.mxu0 %v2986
      %v3085 = vpop.f32.mrf.mxu0
      %v3086 = vadd.f32 0.0, %v3085
      %v3087 = vpop.f32.mrf.mxu0
      %v3088 = vadd.f32 0.0, %v3087
      %3089 = vmatmul.bf16.gmra.mxu0 %v2988
      %v3090 = vpop.f32.mrf.mxu0
      %v3091 = vadd.f32 0.0, %v3090
      %v3092 = vpop.f32.mrf.mxu0
      %v3093 = vadd.f32 0.0, %v3092
      %3094 = vmatmul.bf16.gmra.mxu0 %v2990
      %v3095 = vpop.f32.mrf.mxu0
      %v3096 = vadd.f32 0.0, %v3095
      %v3097 = vpop.f32.mrf.mxu0
      %v3098 = vadd.f32 0.0, %v3097
      %3099 = vmatmul.bf16.gmra.mxu0 %v2992
      %v3100 = vpop.f32.mrf.mxu0
      %v3101 = vadd.f32 0.0, %v3100
      %v3102 = vpop.f32.mrf.mxu0
      %v3103 = vadd.f32 0.0, %v3102
      %3104 = vmatmul.bf16.gmra.mxu0 %v2994
      %v3105 = vpop.f32.mrf.mxu0
      %v3106 = vadd.f32 0.0, %v3105
      %v3107 = vpop.f32.mrf.mxu0
      %v3108 = vadd.f32 0.0, %v3107
      %3109 = vmatmul.bf16.gmra.mxu0 %v2996
      %v3110 = vpop.f32.mrf.mxu0
      %v3111 = vadd.f32 0.0, %v3110
      %v3112 = vpop.f32.mrf.mxu0
      %v3113 = vadd.f32 0.0, %v3112
      %3114 = vmatmul.bf16.gmra.mxu0 %v2998
      %v3115 = vpop.f32.mrf.mxu0
      %v3116 = vadd.f32 0.0, %v3115
      %v3117 = vpop.f32.mrf.mxu0
      %3118 = vdwg.mxu0
      %3119 = vmatpush.bf16.msra.mxu0 0
      %3120 = vmatpush.bf16.msra.mxu0 0
      %3121 = vmatpush.bf16.msra.mxu0 0
      %3122 = vmatpush.bf16.msra.mxu0 %v3041
      %3123 = vmatpush.bf16.msra.mxu0 %v2515
      %3124 = vmatpush.bf16.msra.mxu0 %v2513
      %3125 = vmatpush.bf16.msra.mxu0 %v2511
      %3126 = vmatpush.bf16.msra.mxu0 %v2509
      %3127 = vmatmul.bf16.gmra.mxu0 %v3001
      %v3128 = vpop.f32.mrf.mxu0
      %v3129 = vadd.f32 %v3056, %v3128
      %v3130 = vpop.f32.mrf.mxu0
      %v3131 = vadd.f32 %v3058, %v3130
      %3132 = vmatmul.bf16.gmra.mxu0 %v3004
      %v3133 = vpop.f32.mrf.mxu0
      %v3134 = vadd.f32 %v3061, %v3133
      %v3135 = vpop.f32.mrf.mxu0
      %v3136 = vadd.f32 %v3063, %v3135
      %3137 = vmatmul.bf16.gmra.mxu0 %v3007
      %v3138 = vpop.f32.mrf.mxu0
      %v3139 = vadd.f32 %v3066, %v3138
      %v3140 = vpop.f32.mrf.mxu0
      %v3141 = vadd.f32 %v3068, %v3140
      %3142 = vmatmul.bf16.gmra.mxu0 %v3010
      %v3143 = vpop.f32.mrf.mxu0
      %v3144 = vadd.f32 %v3071, %v3143
      %v3145 = vpop.f32.mrf.mxu0
      %v3146 = vadd.f32 %v3073, %v3145
      %3147 = vmatmul.bf16.gmra.mxu0 %v3013
      %v3148 = vpop.f32.mrf.mxu0
      %v3149 = vadd.f32 %v3076, %v3148
      %v3150 = vpop.f32.mrf.mxu0
      %v3151 = vadd.f32 %v3078, %v3150
      %3152 = vmatmul.bf16.gmra.mxu0 %v3016
      %v3153 = vpop.f32.mrf.mxu0
      %v3154 = vadd.f32 %v3081, %v3153
      %v3155 = vpop.f32.mrf.mxu0
      %v3156 = vadd.f32 %v3083, %v3155
      %3157 = vmatmul.bf16.gmra.mxu0 %v3019
      %v3158 = vpop.f32.mrf.mxu0
      %v3159 = vadd.f32 %v3086, %v3158
      %v3160 = vpop.f32.mrf.mxu0
      %v3161 = vadd.f32 %v3088, %v3160
      %3162 = vmatmul.bf16.gmra.mxu0 %v3022
      %v3163 = vpop.f32.mrf.mxu0
      %v3164 = vadd.f32 %v3091, %v3163
      %v3165 = vpop.f32.mrf.mxu0
      %v3166 = vadd.f32 %v3093, %v3165
      %3167 = vmatmul.bf16.gmra.mxu0 %v3025
      %v3168 = vpop.f32.mrf.mxu0
      %v3169 = vadd.f32 %v3096, %v3168
      %v3170 = vpop.f32.mrf.mxu0
      %v3171 = vadd.f32 %v3098, %v3170
      %3172 = vmatmul.bf16.gmra.mxu0 %v3028
      %v3173 = vpop.f32.mrf.mxu0
      %v3174 = vadd.f32 %v3101, %v3173
      %v3175 = vpop.f32.mrf.mxu0
      %v3176 = vadd.f32 %v3103, %v3175
      %3177 = vmatmul.bf16.gmra.mxu0 %v3031
      %v3178 = vpop.f32.mrf.mxu0
      %v3179 = vadd.f32 %v3106, %v3178
      %v3180 = vpop.f32.mrf.mxu0
      %v3181 = vadd.f32 %v3108, %v3180
      %3182 = vmatmul.bf16.gmra.mxu0 %v3034
      %v3183 = vpop.f32.mrf.mxu0
      %v3184 = vadd.f32 %v3111, %v3183
      %v3185 = vpop.f32.mrf.mxu0
      %v3186 = vadd.f32 %v3113, %v3185
      %3187 = vmatmul.bf16.gmra.mxu0 %v3037
      %v3188 = vpop.f32.mrf.mxu0
      %v3189 = vadd.f32 %v3116, %v3188
      %v3190 = vpop.f32.mrf.mxu0
      %3191 = vdwg.mxu0
      %3192 = vmatpush.bf16.msra.mxu0 %v2508
      %3193 = vmatpush.bf16.msra.mxu0 %v2506
      %3194 = vmatpush.bf16.msra.mxu0 %v2504
      %3195 = vmatpush.bf16.msra.mxu0 %v2502
      %3196 = vmatpush.bf16.msra.mxu0 %v2500
      %3197 = vmatpush.bf16.msra.mxu0 %v2498
      %3198 = vmatpush.bf16.msra.mxu0 %v2496
      %3199 = vmatpush.bf16.msra.mxu0 %v2494
      %3200 = vmatmul.bf16.gmra.mxu0 %v2974
      %v3201 = vpop.f32.mrf.mxu0
      %v3202 = vadd.f32 0.0, %v3201
      %v3203 = vpop.f32.mrf.mxu0
      %v3204 = vadd.f32 0.0, %v3203
      %3205 = vmatmul.bf16.gmra.mxu0 %v2976
      %v3206 = vpop.f32.mrf.mxu0
      %v3207 = vadd.f32 0.0, %v3206
      %v3208 = vpop.f32.mrf.mxu0
      %v3209 = vadd.f32 0.0, %v3208
      %3210 = vmatmul.bf16.gmra.mxu0 %v2978
      %v3211 = vpop.f32.mrf.mxu0
      %v3212 = vadd.f32 0.0, %v3211
      %v3213 = vpop.f32.mrf.mxu0
      %v3214 = vadd.f32 0.0, %v3213
      %3215 = vmatmul.bf16.gmra.mxu0 %v2980
      %v3216 = vpop.f32.mrf.mxu0
      %v3217 = vadd.f32 0.0, %v3216
      %v3218 = vpop.f32.mrf.mxu0
      %v3219 = vadd.f32 0.0, %v3218
      %3220 = vmatmul.bf16.gmra.mxu0 %v2982
      %v3221 = vpop.f32.mrf.mxu0
      %v3222 = vadd.f32 0.0, %v3221
      %v3223 = vpop.f32.mrf.mxu0
      %v3224 = vadd.f32 0.0, %v3223
      %3225 = vmatmul.bf16.gmra.mxu0 %v2984
      %v3226 = vpop.f32.mrf.mxu0
      %v3227 = vadd.f32 0.0, %v3226
      %v3228 = vpop.f32.mrf.mxu0
      %v3229 = vadd.f32 0.0, %v3228
      %3230 = vmatmul.bf16.gmra.mxu0 %v2986
      %v3231 = vpop.f32.mrf.mxu0
      %v3232 = vadd.f32 0.0, %v3231
      %v3233 = vpop.f32.mrf.mxu0
      %v3234 = vadd.f32 0.0, %v3233
      %3235 = vmatmul.bf16.gmra.mxu0 %v2988
      %v3236 = vpop.f32.mrf.mxu0
      %v3237 = vadd.f32 0.0, %v3236
      %v3238 = vpop.f32.mrf.mxu0
      %v3239 = vadd.f32 0.0, %v3238
      %3240 = vmatmul.bf16.gmra.mxu0 %v2990
      %v3241 = vpop.f32.mrf.mxu0
      %v3242 = vadd.f32 0.0, %v3241
      %v3243 = vpop.f32.mrf.mxu0
      %v3244 = vadd.f32 0.0, %v3243
      %3245 = vmatmul.bf16.gmra.mxu0 %v2992
      %v3246 = vpop.f32.mrf.mxu0
      %v3247 = vadd.f32 0.0, %v3246
      %v3248 = vpop.f32.mrf.mxu0
      %v3249 = vadd.f32 0.0, %v3248
      %3250 = vmatmul.bf16.gmra.mxu0 %v2994
      %v3251 = vpop.f32.mrf.mxu0
      %v3252 = vadd.f32 0.0, %v3251
      %v3253 = vpop.f32.mrf.mxu0
      %v3254 = vadd.f32 0.0, %v3253
      %3255 = vmatmul.bf16.gmra.mxu0 %v2996
      %v3256 = vpop.f32.mrf.mxu0
      %v3257 = vadd.f32 0.0, %v3256
      %v3258 = vpop.f32.mrf.mxu0
      %v3259 = vadd.f32 0.0, %v3258
      %3260 = vmatmul.bf16.gmra.mxu0 %v2998
      %v3261 = vpop.f32.mrf.mxu0
      %v3262 = vadd.f32 0.0, %v3261
      %v3263 = vpop.f32.mrf.mxu0
      %3264 = vdwg.mxu0
      %3265 = vmatpush.bf16.msra.mxu0 0
      %3266 = vmatpush.bf16.msra.mxu0 0
      %3267 = vmatpush.bf16.msra.mxu0 0
      %3268 = vmatpush.bf16.msra.mxu0 %v3044
      %3269 = vmatpush.bf16.msra.mxu0 %v2516
      %3270 = vmatpush.bf16.msra.mxu0 %v2514
      %3271 = vmatpush.bf16.msra.mxu0 %v2512
      %3272 = vmatpush.bf16.msra.mxu0 %v2510
      %3273 = vmatmul.bf16.gmra.mxu0 %v3001
      %v3274 = vpop.f32.mrf.mxu0
      %v3275 = vadd.f32 %v3202, %v3274
      %v3276 = vpop.f32.mrf.mxu0
      %v3277 = vadd.f32 %v3204, %v3276
      %3278 = vmatmul.bf16.gmra.mxu0 %v3004
      %v3279 = vpop.f32.mrf.mxu0
      %v3280 = vadd.f32 %v3207, %v3279
      %v3281 = vpop.f32.mrf.mxu0
      %v3282 = vadd.f32 %v3209, %v3281
      %3283 = vmatmul.bf16.gmra.mxu0 %v3007
      %v3284 = vpop.f32.mrf.mxu0
      %v3285 = vadd.f32 %v3212, %v3284
      %v3286 = vpop.f32.mrf.mxu0
      %v3287 = vadd.f32 %v3214, %v3286
      %3288 = vmatmul.bf16.gmra.mxu0 %v3010
      %v3289 = vpop.f32.mrf.mxu0
      %v3290 = vadd.f32 %v3217, %v3289
      %v3291 = vpop.f32.mrf.mxu0
      %v3292 = vadd.f32 %v3219, %v3291
      %3293 = vmatmul.bf16.gmra.mxu0 %v3013
      %v3294 = vpop.f32.mrf.mxu0
      %v3295 = vadd.f32 %v3222, %v3294
      %v3296 = vpop.f32.mrf.mxu0
      %v3297 = vadd.f32 %v3224, %v3296
      %3298 = vmatmul.bf16.gmra.mxu0 %v3016
      %v3299 = vpop.f32.mrf.mxu0
      %v3300 = vadd.f32 %v3227, %v3299
      %v3301 = vpop.f32.mrf.mxu0
      %v3302 = vadd.f32 %v3229, %v3301
      %3303 = vmatmul.bf16.gmra.mxu0 %v3019
      %v3304 = vpop.f32.mrf.mxu0
      %v3305 = vadd.f32 %v3232, %v3304
      %v3306 = vpop.f32.mrf.mxu0
      %v3307 = vadd.f32 %v3234, %v3306
      %3308 = vmatmul.bf16.gmra.mxu0 %v3022
      %v3309 = vpop.f32.mrf.mxu0
      %v3310 = vadd.f32 %v3237, %v3309
      %v3311 = vpop.f32.mrf.mxu0
      %v3312 = vadd.f32 %v3239, %v3311
      %3313 = vmatmul.bf16.gmra.mxu0 %v3025
      %v3314 = vpop.f32.mrf.mxu0
      %v3315 = vadd.f32 %v3242, %v3314
      %v3316 = vpop.f32.mrf.mxu0
      %v3317 = vadd.f32 %v3244, %v3316
      %3318 = vmatmul.bf16.gmra.mxu0 %v3028
      %v3319 = vpop.f32.mrf.mxu0
      %v3320 = vadd.f32 %v3247, %v3319
      %v3321 = vpop.f32.mrf.mxu0
      %v3322 = vadd.f32 %v3249, %v3321
      %3323 = vmatmul.bf16.gmra.mxu0 %v3031
      %v3324 = vpop.f32.mrf.mxu0
      %v3325 = vadd.f32 %v3252, %v3324
      %v3326 = vpop.f32.mrf.mxu0
      %v3327 = vadd.f32 %v3254, %v3326
      %3328 = vmatmul.bf16.gmra.mxu0 %v3034
      %v3329 = vpop.f32.mrf.mxu0
      %v3330 = vadd.f32 %v3257, %v3329
      %v3331 = vpop.f32.mrf.mxu0
      %v3332 = vadd.f32 %v3259, %v3331
      %3333 = vmatmul.bf16.gmra.mxu0 %v3037
      %v3334 = vpop.f32.mrf.mxu0
      %v3335 = vadd.f32 %v3262, %v3334
      %v3336 = vpop.f32.mrf.mxu0
      %3337 = vdwg.mxu0
      %v3338 = vsel %vm2824, -1e+30, %v1563
      %v3339 = vsel %vm2825, -1e+30, %v1564
      %v3340 = vsel %vm2826, -1e+30, %v1565
      %v3341 = vsel %vm2827, -1e+30, %v1566
      %v3342 = vsel %vm2828, -1e+30, %v1567
      %v3343 = vsel %vm2829, -1e+30, %v1568
      %v3344 = vsel %vm2830, -1e+30, %v1569
      %v3345 = vsel %vm2831, -1e+30, %v1570
      %v3346 = vsel %vm2832, -1e+30, %v1571
      %v3347 = vsel %vm2833, -1e+30, %v1572
      %v3348 = vsel %vm2834, -1e+30, %v1573
      %v3349 = vsel %vm2835, -1e+30, %v1574
      %v3350 = vsel %vm2836, -1e+30, %v1575
      %v3351 = vsel %vm2837, -1e+30, %v1576
      %v3352 = vsel %vm2838, -1e+30, %v1577
      %v3353 = vsel %vm2839, -1e+30, %v1578
      %v3354 = vsel %vm2840, -1e+30, %v1579
      %v3355 = vsel %vm2841, -1e+30, %v1580
      %v3356 = vsel %vm2842, -1e+30, %v1581
      %v3357 = vsel %vm2843, -1e+30, %v1582
      %v3358 = vsel %vm2844, -1e+30, %v1583
      %v3359 = vsel %vm2845, -1e+30, %v1584
      %v3360 = vsel %vm2846, -1e+30, %v1585
      %v3361 = vsel %vm2847, -1e+30, %v1586
      %v3362 = vsel %vm2848, -1e+30, %v1587
      %v3363 = vsel %vm2849, -1e+30, %v1588
      %v3364 = vsel %vm2850, -1e+30, %v1589
      %v3365 = vsel %vm2851, -1e+30, %v1590
      %v3366 = vsel %vm2852, -1e+30, %v1591
      %v3367 = vsel %vm2853, -1e+30, %v1592
      %v3368 = vsel %vm2854, -1e+30, %v1593
      %v3369 = vsel %vm2855, -1e+30, %v1594
      %v3370 = vsel %vm2856, -1e+30, %v1595
      %v3371 = vsel %vm2857, -1e+30, %v1596
      %v3372 = vsel %vm2858, -1e+30, %v1597
      %v3373 = vsel %vm2859, -1e+30, %v1598
      %v3374 = vsel %vm2860, -1e+30, %v1599
      %v3375 = vsel %vm2861, -1e+30, %v1600
      %v3376 = vsel %vm2862, -1e+30, %v1601
      %v3377 = vsel %vm2863, -1e+30, %v1602
      %v3378 = vsel %vm2864, -1e+30, %v1603
      %v3379 = vsel %vm2865, -1e+30, %v1604
      %v3380 = vsel %vm2866, -1e+30, %v1605
      %v3381 = vsel %vm2867, -1e+30, %v1606
      %v3382 = vsel %vm2868, -1e+30, %v1607
      %v3383 = vsel %vm2869, -1e+30, %v1608
      %v3384 = vsel %vm2870, -1e+30, %v1609
      %v3385 = vsel %vm2871, -1e+30, %v1610
      %v3386 = vsel %vm2872, -1e+30, %v1611
      %v3387 = vsel %vm2873, -1e+30, %v1612
      %v3388 = vsel %vm2519, %v3339, -inf
      %v3389 = vmax.f32 %v3338, %v3388
      %3390 = vmax.xlane.f32.xlu0 %v3389
      %v3391 = vpop.xlane.xlu0 %3390
      %v3392 = vsel %vm2519, %v3341, -inf
      %v3393 = vmax.f32 %v3340, %v3392
      %3394 = vmax.xlane.f32.xlu0 %v3393
      %v3395 = vpop.xlane.xlu0 %3394
      %v3396 = vsel %vm2519, %v3343, -inf
      %v3397 = vmax.f32 %v3342, %v3396
      %3398 = vmax.xlane.f32.xlu0 %v3397
      %v3399 = vpop.xlane.xlu0 %3398
      %v3400 = vsel %vm2519, %v3345, -inf
      %v3401 = vmax.f32 %v3344, %v3400
      %3402 = vmax.xlane.f32.xlu0 %v3401
      %v3403 = vpop.xlane.xlu0 %3402
      %v3404 = vsel %vm2519, %v3347, -inf
      %v3405 = vmax.f32 %v3346, %v3404
      %3406 = vmax.xlane.f32.xlu0 %v3405
      %v3407 = vpop.xlane.xlu0 %3406
      %v3408 = vsel %vm2519, %v3349, -inf
      %v3409 = vmax.f32 %v3348, %v3408
      %3410 = vmax.xlane.f32.xlu0 %v3409
      %v3411 = vpop.xlane.xlu0 %3410
      %v3412 = vsel %vm2519, %v3351, -inf
      %v3413 = vmax.f32 %v3350, %v3412
      %3414 = vmax.xlane.f32.xlu0 %v3413
      %v3415 = vpop.xlane.xlu0 %3414
      %v3416 = vsel %vm2519, %v3353, -inf
      %v3417 = vmax.f32 %v3352, %v3416
      %3418 = vmax.xlane.f32.xlu0 %v3417
      %v3419 = vpop.xlane.xlu0 %3418
      %v3420 = vsel %vm2519, %v3355, -inf
      %v3421 = vmax.f32 %v3354, %v3420
      %3422 = vmax.xlane.f32.xlu0 %v3421
      %v3423 = vpop.xlane.xlu0 %3422
      %v3424 = vsel %vm2519, %v3357, -inf
      %v3425 = vmax.f32 %v3356, %v3424
      %3426 = vmax.xlane.f32.xlu0 %v3425
      %v3427 = vpop.xlane.xlu0 %3426
      %v3428 = vsel %vm2519, %v3359, -inf
      %v3429 = vmax.f32 %v3358, %v3428
      %3430 = vmax.xlane.f32.xlu0 %v3429
      %v3431 = vpop.xlane.xlu0 %3430
      %v3432 = vsel %vm2519, %v3361, -inf
      %v3433 = vmax.f32 %v3360, %v3432
      %3434 = vmax.xlane.f32.xlu0 %v3433
      %v3435 = vpop.xlane.xlu0 %3434
      %v3436 = vsel %vm2519, %v3363, -inf
      %v3437 = vmax.f32 %v3362, %v3436
      %3438 = vmax.xlane.f32.xlu0 %v3437
      %v3439 = vpop.xlane.xlu0 %3438
      %v3440 = vsel %vm2519, %v3365, -inf
      %v3441 = vmax.f32 %v3364, %v3440
      %3442 = vmax.xlane.f32.xlu0 %v3441
      %v3443 = vpop.xlane.xlu0 %3442
      %v3444 = vsel %vm2519, %v3367, -inf
      %v3445 = vmax.f32 %v3366, %v3444
      %3446 = vmax.xlane.f32.xlu0 %v3445
      %v3447 = vpop.xlane.xlu0 %3446
      %v3448 = vsel %vm2519, %v3369, -inf
      %v3449 = vmax.f32 %v3368, %v3448
      %3450 = vmax.xlane.f32.xlu0 %v3449
      %v3451 = vpop.xlane.xlu0 %3450
      %v3452 = vsel %vm2519, %v3371, -inf
      %v3453 = vmax.f32 %v3370, %v3452
      %3454 = vmax.xlane.f32.xlu0 %v3453
      %v3455 = vpop.xlane.xlu0 %3454
      %v3456 = vsel %vm2519, %v3373, -inf
      %v3457 = vmax.f32 %v3372, %v3456
      %3458 = vmax.xlane.f32.xlu0 %v3457
      %v3459 = vpop.xlane.xlu0 %3458
      %v3460 = vsel %vm2519, %v3375, -inf
      %v3461 = vmax.f32 %v3374, %v3460
      %3462 = vmax.xlane.f32.xlu0 %v3461
      %v3463 = vpop.xlane.xlu0 %3462
      %v3464 = vsel %vm2519, %v3377, -inf
      %v3465 = vmax.f32 %v3376, %v3464
      %3466 = vmax.xlane.f32.xlu0 %v3465
      %v3467 = vpop.xlane.xlu0 %3466
      %v3468 = vsel %vm2519, %v3379, -inf
      %v3469 = vmax.f32 %v3378, %v3468
      %3470 = vmax.xlane.f32.xlu0 %v3469
      %v3471 = vpop.xlane.xlu0 %3470
      %v3472 = vsel %vm2519, %v3381, -inf
      %v3473 = vmax.f32 %v3380, %v3472
      %3474 = vmax.xlane.f32.xlu0 %v3473
      %v3475 = vpop.xlane.xlu0 %3474
      %v3476 = vsel %vm2519, %v3383, -inf
      %v3477 = vmax.f32 %v3382, %v3476
      %3478 = vmax.xlane.f32.xlu0 %v3477
      %v3479 = vpop.xlane.xlu0 %3478
      %v3480 = vsel %vm2519, %v3385, -inf
      %v3481 = vmax.f32 %v3384, %v3480
      %3482 = vmax.xlane.f32.xlu0 %v3481
      %v3483 = vpop.xlane.xlu0 %3482
      %v3484 = vsel %vm2616, %v3386, -inf
      %v3485 = vsel %vm2618, %v3387, -inf
      %v3486 = vmax.f32 %v3484, %v3485
      %3487 = vmax.xlane.f32.xlu0 %v3486
      %v3488 = vpop.xlane.xlu0 %3487
      %vm3489 = vcmp.eq.f32.partialorder %v3338, %v3391
      %vm3490 = vcmp.eq.f32.partialorder %v3339, %v3391
      %vm3491 = vcmp.eq.f32.partialorder %v3340, %v3395
      %vm3492 = vcmp.eq.f32.partialorder %v3341, %v3395
      %vm3493 = vcmp.eq.f32.partialorder %v3342, %v3399
      %vm3494 = vcmp.eq.f32.partialorder %v3343, %v3399
      %vm3495 = vcmp.eq.f32.partialorder %v3344, %v3403
      %vm3496 = vcmp.eq.f32.partialorder %v3345, %v3403
      %vm3497 = vcmp.eq.f32.partialorder %v3346, %v3407
      %vm3498 = vcmp.eq.f32.partialorder %v3347, %v3407
      %vm3499 = vcmp.eq.f32.partialorder %v3348, %v3411
      %vm3500 = vcmp.eq.f32.partialorder %v3349, %v3411
      %vm3501 = vcmp.eq.f32.partialorder %v3350, %v3415
      %vm3502 = vcmp.eq.f32.partialorder %v3351, %v3415
      %vm3503 = vcmp.eq.f32.partialorder %v3352, %v3419
      %vm3504 = vcmp.eq.f32.partialorder %v3353, %v3419
      %vm3505 = vcmp.eq.f32.partialorder %v3354, %v3423
      %vm3506 = vcmp.eq.f32.partialorder %v3355, %v3423
      %vm3507 = vcmp.eq.f32.partialorder %v3356, %v3427
      %vm3508 = vcmp.eq.f32.partialorder %v3357, %v3427
      %vm3509 = vcmp.eq.f32.partialorder %v3358, %v3431
      %vm3510 = vcmp.eq.f32.partialorder %v3359, %v3431
      %vm3511 = vcmp.eq.f32.partialorder %v3360, %v3435
      %vm3512 = vcmp.eq.f32.partialorder %v3361, %v3435
      %vm3513 = vcmp.eq.f32.partialorder %v3362, %v3439
      %vm3514 = vcmp.eq.f32.partialorder %v3363, %v3439
      %vm3515 = vcmp.eq.f32.partialorder %v3364, %v3443
      %vm3516 = vcmp.eq.f32.partialorder %v3365, %v3443
      %vm3517 = vcmp.eq.f32.partialorder %v3366, %v3447
      %vm3518 = vcmp.eq.f32.partialorder %v3367, %v3447
      %vm3519 = vcmp.eq.f32.partialorder %v3368, %v3451
      %vm3520 = vcmp.eq.f32.partialorder %v3369, %v3451
      %vm3521 = vcmp.eq.f32.partialorder %v3370, %v3455
      %vm3522 = vcmp.eq.f32.partialorder %v3371, %v3455
      %vm3523 = vcmp.eq.f32.partialorder %v3372, %v3459
      %vm3524 = vcmp.eq.f32.partialorder %v3373, %v3459
      %vm3525 = vcmp.eq.f32.partialorder %v3374, %v3463
      %vm3526 = vcmp.eq.f32.partialorder %v3375, %v3463
      %vm3527 = vcmp.eq.f32.partialorder %v3376, %v3467
      %vm3528 = vcmp.eq.f32.partialorder %v3377, %v3467
      %vm3529 = vcmp.eq.f32.partialorder %v3378, %v3471
      %vm3530 = vcmp.eq.f32.partialorder %v3379, %v3471
      %vm3531 = vcmp.eq.f32.partialorder %v3380, %v3475
      %vm3532 = vcmp.eq.f32.partialorder %v3381, %v3475
      %vm3533 = vcmp.eq.f32.partialorder %v3382, %v3479
      %vm3534 = vcmp.eq.f32.partialorder %v3383, %v3479
      %vm3535 = vcmp.eq.f32.partialorder %v3384, %v3483
      %vm3536 = vcmp.eq.f32.partialorder %v3385, %v3483
      %vm3537 = vcmp.eq.f32.partialorder %v3386, %v3488
      %vm3538 = vcmp.eq.f32.partialorder %v3387, %v3488
      %v3539 = vsel %vm3489, %v1613, 196.0
      %v3540 = vsel %vm3490, %v1614, 196.0
      %v3541 = vsel %vm3491, %v1613, 196.0
      %v3542 = vsel %vm3492, %v1614, 196.0
      %v3543 = vsel %vm3493, %v1613, 196.0
      %v3544 = vsel %vm3494, %v1614, 196.0
      %v3545 = vsel %vm3495, %v1613, 196.0
      %v3546 = vsel %vm3496, %v1614, 196.0
      %v3547 = vsel %vm3497, %v1613, 196.0
      %v3548 = vsel %vm3498, %v1614, 196.0
      %v3549 = vsel %vm3499, %v1613, 196.0
      %v3550 = vsel %vm3500, %v1614, 196.0
      %v3551 = vsel %vm3501, %v1613, 196.0
      %v3552 = vsel %vm3502, %v1614, 196.0
      %v3553 = vsel %vm3503, %v1613, 196.0
      %v3554 = vsel %vm3504, %v1614, 196.0
      %v3555 = vsel %vm3505, %v1613, 196.0
      %v3556 = vsel %vm3506, %v1614, 196.0
      %v3557 = vsel %vm3507, %v1613, 196.0
      %v3558 = vsel %vm3508, %v1614, 196.0
      %v3559 = vsel %vm3509, %v1613, 196.0
      %v3560 = vsel %vm3510, %v1614, 196.0
      %v3561 = vsel %vm3511, %v1613, 196.0
      %v3562 = vsel %vm3512, %v1614, 196.0
      %v3563 = vsel %vm3513, %v1613, 196.0
      %v3564 = vsel %vm3514, %v1614, 196.0
      %v3565 = vsel %vm3515, %v1613, 196.0
      %v3566 = vsel %vm3516, %v1614, 196.0
      %v3567 = vsel %vm3517, %v1613, 196.0
      %v3568 = vsel %vm3518, %v1614, 196.0
      %v3569 = vsel %vm3519, %v1613, 196.0
      %v3570 = vsel %vm3520, %v1614, 196.0
      %v3571 = vsel %vm3521, %v1613, 196.0
      %v3572 = vsel %vm3522, %v1614, 196.0
      %v3573 = vsel %vm3523, %v1613, 196.0
      %v3574 = vsel %vm3524, %v1614, 196.0
      %v3575 = vsel %vm3525, %v1613, 196.0
      %v3576 = vsel %vm3526, %v1614, 196.0
      %v3577 = vsel %vm3527, %v1613, 196.0
      %v3578 = vsel %vm3528, %v1614, 196.0
      %v3579 = vsel %vm3529, %v1613, 196.0
      %v3580 = vsel %vm3530, %v1614, 196.0
      %v3581 = vsel %vm3531, %v1613, 196.0
      %v3582 = vsel %vm3532, %v1614, 196.0
      %v3583 = vsel %vm3533, %v1613, 196.0
      %v3584 = vsel %vm3534, %v1614, 196.0
      %v3585 = vsel %vm3535, %v1613, 196.0
      %v3586 = vsel %vm3536, %v1614, 196.0
      %v3587 = vsel %vm3537, %v1613, 196.0
      %v3588 = vsel %vm3538, %v1614, 196.0
      %v3589 = vsel %vm2519, %v3540, inf
      %v3590 = vmin.f32 %v3539, %v3589
      %3591 = vmin.xlane.f32.xlu0 %v3590
      %v3592 = vpop.xlane.xlu0 %3591
      %v3593 = vsel %vm2519, %v3542, inf
      %v3594 = vmin.f32 %v3541, %v3593
      %3595 = vmin.xlane.f32.xlu0 %v3594
      %v3596 = vpop.xlane.xlu0 %3595
      %v3597 = vsel %vm2519, %v3544, inf
      %v3598 = vmin.f32 %v3543, %v3597
      %3599 = vmin.xlane.f32.xlu0 %v3598
      %v3600 = vpop.xlane.xlu0 %3599
      %v3601 = vsel %vm2519, %v3546, inf
      %v3602 = vmin.f32 %v3545, %v3601
      %3603 = vmin.xlane.f32.xlu0 %v3602
      %v3604 = vpop.xlane.xlu0 %3603
      %v3605 = vsel %vm2519, %v3548, inf
      %v3606 = vmin.f32 %v3547, %v3605
      %3607 = vmin.xlane.f32.xlu0 %v3606
      %v3608 = vpop.xlane.xlu0 %3607
      %v3609 = vsel %vm2519, %v3550, inf
      %v3610 = vmin.f32 %v3549, %v3609
      %3611 = vmin.xlane.f32.xlu0 %v3610
      %v3612 = vpop.xlane.xlu0 %3611
      %v3613 = vsel %vm2519, %v3552, inf
      %v3614 = vmin.f32 %v3551, %v3613
      %3615 = vmin.xlane.f32.xlu0 %v3614
      %v3616 = vpop.xlane.xlu0 %3615
      %v3617 = vsel %vm2519, %v3554, inf
      %v3618 = vmin.f32 %v3553, %v3617
      %3619 = vmin.xlane.f32.xlu0 %v3618
      %v3620 = vpop.xlane.xlu0 %3619
      %v3621 = vsel %vm2519, %v3556, inf
      %v3622 = vmin.f32 %v3555, %v3621
      %3623 = vmin.xlane.f32.xlu0 %v3622
      %v3624 = vpop.xlane.xlu0 %3623
      %v3625 = vsel %vm2519, %v3558, inf
      %v3626 = vmin.f32 %v3557, %v3625
      %3627 = vmin.xlane.f32.xlu0 %v3626
      %v3628 = vpop.xlane.xlu0 %3627
      %v3629 = vsel %vm2519, %v3560, inf
      %v3630 = vmin.f32 %v3559, %v3629
      %3631 = vmin.xlane.f32.xlu0 %v3630
      %v3632 = vpop.xlane.xlu0 %3631
      %v3633 = vsel %vm2519, %v3562, inf
      %v3634 = vmin.f32 %v3561, %v3633
      %3635 = vmin.xlane.f32.xlu0 %v3634
      %v3636 = vpop.xlane.xlu0 %3635
      %v3637 = vsel %vm2519, %v3564, inf
      %v3638 = vmin.f32 %v3563, %v3637
      %3639 = vmin.xlane.f32.xlu0 %v3638
      %v3640 = vpop.xlane.xlu0 %3639
      %v3641 = vsel %vm2519, %v3566, inf
      %v3642 = vmin.f32 %v3565, %v3641
      %3643 = vmin.xlane.f32.xlu0 %v3642
      %v3644 = vpop.xlane.xlu0 %3643
      %v3645 = vsel %vm2519, %v3568, inf
      %v3646 = vmin.f32 %v3567, %v3645
      %3647 = vmin.xlane.f32.xlu0 %v3646
      %v3648 = vpop.xlane.xlu0 %3647
      %v3649 = vsel %vm2519, %v3570, inf
      %v3650 = vmin.f32 %v3569, %v3649
      %3651 = vmin.xlane.f32.xlu0 %v3650
      %v3652 = vpop.xlane.xlu0 %3651
      %v3653 = vsel %vm2519, %v3572, inf
      %v3654 = vmin.f32 %v3571, %v3653
      %3655 = vmin.xlane.f32.xlu0 %v3654
      %v3656 = vpop.xlane.xlu0 %3655
      %v3657 = vsel %vm2519, %v3574, inf
      %v3658 = vmin.f32 %v3573, %v3657
      %3659 = vmin.xlane.f32.xlu0 %v3658
      %v3660 = vpop.xlane.xlu0 %3659
      %v3661 = vsel %vm2519, %v3576, inf
      %v3662 = vmin.f32 %v3575, %v3661
      %3663 = vmin.xlane.f32.xlu0 %v3662
      %v3664 = vpop.xlane.xlu0 %3663
      %v3665 = vsel %vm2519, %v3578, inf
      %v3666 = vmin.f32 %v3577, %v3665
      %3667 = vmin.xlane.f32.xlu0 %v3666
      %v3668 = vpop.xlane.xlu0 %3667
      %v3669 = vsel %vm2519, %v3580, inf
      %v3670 = vmin.f32 %v3579, %v3669
      %3671 = vmin.xlane.f32.xlu0 %v3670
      %v3672 = vpop.xlane.xlu0 %3671
      %v3673 = vsel %vm2519, %v3582, inf
      %v3674 = vmin.f32 %v3581, %v3673
      %3675 = vmin.xlane.f32.xlu0 %v3674
      %v3676 = vpop.xlane.xlu0 %3675
      %v3677 = vsel %vm2519, %v3584, inf
      %v3678 = vmin.f32 %v3583, %v3677
      %3679 = vmin.xlane.f32.xlu0 %v3678
      %v3680 = vpop.xlane.xlu0 %3679
      %v3681 = vsel %vm2519, %v3586, inf
      %v3682 = vmin.f32 %v3585, %v3681
      %3683 = vmin.xlane.f32.xlu0 %v3682
      %v3684 = vpop.xlane.xlu0 %3683
      %v3685 = vsel %vm2616, %v3587, inf
      %v3686 = vsel %vm2618, %v3588, inf
      %v3687 = vmin.f32 %v3685, %v3686
      %3688 = vmin.xlane.f32.xlu0 %v3687
      %v3689 = vpop.xlane.xlu0 %3688
      %vm3690 = vcmp.eq.f32.partialorder %v1613, %v3592
      %vm3691 = vcmp.eq.f32.partialorder %v1614, %v3592
      %vm3692 = vcmp.eq.f32.partialorder %v1613, %v3596
      %vm3693 = vcmp.eq.f32.partialorder %v1614, %v3596
      %vm3694 = vcmp.eq.f32.partialorder %v1613, %v3600
      %vm3695 = vcmp.eq.f32.partialorder %v1614, %v3600
      %vm3696 = vcmp.eq.f32.partialorder %v1613, %v3604
      %vm3697 = vcmp.eq.f32.partialorder %v1614, %v3604
      %vm3698 = vcmp.eq.f32.partialorder %v1613, %v3608
      %vm3699 = vcmp.eq.f32.partialorder %v1614, %v3608
      %vm3700 = vcmp.eq.f32.partialorder %v1613, %v3612
      %vm3701 = vcmp.eq.f32.partialorder %v1614, %v3612
      %vm3702 = vcmp.eq.f32.partialorder %v1613, %v3616
      %vm3703 = vcmp.eq.f32.partialorder %v1614, %v3616
      %vm3704 = vcmp.eq.f32.partialorder %v1613, %v3620
      %vm3705 = vcmp.eq.f32.partialorder %v1614, %v3620
      %vm3706 = vcmp.eq.f32.partialorder %v1613, %v3624
      %vm3707 = vcmp.eq.f32.partialorder %v1614, %v3624
      %vm3708 = vcmp.eq.f32.partialorder %v1613, %v3628
      %vm3709 = vcmp.eq.f32.partialorder %v1614, %v3628
      %vm3710 = vcmp.eq.f32.partialorder %v1613, %v3632
      %vm3711 = vcmp.eq.f32.partialorder %v1614, %v3632
      %vm3712 = vcmp.eq.f32.partialorder %v1613, %v3636
      %vm3713 = vcmp.eq.f32.partialorder %v1614, %v3636
      %vm3714 = vcmp.eq.f32.partialorder %v1613, %v3640
      %vm3715 = vcmp.eq.f32.partialorder %v1614, %v3640
      %vm3716 = vcmp.eq.f32.partialorder %v1613, %v3644
      %vm3717 = vcmp.eq.f32.partialorder %v1614, %v3644
      %vm3718 = vcmp.eq.f32.partialorder %v1613, %v3648
      %vm3719 = vcmp.eq.f32.partialorder %v1614, %v3648
      %vm3720 = vcmp.eq.f32.partialorder %v1613, %v3652
      %vm3721 = vcmp.eq.f32.partialorder %v1614, %v3652
      %vm3722 = vcmp.eq.f32.partialorder %v1613, %v3656
      %vm3723 = vcmp.eq.f32.partialorder %v1614, %v3656
      %vm3724 = vcmp.eq.f32.partialorder %v1613, %v3660
      %vm3725 = vcmp.eq.f32.partialorder %v1614, %v3660
      %vm3726 = vcmp.eq.f32.partialorder %v1613, %v3664
      %vm3727 = vcmp.eq.f32.partialorder %v1614, %v3664
      %vm3728 = vcmp.eq.f32.partialorder %v1613, %v3668
      %vm3729 = vcmp.eq.f32.partialorder %v1614, %v3668
      %vm3730 = vcmp.eq.f32.partialorder %v1613, %v3672
      %vm3731 = vcmp.eq.f32.partialorder %v1614, %v3672
      %vm3732 = vcmp.eq.f32.partialorder %v1613, %v3676
      %vm3733 = vcmp.eq.f32.partialorder %v1614, %v3676
      %vm3734 = vcmp.eq.f32.partialorder %v1613, %v3680
      %vm3735 = vcmp.eq.f32.partialorder %v1614, %v3680
      %vm3736 = vcmp.eq.f32.partialorder %v1613, %v3684
      %vm3737 = vcmp.eq.f32.partialorder %v1614, %v3684
      %vm3738 = vcmp.eq.f32.partialorder %v1613, %v3689
      %vm3739 = vcmp.eq.f32.partialorder %v1614, %v3689
      %v3740 = vsel %vm3690, 1, 0
      %v3741 = vsel %vm3691, 1, 0
      %v3742 = vsel %vm3692, 1, 0
      %v3743 = vsel %vm3693, 1, 0
      %v3744 = vsel %vm3694, 1, 0
      %v3745 = vsel %vm3695, 1, 0
      %v3746 = vsel %vm3696, 1, 0
      %v3747 = vsel %vm3697, 1, 0
      %v3748 = vsel %vm3698, 1, 0
      %v3749 = vsel %vm3699, 1, 0
      %v3750 = vsel %vm3700, 1, 0
      %v3751 = vsel %vm3701, 1, 0
      %v3752 = vsel %vm3702, 1, 0
      %v3753 = vsel %vm3703, 1, 0
      %v3754 = vsel %vm3704, 1, 0
      %v3755 = vsel %vm3705, 1, 0
      %v3756 = vsel %vm3706, 1, 0
      %v3757 = vsel %vm3707, 1, 0
      %v3758 = vsel %vm3708, 1, 0
      %v3759 = vsel %vm3709, 1, 0
      %v3760 = vsel %vm3710, 1, 0
      %v3761 = vsel %vm3711, 1, 0
      %v3762 = vsel %vm3712, 1, 0
      %v3763 = vsel %vm3713, 1, 0
      %v3764 = vsel %vm3714, 1, 0
      %v3765 = vsel %vm3715, 1, 0
      %v3766 = vsel %vm3716, 1, 0
      %v3767 = vsel %vm3717, 1, 0
      %v3768 = vsel %vm3718, 1, 0
      %v3769 = vsel %vm3719, 1, 0
      %v3770 = vsel %vm3720, 1, 0
      %v3771 = vsel %vm3721, 1, 0
      %v3772 = vsel %vm3722, 1, 0
      %v3773 = vsel %vm3723, 1, 0
      %v3774 = vsel %vm3724, 1, 0
      %v3775 = vsel %vm3725, 1, 0
      %v3776 = vsel %vm3726, 1, 0
      %v3777 = vsel %vm3727, 1, 0
      %v3778 = vsel %vm3728, 1, 0
      %v3779 = vsel %vm3729, 1, 0
      %v3780 = vsel %vm3730, 1, 0
      %v3781 = vsel %vm3731, 1, 0
      %v3782 = vsel %vm3732, 1, 0
      %v3783 = vsel %vm3733, 1, 0
      %v3784 = vsel %vm3734, 1, 0
      %v3785 = vsel %vm3735, 1, 0
      %v3786 = vsel %vm3736, 1, 0
      %v3787 = vsel %vm3737, 1, 0
      %v3788 = vsel %vm3738, 1, 0
      %v3789 = vsel %vm3739, 1, 0
      %v3790 = vcvt.s32.f32 %v3740
      %v3791 = vcvt.s32.f32 %v3741
      %v3792 = vcvt.s32.f32 %v3742
      %v3793 = vcvt.s32.f32 %v3743
      %v3794 = vcvt.s32.f32 %v3744
      %v3795 = vcvt.s32.f32 %v3745
      %v3796 = vcvt.s32.f32 %v3746
      %v3797 = vcvt.s32.f32 %v3747
      %v3798 = vcvt.s32.f32 %v3748
      %v3799 = vcvt.s32.f32 %v3749
      %v3800 = vcvt.s32.f32 %v3750
      %v3801 = vcvt.s32.f32 %v3751
      %v3802 = vcvt.s32.f32 %v3752
      %v3803 = vcvt.s32.f32 %v3753
      %v3804 = vcvt.s32.f32 %v3754
      %v3805 = vcvt.s32.f32 %v3755
      %v3806 = vcvt.s32.f32 %v3756
      %v3807 = vcvt.s32.f32 %v3757
      %v3808 = vcvt.s32.f32 %v3758
      %v3809 = vcvt.s32.f32 %v3759
      %v3810 = vcvt.s32.f32 %v3760
      %v3811 = vcvt.s32.f32 %v3761
      %v3812 = vcvt.s32.f32 %v3762
      %v3813 = vcvt.s32.f32 %v3763
      %v3814 = vcvt.s32.f32 %v3764
      %v3815 = vcvt.s32.f32 %v3765
      %v3816 = vcvt.s32.f32 %v3766
      %v3817 = vcvt.s32.f32 %v3767
      %v3818 = vcvt.s32.f32 %v3768
      %v3819 = vcvt.s32.f32 %v3769
      %v3820 = vcvt.s32.f32 %v3770
      %v3821 = vcvt.s32.f32 %v3771
      %v3822 = vcvt.s32.f32 %v3772
      %v3823 = vcvt.s32.f32 %v3773
      %v3824 = vcvt.s32.f32 %v3774
      %v3825 = vcvt.s32.f32 %v3775
      %v3826 = vcvt.s32.f32 %v3776
      %v3827 = vcvt.s32.f32 %v3777
      %v3828 = vcvt.s32.f32 %v3778
      %v3829 = vcvt.s32.f32 %v3779
      %v3830 = vcvt.s32.f32 %v3780
      %v3831 = vcvt.s32.f32 %v3781
      %v3832 = vcvt.s32.f32 %v3782
      %v3833 = vcvt.s32.f32 %v3783
      %v3834 = vcvt.s32.f32 %v3784
      %v3835 = vcvt.s32.f32 %v3785
      %v3836 = vcvt.s32.f32 %v3786
      %v3837 = vcvt.s32.f32 %v3787
      %v3838 = vcvt.s32.f32 %v3788
      %v3839 = vcvt.s32.f32 %v3789
      %v3840 = vpack.c.bf16 %v3792, %v3790
      %v3841 = vpack.c.bf16 %v3793, %v3791
      %v3842 = vpack.c.bf16 %v3796, %v3794
      %v3843 = vpack.c.bf16 %v3797, %v3795
      %v3844 = vpack.c.bf16 %v3800, %v3798
      %v3845 = vpack.c.bf16 %v3801, %v3799
      %v3846 = vpack.c.bf16 %v3804, %v3802
      %v3847 = vpack.c.bf16 %v3805, %v3803
      %v3848 = vpack.c.bf16 %v3808, %v3806
      %v3849 = vpack.c.bf16 %v3809, %v3807
      %v3850 = vpack.c.bf16 %v3812, %v3810
      %v3851 = vpack.c.bf16 %v3813, %v3811
      %v3852 = vpack.c.bf16 %v3816, %v3814
      %v3853 = vpack.c.bf16 %v3817, %v3815
      %v3854 = vpack.c.bf16 %v3820, %v3818
      %v3855 = vpack.c.bf16 %v3821, %v3819
      %v3856 = vpack.c.bf16 %v3824, %v3822
      %v3857 = vpack.c.bf16 %v3825, %v3823
      %v3858 = vpack.c.bf16 %v3828, %v3826
      %v3859 = vpack.c.bf16 %v3829, %v3827
      %v3860 = vpack.c.bf16 %v3832, %v3830
      %v3861 = vpack.c.bf16 %v3833, %v3831
      %v3862 = vpack.c.bf16 %v3836, %v3834
      %v3863 = vpack.c.bf16 %v3837, %v3835
      %v3864 = vpack.c.bf16 %v3838, %v3838
      %v3865 = vpack.c.bf16 %v3839, %v3839
      %v3867 = vsel %vm2519, %v3841, 0
      %v3870 = vsel %vm2519, %v3843, 0
      %v3873 = vsel %vm2519, %v3845, 0
      %v3876 = vsel %vm2519, %v3847, 0
      %v3879 = vsel %vm2519, %v3849, 0
      %v3882 = vsel %vm2519, %v3851, 0
      %v3885 = vsel %vm2519, %v3853, 0
      %v3888 = vsel %vm2519, %v3855, 0
      %v3891 = vsel %vm2519, %v3857, 0
      %v3894 = vsel %vm2519, %v3859, 0
      %v3897 = vsel %vm2519, %v3861, 0
      %v3900 = vsel %vm2519, %v3863, 0
      %v3903 = vsel %vm2519, %v3865, 0
      %3905 = vmatpush.bf16.msra.mxu0 %v2507
      %3906 = vmatpush.bf16.msra.mxu0 %v2505
      %3907 = vmatpush.bf16.msra.mxu0 %v2503
      %3908 = vmatpush.bf16.msra.mxu0 %v2501
      %3909 = vmatpush.bf16.msra.mxu0 %v2499
      %3910 = vmatpush.bf16.msra.mxu0 %v2497
      %3911 = vmatpush.bf16.msra.mxu0 %v2495
      %3912 = vmatpush.bf16.msra.mxu0 %v2493
      %3913 = vmatmul.bf16.gmra.mxu0 %v3840
      %v3914 = vpop.f32.mrf.mxu0
      %v3915 = vadd.f32 0.0, %v3914
      %v3916 = vpop.f32.mrf.mxu0
      %v3917 = vadd.f32 0.0, %v3916
      %3918 = vmatmul.bf16.gmra.mxu0 %v3842
      %v3919 = vpop.f32.mrf.mxu0
      %v3920 = vadd.f32 0.0, %v3919
      %v3921 = vpop.f32.mrf.mxu0
      %v3922 = vadd.f32 0.0, %v3921
      %3923 = vmatmul.bf16.gmra.mxu0 %v3844
      %v3924 = vpop.f32.mrf.mxu0
      %v3925 = vadd.f32 0.0, %v3924
      %v3926 = vpop.f32.mrf.mxu0
      %v3927 = vadd.f32 0.0, %v3926
      %3928 = vmatmul.bf16.gmra.mxu0 %v3846
      %v3929 = vpop.f32.mrf.mxu0
      %v3930 = vadd.f32 0.0, %v3929
      %v3931 = vpop.f32.mrf.mxu0
      %v3932 = vadd.f32 0.0, %v3931
      %3933 = vmatmul.bf16.gmra.mxu0 %v3848
      %v3934 = vpop.f32.mrf.mxu0
      %v3935 = vadd.f32 0.0, %v3934
      %v3936 = vpop.f32.mrf.mxu0
      %v3937 = vadd.f32 0.0, %v3936
      %3938 = vmatmul.bf16.gmra.mxu0 %v3850
      %v3939 = vpop.f32.mrf.mxu0
      %v3940 = vadd.f32 0.0, %v3939
      %v3941 = vpop.f32.mrf.mxu0
      %v3942 = vadd.f32 0.0, %v3941
      %3943 = vmatmul.bf16.gmra.mxu0 %v3852
      %v3944 = vpop.f32.mrf.mxu0
      %v3945 = vadd.f32 0.0, %v3944
      %v3946 = vpop.f32.mrf.mxu0
      %v3947 = vadd.f32 0.0, %v3946
      %3948 = vmatmul.bf16.gmra.mxu0 %v3854
      %v3949 = vpop.f32.mrf.mxu0
      %v3950 = vadd.f32 0.0, %v3949
      %v3951 = vpop.f32.mrf.mxu0
      %v3952 = vadd.f32 0.0, %v3951
      %3953 = vmatmul.bf16.gmra.mxu0 %v3856
      %v3954 = vpop.f32.mrf.mxu0
      %v3955 = vadd.f32 0.0, %v3954
      %v3956 = vpop.f32.mrf.mxu0
      %v3957 = vadd.f32 0.0, %v3956
      %3958 = vmatmul.bf16.gmra.mxu0 %v3858
      %v3959 = vpop.f32.mrf.mxu0
      %v3960 = vadd.f32 0.0, %v3959
      %v3961 = vpop.f32.mrf.mxu0
      %v3962 = vadd.f32 0.0, %v3961
      %3963 = vmatmul.bf16.gmra.mxu0 %v3860
      %v3964 = vpop.f32.mrf.mxu0
      %v3965 = vadd.f32 0.0, %v3964
      %v3966 = vpop.f32.mrf.mxu0
      %v3967 = vadd.f32 0.0, %v3966
      %3968 = vmatmul.bf16.gmra.mxu0 %v3862
      %v3969 = vpop.f32.mrf.mxu0
      %v3970 = vadd.f32 0.0, %v3969
      %v3971 = vpop.f32.mrf.mxu0
      %v3972 = vadd.f32 0.0, %v3971
      %3973 = vmatmul.bf16.gmra.mxu0 %v3864
      %v3974 = vpop.f32.mrf.mxu0
      %v3975 = vadd.f32 0.0, %v3974
      %v3976 = vpop.f32.mrf.mxu0
      %3977 = vdwg.mxu0
      %3978 = vmatpush.bf16.msra.mxu0 0
      %3979 = vmatpush.bf16.msra.mxu0 0
      %3980 = vmatpush.bf16.msra.mxu0 0
      %3981 = vmatpush.bf16.msra.mxu0 %v3041
      %3982 = vmatpush.bf16.msra.mxu0 %v2515
      %3983 = vmatpush.bf16.msra.mxu0 %v2513
      %3984 = vmatpush.bf16.msra.mxu0 %v2511
      %3985 = vmatpush.bf16.msra.mxu0 %v2509
      %3986 = vmatmul.bf16.gmra.mxu0 %v3867
      %v3987 = vpop.f32.mrf.mxu0
      %v3988 = vadd.f32 %v3915, %v3987
      %v3989 = vpop.f32.mrf.mxu0
      %v3990 = vadd.f32 %v3917, %v3989
      %3991 = vmatmul.bf16.gmra.mxu0 %v3870
      %v3992 = vpop.f32.mrf.mxu0
      %v3993 = vadd.f32 %v3920, %v3992
      %v3994 = vpop.f32.mrf.mxu0
      %v3995 = vadd.f32 %v3922, %v3994
      %3996 = vmatmul.bf16.gmra.mxu0 %v3873
      %v3997 = vpop.f32.mrf.mxu0
      %v3998 = vadd.f32 %v3925, %v3997
      %v3999 = vpop.f32.mrf.mxu0
      %v4000 = vadd.f32 %v3927, %v3999
      %4001 = vmatmul.bf16.gmra.mxu0 %v3876
      %v4002 = vpop.f32.mrf.mxu0
      %v4003 = vadd.f32 %v3930, %v4002
      %v4004 = vpop.f32.mrf.mxu0
      %v4005 = vadd.f32 %v3932, %v4004
      %4006 = vmatmul.bf16.gmra.mxu0 %v3879
      %v4007 = vpop.f32.mrf.mxu0
      %v4008 = vadd.f32 %v3935, %v4007
      %v4009 = vpop.f32.mrf.mxu0
      %v4010 = vadd.f32 %v3937, %v4009
      %4011 = vmatmul.bf16.gmra.mxu0 %v3882
      %v4012 = vpop.f32.mrf.mxu0
      %v4013 = vadd.f32 %v3940, %v4012
      %v4014 = vpop.f32.mrf.mxu0
      %v4015 = vadd.f32 %v3942, %v4014
      %4016 = vmatmul.bf16.gmra.mxu0 %v3885
      %v4017 = vpop.f32.mrf.mxu0
      %v4018 = vadd.f32 %v3945, %v4017
      %v4019 = vpop.f32.mrf.mxu0
      %v4020 = vadd.f32 %v3947, %v4019
      %4021 = vmatmul.bf16.gmra.mxu0 %v3888
      %v4022 = vpop.f32.mrf.mxu0
      %v4023 = vadd.f32 %v3950, %v4022
      %v4024 = vpop.f32.mrf.mxu0
      %v4025 = vadd.f32 %v3952, %v4024
      %4026 = vmatmul.bf16.gmra.mxu0 %v3891
      %v4027 = vpop.f32.mrf.mxu0
      %v4028 = vadd.f32 %v3955, %v4027
      %v4029 = vpop.f32.mrf.mxu0
      %v4030 = vadd.f32 %v3957, %v4029
      %4031 = vmatmul.bf16.gmra.mxu0 %v3894
      %v4032 = vpop.f32.mrf.mxu0
      %v4033 = vadd.f32 %v3960, %v4032
      %v4034 = vpop.f32.mrf.mxu0
      %v4035 = vadd.f32 %v3962, %v4034
      %4036 = vmatmul.bf16.gmra.mxu0 %v3897
      %v4037 = vpop.f32.mrf.mxu0
      %v4038 = vadd.f32 %v3965, %v4037
      %v4039 = vpop.f32.mrf.mxu0
      %v4040 = vadd.f32 %v3967, %v4039
      %4041 = vmatmul.bf16.gmra.mxu0 %v3900
      %v4042 = vpop.f32.mrf.mxu0
      %v4043 = vadd.f32 %v3970, %v4042
      %v4044 = vpop.f32.mrf.mxu0
      %v4045 = vadd.f32 %v3972, %v4044
      %4046 = vmatmul.bf16.gmra.mxu0 %v3903
      %v4047 = vpop.f32.mrf.mxu0
      %v4048 = vadd.f32 %v3975, %v4047
      %v4049 = vpop.f32.mrf.mxu0
      %4050 = vdwg.mxu0
      %4051 = vmatpush.bf16.msra.mxu0 %v2508
      %4052 = vmatpush.bf16.msra.mxu0 %v2506
      %4053 = vmatpush.bf16.msra.mxu0 %v2504
      %4054 = vmatpush.bf16.msra.mxu0 %v2502
      %4055 = vmatpush.bf16.msra.mxu0 %v2500
      %4056 = vmatpush.bf16.msra.mxu0 %v2498
      %4057 = vmatpush.bf16.msra.mxu0 %v2496
      %4058 = vmatpush.bf16.msra.mxu0 %v2494
      %4059 = vmatmul.bf16.gmra.mxu0 %v3840
      %v4060 = vpop.f32.mrf.mxu0
      %v4061 = vadd.f32 0.0, %v4060
      %v4062 = vpop.f32.mrf.mxu0
      %v4063 = vadd.f32 0.0, %v4062
      %4064 = vmatmul.bf16.gmra.mxu0 %v3842
      %v4065 = vpop.f32.mrf.mxu0
      %v4066 = vadd.f32 0.0, %v4065
      %v4067 = vpop.f32.mrf.mxu0
      %v4068 = vadd.f32 0.0, %v4067
      %4069 = vmatmul.bf16.gmra.mxu0 %v3844
      %v4070 = vpop.f32.mrf.mxu0
      %v4071 = vadd.f32 0.0, %v4070
      %v4072 = vpop.f32.mrf.mxu0
      %v4073 = vadd.f32 0.0, %v4072
      %4074 = vmatmul.bf16.gmra.mxu0 %v3846
      %v4075 = vpop.f32.mrf.mxu0
      %v4076 = vadd.f32 0.0, %v4075
      %v4077 = vpop.f32.mrf.mxu0
      %v4078 = vadd.f32 0.0, %v4077
      %4079 = vmatmul.bf16.gmra.mxu0 %v3848
      %v4080 = vpop.f32.mrf.mxu0
      %v4081 = vadd.f32 0.0, %v4080
      %v4082 = vpop.f32.mrf.mxu0
      %v4083 = vadd.f32 0.0, %v4082
      %4084 = vmatmul.bf16.gmra.mxu0 %v3850
      %v4085 = vpop.f32.mrf.mxu0
      %v4086 = vadd.f32 0.0, %v4085
      %v4087 = vpop.f32.mrf.mxu0
      %v4088 = vadd.f32 0.0, %v4087
      %4089 = vmatmul.bf16.gmra.mxu0 %v3852
      %v4090 = vpop.f32.mrf.mxu0
      %v4091 = vadd.f32 0.0, %v4090
      %v4092 = vpop.f32.mrf.mxu0
      %v4093 = vadd.f32 0.0, %v4092
      %4094 = vmatmul.bf16.gmra.mxu0 %v3854
      %v4095 = vpop.f32.mrf.mxu0
      %v4096 = vadd.f32 0.0, %v4095
      %v4097 = vpop.f32.mrf.mxu0
      %v4098 = vadd.f32 0.0, %v4097
      %4099 = vmatmul.bf16.gmra.mxu0 %v3856
      %v4100 = vpop.f32.mrf.mxu0
      %v4101 = vadd.f32 0.0, %v4100
      %v4102 = vpop.f32.mrf.mxu0
      %v4103 = vadd.f32 0.0, %v4102
      %4104 = vmatmul.bf16.gmra.mxu0 %v3858
      %v4105 = vpop.f32.mrf.mxu0
      %v4106 = vadd.f32 0.0, %v4105
      %v4107 = vpop.f32.mrf.mxu0
      %v4108 = vadd.f32 0.0, %v4107
      %4109 = vmatmul.bf16.gmra.mxu0 %v3860
      %v4110 = vpop.f32.mrf.mxu0
      %v4111 = vadd.f32 0.0, %v4110
      %v4112 = vpop.f32.mrf.mxu0
      %v4113 = vadd.f32 0.0, %v4112
      %4114 = vmatmul.bf16.gmra.mxu0 %v3862
      %v4115 = vpop.f32.mrf.mxu0
      %v4116 = vadd.f32 0.0, %v4115
      %v4117 = vpop.f32.mrf.mxu0
      %v4118 = vadd.f32 0.0, %v4117
      %4119 = vmatmul.bf16.gmra.mxu0 %v3864
      %v4120 = vpop.f32.mrf.mxu0
      %v4121 = vadd.f32 0.0, %v4120
      %v4122 = vpop.f32.mrf.mxu0
      %4123 = vdwg.mxu0
      %4124 = vmatpush.bf16.msra.mxu0 0
      %4125 = vmatpush.bf16.msra.mxu0 0
      %4126 = vmatpush.bf16.msra.mxu0 0
      %4127 = vmatpush.bf16.msra.mxu0 %v3044
      %4128 = vmatpush.bf16.msra.mxu0 %v2516
      %4129 = vmatpush.bf16.msra.mxu0 %v2514
      %4130 = vmatpush.bf16.msra.mxu0 %v2512
      %4131 = vmatpush.bf16.msra.mxu0 %v2510
      %4132 = vmatmul.bf16.gmra.mxu0 %v3867
      %v4133 = vpop.f32.mrf.mxu0
      %v4134 = vadd.f32 %v4061, %v4133
      %v4135 = vpop.f32.mrf.mxu0
      %v4136 = vadd.f32 %v4063, %v4135
      %4137 = vmatmul.bf16.gmra.mxu0 %v3870
      %v4138 = vpop.f32.mrf.mxu0
      %v4139 = vadd.f32 %v4066, %v4138
      %v4140 = vpop.f32.mrf.mxu0
      %v4141 = vadd.f32 %v4068, %v4140
      %4142 = vmatmul.bf16.gmra.mxu0 %v3873
      %v4143 = vpop.f32.mrf.mxu0
      %v4144 = vadd.f32 %v4071, %v4143
      %v4145 = vpop.f32.mrf.mxu0
      %v4146 = vadd.f32 %v4073, %v4145
      %4147 = vmatmul.bf16.gmra.mxu0 %v3876
      %v4148 = vpop.f32.mrf.mxu0
      %v4149 = vadd.f32 %v4076, %v4148
      %v4150 = vpop.f32.mrf.mxu0
      %v4151 = vadd.f32 %v4078, %v4150
      %4152 = vmatmul.bf16.gmra.mxu0 %v3879
      %v4153 = vpop.f32.mrf.mxu0
      %v4154 = vadd.f32 %v4081, %v4153
      %v4155 = vpop.f32.mrf.mxu0
      %v4156 = vadd.f32 %v4083, %v4155
      %4157 = vmatmul.bf16.gmra.mxu0 %v3882
      %v4158 = vpop.f32.mrf.mxu0
      %v4159 = vadd.f32 %v4086, %v4158
      %v4160 = vpop.f32.mrf.mxu0
      %v4161 = vadd.f32 %v4088, %v4160
      %4162 = vmatmul.bf16.gmra.mxu0 %v3885
      %v4163 = vpop.f32.mrf.mxu0
      %v4164 = vadd.f32 %v4091, %v4163
      %v4165 = vpop.f32.mrf.mxu0
      %v4166 = vadd.f32 %v4093, %v4165
      %4167 = vmatmul.bf16.gmra.mxu0 %v3888
      %v4168 = vpop.f32.mrf.mxu0
      %v4169 = vadd.f32 %v4096, %v4168
      %v4170 = vpop.f32.mrf.mxu0
      %v4171 = vadd.f32 %v4098, %v4170
      %4172 = vmatmul.bf16.gmra.mxu0 %v3891
      %v4173 = vpop.f32.mrf.mxu0
      %v4174 = vadd.f32 %v4101, %v4173
      %v4175 = vpop.f32.mrf.mxu0
      %v4176 = vadd.f32 %v4103, %v4175
      %4177 = vmatmul.bf16.gmra.mxu0 %v3894
      %v4178 = vpop.f32.mrf.mxu0
      %v4179 = vadd.f32 %v4106, %v4178
      %v4180 = vpop.f32.mrf.mxu0
      %v4181 = vadd.f32 %v4108, %v4180
      %4182 = vmatmul.bf16.gmra.mxu0 %v3897
      %v4183 = vpop.f32.mrf.mxu0
      %v4184 = vadd.f32 %v4111, %v4183
      %v4185 = vpop.f32.mrf.mxu0
      %v4186 = vadd.f32 %v4113, %v4185
      %4187 = vmatmul.bf16.gmra.mxu0 %v3900
      %v4188 = vpop.f32.mrf.mxu0
      %v4189 = vadd.f32 %v4116, %v4188
      %v4190 = vpop.f32.mrf.mxu0
      %v4191 = vadd.f32 %v4118, %v4190
      %4192 = vmatmul.bf16.gmra.mxu0 %v3903
      %v4193 = vpop.f32.mrf.mxu0
      %v4194 = vadd.f32 %v4121, %v4193
      %v4195 = vpop.f32.mrf.mxu0
      %4196 = vdwg.mxu0
      %v4197 = vmax.f32 %v3129, %v3988
      %v4198 = vmax.f32 %v3275, %v4134
      %v4199 = vmax.f32 %v3131, %v3990
      %v4200 = vmax.f32 %v3277, %v4136
      %v4201 = vmax.f32 %v3134, %v3993
      %v4202 = vmax.f32 %v3280, %v4139
      %v4203 = vmax.f32 %v3136, %v3995
      %v4204 = vmax.f32 %v3282, %v4141
      %v4205 = vmax.f32 %v3139, %v3998
      %v4206 = vmax.f32 %v3285, %v4144
      %v4207 = vmax.f32 %v3141, %v4000
      %v4208 = vmax.f32 %v3287, %v4146
      %v4209 = vmax.f32 %v3144, %v4003
      %v4210 = vmax.f32 %v3290, %v4149
      %v4211 = vmax.f32 %v3146, %v4005
      %v4212 = vmax.f32 %v3292, %v4151
      %v4213 = vmax.f32 %v3149, %v4008
      %v4214 = vmax.f32 %v3295, %v4154
      %v4215 = vmax.f32 %v3151, %v4010
      %v4216 = vmax.f32 %v3297, %v4156
      %v4217 = vmax.f32 %v3154, %v4013
      %v4218 = vmax.f32 %v3300, %v4159
      %v4219 = vmax.f32 %v3156, %v4015
      %v4220 = vmax.f32 %v3302, %v4161
      %v4221 = vmax.f32 %v3159, %v4018
      %v4222 = vmax.f32 %v3305, %v4164
      %v4223 = vmax.f32 %v3161, %v4020
      %v4224 = vmax.f32 %v3307, %v4166
      %v4225 = vmax.f32 %v3164, %v4023
      %v4226 = vmax.f32 %v3310, %v4169
      %v4227 = vmax.f32 %v3166, %v4025
      %v4228 = vmax.f32 %v3312, %v4171
      %v4229 = vmax.f32 %v3169, %v4028
      %v4230 = vmax.f32 %v3315, %v4174
      %v4231 = vmax.f32 %v3171, %v4030
      %v4232 = vmax.f32 %v3317, %v4176
      %v4233 = vmax.f32 %v3174, %v4033
      %v4234 = vmax.f32 %v3320, %v4179
      %v4235 = vmax.f32 %v3176, %v4035
      %v4236 = vmax.f32 %v3322, %v4181
      %v4237 = vmax.f32 %v3179, %v4038
      %v4238 = vmax.f32 %v3325, %v4184
      %v4239 = vmax.f32 %v3181, %v4040
      %v4240 = vmax.f32 %v3327, %v4186
      %v4241 = vmax.f32 %v3184, %v4043
      %v4242 = vmax.f32 %v3330, %v4189
      %v4243 = vmax.f32 %v3186, %v4045
      %v4244 = vmax.f32 %v3332, %v4191
      %v4245 = vmax.f32 %v3189, %v4048
      %v4246 = vmax.f32 %v3335, %v4194
      %v4247 = vsel %vm3690, -1e+30, %v3338
      %v4248 = vsel %vm3691, -1e+30, %v3339
      %v4249 = vsel %vm3692, -1e+30, %v3340
      %v4250 = vsel %vm3693, -1e+30, %v3341
      %v4251 = vsel %vm3694, -1e+30, %v3342
      %v4252 = vsel %vm3695, -1e+30, %v3343
      %v4253 = vsel %vm3696, -1e+30, %v3344
      %v4254 = vsel %vm3697, -1e+30, %v3345
      %v4255 = vsel %vm3698, -1e+30, %v3346
      %v4256 = vsel %vm3699, -1e+30, %v3347
      %v4257 = vsel %vm3700, -1e+30, %v3348
      %v4258 = vsel %vm3701, -1e+30, %v3349
      %v4259 = vsel %vm3702, -1e+30, %v3350
      %v4260 = vsel %vm3703, -1e+30, %v3351
      %v4261 = vsel %vm3704, -1e+30, %v3352
      %v4262 = vsel %vm3705, -1e+30, %v3353
      %v4263 = vsel %vm3706, -1e+30, %v3354
      %v4264 = vsel %vm3707, -1e+30, %v3355
      %v4265 = vsel %vm3708, -1e+30, %v3356
      %v4266 = vsel %vm3709, -1e+30, %v3357
      %v4267 = vsel %vm3710, -1e+30, %v3358
      %v4268 = vsel %vm3711, -1e+30, %v3359
      %v4269 = vsel %vm3712, -1e+30, %v3360
      %v4270 = vsel %vm3713, -1e+30, %v3361
      %v4271 = vsel %vm3714, -1e+30, %v3362
      %v4272 = vsel %vm3715, -1e+30, %v3363
      %v4273 = vsel %vm3716, -1e+30, %v3364
      %v4274 = vsel %vm3717, -1e+30, %v3365
      %v4275 = vsel %vm3718, -1e+30, %v3366
      %v4276 = vsel %vm3719, -1e+30, %v3367
      %v4277 = vsel %vm3720, -1e+30, %v3368
      %v4278 = vsel %vm3721, -1e+30, %v3369
      %v4279 = vsel %vm3722, -1e+30, %v3370
      %v4280 = vsel %vm3723, -1e+30, %v3371
      %v4281 = vsel %vm3724, -1e+30, %v3372
      %v4282 = vsel %vm3725, -1e+30, %v3373
      %v4283 = vsel %vm3726, -1e+30, %v3374
      %v4284 = vsel %vm3727, -1e+30, %v3375
      %v4285 = vsel %vm3728, -1e+30, %v3376
      %v4286 = vsel %vm3729, -1e+30, %v3377
      %v4287 = vsel %vm3730, -1e+30, %v3378
      %v4288 = vsel %vm3731, -1e+30, %v3379
      %v4289 = vsel %vm3732, -1e+30, %v3380
      %v4290 = vsel %vm3733, -1e+30, %v3381
      %v4291 = vsel %vm3734, -1e+30, %v3382
      %v4292 = vsel %vm3735, -1e+30, %v3383
      %v4293 = vsel %vm3736, -1e+30, %v3384
      %v4294 = vsel %vm3737, -1e+30, %v3385
      %v4295 = vsel %vm3738, -1e+30, %v3386
      %v4296 = vsel %vm3739, -1e+30, %v3387
      %v4297 = vsel %vm2519, %v4248, -inf
      %v4298 = vmax.f32 %v4247, %v4297
      %4299 = vmax.xlane.f32.xlu0 %v4298
      %v4300 = vpop.xlane.xlu0 %4299
      %v4301 = vsel %vm2519, %v4250, -inf
      %v4302 = vmax.f32 %v4249, %v4301
      %4303 = vmax.xlane.f32.xlu0 %v4302
      %v4304 = vpop.xlane.xlu0 %4303
      %v4305 = vsel %vm2519, %v4252, -inf
      %v4306 = vmax.f32 %v4251, %v4305
      %4307 = vmax.xlane.f32.xlu0 %v4306
      %v4308 = vpop.xlane.xlu0 %4307
      %v4309 = vsel %vm2519, %v4254, -inf
      %v4310 = vmax.f32 %v4253, %v4309
      %4311 = vmax.xlane.f32.xlu0 %v4310
      %v4312 = vpop.xlane.xlu0 %4311
      %v4313 = vsel %vm2519, %v4256, -inf
      %v4314 = vmax.f32 %v4255, %v4313
      %4315 = vmax.xlane.f32.xlu0 %v4314
      %v4316 = vpop.xlane.xlu0 %4315
      %v4317 = vsel %vm2519, %v4258, -inf
      %v4318 = vmax.f32 %v4257, %v4317
      %4319 = vmax.xlane.f32.xlu0 %v4318
      %v4320 = vpop.xlane.xlu0 %4319
      %v4321 = vsel %vm2519, %v4260, -inf
      %v4322 = vmax.f32 %v4259, %v4321
      %4323 = vmax.xlane.f32.xlu0 %v4322
      %v4324 = vpop.xlane.xlu0 %4323
      %v4325 = vsel %vm2519, %v4262, -inf
      %v4326 = vmax.f32 %v4261, %v4325
      %4327 = vmax.xlane.f32.xlu0 %v4326
      %v4328 = vpop.xlane.xlu0 %4327
      %v4329 = vsel %vm2519, %v4264, -inf
      %v4330 = vmax.f32 %v4263, %v4329
      %4331 = vmax.xlane.f32.xlu0 %v4330
      %v4332 = vpop.xlane.xlu0 %4331
      %v4333 = vsel %vm2519, %v4266, -inf
      %v4334 = vmax.f32 %v4265, %v4333
      %4335 = vmax.xlane.f32.xlu0 %v4334
      %v4336 = vpop.xlane.xlu0 %4335
      %v4337 = vsel %vm2519, %v4268, -inf
      %v4338 = vmax.f32 %v4267, %v4337
      %4339 = vmax.xlane.f32.xlu0 %v4338
      %v4340 = vpop.xlane.xlu0 %4339
      %v4341 = vsel %vm2519, %v4270, -inf
      %v4342 = vmax.f32 %v4269, %v4341
      %4343 = vmax.xlane.f32.xlu0 %v4342
      %v4344 = vpop.xlane.xlu0 %4343
      %v4345 = vsel %vm2519, %v4272, -inf
      %v4346 = vmax.f32 %v4271, %v4345
      %4347 = vmax.xlane.f32.xlu0 %v4346
      %v4348 = vpop.xlane.xlu0 %4347
      %v4349 = vsel %vm2519, %v4274, -inf
      %v4350 = vmax.f32 %v4273, %v4349
      %4351 = vmax.xlane.f32.xlu0 %v4350
      %v4352 = vpop.xlane.xlu0 %4351
      %v4353 = vsel %vm2519, %v4276, -inf
      %v4354 = vmax.f32 %v4275, %v4353
      %4355 = vmax.xlane.f32.xlu0 %v4354
      %v4356 = vpop.xlane.xlu0 %4355
      %v4357 = vsel %vm2519, %v4278, -inf
      %v4358 = vmax.f32 %v4277, %v4357
      %4359 = vmax.xlane.f32.xlu0 %v4358
      %v4360 = vpop.xlane.xlu0 %4359
      %v4361 = vsel %vm2519, %v4280, -inf
      %v4362 = vmax.f32 %v4279, %v4361
      %4363 = vmax.xlane.f32.xlu0 %v4362
      %v4364 = vpop.xlane.xlu0 %4363
      %v4365 = vsel %vm2519, %v4282, -inf
      %v4366 = vmax.f32 %v4281, %v4365
      %4367 = vmax.xlane.f32.xlu0 %v4366
      %v4368 = vpop.xlane.xlu0 %4367
      %v4369 = vsel %vm2519, %v4284, -inf
      %v4370 = vmax.f32 %v4283, %v4369
      %4371 = vmax.xlane.f32.xlu0 %v4370
      %v4372 = vpop.xlane.xlu0 %4371
      %v4373 = vsel %vm2519, %v4286, -inf
      %v4374 = vmax.f32 %v4285, %v4373
      %4375 = vmax.xlane.f32.xlu0 %v4374
      %v4376 = vpop.xlane.xlu0 %4375
      %v4377 = vsel %vm2519, %v4288, -inf
      %v4378 = vmax.f32 %v4287, %v4377
      %4379 = vmax.xlane.f32.xlu0 %v4378
      %v4380 = vpop.xlane.xlu0 %4379
      %v4381 = vsel %vm2519, %v4290, -inf
      %v4382 = vmax.f32 %v4289, %v4381
      %4383 = vmax.xlane.f32.xlu0 %v4382
      %v4384 = vpop.xlane.xlu0 %4383
      %v4385 = vsel %vm2519, %v4292, -inf
      %v4386 = vmax.f32 %v4291, %v4385
      %4387 = vmax.xlane.f32.xlu0 %v4386
      %v4388 = vpop.xlane.xlu0 %4387
      %v4389 = vsel %vm2519, %v4294, -inf
      %v4390 = vmax.f32 %v4293, %v4389
      %4391 = vmax.xlane.f32.xlu0 %v4390
      %v4392 = vpop.xlane.xlu0 %4391
      %v4393 = vsel %vm2616, %v4295, -inf
      %v4394 = vsel %vm2618, %v4296, -inf
      %v4395 = vmax.f32 %v4393, %v4394
      %4396 = vmax.xlane.f32.xlu0 %v4395
      %v4397 = vpop.xlane.xlu0 %4396
      %vm4398 = vcmp.eq.f32.partialorder %v4247, %v4300
      %vm4399 = vcmp.eq.f32.partialorder %v4248, %v4300
      %vm4400 = vcmp.eq.f32.partialorder %v4249, %v4304
      %vm4401 = vcmp.eq.f32.partialorder %v4250, %v4304
      %vm4402 = vcmp.eq.f32.partialorder %v4251, %v4308
      %vm4403 = vcmp.eq.f32.partialorder %v4252, %v4308
      %vm4404 = vcmp.eq.f32.partialorder %v4253, %v4312
      %vm4405 = vcmp.eq.f32.partialorder %v4254, %v4312
      %vm4406 = vcmp.eq.f32.partialorder %v4255, %v4316
      %vm4407 = vcmp.eq.f32.partialorder %v4256, %v4316
      %vm4408 = vcmp.eq.f32.partialorder %v4257, %v4320
      %vm4409 = vcmp.eq.f32.partialorder %v4258, %v4320
      %vm4410 = vcmp.eq.f32.partialorder %v4259, %v4324
      %vm4411 = vcmp.eq.f32.partialorder %v4260, %v4324
      %vm4412 = vcmp.eq.f32.partialorder %v4261, %v4328
      %vm4413 = vcmp.eq.f32.partialorder %v4262, %v4328
      %vm4414 = vcmp.eq.f32.partialorder %v4263, %v4332
      %vm4415 = vcmp.eq.f32.partialorder %v4264, %v4332
      %vm4416 = vcmp.eq.f32.partialorder %v4265, %v4336
      %vm4417 = vcmp.eq.f32.partialorder %v4266, %v4336
      %vm4418 = vcmp.eq.f32.partialorder %v4267, %v4340
      %vm4419 = vcmp.eq.f32.partialorder %v4268, %v4340
      %vm4420 = vcmp.eq.f32.partialorder %v4269, %v4344
      %vm4421 = vcmp.eq.f32.partialorder %v4270, %v4344
      %vm4422 = vcmp.eq.f32.partialorder %v4271, %v4348
      %vm4423 = vcmp.eq.f32.partialorder %v4272, %v4348
      %vm4424 = vcmp.eq.f32.partialorder %v4273, %v4352
      %vm4425 = vcmp.eq.f32.partialorder %v4274, %v4352
      %vm4426 = vcmp.eq.f32.partialorder %v4275, %v4356
      %vm4427 = vcmp.eq.f32.partialorder %v4276, %v4356
      %vm4428 = vcmp.eq.f32.partialorder %v4277, %v4360
      %vm4429 = vcmp.eq.f32.partialorder %v4278, %v4360
      %vm4430 = vcmp.eq.f32.partialorder %v4279, %v4364
      %vm4431 = vcmp.eq.f32.partialorder %v4280, %v4364
      %vm4432 = vcmp.eq.f32.partialorder %v4281, %v4368
      %vm4433 = vcmp.eq.f32.partialorder %v4282, %v4368
      %vm4434 = vcmp.eq.f32.partialorder %v4283, %v4372
      %vm4435 = vcmp.eq.f32.partialorder %v4284, %v4372
      %vm4436 = vcmp.eq.f32.partialorder %v4285, %v4376
      %vm4437 = vcmp.eq.f32.partialorder %v4286, %v4376
      %vm4438 = vcmp.eq.f32.partialorder %v4287, %v4380
      %vm4439 = vcmp.eq.f32.partialorder %v4288, %v4380
      %vm4440 = vcmp.eq.f32.partialorder %v4289, %v4384
      %vm4441 = vcmp.eq.f32.partialorder %v4290, %v4384
      %vm4442 = vcmp.eq.f32.partialorder %v4291, %v4388
      %vm4443 = vcmp.eq.f32.partialorder %v4292, %v4388
      %vm4444 = vcmp.eq.f32.partialorder %v4293, %v4392
      %vm4445 = vcmp.eq.f32.partialorder %v4294, %v4392
      %vm4446 = vcmp.eq.f32.partialorder %v4295, %v4397
      %vm4447 = vcmp.eq.f32.partialorder %v4296, %v4397
      %v4448 = vsel %vm4398, %v1613, 196.0
      %v4449 = vsel %vm4399, %v1614, 196.0
      %v4450 = vsel %vm4400, %v1613, 196.0
      %v4451 = vsel %vm4401, %v1614, 196.0
      %v4452 = vsel %vm4402, %v1613, 196.0
      %v4453 = vsel %vm4403, %v1614, 196.0
      %v4454 = vsel %vm4404, %v1613, 196.0
      %v4455 = vsel %vm4405, %v1614, 196.0
      %v4456 = vsel %vm4406, %v1613, 196.0
      %v4457 = vsel %vm4407, %v1614, 196.0
      %v4458 = vsel %vm4408, %v1613, 196.0
      %v4459 = vsel %vm4409, %v1614, 196.0
      %v4460 = vsel %vm4410, %v1613, 196.0
      %v4461 = vsel %vm4411, %v1614, 196.0
      %v4462 = vsel %vm4412, %v1613, 196.0
      %v4463 = vsel %vm4413, %v1614, 196.0
      %v4464 = vsel %vm4414, %v1613, 196.0
      %v4465 = vsel %vm4415, %v1614, 196.0
      %v4466 = vsel %vm4416, %v1613, 196.0
      %v4467 = vsel %vm4417, %v1614, 196.0
      %v4468 = vsel %vm4418, %v1613, 196.0
      %v4469 = vsel %vm4419, %v1614, 196.0
      %v4470 = vsel %vm4420, %v1613, 196.0
      %v4471 = vsel %vm4421, %v1614, 196.0
      %v4472 = vsel %vm4422, %v1613, 196.0
      %v4473 = vsel %vm4423, %v1614, 196.0
      %v4474 = vsel %vm4424, %v1613, 196.0
      %v4475 = vsel %vm4425, %v1614, 196.0
      %v4476 = vsel %vm4426, %v1613, 196.0
      %v4477 = vsel %vm4427, %v1614, 196.0
      %v4478 = vsel %vm4428, %v1613, 196.0
      %v4479 = vsel %vm4429, %v1614, 196.0
      %v4480 = vsel %vm4430, %v1613, 196.0
      %v4481 = vsel %vm4431, %v1614, 196.0
      %v4482 = vsel %vm4432, %v1613, 196.0
      %v4483 = vsel %vm4433, %v1614, 196.0
      %v4484 = vsel %vm4434, %v1613, 196.0
      %v4485 = vsel %vm4435, %v1614, 196.0
      %v4486 = vsel %vm4436, %v1613, 196.0
      %v4487 = vsel %vm4437, %v1614, 196.0
      %v4488 = vsel %vm4438, %v1613, 196.0
      %v4489 = vsel %vm4439, %v1614, 196.0
      %v4490 = vsel %vm4440, %v1613, 196.0
      %v4491 = vsel %vm4441, %v1614, 196.0
      %v4492 = vsel %vm4442, %v1613, 196.0
      %v4493 = vsel %vm4443, %v1614, 196.0
      %v4494 = vsel %vm4444, %v1613, 196.0
      %v4495 = vsel %vm4445, %v1614, 196.0
      %v4496 = vsel %vm4446, %v1613, 196.0
      %v4497 = vsel %vm4447, %v1614, 196.0
      %v4498 = vsel %vm2519, %v4449, inf
      %v4499 = vmin.f32 %v4448, %v4498
      %4500 = vmin.xlane.f32.xlu0 %v4499
      %v4501 = vpop.xlane.xlu0 %4500
      %v4502 = vsel %vm2519, %v4451, inf
      %v4503 = vmin.f32 %v4450, %v4502
      %4504 = vmin.xlane.f32.xlu0 %v4503
      %v4505 = vpop.xlane.xlu0 %4504
      %v4506 = vsel %vm2519, %v4453, inf
      %v4507 = vmin.f32 %v4452, %v4506
      %4508 = vmin.xlane.f32.xlu0 %v4507
      %v4509 = vpop.xlane.xlu0 %4508
      %v4510 = vsel %vm2519, %v4455, inf
      %v4511 = vmin.f32 %v4454, %v4510
      %4512 = vmin.xlane.f32.xlu0 %v4511
      %v4513 = vpop.xlane.xlu0 %4512
      %v4514 = vsel %vm2519, %v4457, inf
      %v4515 = vmin.f32 %v4456, %v4514
      %4516 = vmin.xlane.f32.xlu0 %v4515
      %v4517 = vpop.xlane.xlu0 %4516
      %v4518 = vsel %vm2519, %v4459, inf
      %v4519 = vmin.f32 %v4458, %v4518
      %4520 = vmin.xlane.f32.xlu0 %v4519
      %v4521 = vpop.xlane.xlu0 %4520
      %v4522 = vsel %vm2519, %v4461, inf
      %v4523 = vmin.f32 %v4460, %v4522
      %4524 = vmin.xlane.f32.xlu0 %v4523
      %v4525 = vpop.xlane.xlu0 %4524
      %v4526 = vsel %vm2519, %v4463, inf
      %v4527 = vmin.f32 %v4462, %v4526
      %4528 = vmin.xlane.f32.xlu0 %v4527
      %v4529 = vpop.xlane.xlu0 %4528
      %v4530 = vsel %vm2519, %v4465, inf
      %v4531 = vmin.f32 %v4464, %v4530
      %4532 = vmin.xlane.f32.xlu0 %v4531
      %v4533 = vpop.xlane.xlu0 %4532
      %v4534 = vsel %vm2519, %v4467, inf
      %v4535 = vmin.f32 %v4466, %v4534
      %4536 = vmin.xlane.f32.xlu0 %v4535
      %v4537 = vpop.xlane.xlu0 %4536
      %v4538 = vsel %vm2519, %v4469, inf
      %v4539 = vmin.f32 %v4468, %v4538
      %4540 = vmin.xlane.f32.xlu0 %v4539
      %v4541 = vpop.xlane.xlu0 %4540
      %v4542 = vsel %vm2519, %v4471, inf
      %v4543 = vmin.f32 %v4470, %v4542
      %4544 = vmin.xlane.f32.xlu0 %v4543
      %v4545 = vpop.xlane.xlu0 %4544
      %v4546 = vsel %vm2519, %v4473, inf
      %v4547 = vmin.f32 %v4472, %v4546
      %4548 = vmin.xlane.f32.xlu0 %v4547
      %v4549 = vpop.xlane.xlu0 %4548
      %v4550 = vsel %vm2519, %v4475, inf
      %v4551 = vmin.f32 %v4474, %v4550
      %4552 = vmin.xlane.f32.xlu0 %v4551
      %v4553 = vpop.xlane.xlu0 %4552
      %v4554 = vsel %vm2519, %v4477, inf
      %v4555 = vmin.f32 %v4476, %v4554
      %4556 = vmin.xlane.f32.xlu0 %v4555
      %v4557 = vpop.xlane.xlu0 %4556
      %v4558 = vsel %vm2519, %v4479, inf
      %v4559 = vmin.f32 %v4478, %v4558
      %4560 = vmin.xlane.f32.xlu0 %v4559
      %v4561 = vpop.xlane.xlu0 %4560
      %v4562 = vsel %vm2519, %v4481, inf
      %v4563 = vmin.f32 %v4480, %v4562
      %4564 = vmin.xlane.f32.xlu0 %v4563
      %v4565 = vpop.xlane.xlu0 %4564
      %v4566 = vsel %vm2519, %v4483, inf
      %v4567 = vmin.f32 %v4482, %v4566
      %4568 = vmin.xlane.f32.xlu0 %v4567
      %v4569 = vpop.xlane.xlu0 %4568
      %v4570 = vsel %vm2519, %v4485, inf
      %v4571 = vmin.f32 %v4484, %v4570
      %4572 = vmin.xlane.f32.xlu0 %v4571
      %v4573 = vpop.xlane.xlu0 %4572
      %v4574 = vsel %vm2519, %v4487, inf
      %v4575 = vmin.f32 %v4486, %v4574
      %4576 = vmin.xlane.f32.xlu0 %v4575
      %v4577 = vpop.xlane.xlu0 %4576
      %v4578 = vsel %vm2519, %v4489, inf
      %v4579 = vmin.f32 %v4488, %v4578
      %4580 = vmin.xlane.f32.xlu0 %v4579
      %v4581 = vpop.xlane.xlu0 %4580
      %v4582 = vsel %vm2519, %v4491, inf
      %v4583 = vmin.f32 %v4490, %v4582
      %4584 = vmin.xlane.f32.xlu0 %v4583
      %v4585 = vpop.xlane.xlu0 %4584
      %v4586 = vsel %vm2519, %v4493, inf
      %v4587 = vmin.f32 %v4492, %v4586
      %4588 = vmin.xlane.f32.xlu0 %v4587
      %v4589 = vpop.xlane.xlu0 %4588
      %v4590 = vsel %vm2519, %v4495, inf
      %v4591 = vmin.f32 %v4494, %v4590
      %4592 = vmin.xlane.f32.xlu0 %v4591
      %v4593 = vpop.xlane.xlu0 %4592
      %v4594 = vsel %vm2616, %v4496, inf
      %v4595 = vsel %vm2618, %v4497, inf
      %v4596 = vmin.f32 %v4594, %v4595
      %4597 = vmin.xlane.f32.xlu0 %v4596
      %v4598 = vpop.xlane.xlu0 %4597
      %vm4599 = vcmp.eq.f32.partialorder %v1613, %v4501
      %vm4600 = vcmp.eq.f32.partialorder %v1614, %v4501
      %vm4601 = vcmp.eq.f32.partialorder %v1613, %v4505
      %vm4602 = vcmp.eq.f32.partialorder %v1614, %v4505
      %vm4603 = vcmp.eq.f32.partialorder %v1613, %v4509
      %vm4604 = vcmp.eq.f32.partialorder %v1614, %v4509
      %vm4605 = vcmp.eq.f32.partialorder %v1613, %v4513
      %vm4606 = vcmp.eq.f32.partialorder %v1614, %v4513
      %vm4607 = vcmp.eq.f32.partialorder %v1613, %v4517
      %vm4608 = vcmp.eq.f32.partialorder %v1614, %v4517
      %vm4609 = vcmp.eq.f32.partialorder %v1613, %v4521
      %vm4610 = vcmp.eq.f32.partialorder %v1614, %v4521
      %vm4611 = vcmp.eq.f32.partialorder %v1613, %v4525
      %vm4612 = vcmp.eq.f32.partialorder %v1614, %v4525
      %vm4613 = vcmp.eq.f32.partialorder %v1613, %v4529
      %vm4614 = vcmp.eq.f32.partialorder %v1614, %v4529
      %vm4615 = vcmp.eq.f32.partialorder %v1613, %v4533
      %vm4616 = vcmp.eq.f32.partialorder %v1614, %v4533
      %vm4617 = vcmp.eq.f32.partialorder %v1613, %v4537
      %vm4618 = vcmp.eq.f32.partialorder %v1614, %v4537
      %vm4619 = vcmp.eq.f32.partialorder %v1613, %v4541
      %vm4620 = vcmp.eq.f32.partialorder %v1614, %v4541
      %vm4621 = vcmp.eq.f32.partialorder %v1613, %v4545
      %vm4622 = vcmp.eq.f32.partialorder %v1614, %v4545
      %vm4623 = vcmp.eq.f32.partialorder %v1613, %v4549
      %vm4624 = vcmp.eq.f32.partialorder %v1614, %v4549
      %vm4625 = vcmp.eq.f32.partialorder %v1613, %v4553
      %vm4626 = vcmp.eq.f32.partialorder %v1614, %v4553
      %vm4627 = vcmp.eq.f32.partialorder %v1613, %v4557
      %vm4628 = vcmp.eq.f32.partialorder %v1614, %v4557
      %vm4629 = vcmp.eq.f32.partialorder %v1613, %v4561
      %vm4630 = vcmp.eq.f32.partialorder %v1614, %v4561
      %vm4631 = vcmp.eq.f32.partialorder %v1613, %v4565
      %vm4632 = vcmp.eq.f32.partialorder %v1614, %v4565
      %vm4633 = vcmp.eq.f32.partialorder %v1613, %v4569
      %vm4634 = vcmp.eq.f32.partialorder %v1614, %v4569
      %vm4635 = vcmp.eq.f32.partialorder %v1613, %v4573
      %vm4636 = vcmp.eq.f32.partialorder %v1614, %v4573
      %vm4637 = vcmp.eq.f32.partialorder %v1613, %v4577
      %vm4638 = vcmp.eq.f32.partialorder %v1614, %v4577
      %vm4639 = vcmp.eq.f32.partialorder %v1613, %v4581
      %vm4640 = vcmp.eq.f32.partialorder %v1614, %v4581
      %vm4641 = vcmp.eq.f32.partialorder %v1613, %v4585
      %vm4642 = vcmp.eq.f32.partialorder %v1614, %v4585
      %vm4643 = vcmp.eq.f32.partialorder %v1613, %v4589
      %vm4644 = vcmp.eq.f32.partialorder %v1614, %v4589
      %vm4645 = vcmp.eq.f32.partialorder %v1613, %v4593
      %vm4646 = vcmp.eq.f32.partialorder %v1614, %v4593
      %vm4647 = vcmp.eq.f32.partialorder %v1613, %v4598
      %vm4648 = vcmp.eq.f32.partialorder %v1614, %v4598
      %v4649 = vsel %vm4599, 1, 0
      %v4650 = vsel %vm4600, 1, 0
      %v4651 = vsel %vm4601, 1, 0
      %v4652 = vsel %vm4602, 1, 0
      %v4653 = vsel %vm4603, 1, 0
      %v4654 = vsel %vm4604, 1, 0
      %v4655 = vsel %vm4605, 1, 0
      %v4656 = vsel %vm4606, 1, 0
      %v4657 = vsel %vm4607, 1, 0
      %v4658 = vsel %vm4608, 1, 0
      %v4659 = vsel %vm4609, 1, 0
      %v4660 = vsel %vm4610, 1, 0
      %v4661 = vsel %vm4611, 1, 0
      %v4662 = vsel %vm4612, 1, 0
      %v4663 = vsel %vm4613, 1, 0
      %v4664 = vsel %vm4614, 1, 0
      %v4665 = vsel %vm4615, 1, 0
      %v4666 = vsel %vm4616, 1, 0
      %v4667 = vsel %vm4617, 1, 0
      %v4668 = vsel %vm4618, 1, 0
      %v4669 = vsel %vm4619, 1, 0
      %v4670 = vsel %vm4620, 1, 0
      %v4671 = vsel %vm4621, 1, 0
      %v4672 = vsel %vm4622, 1, 0
      %v4673 = vsel %vm4623, 1, 0
      %v4674 = vsel %vm4624, 1, 0
      %v4675 = vsel %vm4625, 1, 0
      %v4676 = vsel %vm4626, 1, 0
      %v4677 = vsel %vm4627, 1, 0
      %v4678 = vsel %vm4628, 1, 0
      %v4679 = vsel %vm4629, 1, 0
      %v4680 = vsel %vm4630, 1, 0
      %v4681 = vsel %vm4631, 1, 0
      %v4682 = vsel %vm4632, 1, 0
      %v4683 = vsel %vm4633, 1, 0
      %v4684 = vsel %vm4634, 1, 0
      %v4685 = vsel %vm4635, 1, 0
      %v4686 = vsel %vm4636, 1, 0
      %v4687 = vsel %vm4637, 1, 0
      %v4688 = vsel %vm4638, 1, 0
      %v4689 = vsel %vm4639, 1, 0
      %v4690 = vsel %vm4640, 1, 0
      %v4691 = vsel %vm4641, 1, 0
      %v4692 = vsel %vm4642, 1, 0
      %v4693 = vsel %vm4643, 1, 0
      %v4694 = vsel %vm4644, 1, 0
      %v4695 = vsel %vm4645, 1, 0
      %v4696 = vsel %vm4646, 1, 0
      %v4697 = vsel %vm4647, 1, 0
      %v4698 = vsel %vm4648, 1, 0
      %v4699 = vcvt.s32.f32 %v4649
      %v4700 = vcvt.s32.f32 %v4650
      %v4701 = vcvt.s32.f32 %v4651
      %v4702 = vcvt.s32.f32 %v4652
      %v4703 = vcvt.s32.f32 %v4653
      %v4704 = vcvt.s32.f32 %v4654
      %v4705 = vcvt.s32.f32 %v4655
      %v4706 = vcvt.s32.f32 %v4656
      %v4707 = vcvt.s32.f32 %v4657
      %v4708 = vcvt.s32.f32 %v4658
      %v4709 = vcvt.s32.f32 %v4659
      %v4710 = vcvt.s32.f32 %v4660
      %v4711 = vcvt.s32.f32 %v4661
      %v4712 = vcvt.s32.f32 %v4662
      %v4713 = vcvt.s32.f32 %v4663
      %v4714 = vcvt.s32.f32 %v4664
      %v4715 = vcvt.s32.f32 %v4665
      %v4716 = vcvt.s32.f32 %v4666
      %v4717 = vcvt.s32.f32 %v4667
      %v4718 = vcvt.s32.f32 %v4668
      %v4719 = vcvt.s32.f32 %v4669
      %v4720 = vcvt.s32.f32 %v4670
      %v4721 = vcvt.s32.f32 %v4671
      %v4722 = vcvt.s32.f32 %v4672
      %v4723 = vcvt.s32.f32 %v4673
      %v4724 = vcvt.s32.f32 %v4674
      %v4725 = vcvt.s32.f32 %v4675
      %v4726 = vcvt.s32.f32 %v4676
      %v4727 = vcvt.s32.f32 %v4677
      %v4728 = vcvt.s32.f32 %v4678
      %v4729 = vcvt.s32.f32 %v4679
      %v4730 = vcvt.s32.f32 %v4680
      %v4731 = vcvt.s32.f32 %v4681
      %v4732 = vcvt.s32.f32 %v4682
      %v4733 = vcvt.s32.f32 %v4683
      %v4734 = vcvt.s32.f32 %v4684
      %v4735 = vcvt.s32.f32 %v4685
      %v4736 = vcvt.s32.f32 %v4686
      %v4737 = vcvt.s32.f32 %v4687
      %v4738 = vcvt.s32.f32 %v4688
      %v4739 = vcvt.s32.f32 %v4689
      %v4740 = vcvt.s32.f32 %v4690
      %v4741 = vcvt.s32.f32 %v4691
      %v4742 = vcvt.s32.f32 %v4692
      %v4743 = vcvt.s32.f32 %v4693
      %v4744 = vcvt.s32.f32 %v4694
      %v4745 = vcvt.s32.f32 %v4695
      %v4746 = vcvt.s32.f32 %v4696
      %v4747 = vcvt.s32.f32 %v4697
      %v4748 = vcvt.s32.f32 %v4698
      %v4749 = vpack.c.bf16 %v4701, %v4699
      %v4750 = vpack.c.bf16 %v4702, %v4700
      %v4751 = vpack.c.bf16 %v4705, %v4703
      %v4752 = vpack.c.bf16 %v4706, %v4704
      %v4753 = vpack.c.bf16 %v4709, %v4707
      %v4754 = vpack.c.bf16 %v4710, %v4708
      %v4755 = vpack.c.bf16 %v4713, %v4711
      %v4756 = vpack.c.bf16 %v4714, %v4712
      %v4757 = vpack.c.bf16 %v4717, %v4715
      %v4758 = vpack.c.bf16 %v4718, %v4716
      %v4759 = vpack.c.bf16 %v4721, %v4719
      %v4760 = vpack.c.bf16 %v4722, %v4720
      %v4761 = vpack.c.bf16 %v4725, %v4723
      %v4762 = vpack.c.bf16 %v4726, %v4724
      %v4763 = vpack.c.bf16 %v4729, %v4727
      %v4764 = vpack.c.bf16 %v4730, %v4728
      %v4765 = vpack.c.bf16 %v4733, %v4731
      %v4766 = vpack.c.bf16 %v4734, %v4732
      %v4767 = vpack.c.bf16 %v4737, %v4735
      %v4768 = vpack.c.bf16 %v4738, %v4736
      %v4769 = vpack.c.bf16 %v4741, %v4739
      %v4770 = vpack.c.bf16 %v4742, %v4740
      %v4771 = vpack.c.bf16 %v4745, %v4743
      %v4772 = vpack.c.bf16 %v4746, %v4744
      %v4773 = vpack.c.bf16 %v4747, %v4747
      %v4774 = vpack.c.bf16 %v4748, %v4748
      %v4776 = vsel %vm2519, %v4750, 0
      %v4779 = vsel %vm2519, %v4752, 0
      %v4782 = vsel %vm2519, %v4754, 0
      %v4785 = vsel %vm2519, %v4756, 0
      %v4788 = vsel %vm2519, %v4758, 0
      %v4791 = vsel %vm2519, %v4760, 0
      %v4794 = vsel %vm2519, %v4762, 0
      %v4797 = vsel %vm2519, %v4764, 0
      %v4800 = vsel %vm2519, %v4766, 0
      %v4803 = vsel %vm2519, %v4768, 0
      %v4806 = vsel %vm2519, %v4770, 0
      %v4809 = vsel %vm2519, %v4772, 0
      %v4812 = vsel %vm2519, %v4774, 0
      %4814 = vmatpush.bf16.msra.mxu0 %v2507
      %4815 = vmatpush.bf16.msra.mxu0 %v2505
      %4816 = vmatpush.bf16.msra.mxu0 %v2503
      %4817 = vmatpush.bf16.msra.mxu0 %v2501
      %4818 = vmatpush.bf16.msra.mxu0 %v2499
      %4819 = vmatpush.bf16.msra.mxu0 %v2497
      %4820 = vmatpush.bf16.msra.mxu0 %v2495
      %4821 = vmatpush.bf16.msra.mxu0 %v2493
      %4822 = vmatmul.bf16.gmra.mxu0 %v4749
      %v4823 = vpop.f32.mrf.mxu0
      %v4824 = vadd.f32 0.0, %v4823
      %v4825 = vpop.f32.mrf.mxu0
      %v4826 = vadd.f32 0.0, %v4825
      %4827 = vmatmul.bf16.gmra.mxu0 %v4751
      %v4828 = vpop.f32.mrf.mxu0
      %v4829 = vadd.f32 0.0, %v4828
      %v4830 = vpop.f32.mrf.mxu0
      %v4831 = vadd.f32 0.0, %v4830
      %4832 = vmatmul.bf16.gmra.mxu0 %v4753
      %v4833 = vpop.f32.mrf.mxu0
      %v4834 = vadd.f32 0.0, %v4833
      %v4835 = vpop.f32.mrf.mxu0
      %v4836 = vadd.f32 0.0, %v4835
      %4837 = vmatmul.bf16.gmra.mxu0 %v4755
      %v4838 = vpop.f32.mrf.mxu0
      %v4839 = vadd.f32 0.0, %v4838
      %v4840 = vpop.f32.mrf.mxu0
      %v4841 = vadd.f32 0.0, %v4840
      %4842 = vmatmul.bf16.gmra.mxu0 %v4757
      %v4843 = vpop.f32.mrf.mxu0
      %v4844 = vadd.f32 0.0, %v4843
      %v4845 = vpop.f32.mrf.mxu0
      %v4846 = vadd.f32 0.0, %v4845
      %4847 = vmatmul.bf16.gmra.mxu0 %v4759
      %v4848 = vpop.f32.mrf.mxu0
      %v4849 = vadd.f32 0.0, %v4848
      %v4850 = vpop.f32.mrf.mxu0
      %v4851 = vadd.f32 0.0, %v4850
      %4852 = vmatmul.bf16.gmra.mxu0 %v4761
      %v4853 = vpop.f32.mrf.mxu0
      %v4854 = vadd.f32 0.0, %v4853
      %v4855 = vpop.f32.mrf.mxu0
      %v4856 = vadd.f32 0.0, %v4855
      %4857 = vmatmul.bf16.gmra.mxu0 %v4763
      %v4858 = vpop.f32.mrf.mxu0
      %v4859 = vadd.f32 0.0, %v4858
      %v4860 = vpop.f32.mrf.mxu0
      %v4861 = vadd.f32 0.0, %v4860
      %4862 = vmatmul.bf16.gmra.mxu0 %v4765
      %v4863 = vpop.f32.mrf.mxu0
      %v4864 = vadd.f32 0.0, %v4863
      %v4865 = vpop.f32.mrf.mxu0
      %v4866 = vadd.f32 0.0, %v4865
      %4867 = vmatmul.bf16.gmra.mxu0 %v4767
      %v4868 = vpop.f32.mrf.mxu0
      %v4869 = vadd.f32 0.0, %v4868
      %v4870 = vpop.f32.mrf.mxu0
      %v4871 = vadd.f32 0.0, %v4870
      %4872 = vmatmul.bf16.gmra.mxu0 %v4769
      %v4873 = vpop.f32.mrf.mxu0
      %v4874 = vadd.f32 0.0, %v4873
      %v4875 = vpop.f32.mrf.mxu0
      %v4876 = vadd.f32 0.0, %v4875
      %4877 = vmatmul.bf16.gmra.mxu0 %v4771
      %v4878 = vpop.f32.mrf.mxu0
      %v4879 = vadd.f32 0.0, %v4878
      %v4880 = vpop.f32.mrf.mxu0
      %v4881 = vadd.f32 0.0, %v4880
      %4882 = vmatmul.bf16.gmra.mxu0 %v4773
      %v4883 = vpop.f32.mrf.mxu0
      %v4884 = vadd.f32 0.0, %v4883
      %v4885 = vpop.f32.mrf.mxu0
      %4886 = vdwg.mxu0
      %4887 = vmatpush.bf16.msra.mxu0 0
      %4888 = vmatpush.bf16.msra.mxu0 0
      %4889 = vmatpush.bf16.msra.mxu0 0
      %4890 = vmatpush.bf16.msra.mxu0 %v3041
      %4891 = vmatpush.bf16.msra.mxu0 %v2515
      %4892 = vmatpush.bf16.msra.mxu0 %v2513
      %4893 = vmatpush.bf16.msra.mxu0 %v2511
      %4894 = vmatpush.bf16.msra.mxu0 %v2509
      %4895 = vmatmul.bf16.gmra.mxu0 %v4776
      %v4896 = vpop.f32.mrf.mxu0
      %v4897 = vadd.f32 %v4824, %v4896
      %v4898 = vpop.f32.mrf.mxu0
      %v4899 = vadd.f32 %v4826, %v4898
      %4900 = vmatmul.bf16.gmra.mxu0 %v4779
      %v4901 = vpop.f32.mrf.mxu0
      %v4902 = vadd.f32 %v4829, %v4901
      %v4903 = vpop.f32.mrf.mxu0
      %v4904 = vadd.f32 %v4831, %v4903
      %4905 = vmatmul.bf16.gmra.mxu0 %v4782
      %v4906 = vpop.f32.mrf.mxu0
      %v4907 = vadd.f32 %v4834, %v4906
      %v4908 = vpop.f32.mrf.mxu0
      %v4909 = vadd.f32 %v4836, %v4908
      %4910 = vmatmul.bf16.gmra.mxu0 %v4785
      %v4911 = vpop.f32.mrf.mxu0
      %v4912 = vadd.f32 %v4839, %v4911
      %v4913 = vpop.f32.mrf.mxu0
      %v4914 = vadd.f32 %v4841, %v4913
      %4915 = vmatmul.bf16.gmra.mxu0 %v4788
      %v4916 = vpop.f32.mrf.mxu0
      %v4917 = vadd.f32 %v4844, %v4916
      %v4918 = vpop.f32.mrf.mxu0
      %v4919 = vadd.f32 %v4846, %v4918
      %4920 = vmatmul.bf16.gmra.mxu0 %v4791
      %v4921 = vpop.f32.mrf.mxu0
      %v4922 = vadd.f32 %v4849, %v4921
      %v4923 = vpop.f32.mrf.mxu0
      %v4924 = vadd.f32 %v4851, %v4923
      %4925 = vmatmul.bf16.gmra.mxu0 %v4794
      %v4926 = vpop.f32.mrf.mxu0
      %v4927 = vadd.f32 %v4854, %v4926
      %v4928 = vpop.f32.mrf.mxu0
      %v4929 = vadd.f32 %v4856, %v4928
      %4930 = vmatmul.bf16.gmra.mxu0 %v4797
      %v4931 = vpop.f32.mrf.mxu0
      %v4932 = vadd.f32 %v4859, %v4931
      %v4933 = vpop.f32.mrf.mxu0
      %v4934 = vadd.f32 %v4861, %v4933
      %4935 = vmatmul.bf16.gmra.mxu0 %v4800
      %v4936 = vpop.f32.mrf.mxu0
      %v4937 = vadd.f32 %v4864, %v4936
      %v4938 = vpop.f32.mrf.mxu0
      %v4939 = vadd.f32 %v4866, %v4938
      %4940 = vmatmul.bf16.gmra.mxu0 %v4803
      %v4941 = vpop.f32.mrf.mxu0
      %v4942 = vadd.f32 %v4869, %v4941
      %v4943 = vpop.f32.mrf.mxu0
      %v4944 = vadd.f32 %v4871, %v4943
      %4945 = vmatmul.bf16.gmra.mxu0 %v4806
      %v4946 = vpop.f32.mrf.mxu0
      %v4947 = vadd.f32 %v4874, %v4946
      %v4948 = vpop.f32.mrf.mxu0
      %v4949 = vadd.f32 %v4876, %v4948
      %4950 = vmatmul.bf16.gmra.mxu0 %v4809
      %v4951 = vpop.f32.mrf.mxu0
      %v4952 = vadd.f32 %v4879, %v4951
      %v4953 = vpop.f32.mrf.mxu0
      %v4954 = vadd.f32 %v4881, %v4953
      %4955 = vmatmul.bf16.gmra.mxu0 %v4812
      %v4956 = vpop.f32.mrf.mxu0
      %v4957 = vadd.f32 %v4884, %v4956
      %v4958 = vpop.f32.mrf.mxu0
      %4959 = vdwg.mxu0
      %4960 = vmatpush.bf16.msra.mxu0 %v2508
      %4961 = vmatpush.bf16.msra.mxu0 %v2506
      %4962 = vmatpush.bf16.msra.mxu0 %v2504
      %4963 = vmatpush.bf16.msra.mxu0 %v2502
      %4964 = vmatpush.bf16.msra.mxu0 %v2500
      %4965 = vmatpush.bf16.msra.mxu0 %v2498
      %4966 = vmatpush.bf16.msra.mxu0 %v2496
      %4967 = vmatpush.bf16.msra.mxu0 %v2494
      %4968 = vmatmul.bf16.gmra.mxu0 %v4749
      %v4969 = vpop.f32.mrf.mxu0
      %v4970 = vadd.f32 0.0, %v4969
      %v4971 = vpop.f32.mrf.mxu0
      %v4972 = vadd.f32 0.0, %v4971
      %4973 = vmatmul.bf16.gmra.mxu0 %v4751
      %v4974 = vpop.f32.mrf.mxu0
      %v4975 = vadd.f32 0.0, %v4974
      %v4976 = vpop.f32.mrf.mxu0
      %v4977 = vadd.f32 0.0, %v4976
      %4978 = vmatmul.bf16.gmra.mxu0 %v4753
      %v4979 = vpop.f32.mrf.mxu0
      %v4980 = vadd.f32 0.0, %v4979
      %v4981 = vpop.f32.mrf.mxu0
      %v4982 = vadd.f32 0.0, %v4981
      %4983 = vmatmul.bf16.gmra.mxu0 %v4755
      %v4984 = vpop.f32.mrf.mxu0
      %v4985 = vadd.f32 0.0, %v4984
      %v4986 = vpop.f32.mrf.mxu0
      %v4987 = vadd.f32 0.0, %v4986
      %4988 = vmatmul.bf16.gmra.mxu0 %v4757
      %v4989 = vpop.f32.mrf.mxu0
      %v4990 = vadd.f32 0.0, %v4989
      %v4991 = vpop.f32.mrf.mxu0
      %v4992 = vadd.f32 0.0, %v4991
      %4993 = vmatmul.bf16.gmra.mxu0 %v4759
      %v4994 = vpop.f32.mrf.mxu0
      %v4995 = vadd.f32 0.0, %v4994
      %v4996 = vpop.f32.mrf.mxu0
      %v4997 = vadd.f32 0.0, %v4996
      %4998 = vmatmul.bf16.gmra.mxu0 %v4761
      %v4999 = vpop.f32.mrf.mxu0
      %v5000 = vadd.f32 0.0, %v4999
      %v5001 = vpop.f32.mrf.mxu0
      %v5002 = vadd.f32 0.0, %v5001
      %5003 = vmatmul.bf16.gmra.mxu0 %v4763
      %v5004 = vpop.f32.mrf.mxu0
      %v5005 = vadd.f32 0.0, %v5004
      %v5006 = vpop.f32.mrf.mxu0
      %v5007 = vadd.f32 0.0, %v5006
      %5008 = vmatmul.bf16.gmra.mxu0 %v4765
      %v5009 = vpop.f32.mrf.mxu0
      %v5010 = vadd.f32 0.0, %v5009
      %v5011 = vpop.f32.mrf.mxu0
      %v5012 = vadd.f32 0.0, %v5011
      %5013 = vmatmul.bf16.gmra.mxu0 %v4767
      %v5014 = vpop.f32.mrf.mxu0
      %v5015 = vadd.f32 0.0, %v5014
      %v5016 = vpop.f32.mrf.mxu0
      %v5017 = vadd.f32 0.0, %v5016
      %5018 = vmatmul.bf16.gmra.mxu0 %v4769
      %v5019 = vpop.f32.mrf.mxu0
      %v5020 = vadd.f32 0.0, %v5019
      %v5021 = vpop.f32.mrf.mxu0
      %v5022 = vadd.f32 0.0, %v5021
      %5023 = vmatmul.bf16.gmra.mxu0 %v4771
      %v5024 = vpop.f32.mrf.mxu0
      %v5025 = vadd.f32 0.0, %v5024
      %v5026 = vpop.f32.mrf.mxu0
      %v5027 = vadd.f32 0.0, %v5026
      %5028 = vmatmul.bf16.gmra.mxu0 %v4773
      %v5029 = vpop.f32.mrf.mxu0
      %v5030 = vadd.f32 0.0, %v5029
      %v5031 = vpop.f32.mrf.mxu0
      %5032 = vdwg.mxu0
      %5033 = vmatpush.bf16.msra.mxu0 0
      %5034 = vmatpush.bf16.msra.mxu0 0
      %5035 = vmatpush.bf16.msra.mxu0 0
      %5036 = vmatpush.bf16.msra.mxu0 %v3044
      %5037 = vmatpush.bf16.msra.mxu0 %v2516
      %5038 = vmatpush.bf16.msra.mxu0 %v2514
      %5039 = vmatpush.bf16.msra.mxu0 %v2512
      %5040 = vmatpush.bf16.msra.mxu0 %v2510
      %5041 = vmatmul.bf16.gmra.mxu0 %v4776
      %v5042 = vpop.f32.mrf.mxu0
      %v5043 = vadd.f32 %v4970, %v5042
      %v5044 = vpop.f32.mrf.mxu0
      %v5045 = vadd.f32 %v4972, %v5044
      %5046 = vmatmul.bf16.gmra.mxu0 %v4779
      %v5047 = vpop.f32.mrf.mxu0
      %v5048 = vadd.f32 %v4975, %v5047
      %v5049 = vpop.f32.mrf.mxu0
      %v5050 = vadd.f32 %v4977, %v5049
      %5051 = vmatmul.bf16.gmra.mxu0 %v4782
      %v5052 = vpop.f32.mrf.mxu0
      %v5053 = vadd.f32 %v4980, %v5052
      %v5054 = vpop.f32.mrf.mxu0
      %v5055 = vadd.f32 %v4982, %v5054
      %5056 = vmatmul.bf16.gmra.mxu0 %v4785
      %v5057 = vpop.f32.mrf.mxu0
      %v5058 = vadd.f32 %v4985, %v5057
      %v5059 = vpop.f32.mrf.mxu0
      %v5060 = vadd.f32 %v4987, %v5059
      %5061 = vmatmul.bf16.gmra.mxu0 %v4788
      %v5062 = vpop.f32.mrf.mxu0
      %v5063 = vadd.f32 %v4990, %v5062
      %v5064 = vpop.f32.mrf.mxu0
      %v5065 = vadd.f32 %v4992, %v5064
      %5066 = vmatmul.bf16.gmra.mxu0 %v4791
      %v5067 = vpop.f32.mrf.mxu0
      %v5068 = vadd.f32 %v4995, %v5067
      %v5069 = vpop.f32.mrf.mxu0
      %v5070 = vadd.f32 %v4997, %v5069
      %5071 = vmatmul.bf16.gmra.mxu0 %v4794
      %v5072 = vpop.f32.mrf.mxu0
      %v5073 = vadd.f32 %v5000, %v5072
      %v5074 = vpop.f32.mrf.mxu0
      %v5075 = vadd.f32 %v5002, %v5074
      %5076 = vmatmul.bf16.gmra.mxu0 %v4797
      %v5077 = vpop.f32.mrf.mxu0
      %v5078 = vadd.f32 %v5005, %v5077
      %v5079 = vpop.f32.mrf.mxu0
      %v5080 = vadd.f32 %v5007, %v5079
      %5081 = vmatmul.bf16.gmra.mxu0 %v4800
      %v5082 = vpop.f32.mrf.mxu0
      %v5083 = vadd.f32 %v5010, %v5082
      %v5084 = vpop.f32.mrf.mxu0
      %v5085 = vadd.f32 %v5012, %v5084
      %5086 = vmatmul.bf16.gmra.mxu0 %v4803
      %v5087 = vpop.f32.mrf.mxu0
      %v5088 = vadd.f32 %v5015, %v5087
      %v5089 = vpop.f32.mrf.mxu0
      %v5090 = vadd.f32 %v5017, %v5089
      %5091 = vmatmul.bf16.gmra.mxu0 %v4806
      %v5092 = vpop.f32.mrf.mxu0
      %v5093 = vadd.f32 %v5020, %v5092
      %v5094 = vpop.f32.mrf.mxu0
      %v5095 = vadd.f32 %v5022, %v5094
      %5096 = vmatmul.bf16.gmra.mxu0 %v4809
      %v5097 = vpop.f32.mrf.mxu0
      %v5098 = vadd.f32 %v5025, %v5097
      %v5099 = vpop.f32.mrf.mxu0
      %v5100 = vadd.f32 %v5027, %v5099
      %5101 = vmatmul.bf16.gmra.mxu0 %v4812
      %v5102 = vpop.f32.mrf.mxu0
      %v5103 = vadd.f32 %v5030, %v5102
      %v5104 = vpop.f32.mrf.mxu0
      %5105 = vdwg.mxu0
      %v5106 = vmax.f32 %v4197, %v4897
      %v5107 = vmax.f32 %v4198, %v5043
      %v5108 = vmax.f32 %v4199, %v4899
      %v5109 = vmax.f32 %v4200, %v5045
      %v5110 = vmax.f32 %v4201, %v4902
      %v5111 = vmax.f32 %v4202, %v5048
      %v5112 = vmax.f32 %v4203, %v4904
      %v5113 = vmax.f32 %v4204, %v5050
      %v5114 = vmax.f32 %v4205, %v4907
      %v5115 = vmax.f32 %v4206, %v5053
      %v5116 = vmax.f32 %v4207, %v4909
      %v5117 = vmax.f32 %v4208, %v5055
      %v5118 = vmax.f32 %v4209, %v4912
      %v5119 = vmax.f32 %v4210, %v5058
      %v5120 = vmax.f32 %v4211, %v4914
      %v5121 = vmax.f32 %v4212, %v5060
      %v5122 = vmax.f32 %v4213, %v4917
      %v5123 = vmax.f32 %v4214, %v5063
      %v5124 = vmax.f32 %v4215, %v4919
      %v5125 = vmax.f32 %v4216, %v5065
      %v5126 = vmax.f32 %v4217, %v4922
      %v5127 = vmax.f32 %v4218, %v5068
      %v5128 = vmax.f32 %v4219, %v4924
      %v5129 = vmax.f32 %v4220, %v5070
      %v5130 = vmax.f32 %v4221, %v4927
      %v5131 = vmax.f32 %v4222, %v5073
      %v5132 = vmax.f32 %v4223, %v4929
      %v5133 = vmax.f32 %v4224, %v5075
      %v5134 = vmax.f32 %v4225, %v4932
      %v5135 = vmax.f32 %v4226, %v5078
      %v5136 = vmax.f32 %v4227, %v4934
      %v5137 = vmax.f32 %v4228, %v5080
      %v5138 = vmax.f32 %v4229, %v4937
      %v5139 = vmax.f32 %v4230, %v5083
      %v5140 = vmax.f32 %v4231, %v4939
      %v5141 = vmax.f32 %v4232, %v5085
      %v5142 = vmax.f32 %v4233, %v4942
      %v5143 = vmax.f32 %v4234, %v5088
      %v5144 = vmax.f32 %v4235, %v4944
      %v5145 = vmax.f32 %v4236, %v5090
      %v5146 = vmax.f32 %v4237, %v4947
      %v5147 = vmax.f32 %v4238, %v5093
      %v5148 = vmax.f32 %v4239, %v4949
      %v5149 = vmax.f32 %v4240, %v5095
      %v5150 = vmax.f32 %v4241, %v4952
      %v5151 = vmax.f32 %v4242, %v5098
      %v5152 = vmax.f32 %v4243, %v4954
      %v5153 = vmax.f32 %v4244, %v5100
      %v5154 = vmax.f32 %v4245, %v4957
      %v5155 = vmax.f32 %v4246, %v5103
      %v5156 = vsel %vm4599, -1e+30, %v4247
      %v5157 = vsel %vm4600, -1e+30, %v4248
      %v5158 = vsel %vm4601, -1e+30, %v4249
      %v5159 = vsel %vm4602, -1e+30, %v4250
      %v5160 = vsel %vm4603, -1e+30, %v4251
      %v5161 = vsel %vm4604, -1e+30, %v4252
      %v5162 = vsel %vm4605, -1e+30, %v4253
      %v5163 = vsel %vm4606, -1e+30, %v4254
      %v5164 = vsel %vm4607, -1e+30, %v4255
      %v5165 = vsel %vm4608, -1e+30, %v4256
      %v5166 = vsel %vm4609, -1e+30, %v4257
      %v5167 = vsel %vm4610, -1e+30, %v4258
      %v5168 = vsel %vm4611, -1e+30, %v4259
      %v5169 = vsel %vm4612, -1e+30, %v4260
      %v5170 = vsel %vm4613, -1e+30, %v4261
      %v5171 = vsel %vm4614, -1e+30, %v4262
      %v5172 = vsel %vm4615, -1e+30, %v4263
      %v5173 = vsel %vm4616, -1e+30, %v4264
      %v5174 = vsel %vm4617, -1e+30, %v4265
      %v5175 = vsel %vm4618, -1e+30, %v4266
      %v5176 = vsel %vm4619, -1e+30, %v4267
      %v5177 = vsel %vm4620, -1e+30, %v4268
      %v5178 = vsel %vm4621, -1e+30, %v4269
      %v5179 = vsel %vm4622, -1e+30, %v4270
      %v5180 = vsel %vm4623, -1e+30, %v4271
      %v5181 = vsel %vm4624, -1e+30, %v4272
      %v5182 = vsel %vm4625, -1e+30, %v4273
      %v5183 = vsel %vm4626, -1e+30, %v4274
      %v5184 = vsel %vm4627, -1e+30, %v4275
      %v5185 = vsel %vm4628, -1e+30, %v4276
      %v5186 = vsel %vm4629, -1e+30, %v4277
      %v5187 = vsel %vm4630, -1e+30, %v4278
      %v5188 = vsel %vm4631, -1e+30, %v4279
      %v5189 = vsel %vm4632, -1e+30, %v4280
      %v5190 = vsel %vm4633, -1e+30, %v4281
      %v5191 = vsel %vm4634, -1e+30, %v4282
      %v5192 = vsel %vm4635, -1e+30, %v4283
      %v5193 = vsel %vm4636, -1e+30, %v4284
      %v5194 = vsel %vm4637, -1e+30, %v4285
      %v5195 = vsel %vm4638, -1e+30, %v4286
      %v5196 = vsel %vm4639, -1e+30, %v4287
      %v5197 = vsel %vm4640, -1e+30, %v4288
      %v5198 = vsel %vm4641, -1e+30, %v4289
      %v5199 = vsel %vm4642, -1e+30, %v4290
      %v5200 = vsel %vm4643, -1e+30, %v4291
      %v5201 = vsel %vm4644, -1e+30, %v4292
      %v5202 = vsel %vm4645, -1e+30, %v4293
      %v5203 = vsel %vm4646, -1e+30, %v4294
      %v5204 = vsel %vm4647, -1e+30, %v4295
      %v5205 = vsel %vm4648, -1e+30, %v4296
      %v5206 = vsel %vm2519, %v5157, -inf
      %v5207 = vmax.f32 %v5156, %v5206
      %5208 = vmax.xlane.f32.xlu0 %v5207
      %v5209 = vpop.xlane.xlu0 %5208
      %v5210 = vsel %vm2519, %v5159, -inf
      %v5211 = vmax.f32 %v5158, %v5210
      %5212 = vmax.xlane.f32.xlu0 %v5211
      %v5213 = vpop.xlane.xlu0 %5212
      %v5214 = vsel %vm2519, %v5161, -inf
      %v5215 = vmax.f32 %v5160, %v5214
      %5216 = vmax.xlane.f32.xlu0 %v5215
      %v5217 = vpop.xlane.xlu0 %5216
      %v5218 = vsel %vm2519, %v5163, -inf
      %v5219 = vmax.f32 %v5162, %v5218
      %5220 = vmax.xlane.f32.xlu0 %v5219
      %v5221 = vpop.xlane.xlu0 %5220
      %v5222 = vsel %vm2519, %v5165, -inf
      %v5223 = vmax.f32 %v5164, %v5222
      %5224 = vmax.xlane.f32.xlu0 %v5223
      %v5225 = vpop.xlane.xlu0 %5224
      %v5226 = vsel %vm2519, %v5167, -inf
      %v5227 = vmax.f32 %v5166, %v5226
      %5228 = vmax.xlane.f32.xlu0 %v5227
      %v5229 = vpop.xlane.xlu0 %5228
      %v5230 = vsel %vm2519, %v5169, -inf
      %v5231 = vmax.f32 %v5168, %v5230
      %5232 = vmax.xlane.f32.xlu0 %v5231
      %v5233 = vpop.xlane.xlu0 %5232
      %v5234 = vsel %vm2519, %v5171, -inf
      %v5235 = vmax.f32 %v5170, %v5234
      %5236 = vmax.xlane.f32.xlu0 %v5235
      %v5237 = vpop.xlane.xlu0 %5236
      %v5238 = vsel %vm2519, %v5173, -inf
      %v5239 = vmax.f32 %v5172, %v5238
      %5240 = vmax.xlane.f32.xlu0 %v5239
      %v5241 = vpop.xlane.xlu0 %5240
      %v5242 = vsel %vm2519, %v5175, -inf
      %v5243 = vmax.f32 %v5174, %v5242
      %5244 = vmax.xlane.f32.xlu0 %v5243
      %v5245 = vpop.xlane.xlu0 %5244
      %v5246 = vsel %vm2519, %v5177, -inf
      %v5247 = vmax.f32 %v5176, %v5246
      %5248 = vmax.xlane.f32.xlu0 %v5247
      %v5249 = vpop.xlane.xlu0 %5248
      %v5250 = vsel %vm2519, %v5179, -inf
      %v5251 = vmax.f32 %v5178, %v5250
      %5252 = vmax.xlane.f32.xlu0 %v5251
      %v5253 = vpop.xlane.xlu0 %5252
      %v5254 = vsel %vm2519, %v5181, -inf
      %v5255 = vmax.f32 %v5180, %v5254
      %5256 = vmax.xlane.f32.xlu0 %v5255
      %v5257 = vpop.xlane.xlu0 %5256
      %v5258 = vsel %vm2519, %v5183, -inf
      %v5259 = vmax.f32 %v5182, %v5258
      %5260 = vmax.xlane.f32.xlu0 %v5259
      %v5261 = vpop.xlane.xlu0 %5260
      %v5262 = vsel %vm2519, %v5185, -inf
      %v5263 = vmax.f32 %v5184, %v5262
      %5264 = vmax.xlane.f32.xlu0 %v5263
      %v5265 = vpop.xlane.xlu0 %5264
      %v5266 = vsel %vm2519, %v5187, -inf
      %v5267 = vmax.f32 %v5186, %v5266
      %5268 = vmax.xlane.f32.xlu0 %v5267
      %v5269 = vpop.xlane.xlu0 %5268
      %v5270 = vsel %vm2519, %v5189, -inf
      %v5271 = vmax.f32 %v5188, %v5270
      %5272 = vmax.xlane.f32.xlu0 %v5271
      %v5273 = vpop.xlane.xlu0 %5272
      %v5274 = vsel %vm2519, %v5191, -inf
      %v5275 = vmax.f32 %v5190, %v5274
      %5276 = vmax.xlane.f32.xlu0 %v5275
      %v5277 = vpop.xlane.xlu0 %5276
      %v5278 = vsel %vm2519, %v5193, -inf
      %v5279 = vmax.f32 %v5192, %v5278
      %5280 = vmax.xlane.f32.xlu0 %v5279
      %v5281 = vpop.xlane.xlu0 %5280
      %v5282 = vsel %vm2519, %v5195, -inf
      %v5283 = vmax.f32 %v5194, %v5282
      %5284 = vmax.xlane.f32.xlu0 %v5283
      %v5285 = vpop.xlane.xlu0 %5284
      %v5286 = vsel %vm2519, %v5197, -inf
      %v5287 = vmax.f32 %v5196, %v5286
      %5288 = vmax.xlane.f32.xlu0 %v5287
      %v5289 = vpop.xlane.xlu0 %5288
      %v5290 = vsel %vm2519, %v5199, -inf
      %v5291 = vmax.f32 %v5198, %v5290
      %5292 = vmax.xlane.f32.xlu0 %v5291
      %v5293 = vpop.xlane.xlu0 %5292
      %v5294 = vsel %vm2519, %v5201, -inf
      %v5295 = vmax.f32 %v5200, %v5294
      %5296 = vmax.xlane.f32.xlu0 %v5295
      %v5297 = vpop.xlane.xlu0 %5296
      %v5298 = vsel %vm2519, %v5203, -inf
      %v5299 = vmax.f32 %v5202, %v5298
      %5300 = vmax.xlane.f32.xlu0 %v5299
      %v5301 = vpop.xlane.xlu0 %5300
      %v5302 = vsel %vm2616, %v5204, -inf
      %v5303 = vsel %vm2618, %v5205, -inf
      %v5304 = vmax.f32 %v5302, %v5303
      %5305 = vmax.xlane.f32.xlu0 %v5304
      %v5306 = vpop.xlane.xlu0 %5305
      %vm5307 = vcmp.eq.f32.partialorder %v5156, %v5209
      %vm5308 = vcmp.eq.f32.partialorder %v5157, %v5209
      %vm5309 = vcmp.eq.f32.partialorder %v5158, %v5213
      %vm5310 = vcmp.eq.f32.partialorder %v5159, %v5213
      %vm5311 = vcmp.eq.f32.partialorder %v5160, %v5217
      %vm5312 = vcmp.eq.f32.partialorder %v5161, %v5217
      %vm5313 = vcmp.eq.f32.partialorder %v5162, %v5221
      %vm5314 = vcmp.eq.f32.partialorder %v5163, %v5221
      %vm5315 = vcmp.eq.f32.partialorder %v5164, %v5225
      %vm5316 = vcmp.eq.f32.partialorder %v5165, %v5225
      %vm5317 = vcmp.eq.f32.partialorder %v5166, %v5229
      %vm5318 = vcmp.eq.f32.partialorder %v5167, %v5229
      %vm5319 = vcmp.eq.f32.partialorder %v5168, %v5233
      %vm5320 = vcmp.eq.f32.partialorder %v5169, %v5233
      %vm5321 = vcmp.eq.f32.partialorder %v5170, %v5237
      %vm5322 = vcmp.eq.f32.partialorder %v5171, %v5237
      %vm5323 = vcmp.eq.f32.partialorder %v5172, %v5241
      %vm5324 = vcmp.eq.f32.partialorder %v5173, %v5241
      %vm5325 = vcmp.eq.f32.partialorder %v5174, %v5245
      %vm5326 = vcmp.eq.f32.partialorder %v5175, %v5245
      %vm5327 = vcmp.eq.f32.partialorder %v5176, %v5249
      %vm5328 = vcmp.eq.f32.partialorder %v5177, %v5249
      %vm5329 = vcmp.eq.f32.partialorder %v5178, %v5253
      %vm5330 = vcmp.eq.f32.partialorder %v5179, %v5253
      %vm5331 = vcmp.eq.f32.partialorder %v5180, %v5257
      %vm5332 = vcmp.eq.f32.partialorder %v5181, %v5257
      %vm5333 = vcmp.eq.f32.partialorder %v5182, %v5261
      %vm5334 = vcmp.eq.f32.partialorder %v5183, %v5261
      %vm5335 = vcmp.eq.f32.partialorder %v5184, %v5265
      %vm5336 = vcmp.eq.f32.partialorder %v5185, %v5265
      %vm5337 = vcmp.eq.f32.partialorder %v5186, %v5269
      %vm5338 = vcmp.eq.f32.partialorder %v5187, %v5269
      %vm5339 = vcmp.eq.f32.partialorder %v5188, %v5273
      %vm5340 = vcmp.eq.f32.partialorder %v5189, %v5273
      %vm5341 = vcmp.eq.f32.partialorder %v5190, %v5277
      %vm5342 = vcmp.eq.f32.partialorder %v5191, %v5277
      %vm5343 = vcmp.eq.f32.partialorder %v5192, %v5281
      %vm5344 = vcmp.eq.f32.partialorder %v5193, %v5281
      %vm5345 = vcmp.eq.f32.partialorder %v5194, %v5285
      %vm5346 = vcmp.eq.f32.partialorder %v5195, %v5285
      %vm5347 = vcmp.eq.f32.partialorder %v5196, %v5289
      %vm5348 = vcmp.eq.f32.partialorder %v5197, %v5289
      %vm5349 = vcmp.eq.f32.partialorder %v5198, %v5293
      %vm5350 = vcmp.eq.f32.partialorder %v5199, %v5293
      %vm5351 = vcmp.eq.f32.partialorder %v5200, %v5297
      %vm5352 = vcmp.eq.f32.partialorder %v5201, %v5297
      %vm5353 = vcmp.eq.f32.partialorder %v5202, %v5301
      %vm5354 = vcmp.eq.f32.partialorder %v5203, %v5301
      %vm5355 = vcmp.eq.f32.partialorder %v5204, %v5306
      %vm5356 = vcmp.eq.f32.partialorder %v5205, %v5306
      %v5357 = vsel %vm5307, %v1613, 196.0
      %v5358 = vsel %vm5308, %v1614, 196.0
      %v5359 = vsel %vm5309, %v1613, 196.0
      %v5360 = vsel %vm5310, %v1614, 196.0
      %v5361 = vsel %vm5311, %v1613, 196.0
      %v5362 = vsel %vm5312, %v1614, 196.0
      %v5363 = vsel %vm5313, %v1613, 196.0
      %v5364 = vsel %vm5314, %v1614, 196.0
      %v5365 = vsel %vm5315, %v1613, 196.0
      %v5366 = vsel %vm5316, %v1614, 196.0
      %v5367 = vsel %vm5317, %v1613, 196.0
      %v5368 = vsel %vm5318, %v1614, 196.0
      %v5369 = vsel %vm5319, %v1613, 196.0
      %v5370 = vsel %vm5320, %v1614, 196.0
      %v5371 = vsel %vm5321, %v1613, 196.0
      %v5372 = vsel %vm5322, %v1614, 196.0
      %v5373 = vsel %vm5323, %v1613, 196.0
      %v5374 = vsel %vm5324, %v1614, 196.0
      %v5375 = vsel %vm5325, %v1613, 196.0
      %v5376 = vsel %vm5326, %v1614, 196.0
      %v5377 = vsel %vm5327, %v1613, 196.0
      %v5378 = vsel %vm5328, %v1614, 196.0
      %v5379 = vsel %vm5329, %v1613, 196.0
      %v5380 = vsel %vm5330, %v1614, 196.0
      %v5381 = vsel %vm5331, %v1613, 196.0
      %v5382 = vsel %vm5332, %v1614, 196.0
      %v5383 = vsel %vm5333, %v1613, 196.0
      %v5384 = vsel %vm5334, %v1614, 196.0
      %v5385 = vsel %vm5335, %v1613, 196.0
      %v5386 = vsel %vm5336, %v1614, 196.0
      %v5387 = vsel %vm5337, %v1613, 196.0
      %v5388 = vsel %vm5338, %v1614, 196.0
      %v5389 = vsel %vm5339, %v1613, 196.0
      %v5390 = vsel %vm5340, %v1614, 196.0
      %v5391 = vsel %vm5341, %v1613, 196.0
      %v5392 = vsel %vm5342, %v1614, 196.0
      %v5393 = vsel %vm5343, %v1613, 196.0
      %v5394 = vsel %vm5344, %v1614, 196.0
      %v5395 = vsel %vm5345, %v1613, 196.0
      %v5396 = vsel %vm5346, %v1614, 196.0
      %v5397 = vsel %vm5347, %v1613, 196.0
      %v5398 = vsel %vm5348, %v1614, 196.0
      %v5399 = vsel %vm5349, %v1613, 196.0
      %v5400 = vsel %vm5350, %v1614, 196.0
      %v5401 = vsel %vm5351, %v1613, 196.0
      %v5402 = vsel %vm5352, %v1614, 196.0
      %v5403 = vsel %vm5353, %v1613, 196.0
      %v5404 = vsel %vm5354, %v1614, 196.0
      %v5405 = vsel %vm5355, %v1613, 196.0
      %v5406 = vsel %vm5356, %v1614, 196.0
      %v5407 = vsel %vm2519, %v5358, inf
      %v5408 = vmin.f32 %v5357, %v5407
      %5409 = vmin.xlane.f32.xlu0 %v5408
      %v5410 = vpop.xlane.xlu0 %5409
      %v5411 = vsel %vm2519, %v5360, inf
      %v5412 = vmin.f32 %v5359, %v5411
      %5413 = vmin.xlane.f32.xlu0 %v5412
      %v5414 = vpop.xlane.xlu0 %5413
      %v5415 = vsel %vm2519, %v5362, inf
      %v5416 = vmin.f32 %v5361, %v5415
      %5417 = vmin.xlane.f32.xlu0 %v5416
      %v5418 = vpop.xlane.xlu0 %5417
      %v5419 = vsel %vm2519, %v5364, inf
      %v5420 = vmin.f32 %v5363, %v5419
      %5421 = vmin.xlane.f32.xlu0 %v5420
      %v5422 = vpop.xlane.xlu0 %5421
      %v5423 = vsel %vm2519, %v5366, inf
      %v5424 = vmin.f32 %v5365, %v5423
      %5425 = vmin.xlane.f32.xlu0 %v5424
      %v5426 = vpop.xlane.xlu0 %5425
      %v5427 = vsel %vm2519, %v5368, inf
      %v5428 = vmin.f32 %v5367, %v5427
      %5429 = vmin.xlane.f32.xlu0 %v5428
      %v5430 = vpop.xlane.xlu0 %5429
      %v5431 = vsel %vm2519, %v5370, inf
      %v5432 = vmin.f32 %v5369, %v5431
      %5433 = vmin.xlane.f32.xlu0 %v5432
      %v5434 = vpop.xlane.xlu0 %5433
      %v5435 = vsel %vm2519, %v5372, inf
      %v5436 = vmin.f32 %v5371, %v5435
      %5437 = vmin.xlane.f32.xlu0 %v5436
      %v5438 = vpop.xlane.xlu0 %5437
      %v5439 = vsel %vm2519, %v5374, inf
      %v5440 = vmin.f32 %v5373, %v5439
      %5441 = vmin.xlane.f32.xlu0 %v5440
      %v5442 = vpop.xlane.xlu0 %5441
      %v5443 = vsel %vm2519, %v5376, inf
      %v5444 = vmin.f32 %v5375, %v5443
      %5445 = vmin.xlane.f32.xlu0 %v5444
      %v5446 = vpop.xlane.xlu0 %5445
      %v5447 = vsel %vm2519, %v5378, inf
      %v5448 = vmin.f32 %v5377, %v5447
      %5449 = vmin.xlane.f32.xlu0 %v5448
      %v5450 = vpop.xlane.xlu0 %5449
      %v5451 = vsel %vm2519, %v5380, inf
      %v5452 = vmin.f32 %v5379, %v5451
      %5453 = vmin.xlane.f32.xlu0 %v5452
      %v5454 = vpop.xlane.xlu0 %5453
      %v5455 = vsel %vm2519, %v5382, inf
      %v5456 = vmin.f32 %v5381, %v5455
      %5457 = vmin.xlane.f32.xlu0 %v5456
      %v5458 = vpop.xlane.xlu0 %5457
      %v5459 = vsel %vm2519, %v5384, inf
      %v5460 = vmin.f32 %v5383, %v5459
      %5461 = vmin.xlane.f32.xlu0 %v5460
      %v5462 = vpop.xlane.xlu0 %5461
      %v5463 = vsel %vm2519, %v5386, inf
      %v5464 = vmin.f32 %v5385, %v5463
      %5465 = vmin.xlane.f32.xlu0 %v5464
      %v5466 = vpop.xlane.xlu0 %5465
      %v5467 = vsel %vm2519, %v5388, inf
      %v5468 = vmin.f32 %v5387, %v5467
      %5469 = vmin.xlane.f32.xlu0 %v5468
      %v5470 = vpop.xlane.xlu0 %5469
      %v5471 = vsel %vm2519, %v5390, inf
      %v5472 = vmin.f32 %v5389, %v5471
      %5473 = vmin.xlane.f32.xlu0 %v5472
      %v5474 = vpop.xlane.xlu0 %5473
      %v5475 = vsel %vm2519, %v5392, inf
      %v5476 = vmin.f32 %v5391, %v5475
      %5477 = vmin.xlane.f32.xlu0 %v5476
      %v5478 = vpop.xlane.xlu0 %5477
      %v5479 = vsel %vm2519, %v5394, inf
      %v5480 = vmin.f32 %v5393, %v5479
      %5481 = vmin.xlane.f32.xlu0 %v5480
      %v5482 = vpop.xlane.xlu0 %5481
      %v5483 = vsel %vm2519, %v5396, inf
      %v5484 = vmin.f32 %v5395, %v5483
      %5485 = vmin.xlane.f32.xlu0 %v5484
      %v5486 = vpop.xlane.xlu0 %5485
      %v5487 = vsel %vm2519, %v5398, inf
      %v5488 = vmin.f32 %v5397, %v5487
      %5489 = vmin.xlane.f32.xlu0 %v5488
      %v5490 = vpop.xlane.xlu0 %5489
      %v5491 = vsel %vm2519, %v5400, inf
      %v5492 = vmin.f32 %v5399, %v5491
      %5493 = vmin.xlane.f32.xlu0 %v5492
      %v5494 = vpop.xlane.xlu0 %5493
      %v5495 = vsel %vm2519, %v5402, inf
      %v5496 = vmin.f32 %v5401, %v5495
      %5497 = vmin.xlane.f32.xlu0 %v5496
      %v5498 = vpop.xlane.xlu0 %5497
      %v5499 = vsel %vm2519, %v5404, inf
      %v5500 = vmin.f32 %v5403, %v5499
      %5501 = vmin.xlane.f32.xlu0 %v5500
      %v5502 = vpop.xlane.xlu0 %5501
      %v5503 = vsel %vm2616, %v5405, inf
      %v5504 = vsel %vm2618, %v5406, inf
      %v5505 = vmin.f32 %v5503, %v5504
      %5506 = vmin.xlane.f32.xlu0 %v5505
      %v5507 = vpop.xlane.xlu0 %5506
      %vm5508 = vcmp.eq.f32.partialorder %v1613, %v5410
      %vm5509 = vcmp.eq.f32.partialorder %v1614, %v5410
      %vm5510 = vcmp.eq.f32.partialorder %v1613, %v5414
      %vm5511 = vcmp.eq.f32.partialorder %v1614, %v5414
      %vm5512 = vcmp.eq.f32.partialorder %v1613, %v5418
      %vm5513 = vcmp.eq.f32.partialorder %v1614, %v5418
      %vm5514 = vcmp.eq.f32.partialorder %v1613, %v5422
      %vm5515 = vcmp.eq.f32.partialorder %v1614, %v5422
      %vm5516 = vcmp.eq.f32.partialorder %v1613, %v5426
      %vm5517 = vcmp.eq.f32.partialorder %v1614, %v5426
      %vm5518 = vcmp.eq.f32.partialorder %v1613, %v5430
      %vm5519 = vcmp.eq.f32.partialorder %v1614, %v5430
      %vm5520 = vcmp.eq.f32.partialorder %v1613, %v5434
      %vm5521 = vcmp.eq.f32.partialorder %v1614, %v5434
      %vm5522 = vcmp.eq.f32.partialorder %v1613, %v5438
      %vm5523 = vcmp.eq.f32.partialorder %v1614, %v5438
      %vm5524 = vcmp.eq.f32.partialorder %v1613, %v5442
      %vm5525 = vcmp.eq.f32.partialorder %v1614, %v5442
      %vm5526 = vcmp.eq.f32.partialorder %v1613, %v5446
      %vm5527 = vcmp.eq.f32.partialorder %v1614, %v5446
      %vm5528 = vcmp.eq.f32.partialorder %v1613, %v5450
      %vm5529 = vcmp.eq.f32.partialorder %v1614, %v5450
      %vm5530 = vcmp.eq.f32.partialorder %v1613, %v5454
      %vm5531 = vcmp.eq.f32.partialorder %v1614, %v5454
      %vm5532 = vcmp.eq.f32.partialorder %v1613, %v5458
      %vm5533 = vcmp.eq.f32.partialorder %v1614, %v5458
      %vm5534 = vcmp.eq.f32.partialorder %v1613, %v5462
      %vm5535 = vcmp.eq.f32.partialorder %v1614, %v5462
      %vm5536 = vcmp.eq.f32.partialorder %v1613, %v5466
      %vm5537 = vcmp.eq.f32.partialorder %v1614, %v5466
      %vm5538 = vcmp.eq.f32.partialorder %v1613, %v5470
      %vm5539 = vcmp.eq.f32.partialorder %v1614, %v5470
      %vm5540 = vcmp.eq.f32.partialorder %v1613, %v5474
      %vm5541 = vcmp.eq.f32.partialorder %v1614, %v5474
      %vm5542 = vcmp.eq.f32.partialorder %v1613, %v5478
      %vm5543 = vcmp.eq.f32.partialorder %v1614, %v5478
      %vm5544 = vcmp.eq.f32.partialorder %v1613, %v5482
      %vm5545 = vcmp.eq.f32.partialorder %v1614, %v5482
      %vm5546 = vcmp.eq.f32.partialorder %v1613, %v5486
      %vm5547 = vcmp.eq.f32.partialorder %v1614, %v5486
      %vm5548 = vcmp.eq.f32.partialorder %v1613, %v5490
      %vm5549 = vcmp.eq.f32.partialorder %v1614, %v5490
      %vm5550 = vcmp.eq.f32.partialorder %v1613, %v5494
      %vm5551 = vcmp.eq.f32.partialorder %v1614, %v5494
      %vm5552 = vcmp.eq.f32.partialorder %v1613, %v5498
      %vm5553 = vcmp.eq.f32.partialorder %v1614, %v5498
      %vm5554 = vcmp.eq.f32.partialorder %v1613, %v5502
      %vm5555 = vcmp.eq.f32.partialorder %v1614, %v5502
      %vm5556 = vcmp.eq.f32.partialorder %v1613, %v5507
      %vm5557 = vcmp.eq.f32.partialorder %v1614, %v5507
      %v5558 = vsel %vm5508, 1, 0
      %v5559 = vsel %vm5509, 1, 0
      %v5560 = vsel %vm5510, 1, 0
      %v5561 = vsel %vm5511, 1, 0
      %v5562 = vsel %vm5512, 1, 0
      %v5563 = vsel %vm5513, 1, 0
      %v5564 = vsel %vm5514, 1, 0
      %v5565 = vsel %vm5515, 1, 0
      %v5566 = vsel %vm5516, 1, 0
      %v5567 = vsel %vm5517, 1, 0
      %v5568 = vsel %vm5518, 1, 0
      %v5569 = vsel %vm5519, 1, 0
      %v5570 = vsel %vm5520, 1, 0
      %v5571 = vsel %vm5521, 1, 0
      %v5572 = vsel %vm5522, 1, 0
      %v5573 = vsel %vm5523, 1, 0
      %v5574 = vsel %vm5524, 1, 0
      %v5575 = vsel %vm5525, 1, 0
      %v5576 = vsel %vm5526, 1, 0
      %v5577 = vsel %vm5527, 1, 0
      %v5578 = vsel %vm5528, 1, 0
      %v5579 = vsel %vm5529, 1, 0
      %v5580 = vsel %vm5530, 1, 0
      %v5581 = vsel %vm5531, 1, 0
      %v5582 = vsel %vm5532, 1, 0
      %v5583 = vsel %vm5533, 1, 0
      %v5584 = vsel %vm5534, 1, 0
      %v5585 = vsel %vm5535, 1, 0
      %v5586 = vsel %vm5536, 1, 0
      %v5587 = vsel %vm5537, 1, 0
      %v5588 = vsel %vm5538, 1, 0
      %v5589 = vsel %vm5539, 1, 0
      %v5590 = vsel %vm5540, 1, 0
      %v5591 = vsel %vm5541, 1, 0
      %v5592 = vsel %vm5542, 1, 0
      %v5593 = vsel %vm5543, 1, 0
      %v5594 = vsel %vm5544, 1, 0
      %v5595 = vsel %vm5545, 1, 0
      %v5596 = vsel %vm5546, 1, 0
      %v5597 = vsel %vm5547, 1, 0
      %v5598 = vsel %vm5548, 1, 0
      %v5599 = vsel %vm5549, 1, 0
      %v5600 = vsel %vm5550, 1, 0
      %v5601 = vsel %vm5551, 1, 0
      %v5602 = vsel %vm5552, 1, 0
      %v5603 = vsel %vm5553, 1, 0
      %v5604 = vsel %vm5554, 1, 0
      %v5605 = vsel %vm5555, 1, 0
      %v5606 = vsel %vm5556, 1, 0
      %v5607 = vsel %vm5557, 1, 0
      %v5608 = vcvt.s32.f32 %v5558
      %v5609 = vcvt.s32.f32 %v5559
      %v5610 = vcvt.s32.f32 %v5560
      %v5611 = vcvt.s32.f32 %v5561
      %v5612 = vcvt.s32.f32 %v5562
      %v5613 = vcvt.s32.f32 %v5563
      %v5614 = vcvt.s32.f32 %v5564
      %v5615 = vcvt.s32.f32 %v5565
      %v5616 = vcvt.s32.f32 %v5566
      %v5617 = vcvt.s32.f32 %v5567
      %v5618 = vcvt.s32.f32 %v5568
      %v5619 = vcvt.s32.f32 %v5569
      %v5620 = vcvt.s32.f32 %v5570
      %v5621 = vcvt.s32.f32 %v5571
      %v5622 = vcvt.s32.f32 %v5572
      %v5623 = vcvt.s32.f32 %v5573
      %v5624 = vcvt.s32.f32 %v5574
      %v5625 = vcvt.s32.f32 %v5575
      %v5626 = vcvt.s32.f32 %v5576
      %v5627 = vcvt.s32.f32 %v5577
      %v5628 = vcvt.s32.f32 %v5578
      %v5629 = vcvt.s32.f32 %v5579
      %v5630 = vcvt.s32.f32 %v5580
      %v5631 = vcvt.s32.f32 %v5581
      %v5632 = vcvt.s32.f32 %v5582
      %v5633 = vcvt.s32.f32 %v5583
      %v5634 = vcvt.s32.f32 %v5584
      %v5635 = vcvt.s32.f32 %v5585
      %v5636 = vcvt.s32.f32 %v5586
      %v5637 = vcvt.s32.f32 %v5587
      %v5638 = vcvt.s32.f32 %v5588
      %v5639 = vcvt.s32.f32 %v5589
      %v5640 = vcvt.s32.f32 %v5590
      %v5641 = vcvt.s32.f32 %v5591
      %v5642 = vcvt.s32.f32 %v5592
      %v5643 = vcvt.s32.f32 %v5593
      %v5644 = vcvt.s32.f32 %v5594
      %v5645 = vcvt.s32.f32 %v5595
      %v5646 = vcvt.s32.f32 %v5596
      %v5647 = vcvt.s32.f32 %v5597
      %v5648 = vcvt.s32.f32 %v5598
      %v5649 = vcvt.s32.f32 %v5599
      %v5650 = vcvt.s32.f32 %v5600
      %v5651 = vcvt.s32.f32 %v5601
      %v5652 = vcvt.s32.f32 %v5602
      %v5653 = vcvt.s32.f32 %v5603
      %v5654 = vcvt.s32.f32 %v5604
      %v5655 = vcvt.s32.f32 %v5605
      %v5656 = vcvt.s32.f32 %v5606
      %v5657 = vcvt.s32.f32 %v5607
      %v5658 = vpack.c.bf16 %v5610, %v5608
      %v5659 = vpack.c.bf16 %v5611, %v5609
      %v5660 = vpack.c.bf16 %v5614, %v5612
      %v5661 = vpack.c.bf16 %v5615, %v5613
      %v5662 = vpack.c.bf16 %v5618, %v5616
      %v5663 = vpack.c.bf16 %v5619, %v5617
      %v5664 = vpack.c.bf16 %v5622, %v5620
      %v5665 = vpack.c.bf16 %v5623, %v5621
      %v5666 = vpack.c.bf16 %v5626, %v5624
      %v5667 = vpack.c.bf16 %v5627, %v5625
      %v5668 = vpack.c.bf16 %v5630, %v5628
      %v5669 = vpack.c.bf16 %v5631, %v5629
      %v5670 = vpack.c.bf16 %v5634, %v5632
      %v5671 = vpack.c.bf16 %v5635, %v5633
      %v5672 = vpack.c.bf16 %v5638, %v5636
      %v5673 = vpack.c.bf16 %v5639, %v5637
      %v5674 = vpack.c.bf16 %v5642, %v5640
      %v5675 = vpack.c.bf16 %v5643, %v5641
      %v5676 = vpack.c.bf16 %v5646, %v5644
      %v5677 = vpack.c.bf16 %v5647, %v5645
      %v5678 = vpack.c.bf16 %v5650, %v5648
      %v5679 = vpack.c.bf16 %v5651, %v5649
      %v5680 = vpack.c.bf16 %v5654, %v5652
      %v5681 = vpack.c.bf16 %v5655, %v5653
      %v5682 = vpack.c.bf16 %v5656, %v5656
      %v5683 = vpack.c.bf16 %v5657, %v5657
      %v5685 = vsel %vm2519, %v5659, 0
      %v5688 = vsel %vm2519, %v5661, 0
      %v5691 = vsel %vm2519, %v5663, 0
      %v5694 = vsel %vm2519, %v5665, 0
      %v5697 = vsel %vm2519, %v5667, 0
      %v5700 = vsel %vm2519, %v5669, 0
      %v5703 = vsel %vm2519, %v5671, 0
      %v5706 = vsel %vm2519, %v5673, 0
      %v5709 = vsel %vm2519, %v5675, 0
      %v5712 = vsel %vm2519, %v5677, 0
      %v5715 = vsel %vm2519, %v5679, 0
      %v5718 = vsel %vm2519, %v5681, 0
      %v5721 = vsel %vm2519, %v5683, 0
      %5723 = vmatpush.bf16.msra.mxu0 %v2507
      %5724 = vmatpush.bf16.msra.mxu0 %v2505
      %5725 = vmatpush.bf16.msra.mxu0 %v2503
      %5726 = vmatpush.bf16.msra.mxu0 %v2501
      %5727 = vmatpush.bf16.msra.mxu0 %v2499
      %5728 = vmatpush.bf16.msra.mxu0 %v2497
      %5729 = vmatpush.bf16.msra.mxu0 %v2495
      %5730 = vmatpush.bf16.msra.mxu0 %v2493
      %5731 = vmatmul.bf16.gmra.mxu0 %v5658
      %v5732 = vpop.f32.mrf.mxu0
      %v5733 = vadd.f32 0.0, %v5732
      %v5734 = vpop.f32.mrf.mxu0
      %v5735 = vadd.f32 0.0, %v5734
      %5736 = vmatmul.bf16.gmra.mxu0 %v5660
      %v5737 = vpop.f32.mrf.mxu0
      %v5738 = vadd.f32 0.0, %v5737
      %v5739 = vpop.f32.mrf.mxu0
      %v5740 = vadd.f32 0.0, %v5739
      %5741 = vmatmul.bf16.gmra.mxu0 %v5662
      %v5742 = vpop.f32.mrf.mxu0
      %v5743 = vadd.f32 0.0, %v5742
      %v5744 = vpop.f32.mrf.mxu0
      %v5745 = vadd.f32 0.0, %v5744
      %5746 = vmatmul.bf16.gmra.mxu0 %v5664
      %v5747 = vpop.f32.mrf.mxu0
      %v5748 = vadd.f32 0.0, %v5747
      %v5749 = vpop.f32.mrf.mxu0
      %v5750 = vadd.f32 0.0, %v5749
      %5751 = vmatmul.bf16.gmra.mxu0 %v5666
      %v5752 = vpop.f32.mrf.mxu0
      %v5753 = vadd.f32 0.0, %v5752
      %v5754 = vpop.f32.mrf.mxu0
      %v5755 = vadd.f32 0.0, %v5754
      %5756 = vmatmul.bf16.gmra.mxu0 %v5668
      %v5757 = vpop.f32.mrf.mxu0
      %v5758 = vadd.f32 0.0, %v5757
      %v5759 = vpop.f32.mrf.mxu0
      %v5760 = vadd.f32 0.0, %v5759
      %5761 = vmatmul.bf16.gmra.mxu0 %v5670
      %v5762 = vpop.f32.mrf.mxu0
      %v5763 = vadd.f32 0.0, %v5762
      %v5764 = vpop.f32.mrf.mxu0
      %v5765 = vadd.f32 0.0, %v5764
      %5766 = vmatmul.bf16.gmra.mxu0 %v5672
      %v5767 = vpop.f32.mrf.mxu0
      %v5768 = vadd.f32 0.0, %v5767
      %v5769 = vpop.f32.mrf.mxu0
      %v5770 = vadd.f32 0.0, %v5769
      %5771 = vmatmul.bf16.gmra.mxu0 %v5674
      %v5772 = vpop.f32.mrf.mxu0
      %v5773 = vadd.f32 0.0, %v5772
      %v5774 = vpop.f32.mrf.mxu0
      %v5775 = vadd.f32 0.0, %v5774
      %5776 = vmatmul.bf16.gmra.mxu0 %v5676
      %v5777 = vpop.f32.mrf.mxu0
      %v5778 = vadd.f32 0.0, %v5777
      %v5779 = vpop.f32.mrf.mxu0
      %v5780 = vadd.f32 0.0, %v5779
      %5781 = vmatmul.bf16.gmra.mxu0 %v5678
      %v5782 = vpop.f32.mrf.mxu0
      %v5783 = vadd.f32 0.0, %v5782
      %v5784 = vpop.f32.mrf.mxu0
      %v5785 = vadd.f32 0.0, %v5784
      %5786 = vmatmul.bf16.gmra.mxu0 %v5680
      %v5787 = vpop.f32.mrf.mxu0
      %v5788 = vadd.f32 0.0, %v5787
      %v5789 = vpop.f32.mrf.mxu0
      %v5790 = vadd.f32 0.0, %v5789
      %5791 = vmatmul.bf16.gmra.mxu0 %v5682
      %v5792 = vpop.f32.mrf.mxu0
      %v5793 = vadd.f32 0.0, %v5792
      %v5794 = vpop.f32.mrf.mxu0
      %5795 = vdwg.mxu0
      %5796 = vmatpush.bf16.msra.mxu0 0
      %5797 = vmatpush.bf16.msra.mxu0 0
      %5798 = vmatpush.bf16.msra.mxu0 0
      %5799 = vmatpush.bf16.msra.mxu0 %v3041
      %5800 = vmatpush.bf16.msra.mxu0 %v2515
      %5801 = vmatpush.bf16.msra.mxu0 %v2513
      %5802 = vmatpush.bf16.msra.mxu0 %v2511
      %5803 = vmatpush.bf16.msra.mxu0 %v2509
      %5804 = vmatmul.bf16.gmra.mxu0 %v5685
      %v5805 = vpop.f32.mrf.mxu0
      %v5806 = vadd.f32 %v5733, %v5805
      %v5807 = vpop.f32.mrf.mxu0
      %v5808 = vadd.f32 %v5735, %v5807
      %5809 = vmatmul.bf16.gmra.mxu0 %v5688
      %v5810 = vpop.f32.mrf.mxu0
      %v5811 = vadd.f32 %v5738, %v5810
      %v5812 = vpop.f32.mrf.mxu0
      %v5813 = vadd.f32 %v5740, %v5812
      %5814 = vmatmul.bf16.gmra.mxu0 %v5691
      %v5815 = vpop.f32.mrf.mxu0
      %v5816 = vadd.f32 %v5743, %v5815
      %v5817 = vpop.f32.mrf.mxu0
      %v5818 = vadd.f32 %v5745, %v5817
      %5819 = vmatmul.bf16.gmra.mxu0 %v5694
      %v5820 = vpop.f32.mrf.mxu0
      %v5821 = vadd.f32 %v5748, %v5820
      %v5822 = vpop.f32.mrf.mxu0
      %v5823 = vadd.f32 %v5750, %v5822
      %5824 = vmatmul.bf16.gmra.mxu0 %v5697
      %v5825 = vpop.f32.mrf.mxu0
      %v5826 = vadd.f32 %v5753, %v5825
      %v5827 = vpop.f32.mrf.mxu0
      %v5828 = vadd.f32 %v5755, %v5827
      %5829 = vmatmul.bf16.gmra.mxu0 %v5700
      %v5830 = vpop.f32.mrf.mxu0
      %v5831 = vadd.f32 %v5758, %v5830
      %v5832 = vpop.f32.mrf.mxu0
      %v5833 = vadd.f32 %v5760, %v5832
      %5834 = vmatmul.bf16.gmra.mxu0 %v5703
      %v5835 = vpop.f32.mrf.mxu0
      %v5836 = vadd.f32 %v5763, %v5835
      %v5837 = vpop.f32.mrf.mxu0
      %v5838 = vadd.f32 %v5765, %v5837
      %5839 = vmatmul.bf16.gmra.mxu0 %v5706
      %v5840 = vpop.f32.mrf.mxu0
      %v5841 = vadd.f32 %v5768, %v5840
      %v5842 = vpop.f32.mrf.mxu0
      %v5843 = vadd.f32 %v5770, %v5842
      %5844 = vmatmul.bf16.gmra.mxu0 %v5709
      %v5845 = vpop.f32.mrf.mxu0
      %v5846 = vadd.f32 %v5773, %v5845
      %v5847 = vpop.f32.mrf.mxu0
      %v5848 = vadd.f32 %v5775, %v5847
      %5849 = vmatmul.bf16.gmra.mxu0 %v5712
      %v5850 = vpop.f32.mrf.mxu0
      %v5851 = vadd.f32 %v5778, %v5850
      %v5852 = vpop.f32.mrf.mxu0
      %v5853 = vadd.f32 %v5780, %v5852
      %5854 = vmatmul.bf16.gmra.mxu0 %v5715
      %v5855 = vpop.f32.mrf.mxu0
      %v5856 = vadd.f32 %v5783, %v5855
      %v5857 = vpop.f32.mrf.mxu0
      %v5858 = vadd.f32 %v5785, %v5857
      %5859 = vmatmul.bf16.gmra.mxu0 %v5718
      %v5860 = vpop.f32.mrf.mxu0
      %v5861 = vadd.f32 %v5788, %v5860
      %v5862 = vpop.f32.mrf.mxu0
      %v5863 = vadd.f32 %v5790, %v5862
      %5864 = vmatmul.bf16.gmra.mxu0 %v5721
      %v5865 = vpop.f32.mrf.mxu0
      %v5866 = vadd.f32 %v5793, %v5865
      %v5867 = vpop.f32.mrf.mxu0
      %5868 = vdwg.mxu0
      %5869 = vmatpush.bf16.msra.mxu0 %v2508
      %5870 = vmatpush.bf16.msra.mxu0 %v2506
      %5871 = vmatpush.bf16.msra.mxu0 %v2504
      %5872 = vmatpush.bf16.msra.mxu0 %v2502
      %5873 = vmatpush.bf16.msra.mxu0 %v2500
      %5874 = vmatpush.bf16.msra.mxu0 %v2498
      %5875 = vmatpush.bf16.msra.mxu0 %v2496
      %5876 = vmatpush.bf16.msra.mxu0 %v2494
      %5877 = vmatmul.bf16.gmra.mxu0 %v5658
      %v5878 = vpop.f32.mrf.mxu0
      %v5879 = vadd.f32 0.0, %v5878
      %v5880 = vpop.f32.mrf.mxu0
      %v5881 = vadd.f32 0.0, %v5880
      %5882 = vmatmul.bf16.gmra.mxu0 %v5660
      %v5883 = vpop.f32.mrf.mxu0
      %v5884 = vadd.f32 0.0, %v5883
      %v5885 = vpop.f32.mrf.mxu0
      %v5886 = vadd.f32 0.0, %v5885
      %5887 = vmatmul.bf16.gmra.mxu0 %v5662
      %v5888 = vpop.f32.mrf.mxu0
      %v5889 = vadd.f32 0.0, %v5888
      %v5890 = vpop.f32.mrf.mxu0
      %v5891 = vadd.f32 0.0, %v5890
      %5892 = vmatmul.bf16.gmra.mxu0 %v5664
      %v5893 = vpop.f32.mrf.mxu0
      %v5894 = vadd.f32 0.0, %v5893
      %v5895 = vpop.f32.mrf.mxu0
      %v5896 = vadd.f32 0.0, %v5895
      %5897 = vmatmul.bf16.gmra.mxu0 %v5666
      %v5898 = vpop.f32.mrf.mxu0
      %v5899 = vadd.f32 0.0, %v5898
      %v5900 = vpop.f32.mrf.mxu0
      %v5901 = vadd.f32 0.0, %v5900
      %5902 = vmatmul.bf16.gmra.mxu0 %v5668
      %v5903 = vpop.f32.mrf.mxu0
      %v5904 = vadd.f32 0.0, %v5903
      %v5905 = vpop.f32.mrf.mxu0
      %v5906 = vadd.f32 0.0, %v5905
      %5907 = vmatmul.bf16.gmra.mxu0 %v5670
      %v5908 = vpop.f32.mrf.mxu0
      %v5909 = vadd.f32 0.0, %v5908
      %v5910 = vpop.f32.mrf.mxu0
      %v5911 = vadd.f32 0.0, %v5910
      %5912 = vmatmul.bf16.gmra.mxu0 %v5672
      %v5913 = vpop.f32.mrf.mxu0
      %v5914 = vadd.f32 0.0, %v5913
      %v5915 = vpop.f32.mrf.mxu0
      %v5916 = vadd.f32 0.0, %v5915
      %5917 = vmatmul.bf16.gmra.mxu0 %v5674
      %v5918 = vpop.f32.mrf.mxu0
      %v5919 = vadd.f32 0.0, %v5918
      %v5920 = vpop.f32.mrf.mxu0
      %v5921 = vadd.f32 0.0, %v5920
      %5922 = vmatmul.bf16.gmra.mxu0 %v5676
      %v5923 = vpop.f32.mrf.mxu0
      %v5924 = vadd.f32 0.0, %v5923
      %v5925 = vpop.f32.mrf.mxu0
      %v5926 = vadd.f32 0.0, %v5925
      %5927 = vmatmul.bf16.gmra.mxu0 %v5678
      %v5928 = vpop.f32.mrf.mxu0
      %v5929 = vadd.f32 0.0, %v5928
      %v5930 = vpop.f32.mrf.mxu0
      %v5931 = vadd.f32 0.0, %v5930
      %5932 = vmatmul.bf16.gmra.mxu0 %v5680
      %v5933 = vpop.f32.mrf.mxu0
      %v5934 = vadd.f32 0.0, %v5933
      %v5935 = vpop.f32.mrf.mxu0
      %v5936 = vadd.f32 0.0, %v5935
      %5937 = vmatmul.bf16.gmra.mxu0 %v5682
      %v5938 = vpop.f32.mrf.mxu0
      %v5939 = vadd.f32 0.0, %v5938
      %v5940 = vpop.f32.mrf.mxu0
      %5941 = vdwg.mxu0
      %5942 = vmatpush.bf16.msra.mxu0 0
      %5943 = vmatpush.bf16.msra.mxu0 0
      %5944 = vmatpush.bf16.msra.mxu0 0
      %5945 = vmatpush.bf16.msra.mxu0 %v3044
      %5946 = vmatpush.bf16.msra.mxu0 %v2516
      %5947 = vmatpush.bf16.msra.mxu0 %v2514
      %5948 = vmatpush.bf16.msra.mxu0 %v2512
      %5949 = vmatpush.bf16.msra.mxu0 %v2510
      %5950 = vmatmul.bf16.gmra.mxu0 %v5685
      %v5951 = vpop.f32.mrf.mxu0
      %v5952 = vadd.f32 %v5879, %v5951
      %v5953 = vpop.f32.mrf.mxu0
      %v5954 = vadd.f32 %v5881, %v5953
      %5955 = vmatmul.bf16.gmra.mxu0 %v5688
      %v5956 = vpop.f32.mrf.mxu0
      %v5957 = vadd.f32 %v5884, %v5956
      %v5958 = vpop.f32.mrf.mxu0
      %v5959 = vadd.f32 %v5886, %v5958
      %5960 = vmatmul.bf16.gmra.mxu0 %v5691
      %v5961 = vpop.f32.mrf.mxu0
      %v5962 = vadd.f32 %v5889, %v5961
      %v5963 = vpop.f32.mrf.mxu0
      %v5964 = vadd.f32 %v5891, %v5963
      %5965 = vmatmul.bf16.gmra.mxu0 %v5694
      %v5966 = vpop.f32.mrf.mxu0
      %v5967 = vadd.f32 %v5894, %v5966
      %v5968 = vpop.f32.mrf.mxu0
      %v5969 = vadd.f32 %v5896, %v5968
      %5970 = vmatmul.bf16.gmra.mxu0 %v5697
      %v5971 = vpop.f32.mrf.mxu0
      %v5972 = vadd.f32 %v5899, %v5971
      %v5973 = vpop.f32.mrf.mxu0
      %v5974 = vadd.f32 %v5901, %v5973
      %5975 = vmatmul.bf16.gmra.mxu0 %v5700
      %v5976 = vpop.f32.mrf.mxu0
      %v5977 = vadd.f32 %v5904, %v5976
      %v5978 = vpop.f32.mrf.mxu0
      %v5979 = vadd.f32 %v5906, %v5978
      %5980 = vmatmul.bf16.gmra.mxu0 %v5703
      %v5981 = vpop.f32.mrf.mxu0
      %v5982 = vadd.f32 %v5909, %v5981
      %v5983 = vpop.f32.mrf.mxu0
      %v5984 = vadd.f32 %v5911, %v5983
      %5985 = vmatmul.bf16.gmra.mxu0 %v5706
      %v5986 = vpop.f32.mrf.mxu0
      %v5987 = vadd.f32 %v5914, %v5986
      %v5988 = vpop.f32.mrf.mxu0
      %v5989 = vadd.f32 %v5916, %v5988
      %5990 = vmatmul.bf16.gmra.mxu0 %v5709
      %v5991 = vpop.f32.mrf.mxu0
      %v5992 = vadd.f32 %v5919, %v5991
      %v5993 = vpop.f32.mrf.mxu0
      %v5994 = vadd.f32 %v5921, %v5993
      %5995 = vmatmul.bf16.gmra.mxu0 %v5712
      %v5996 = vpop.f32.mrf.mxu0
      %v5997 = vadd.f32 %v5924, %v5996
      %v5998 = vpop.f32.mrf.mxu0
      %v5999 = vadd.f32 %v5926, %v5998
      %6000 = vmatmul.bf16.gmra.mxu0 %v5715
      %v6001 = vpop.f32.mrf.mxu0
      %v6002 = vadd.f32 %v5929, %v6001
      %v6003 = vpop.f32.mrf.mxu0
      %v6004 = vadd.f32 %v5931, %v6003
      %6005 = vmatmul.bf16.gmra.mxu0 %v5718
      %v6006 = vpop.f32.mrf.mxu0
      %v6007 = vadd.f32 %v5934, %v6006
      %v6008 = vpop.f32.mrf.mxu0
      %v6009 = vadd.f32 %v5936, %v6008
      %6010 = vmatmul.bf16.gmra.mxu0 %v5721
      %v6011 = vpop.f32.mrf.mxu0
      %v6012 = vadd.f32 %v5939, %v6011
      %v6013 = vpop.f32.mrf.mxu0
      %6014 = vdwg.mxu0
      %v6015 = vmax.f32 %v5106, %v5806
      %v6016 = vmax.f32 %v5107, %v5952
      %v6017 = vmax.f32 %v5108, %v5808
      %v6018 = vmax.f32 %v5109, %v5954
      %v6019 = vmax.f32 %v5110, %v5811
      %v6020 = vmax.f32 %v5111, %v5957
      %v6021 = vmax.f32 %v5112, %v5813
      %v6022 = vmax.f32 %v5113, %v5959
      %v6023 = vmax.f32 %v5114, %v5816
      %v6024 = vmax.f32 %v5115, %v5962
      %v6025 = vmax.f32 %v5116, %v5818
      %v6026 = vmax.f32 %v5117, %v5964
      %v6027 = vmax.f32 %v5118, %v5821
      %v6028 = vmax.f32 %v5119, %v5967
      %v6029 = vmax.f32 %v5120, %v5823
      %v6030 = vmax.f32 %v5121, %v5969
      %v6031 = vmax.f32 %v5122, %v5826
      %v6032 = vmax.f32 %v5123, %v5972
      %v6033 = vmax.f32 %v5124, %v5828
      %v6034 = vmax.f32 %v5125, %v5974
      %v6035 = vmax.f32 %v5126, %v5831
      %v6036 = vmax.f32 %v5127, %v5977
      %v6037 = vmax.f32 %v5128, %v5833
      %v6038 = vmax.f32 %v5129, %v5979
      %v6039 = vmax.f32 %v5130, %v5836
      %v6040 = vmax.f32 %v5131, %v5982
      %v6041 = vmax.f32 %v5132, %v5838
      %v6042 = vmax.f32 %v5133, %v5984
      %v6043 = vmax.f32 %v5134, %v5841
      %v6044 = vmax.f32 %v5135, %v5987
      %v6045 = vmax.f32 %v5136, %v5843
      %v6046 = vmax.f32 %v5137, %v5989
      %v6047 = vmax.f32 %v5138, %v5846
      %v6048 = vmax.f32 %v5139, %v5992
      %v6049 = vmax.f32 %v5140, %v5848
      %v6050 = vmax.f32 %v5141, %v5994
      %v6051 = vmax.f32 %v5142, %v5851
      %v6052 = vmax.f32 %v5143, %v5997
      %v6053 = vmax.f32 %v5144, %v5853
      %v6054 = vmax.f32 %v5145, %v5999
      %v6055 = vmax.f32 %v5146, %v5856
      %v6056 = vmax.f32 %v5147, %v6002
      %v6057 = vmax.f32 %v5148, %v5858
      %v6058 = vmax.f32 %v5149, %v6004
      %v6059 = vmax.f32 %v5150, %v5861
      %v6060 = vmax.f32 %v5151, %v6007
      %v6061 = vmax.f32 %v5152, %v5863
      %v6062 = vmax.f32 %v5153, %v6009
      %v6063 = vmax.f32 %v5154, %v5866
      %v6064 = vmax.f32 %v5155, %v6012
      %v6065 = vsel %vm5508, -1e+30, %v5156
      %v6066 = vsel %vm5509, -1e+30, %v5157
      %v6067 = vsel %vm5510, -1e+30, %v5158
      %v6068 = vsel %vm5511, -1e+30, %v5159
      %v6069 = vsel %vm5512, -1e+30, %v5160
      %v6070 = vsel %vm5513, -1e+30, %v5161
      %v6071 = vsel %vm5514, -1e+30, %v5162
      %v6072 = vsel %vm5515, -1e+30, %v5163
      %v6073 = vsel %vm5516, -1e+30, %v5164
      %v6074 = vsel %vm5517, -1e+30, %v5165
      %v6075 = vsel %vm5518, -1e+30, %v5166
      %v6076 = vsel %vm5519, -1e+30, %v5167
      %v6077 = vsel %vm5520, -1e+30, %v5168
      %v6078 = vsel %vm5521, -1e+30, %v5169
      %v6079 = vsel %vm5522, -1e+30, %v5170
      %v6080 = vsel %vm5523, -1e+30, %v5171
      %v6081 = vsel %vm5524, -1e+30, %v5172
      %v6082 = vsel %vm5525, -1e+30, %v5173
      %v6083 = vsel %vm5526, -1e+30, %v5174
      %v6084 = vsel %vm5527, -1e+30, %v5175
      %v6085 = vsel %vm5528, -1e+30, %v5176
      %v6086 = vsel %vm5529, -1e+30, %v5177
      %v6087 = vsel %vm5530, -1e+30, %v5178
      %v6088 = vsel %vm5531, -1e+30, %v5179
      %v6089 = vsel %vm5532, -1e+30, %v5180
      %v6090 = vsel %vm5533, -1e+30, %v5181
      %v6091 = vsel %vm5534, -1e+30, %v5182
      %v6092 = vsel %vm5535, -1e+30, %v5183
      %v6093 = vsel %vm5536, -1e+30, %v5184
      %v6094 = vsel %vm5537, -1e+30, %v5185
      %v6095 = vsel %vm5538, -1e+30, %v5186
      %v6096 = vsel %vm5539, -1e+30, %v5187
      %v6097 = vsel %vm5540, -1e+30, %v5188
      %v6098 = vsel %vm5541, -1e+30, %v5189
      %v6099 = vsel %vm5542, -1e+30, %v5190
      %v6100 = vsel %vm5543, -1e+30, %v5191
      %v6101 = vsel %vm5544, -1e+30, %v5192
      %v6102 = vsel %vm5545, -1e+30, %v5193
      %v6103 = vsel %vm5546, -1e+30, %v5194
      %v6104 = vsel %vm5547, -1e+30, %v5195
      %v6105 = vsel %vm5548, -1e+30, %v5196
      %v6106 = vsel %vm5549, -1e+30, %v5197
      %v6107 = vsel %vm5550, -1e+30, %v5198
      %v6108 = vsel %vm5551, -1e+30, %v5199
      %v6109 = vsel %vm5552, -1e+30, %v5200
      %v6110 = vsel %vm5553, -1e+30, %v5201
      %v6111 = vsel %vm5554, -1e+30, %v5202
      %v6112 = vsel %vm5555, -1e+30, %v5203
      %v6113 = vsel %vm5556, -1e+30, %v5204
      %v6114 = vsel %vm5557, -1e+30, %v5205
      %v6115 = vsel %vm2519, %v6066, -inf
      %v6116 = vmax.f32 %v6065, %v6115
      %6117 = vmax.xlane.f32.xlu0 %v6116
      %v6118 = vpop.xlane.xlu0 %6117
      %v6119 = vsel %vm2519, %v6068, -inf
      %v6120 = vmax.f32 %v6067, %v6119
      %6121 = vmax.xlane.f32.xlu0 %v6120
      %v6122 = vpop.xlane.xlu0 %6121
      %v6123 = vsel %vm2519, %v6070, -inf
      %v6124 = vmax.f32 %v6069, %v6123
      %6125 = vmax.xlane.f32.xlu0 %v6124
      %v6126 = vpop.xlane.xlu0 %6125
      %v6127 = vsel %vm2519, %v6072, -inf
      %v6128 = vmax.f32 %v6071, %v6127
      %6129 = vmax.xlane.f32.xlu0 %v6128
      %v6130 = vpop.xlane.xlu0 %6129
      %v6131 = vsel %vm2519, %v6074, -inf
      %v6132 = vmax.f32 %v6073, %v6131
      %6133 = vmax.xlane.f32.xlu0 %v6132
      %v6134 = vpop.xlane.xlu0 %6133
      %v6135 = vsel %vm2519, %v6076, -inf
      %v6136 = vmax.f32 %v6075, %v6135
      %6137 = vmax.xlane.f32.xlu0 %v6136
      %v6138 = vpop.xlane.xlu0 %6137
      %v6139 = vsel %vm2519, %v6078, -inf
      %v6140 = vmax.f32 %v6077, %v6139
      %6141 = vmax.xlane.f32.xlu0 %v6140
      %v6142 = vpop.xlane.xlu0 %6141
      %v6143 = vsel %vm2519, %v6080, -inf
      %v6144 = vmax.f32 %v6079, %v6143
      %6145 = vmax.xlane.f32.xlu0 %v6144
      %v6146 = vpop.xlane.xlu0 %6145
      %v6147 = vsel %vm2519, %v6082, -inf
      %v6148 = vmax.f32 %v6081, %v6147
      %6149 = vmax.xlane.f32.xlu0 %v6148
      %v6150 = vpop.xlane.xlu0 %6149
      %v6151 = vsel %vm2519, %v6084, -inf
      %v6152 = vmax.f32 %v6083, %v6151
      %6153 = vmax.xlane.f32.xlu0 %v6152
      %v6154 = vpop.xlane.xlu0 %6153
      %v6155 = vsel %vm2519, %v6086, -inf
      %v6156 = vmax.f32 %v6085, %v6155
      %6157 = vmax.xlane.f32.xlu0 %v6156
      %v6158 = vpop.xlane.xlu0 %6157
      %v6159 = vsel %vm2519, %v6088, -inf
      %v6160 = vmax.f32 %v6087, %v6159
      %6161 = vmax.xlane.f32.xlu0 %v6160
      %v6162 = vpop.xlane.xlu0 %6161
      %v6163 = vsel %vm2519, %v6090, -inf
      %v6164 = vmax.f32 %v6089, %v6163
      %6165 = vmax.xlane.f32.xlu0 %v6164
      %v6166 = vpop.xlane.xlu0 %6165
      %v6167 = vsel %vm2519, %v6092, -inf
      %v6168 = vmax.f32 %v6091, %v6167
      %6169 = vmax.xlane.f32.xlu0 %v6168
      %v6170 = vpop.xlane.xlu0 %6169
      %v6171 = vsel %vm2519, %v6094, -inf
      %v6172 = vmax.f32 %v6093, %v6171
      %6173 = vmax.xlane.f32.xlu0 %v6172
      %v6174 = vpop.xlane.xlu0 %6173
      %v6175 = vsel %vm2519, %v6096, -inf
      %v6176 = vmax.f32 %v6095, %v6175
      %6177 = vmax.xlane.f32.xlu0 %v6176
      %v6178 = vpop.xlane.xlu0 %6177
      %v6179 = vsel %vm2519, %v6098, -inf
      %v6180 = vmax.f32 %v6097, %v6179
      %6181 = vmax.xlane.f32.xlu0 %v6180
      %v6182 = vpop.xlane.xlu0 %6181
      %v6183 = vsel %vm2519, %v6100, -inf
      %v6184 = vmax.f32 %v6099, %v6183
      %6185 = vmax.xlane.f32.xlu0 %v6184
      %v6186 = vpop.xlane.xlu0 %6185
      %v6187 = vsel %vm2519, %v6102, -inf
      %v6188 = vmax.f32 %v6101, %v6187
      %6189 = vmax.xlane.f32.xlu0 %v6188
      %v6190 = vpop.xlane.xlu0 %6189
      %v6191 = vsel %vm2519, %v6104, -inf
      %v6192 = vmax.f32 %v6103, %v6191
      %6193 = vmax.xlane.f32.xlu0 %v6192
      %v6194 = vpop.xlane.xlu0 %6193
      %v6195 = vsel %vm2519, %v6106, -inf
      %v6196 = vmax.f32 %v6105, %v6195
      %6197 = vmax.xlane.f32.xlu0 %v6196
      %v6198 = vpop.xlane.xlu0 %6197
      %v6199 = vsel %vm2519, %v6108, -inf
      %v6200 = vmax.f32 %v6107, %v6199
      %6201 = vmax.xlane.f32.xlu0 %v6200
      %v6202 = vpop.xlane.xlu0 %6201
      %v6203 = vsel %vm2519, %v6110, -inf
      %v6204 = vmax.f32 %v6109, %v6203
      %6205 = vmax.xlane.f32.xlu0 %v6204
      %v6206 = vpop.xlane.xlu0 %6205
      %v6207 = vsel %vm2519, %v6112, -inf
      %v6208 = vmax.f32 %v6111, %v6207
      %6209 = vmax.xlane.f32.xlu0 %v6208
      %v6210 = vpop.xlane.xlu0 %6209
      %v6211 = vsel %vm2616, %v6113, -inf
      %v6212 = vsel %vm2618, %v6114, -inf
      %v6213 = vmax.f32 %v6211, %v6212
      %6214 = vmax.xlane.f32.xlu0 %v6213
      %v6215 = vpop.xlane.xlu0 %6214
      %vm6216 = vcmp.eq.f32.partialorder %v6065, %v6118
      %vm6217 = vcmp.eq.f32.partialorder %v6066, %v6118
      %vm6218 = vcmp.eq.f32.partialorder %v6067, %v6122
      %vm6219 = vcmp.eq.f32.partialorder %v6068, %v6122
      %vm6220 = vcmp.eq.f32.partialorder %v6069, %v6126
      %vm6221 = vcmp.eq.f32.partialorder %v6070, %v6126
      %vm6222 = vcmp.eq.f32.partialorder %v6071, %v6130
      %vm6223 = vcmp.eq.f32.partialorder %v6072, %v6130
      %vm6224 = vcmp.eq.f32.partialorder %v6073, %v6134
      %vm6225 = vcmp.eq.f32.partialorder %v6074, %v6134
      %vm6226 = vcmp.eq.f32.partialorder %v6075, %v6138
      %vm6227 = vcmp.eq.f32.partialorder %v6076, %v6138
      %vm6228 = vcmp.eq.f32.partialorder %v6077, %v6142
      %vm6229 = vcmp.eq.f32.partialorder %v6078, %v6142
      %vm6230 = vcmp.eq.f32.partialorder %v6079, %v6146
      %vm6231 = vcmp.eq.f32.partialorder %v6080, %v6146
      %vm6232 = vcmp.eq.f32.partialorder %v6081, %v6150
      %vm6233 = vcmp.eq.f32.partialorder %v6082, %v6150
      %vm6234 = vcmp.eq.f32.partialorder %v6083, %v6154
      %vm6235 = vcmp.eq.f32.partialorder %v6084, %v6154
      %vm6236 = vcmp.eq.f32.partialorder %v6085, %v6158
      %vm6237 = vcmp.eq.f32.partialorder %v6086, %v6158
      %vm6238 = vcmp.eq.f32.partialorder %v6087, %v6162
      %vm6239 = vcmp.eq.f32.partialorder %v6088, %v6162
      %vm6240 = vcmp.eq.f32.partialorder %v6089, %v6166
      %vm6241 = vcmp.eq.f32.partialorder %v6090, %v6166
      %vm6242 = vcmp.eq.f32.partialorder %v6091, %v6170
      %vm6243 = vcmp.eq.f32.partialorder %v6092, %v6170
      %vm6244 = vcmp.eq.f32.partialorder %v6093, %v6174
      %vm6245 = vcmp.eq.f32.partialorder %v6094, %v6174
      %vm6246 = vcmp.eq.f32.partialorder %v6095, %v6178
      %vm6247 = vcmp.eq.f32.partialorder %v6096, %v6178
      %vm6248 = vcmp.eq.f32.partialorder %v6097, %v6182
      %vm6249 = vcmp.eq.f32.partialorder %v6098, %v6182
      %vm6250 = vcmp.eq.f32.partialorder %v6099, %v6186
      %vm6251 = vcmp.eq.f32.partialorder %v6100, %v6186
      %vm6252 = vcmp.eq.f32.partialorder %v6101, %v6190
      %vm6253 = vcmp.eq.f32.partialorder %v6102, %v6190
      %vm6254 = vcmp.eq.f32.partialorder %v6103, %v6194
      %vm6255 = vcmp.eq.f32.partialorder %v6104, %v6194
      %vm6256 = vcmp.eq.f32.partialorder %v6105, %v6198
      %vm6257 = vcmp.eq.f32.partialorder %v6106, %v6198
      %vm6258 = vcmp.eq.f32.partialorder %v6107, %v6202
      %vm6259 = vcmp.eq.f32.partialorder %v6108, %v6202
      %vm6260 = vcmp.eq.f32.partialorder %v6109, %v6206
      %vm6261 = vcmp.eq.f32.partialorder %v6110, %v6206
      %vm6262 = vcmp.eq.f32.partialorder %v6111, %v6210
      %vm6263 = vcmp.eq.f32.partialorder %v6112, %v6210
      %vm6264 = vcmp.eq.f32.partialorder %v6113, %v6215
      %vm6265 = vcmp.eq.f32.partialorder %v6114, %v6215
      %v6266 = vsel %vm6216, %v1613, 196.0
      %v6267 = vsel %vm6217, %v1614, 196.0
      %v6268 = vsel %vm6218, %v1613, 196.0
      %v6269 = vsel %vm6219, %v1614, 196.0
      %v6270 = vsel %vm6220, %v1613, 196.0
      %v6271 = vsel %vm6221, %v1614, 196.0
      %v6272 = vsel %vm6222, %v1613, 196.0
      %v6273 = vsel %vm6223, %v1614, 196.0
      %v6274 = vsel %vm6224, %v1613, 196.0
      %v6275 = vsel %vm6225, %v1614, 196.0
      %v6276 = vsel %vm6226, %v1613, 196.0
      %v6277 = vsel %vm6227, %v1614, 196.0
      %v6278 = vsel %vm6228, %v1613, 196.0
      %v6279 = vsel %vm6229, %v1614, 196.0
      %v6280 = vsel %vm6230, %v1613, 196.0
      %v6281 = vsel %vm6231, %v1614, 196.0
      %v6282 = vsel %vm6232, %v1613, 196.0
      %v6283 = vsel %vm6233, %v1614, 196.0
      %v6284 = vsel %vm6234, %v1613, 196.0
      %v6285 = vsel %vm6235, %v1614, 196.0
      %v6286 = vsel %vm6236, %v1613, 196.0
      %v6287 = vsel %vm6237, %v1614, 196.0
      %v6288 = vsel %vm6238, %v1613, 196.0
      %v6289 = vsel %vm6239, %v1614, 196.0
      %v6290 = vsel %vm6240, %v1613, 196.0
      %v6291 = vsel %vm6241, %v1614, 196.0
      %v6292 = vsel %vm6242, %v1613, 196.0
      %v6293 = vsel %vm6243, %v1614, 196.0
      %v6294 = vsel %vm6244, %v1613, 196.0
      %v6295 = vsel %vm6245, %v1614, 196.0
      %v6296 = vsel %vm6246, %v1613, 196.0
      %v6297 = vsel %vm6247, %v1614, 196.0
      %v6298 = vsel %vm6248, %v1613, 196.0
      %v6299 = vsel %vm6249, %v1614, 196.0
      %v6300 = vsel %vm6250, %v1613, 196.0
      %v6301 = vsel %vm6251, %v1614, 196.0
      %v6302 = vsel %vm6252, %v1613, 196.0
      %v6303 = vsel %vm6253, %v1614, 196.0
      %v6304 = vsel %vm6254, %v1613, 196.0
      %v6305 = vsel %vm6255, %v1614, 196.0
      %v6306 = vsel %vm6256, %v1613, 196.0
      %v6307 = vsel %vm6257, %v1614, 196.0
      %v6308 = vsel %vm6258, %v1613, 196.0
      %v6309 = vsel %vm6259, %v1614, 196.0
      %v6310 = vsel %vm6260, %v1613, 196.0
      %v6311 = vsel %vm6261, %v1614, 196.0
      %v6312 = vsel %vm6262, %v1613, 196.0
      %v6313 = vsel %vm6263, %v1614, 196.0
      %v6314 = vsel %vm6264, %v1613, 196.0
      %v6315 = vsel %vm6265, %v1614, 196.0
      %v6316 = vsel %vm2519, %v6267, inf
      %v6317 = vmin.f32 %v6266, %v6316
      %6318 = vmin.xlane.f32.xlu0 %v6317
      %v6319 = vpop.xlane.xlu0 %6318
      %v6320 = vsel %vm2519, %v6269, inf
      %v6321 = vmin.f32 %v6268, %v6320
      %6322 = vmin.xlane.f32.xlu0 %v6321
      %v6323 = vpop.xlane.xlu0 %6322
      %v6324 = vsel %vm2519, %v6271, inf
      %v6325 = vmin.f32 %v6270, %v6324
      %6326 = vmin.xlane.f32.xlu0 %v6325
      %v6327 = vpop.xlane.xlu0 %6326
      %v6328 = vsel %vm2519, %v6273, inf
      %v6329 = vmin.f32 %v6272, %v6328
      %6330 = vmin.xlane.f32.xlu0 %v6329
      %v6331 = vpop.xlane.xlu0 %6330
      %v6332 = vsel %vm2519, %v6275, inf
      %v6333 = vmin.f32 %v6274, %v6332
      %6334 = vmin.xlane.f32.xlu0 %v6333
      %v6335 = vpop.xlane.xlu0 %6334
      %v6336 = vsel %vm2519, %v6277, inf
      %v6337 = vmin.f32 %v6276, %v6336
      %6338 = vmin.xlane.f32.xlu0 %v6337
      %v6339 = vpop.xlane.xlu0 %6338
      %v6340 = vsel %vm2519, %v6279, inf
      %v6341 = vmin.f32 %v6278, %v6340
      %6342 = vmin.xlane.f32.xlu0 %v6341
      %v6343 = vpop.xlane.xlu0 %6342
      %v6344 = vsel %vm2519, %v6281, inf
      %v6345 = vmin.f32 %v6280, %v6344
      %6346 = vmin.xlane.f32.xlu0 %v6345
      %v6347 = vpop.xlane.xlu0 %6346
      %v6348 = vsel %vm2519, %v6283, inf
      %v6349 = vmin.f32 %v6282, %v6348
      %6350 = vmin.xlane.f32.xlu0 %v6349
      %v6351 = vpop.xlane.xlu0 %6350
      %v6352 = vsel %vm2519, %v6285, inf
      %v6353 = vmin.f32 %v6284, %v6352
      %6354 = vmin.xlane.f32.xlu0 %v6353
      %v6355 = vpop.xlane.xlu0 %6354
      %v6356 = vsel %vm2519, %v6287, inf
      %v6357 = vmin.f32 %v6286, %v6356
      %6358 = vmin.xlane.f32.xlu0 %v6357
      %v6359 = vpop.xlane.xlu0 %6358
      %v6360 = vsel %vm2519, %v6289, inf
      %v6361 = vmin.f32 %v6288, %v6360
      %6362 = vmin.xlane.f32.xlu0 %v6361
      %v6363 = vpop.xlane.xlu0 %6362
      %v6364 = vsel %vm2519, %v6291, inf
      %v6365 = vmin.f32 %v6290, %v6364
      %6366 = vmin.xlane.f32.xlu0 %v6365
      %v6367 = vpop.xlane.xlu0 %6366
      %v6368 = vsel %vm2519, %v6293, inf
      %v6369 = vmin.f32 %v6292, %v6368
      %6370 = vmin.xlane.f32.xlu0 %v6369
      %v6371 = vpop.xlane.xlu0 %6370
      %v6372 = vsel %vm2519, %v6295, inf
      %v6373 = vmin.f32 %v6294, %v6372
      %6374 = vmin.xlane.f32.xlu0 %v6373
      %v6375 = vpop.xlane.xlu0 %6374
      %v6376 = vsel %vm2519, %v6297, inf
      %v6377 = vmin.f32 %v6296, %v6376
      %6378 = vmin.xlane.f32.xlu0 %v6377
      %v6379 = vpop.xlane.xlu0 %6378
      %v6380 = vsel %vm2519, %v6299, inf
      %v6381 = vmin.f32 %v6298, %v6380
      %6382 = vmin.xlane.f32.xlu0 %v6381
      %v6383 = vpop.xlane.xlu0 %6382
      %v6384 = vsel %vm2519, %v6301, inf
      %v6385 = vmin.f32 %v6300, %v6384
      %6386 = vmin.xlane.f32.xlu0 %v6385
      %v6387 = vpop.xlane.xlu0 %6386
      %v6388 = vsel %vm2519, %v6303, inf
      %v6389 = vmin.f32 %v6302, %v6388
      %6390 = vmin.xlane.f32.xlu0 %v6389
      %v6391 = vpop.xlane.xlu0 %6390
      %v6392 = vsel %vm2519, %v6305, inf
      %v6393 = vmin.f32 %v6304, %v6392
      %6394 = vmin.xlane.f32.xlu0 %v6393
      %v6395 = vpop.xlane.xlu0 %6394
      %v6396 = vsel %vm2519, %v6307, inf
      %v6397 = vmin.f32 %v6306, %v6396
      %6398 = vmin.xlane.f32.xlu0 %v6397
      %v6399 = vpop.xlane.xlu0 %6398
      %v6400 = vsel %vm2519, %v6309, inf
      %v6401 = vmin.f32 %v6308, %v6400
      %6402 = vmin.xlane.f32.xlu0 %v6401
      %v6403 = vpop.xlane.xlu0 %6402
      %v6404 = vsel %vm2519, %v6311, inf
      %v6405 = vmin.f32 %v6310, %v6404
      %6406 = vmin.xlane.f32.xlu0 %v6405
      %v6407 = vpop.xlane.xlu0 %6406
      %v6408 = vsel %vm2519, %v6313, inf
      %v6409 = vmin.f32 %v6312, %v6408
      %6410 = vmin.xlane.f32.xlu0 %v6409
      %v6411 = vpop.xlane.xlu0 %6410
      %v6412 = vsel %vm2616, %v6314, inf
      %v6413 = vsel %vm2618, %v6315, inf
      %v6414 = vmin.f32 %v6412, %v6413
      %6415 = vmin.xlane.f32.xlu0 %v6414
      %v6416 = vpop.xlane.xlu0 %6415
      %vm6417 = vcmp.eq.f32.partialorder %v1613, %v6319
      %vm6418 = vcmp.eq.f32.partialorder %v1614, %v6319
      %vm6419 = vcmp.eq.f32.partialorder %v1613, %v6323
      %vm6420 = vcmp.eq.f32.partialorder %v1614, %v6323
      %vm6421 = vcmp.eq.f32.partialorder %v1613, %v6327
      %vm6422 = vcmp.eq.f32.partialorder %v1614, %v6327
      %vm6423 = vcmp.eq.f32.partialorder %v1613, %v6331
      %vm6424 = vcmp.eq.f32.partialorder %v1614, %v6331
      %vm6425 = vcmp.eq.f32.partialorder %v1613, %v6335
      %vm6426 = vcmp.eq.f32.partialorder %v1614, %v6335
      %vm6427 = vcmp.eq.f32.partialorder %v1613, %v6339
      %vm6428 = vcmp.eq.f32.partialorder %v1614, %v6339
      %vm6429 = vcmp.eq.f32.partialorder %v1613, %v6343
      %vm6430 = vcmp.eq.f32.partialorder %v1614, %v6343
      %vm6431 = vcmp.eq.f32.partialorder %v1613, %v6347
      %vm6432 = vcmp.eq.f32.partialorder %v1614, %v6347
      %vm6433 = vcmp.eq.f32.partialorder %v1613, %v6351
      %vm6434 = vcmp.eq.f32.partialorder %v1614, %v6351
      %vm6435 = vcmp.eq.f32.partialorder %v1613, %v6355
      %vm6436 = vcmp.eq.f32.partialorder %v1614, %v6355
      %vm6437 = vcmp.eq.f32.partialorder %v1613, %v6359
      %vm6438 = vcmp.eq.f32.partialorder %v1614, %v6359
      %vm6439 = vcmp.eq.f32.partialorder %v1613, %v6363
      %vm6440 = vcmp.eq.f32.partialorder %v1614, %v6363
      %vm6441 = vcmp.eq.f32.partialorder %v1613, %v6367
      %vm6442 = vcmp.eq.f32.partialorder %v1614, %v6367
      %vm6443 = vcmp.eq.f32.partialorder %v1613, %v6371
      %vm6444 = vcmp.eq.f32.partialorder %v1614, %v6371
      %vm6445 = vcmp.eq.f32.partialorder %v1613, %v6375
      %vm6446 = vcmp.eq.f32.partialorder %v1614, %v6375
      %vm6447 = vcmp.eq.f32.partialorder %v1613, %v6379
      %vm6448 = vcmp.eq.f32.partialorder %v1614, %v6379
      %vm6449 = vcmp.eq.f32.partialorder %v1613, %v6383
      %vm6450 = vcmp.eq.f32.partialorder %v1614, %v6383
      %vm6451 = vcmp.eq.f32.partialorder %v1613, %v6387
      %vm6452 = vcmp.eq.f32.partialorder %v1614, %v6387
      %vm6453 = vcmp.eq.f32.partialorder %v1613, %v6391
      %vm6454 = vcmp.eq.f32.partialorder %v1614, %v6391
      %vm6455 = vcmp.eq.f32.partialorder %v1613, %v6395
      %vm6456 = vcmp.eq.f32.partialorder %v1614, %v6395
      %vm6457 = vcmp.eq.f32.partialorder %v1613, %v6399
      %vm6458 = vcmp.eq.f32.partialorder %v1614, %v6399
      %vm6459 = vcmp.eq.f32.partialorder %v1613, %v6403
      %vm6460 = vcmp.eq.f32.partialorder %v1614, %v6403
      %vm6461 = vcmp.eq.f32.partialorder %v1613, %v6407
      %vm6462 = vcmp.eq.f32.partialorder %v1614, %v6407
      %vm6463 = vcmp.eq.f32.partialorder %v1613, %v6411
      %vm6464 = vcmp.eq.f32.partialorder %v1614, %v6411
      %vm6465 = vcmp.eq.f32.partialorder %v1613, %v6416
      %vm6466 = vcmp.eq.f32.partialorder %v1614, %v6416
      %v6467 = vsel %vm6417, 1, 0
      %v6468 = vsel %vm6418, 1, 0
      %v6469 = vsel %vm6419, 1, 0
      %v6470 = vsel %vm6420, 1, 0
      %v6471 = vsel %vm6421, 1, 0
      %v6472 = vsel %vm6422, 1, 0
      %v6473 = vsel %vm6423, 1, 0
      %v6474 = vsel %vm6424, 1, 0
      %v6475 = vsel %vm6425, 1, 0
      %v6476 = vsel %vm6426, 1, 0
      %v6477 = vsel %vm6427, 1, 0
      %v6478 = vsel %vm6428, 1, 0
      %v6479 = vsel %vm6429, 1, 0
      %v6480 = vsel %vm6430, 1, 0
      %v6481 = vsel %vm6431, 1, 0
      %v6482 = vsel %vm6432, 1, 0
      %v6483 = vsel %vm6433, 1, 0
      %v6484 = vsel %vm6434, 1, 0
      %v6485 = vsel %vm6435, 1, 0
      %v6486 = vsel %vm6436, 1, 0
      %v6487 = vsel %vm6437, 1, 0
      %v6488 = vsel %vm6438, 1, 0
      %v6489 = vsel %vm6439, 1, 0
      %v6490 = vsel %vm6440, 1, 0
      %v6491 = vsel %vm6441, 1, 0
      %v6492 = vsel %vm6442, 1, 0
      %v6493 = vsel %vm6443, 1, 0
      %v6494 = vsel %vm6444, 1, 0
      %v6495 = vsel %vm6445, 1, 0
      %v6496 = vsel %vm6446, 1, 0
      %v6497 = vsel %vm6447, 1, 0
      %v6498 = vsel %vm6448, 1, 0
      %v6499 = vsel %vm6449, 1, 0
      %v6500 = vsel %vm6450, 1, 0
      %v6501 = vsel %vm6451, 1, 0
      %v6502 = vsel %vm6452, 1, 0
      %v6503 = vsel %vm6453, 1, 0
      %v6504 = vsel %vm6454, 1, 0
      %v6505 = vsel %vm6455, 1, 0
      %v6506 = vsel %vm6456, 1, 0
      %v6507 = vsel %vm6457, 1, 0
      %v6508 = vsel %vm6458, 1, 0
      %v6509 = vsel %vm6459, 1, 0
      %v6510 = vsel %vm6460, 1, 0
      %v6511 = vsel %vm6461, 1, 0
      %v6512 = vsel %vm6462, 1, 0
      %v6513 = vsel %vm6463, 1, 0
      %v6514 = vsel %vm6464, 1, 0
      %v6515 = vsel %vm6465, 1, 0
      %v6516 = vsel %vm6466, 1, 0
      %v6517 = vcvt.s32.f32 %v6467
      %v6518 = vcvt.s32.f32 %v6468
      %v6519 = vcvt.s32.f32 %v6469
      %v6520 = vcvt.s32.f32 %v6470
      %v6521 = vcvt.s32.f32 %v6471
      %v6522 = vcvt.s32.f32 %v6472
      %v6523 = vcvt.s32.f32 %v6473
      %v6524 = vcvt.s32.f32 %v6474
      %v6525 = vcvt.s32.f32 %v6475
      %v6526 = vcvt.s32.f32 %v6476
      %v6527 = vcvt.s32.f32 %v6477
      %v6528 = vcvt.s32.f32 %v6478
      %v6529 = vcvt.s32.f32 %v6479
      %v6530 = vcvt.s32.f32 %v6480
      %v6531 = vcvt.s32.f32 %v6481
      %v6532 = vcvt.s32.f32 %v6482
      %v6533 = vcvt.s32.f32 %v6483
      %v6534 = vcvt.s32.f32 %v6484
      %v6535 = vcvt.s32.f32 %v6485
      %v6536 = vcvt.s32.f32 %v6486
      %v6537 = vcvt.s32.f32 %v6487
      %v6538 = vcvt.s32.f32 %v6488
      %v6539 = vcvt.s32.f32 %v6489
      %v6540 = vcvt.s32.f32 %v6490
      %v6541 = vcvt.s32.f32 %v6491
      %v6542 = vcvt.s32.f32 %v6492
      %v6543 = vcvt.s32.f32 %v6493
      %v6544 = vcvt.s32.f32 %v6494
      %v6545 = vcvt.s32.f32 %v6495
      %v6546 = vcvt.s32.f32 %v6496
      %v6547 = vcvt.s32.f32 %v6497
      %v6548 = vcvt.s32.f32 %v6498
      %v6549 = vcvt.s32.f32 %v6499
      %v6550 = vcvt.s32.f32 %v6500
      %v6551 = vcvt.s32.f32 %v6501
      %v6552 = vcvt.s32.f32 %v6502
      %v6553 = vcvt.s32.f32 %v6503
      %v6554 = vcvt.s32.f32 %v6504
      %v6555 = vcvt.s32.f32 %v6505
      %v6556 = vcvt.s32.f32 %v6506
      %v6557 = vcvt.s32.f32 %v6507
      %v6558 = vcvt.s32.f32 %v6508
      %v6559 = vcvt.s32.f32 %v6509
      %v6560 = vcvt.s32.f32 %v6510
      %v6561 = vcvt.s32.f32 %v6511
      %v6562 = vcvt.s32.f32 %v6512
      %v6563 = vcvt.s32.f32 %v6513
      %v6564 = vcvt.s32.f32 %v6514
      %v6565 = vcvt.s32.f32 %v6515
      %v6566 = vcvt.s32.f32 %v6516
      %v6567 = vpack.c.bf16 %v6519, %v6517
      %v6568 = vpack.c.bf16 %v6520, %v6518
      %v6569 = vpack.c.bf16 %v6523, %v6521
      %v6570 = vpack.c.bf16 %v6524, %v6522
      %v6571 = vpack.c.bf16 %v6527, %v6525
      %v6572 = vpack.c.bf16 %v6528, %v6526
      %v6573 = vpack.c.bf16 %v6531, %v6529
      %v6574 = vpack.c.bf16 %v6532, %v6530
      %v6575 = vpack.c.bf16 %v6535, %v6533
      %v6576 = vpack.c.bf16 %v6536, %v6534
      %v6577 = vpack.c.bf16 %v6539, %v6537
      %v6578 = vpack.c.bf16 %v6540, %v6538
      %v6579 = vpack.c.bf16 %v6543, %v6541
      %v6580 = vpack.c.bf16 %v6544, %v6542
      %v6581 = vpack.c.bf16 %v6547, %v6545
      %v6582 = vpack.c.bf16 %v6548, %v6546
      %v6583 = vpack.c.bf16 %v6551, %v6549
      %v6584 = vpack.c.bf16 %v6552, %v6550
      %v6585 = vpack.c.bf16 %v6555, %v6553
      %v6586 = vpack.c.bf16 %v6556, %v6554
      %v6587 = vpack.c.bf16 %v6559, %v6557
      %v6588 = vpack.c.bf16 %v6560, %v6558
      %v6589 = vpack.c.bf16 %v6563, %v6561
      %v6590 = vpack.c.bf16 %v6564, %v6562
      %v6591 = vpack.c.bf16 %v6565, %v6565
      %v6592 = vpack.c.bf16 %v6566, %v6566
      %v6594 = vsel %vm2519, %v6568, 0
      %v6597 = vsel %vm2519, %v6570, 0
      %v6600 = vsel %vm2519, %v6572, 0
      %v6603 = vsel %vm2519, %v6574, 0
      %v6606 = vsel %vm2519, %v6576, 0
      %v6609 = vsel %vm2519, %v6578, 0
      %v6612 = vsel %vm2519, %v6580, 0
      %v6615 = vsel %vm2519, %v6582, 0
      %v6618 = vsel %vm2519, %v6584, 0
      %v6621 = vsel %vm2519, %v6586, 0
      %v6624 = vsel %vm2519, %v6588, 0
      %v6627 = vsel %vm2519, %v6590, 0
      %v6630 = vsel %vm2519, %v6592, 0
      %6632 = vmatpush.bf16.msra.mxu0 %v2507
      %6633 = vmatpush.bf16.msra.mxu0 %v2505
      %6634 = vmatpush.bf16.msra.mxu0 %v2503
      %6635 = vmatpush.bf16.msra.mxu0 %v2501
      %6636 = vmatpush.bf16.msra.mxu0 %v2499
      %6637 = vmatpush.bf16.msra.mxu0 %v2497
      %6638 = vmatpush.bf16.msra.mxu0 %v2495
      %6639 = vmatpush.bf16.msra.mxu0 %v2493
      %6640 = vmatmul.bf16.gmra.mxu0 %v6567
      %v6641 = vpop.f32.mrf.mxu0
      %v6642 = vadd.f32 0.0, %v6641
      %v6643 = vpop.f32.mrf.mxu0
      %v6644 = vadd.f32 0.0, %v6643
      %6645 = vmatmul.bf16.gmra.mxu0 %v6569
      %v6646 = vpop.f32.mrf.mxu0
      %v6647 = vadd.f32 0.0, %v6646
      %v6648 = vpop.f32.mrf.mxu0
      %v6649 = vadd.f32 0.0, %v6648
      %6650 = vmatmul.bf16.gmra.mxu0 %v6571
      %v6651 = vpop.f32.mrf.mxu0
      %v6652 = vadd.f32 0.0, %v6651
      %v6653 = vpop.f32.mrf.mxu0
      %v6654 = vadd.f32 0.0, %v6653
      %6655 = vmatmul.bf16.gmra.mxu0 %v6573
      %v6656 = vpop.f32.mrf.mxu0
      %v6657 = vadd.f32 0.0, %v6656
      %v6658 = vpop.f32.mrf.mxu0
      %v6659 = vadd.f32 0.0, %v6658
      %6660 = vmatmul.bf16.gmra.mxu0 %v6575
      %v6661 = vpop.f32.mrf.mxu0
      %v6662 = vadd.f32 0.0, %v6661
      %v6663 = vpop.f32.mrf.mxu0
      %v6664 = vadd.f32 0.0, %v6663
      %6665 = vmatmul.bf16.gmra.mxu0 %v6577
      %v6666 = vpop.f32.mrf.mxu0
      %v6667 = vadd.f32 0.0, %v6666
      %v6668 = vpop.f32.mrf.mxu0
      %v6669 = vadd.f32 0.0, %v6668
      %6670 = vmatmul.bf16.gmra.mxu0 %v6579
      %v6671 = vpop.f32.mrf.mxu0
      %v6672 = vadd.f32 0.0, %v6671
      %v6673 = vpop.f32.mrf.mxu0
      %v6674 = vadd.f32 0.0, %v6673
      %6675 = vmatmul.bf16.gmra.mxu0 %v6581
      %v6676 = vpop.f32.mrf.mxu0
      %v6677 = vadd.f32 0.0, %v6676
      %v6678 = vpop.f32.mrf.mxu0
      %v6679 = vadd.f32 0.0, %v6678
      %6680 = vmatmul.bf16.gmra.mxu0 %v6583
      %v6681 = vpop.f32.mrf.mxu0
      %v6682 = vadd.f32 0.0, %v6681
      %v6683 = vpop.f32.mrf.mxu0
      %v6684 = vadd.f32 0.0, %v6683
      %6685 = vmatmul.bf16.gmra.mxu0 %v6585
      %v6686 = vpop.f32.mrf.mxu0
      %v6687 = vadd.f32 0.0, %v6686
      %v6688 = vpop.f32.mrf.mxu0
      %v6689 = vadd.f32 0.0, %v6688
      %6690 = vmatmul.bf16.gmra.mxu0 %v6587
      %v6691 = vpop.f32.mrf.mxu0
      %v6692 = vadd.f32 0.0, %v6691
      %v6693 = vpop.f32.mrf.mxu0
      %v6694 = vadd.f32 0.0, %v6693
      %6695 = vmatmul.bf16.gmra.mxu0 %v6589
      %v6696 = vpop.f32.mrf.mxu0
      %v6697 = vadd.f32 0.0, %v6696
      %v6698 = vpop.f32.mrf.mxu0
      %v6699 = vadd.f32 0.0, %v6698
      %6700 = vmatmul.bf16.gmra.mxu0 %v6591
      %v6701 = vpop.f32.mrf.mxu0
      %v6702 = vadd.f32 0.0, %v6701
      %v6703 = vpop.f32.mrf.mxu0
      %6704 = vdwg.mxu0
      %6705 = vmatpush.bf16.msra.mxu0 0
      %6706 = vmatpush.bf16.msra.mxu0 0
      %6707 = vmatpush.bf16.msra.mxu0 0
      %6708 = vmatpush.bf16.msra.mxu0 %v3041
      %6709 = vmatpush.bf16.msra.mxu0 %v2515
      %6710 = vmatpush.bf16.msra.mxu0 %v2513
      %6711 = vmatpush.bf16.msra.mxu0 %v2511
      %6712 = vmatpush.bf16.msra.mxu0 %v2509
      %6713 = vmatmul.bf16.gmra.mxu0 %v6594
      %v6714 = vpop.f32.mrf.mxu0
      %v6715 = vadd.f32 %v6642, %v6714
      %v6716 = vpop.f32.mrf.mxu0
      %v6717 = vadd.f32 %v6644, %v6716
      %6718 = vmatmul.bf16.gmra.mxu0 %v6597
      %v6719 = vpop.f32.mrf.mxu0
      %v6720 = vadd.f32 %v6647, %v6719
      %v6721 = vpop.f32.mrf.mxu0
      %v6722 = vadd.f32 %v6649, %v6721
      %6723 = vmatmul.bf16.gmra.mxu0 %v6600
      %v6724 = vpop.f32.mrf.mxu0
      %v6725 = vadd.f32 %v6652, %v6724
      %v6726 = vpop.f32.mrf.mxu0
      %v6727 = vadd.f32 %v6654, %v6726
      %6728 = vmatmul.bf16.gmra.mxu0 %v6603
      %v6729 = vpop.f32.mrf.mxu0
      %v6730 = vadd.f32 %v6657, %v6729
      %v6731 = vpop.f32.mrf.mxu0
      %v6732 = vadd.f32 %v6659, %v6731
      %6733 = vmatmul.bf16.gmra.mxu0 %v6606
      %v6734 = vpop.f32.mrf.mxu0
      %v6735 = vadd.f32 %v6662, %v6734
      %v6736 = vpop.f32.mrf.mxu0
      %v6737 = vadd.f32 %v6664, %v6736
      %6738 = vmatmul.bf16.gmra.mxu0 %v6609
      %v6739 = vpop.f32.mrf.mxu0
      %v6740 = vadd.f32 %v6667, %v6739
      %v6741 = vpop.f32.mrf.mxu0
      %v6742 = vadd.f32 %v6669, %v6741
      %6743 = vmatmul.bf16.gmra.mxu0 %v6612
      %v6744 = vpop.f32.mrf.mxu0
      %v6745 = vadd.f32 %v6672, %v6744
      %v6746 = vpop.f32.mrf.mxu0
      %v6747 = vadd.f32 %v6674, %v6746
      %6748 = vmatmul.bf16.gmra.mxu0 %v6615
      %v6749 = vpop.f32.mrf.mxu0
      %v6750 = vadd.f32 %v6677, %v6749
      %v6751 = vpop.f32.mrf.mxu0
      %v6752 = vadd.f32 %v6679, %v6751
      %6753 = vmatmul.bf16.gmra.mxu0 %v6618
      %v6754 = vpop.f32.mrf.mxu0
      %v6755 = vadd.f32 %v6682, %v6754
      %v6756 = vpop.f32.mrf.mxu0
      %v6757 = vadd.f32 %v6684, %v6756
      %6758 = vmatmul.bf16.gmra.mxu0 %v6621
      %v6759 = vpop.f32.mrf.mxu0
      %v6760 = vadd.f32 %v6687, %v6759
      %v6761 = vpop.f32.mrf.mxu0
      %v6762 = vadd.f32 %v6689, %v6761
      %6763 = vmatmul.bf16.gmra.mxu0 %v6624
      %v6764 = vpop.f32.mrf.mxu0
      %v6765 = vadd.f32 %v6692, %v6764
      %v6766 = vpop.f32.mrf.mxu0
      %v6767 = vadd.f32 %v6694, %v6766
      %6768 = vmatmul.bf16.gmra.mxu0 %v6627
      %v6769 = vpop.f32.mrf.mxu0
      %v6770 = vadd.f32 %v6697, %v6769
      %v6771 = vpop.f32.mrf.mxu0
      %v6772 = vadd.f32 %v6699, %v6771
      %6773 = vmatmul.bf16.gmra.mxu0 %v6630
      %v6774 = vpop.f32.mrf.mxu0
      %v6775 = vadd.f32 %v6702, %v6774
      %v6776 = vpop.f32.mrf.mxu0
      %6777 = vdwg.mxu0
      %6778 = vmatpush.bf16.msra.mxu0 %v2508
      %6779 = vmatpush.bf16.msra.mxu0 %v2506
      %6780 = vmatpush.bf16.msra.mxu0 %v2504
      %6781 = vmatpush.bf16.msra.mxu0 %v2502
      %6782 = vmatpush.bf16.msra.mxu0 %v2500
      %6783 = vmatpush.bf16.msra.mxu0 %v2498
      %6784 = vmatpush.bf16.msra.mxu0 %v2496
      %6785 = vmatpush.bf16.msra.mxu0 %v2494
      %6786 = vmatmul.bf16.gmra.mxu0 %v6567
      %v6787 = vpop.f32.mrf.mxu0
      %v6788 = vadd.f32 0.0, %v6787
      %v6789 = vpop.f32.mrf.mxu0
      %v6790 = vadd.f32 0.0, %v6789
      %6791 = vmatmul.bf16.gmra.mxu0 %v6569
      %v6792 = vpop.f32.mrf.mxu0
      %v6793 = vadd.f32 0.0, %v6792
      %v6794 = vpop.f32.mrf.mxu0
      %v6795 = vadd.f32 0.0, %v6794
      %6796 = vmatmul.bf16.gmra.mxu0 %v6571
      %v6797 = vpop.f32.mrf.mxu0
      %v6798 = vadd.f32 0.0, %v6797
      %v6799 = vpop.f32.mrf.mxu0
      %v6800 = vadd.f32 0.0, %v6799
      %6801 = vmatmul.bf16.gmra.mxu0 %v6573
      %v6802 = vpop.f32.mrf.mxu0
      %v6803 = vadd.f32 0.0, %v6802
      %v6804 = vpop.f32.mrf.mxu0
      %v6805 = vadd.f32 0.0, %v6804
      %6806 = vmatmul.bf16.gmra.mxu0 %v6575
      %v6807 = vpop.f32.mrf.mxu0
      %v6808 = vadd.f32 0.0, %v6807
      %v6809 = vpop.f32.mrf.mxu0
      %v6810 = vadd.f32 0.0, %v6809
      %6811 = vmatmul.bf16.gmra.mxu0 %v6577
      %v6812 = vpop.f32.mrf.mxu0
      %v6813 = vadd.f32 0.0, %v6812
      %v6814 = vpop.f32.mrf.mxu0
      %v6815 = vadd.f32 0.0, %v6814
      %6816 = vmatmul.bf16.gmra.mxu0 %v6579
      %v6817 = vpop.f32.mrf.mxu0
      %v6818 = vadd.f32 0.0, %v6817
      %v6819 = vpop.f32.mrf.mxu0
      %v6820 = vadd.f32 0.0, %v6819
      %6821 = vmatmul.bf16.gmra.mxu0 %v6581
      %v6822 = vpop.f32.mrf.mxu0
      %v6823 = vadd.f32 0.0, %v6822
      %v6824 = vpop.f32.mrf.mxu0
      %v6825 = vadd.f32 0.0, %v6824
      %6826 = vmatmul.bf16.gmra.mxu0 %v6583
      %v6827 = vpop.f32.mrf.mxu0
      %v6828 = vadd.f32 0.0, %v6827
      %v6829 = vpop.f32.mrf.mxu0
      %v6830 = vadd.f32 0.0, %v6829
      %6831 = vmatmul.bf16.gmra.mxu0 %v6585
      %v6832 = vpop.f32.mrf.mxu0
      %v6833 = vadd.f32 0.0, %v6832
      %v6834 = vpop.f32.mrf.mxu0
      %v6835 = vadd.f32 0.0, %v6834
      %6836 = vmatmul.bf16.gmra.mxu0 %v6587
      %v6837 = vpop.f32.mrf.mxu0
      %v6838 = vadd.f32 0.0, %v6837
      %v6839 = vpop.f32.mrf.mxu0
      %v6840 = vadd.f32 0.0, %v6839
      %6841 = vmatmul.bf16.gmra.mxu0 %v6589
      %v6842 = vpop.f32.mrf.mxu0
      %v6843 = vadd.f32 0.0, %v6842
      %v6844 = vpop.f32.mrf.mxu0
      %v6845 = vadd.f32 0.0, %v6844
      %6846 = vmatmul.bf16.gmra.mxu0 %v6591
      %v6847 = vpop.f32.mrf.mxu0
      %v6848 = vadd.f32 0.0, %v6847
      %v6849 = vpop.f32.mrf.mxu0
      %6850 = vdwg.mxu0
      %6851 = vmatpush.bf16.msra.mxu0 0
      %6852 = vmatpush.bf16.msra.mxu0 0
      %6853 = vmatpush.bf16.msra.mxu0 0
      %6854 = vmatpush.bf16.msra.mxu0 %v3044
      %6855 = vmatpush.bf16.msra.mxu0 %v2516
      %6856 = vmatpush.bf16.msra.mxu0 %v2514
      %6857 = vmatpush.bf16.msra.mxu0 %v2512
      %6858 = vmatpush.bf16.msra.mxu0 %v2510
      %6859 = vmatmul.bf16.gmra.mxu0 %v6594
      %v6860 = vpop.f32.mrf.mxu0
      %v6861 = vadd.f32 %v6788, %v6860
      %v6862 = vpop.f32.mrf.mxu0
      %v6863 = vadd.f32 %v6790, %v6862
      %6864 = vmatmul.bf16.gmra.mxu0 %v6597
      %v6865 = vpop.f32.mrf.mxu0
      %v6866 = vadd.f32 %v6793, %v6865
      %v6867 = vpop.f32.mrf.mxu0
      %v6868 = vadd.f32 %v6795, %v6867
      %6869 = vmatmul.bf16.gmra.mxu0 %v6600
      %v6870 = vpop.f32.mrf.mxu0
      %v6871 = vadd.f32 %v6798, %v6870
      %v6872 = vpop.f32.mrf.mxu0
      %v6873 = vadd.f32 %v6800, %v6872
      %6874 = vmatmul.bf16.gmra.mxu0 %v6603
      %v6875 = vpop.f32.mrf.mxu0
      %v6876 = vadd.f32 %v6803, %v6875
      %v6877 = vpop.f32.mrf.mxu0
      %v6878 = vadd.f32 %v6805, %v6877
      %6879 = vmatmul.bf16.gmra.mxu0 %v6606
      %v6880 = vpop.f32.mrf.mxu0
      %v6881 = vadd.f32 %v6808, %v6880
      %v6882 = vpop.f32.mrf.mxu0
      %v6883 = vadd.f32 %v6810, %v6882
      %6884 = vmatmul.bf16.gmra.mxu0 %v6609
      %v6885 = vpop.f32.mrf.mxu0
      %v6886 = vadd.f32 %v6813, %v6885
      %v6887 = vpop.f32.mrf.mxu0
      %v6888 = vadd.f32 %v6815, %v6887
      %6889 = vmatmul.bf16.gmra.mxu0 %v6612
      %v6890 = vpop.f32.mrf.mxu0
      %v6891 = vadd.f32 %v6818, %v6890
      %v6892 = vpop.f32.mrf.mxu0
      %v6893 = vadd.f32 %v6820, %v6892
      %6894 = vmatmul.bf16.gmra.mxu0 %v6615
      %v6895 = vpop.f32.mrf.mxu0
      %v6896 = vadd.f32 %v6823, %v6895
      %v6897 = vpop.f32.mrf.mxu0
      %v6898 = vadd.f32 %v6825, %v6897
      %6899 = vmatmul.bf16.gmra.mxu0 %v6618
      %v6900 = vpop.f32.mrf.mxu0
      %v6901 = vadd.f32 %v6828, %v6900
      %v6902 = vpop.f32.mrf.mxu0
      %v6903 = vadd.f32 %v6830, %v6902
      %6904 = vmatmul.bf16.gmra.mxu0 %v6621
      %v6905 = vpop.f32.mrf.mxu0
      %v6906 = vadd.f32 %v6833, %v6905
      %v6907 = vpop.f32.mrf.mxu0
      %v6908 = vadd.f32 %v6835, %v6907
      %6909 = vmatmul.bf16.gmra.mxu0 %v6624
      %v6910 = vpop.f32.mrf.mxu0
      %v6911 = vadd.f32 %v6838, %v6910
      %v6912 = vpop.f32.mrf.mxu0
      %v6913 = vadd.f32 %v6840, %v6912
      %6914 = vmatmul.bf16.gmra.mxu0 %v6627
      %v6915 = vpop.f32.mrf.mxu0
      %v6916 = vadd.f32 %v6843, %v6915
      %v6917 = vpop.f32.mrf.mxu0
      %v6918 = vadd.f32 %v6845, %v6917
      %6919 = vmatmul.bf16.gmra.mxu0 %v6630
      %v6920 = vpop.f32.mrf.mxu0
      %v6921 = vadd.f32 %v6848, %v6920
      %v6922 = vpop.f32.mrf.mxu0
      %6923 = vdwg.mxu0
      %v6924 = vmax.f32 %v6015, %v6715
      %v6925 = vmax.f32 %v6016, %v6861
      %v6926 = vmax.f32 %v6017, %v6717
      %v6927 = vmax.f32 %v6018, %v6863
      %v6928 = vmax.f32 %v6019, %v6720
      %v6929 = vmax.f32 %v6020, %v6866
      %v6930 = vmax.f32 %v6021, %v6722
      %v6931 = vmax.f32 %v6022, %v6868
      %v6932 = vmax.f32 %v6023, %v6725
      %v6933 = vmax.f32 %v6024, %v6871
      %v6934 = vmax.f32 %v6025, %v6727
      %v6935 = vmax.f32 %v6026, %v6873
      %v6936 = vmax.f32 %v6027, %v6730
      %v6937 = vmax.f32 %v6028, %v6876
      %v6938 = vmax.f32 %v6029, %v6732
      %v6939 = vmax.f32 %v6030, %v6878
      %v6940 = vmax.f32 %v6031, %v6735
      %v6941 = vmax.f32 %v6032, %v6881
      %v6942 = vmax.f32 %v6033, %v6737
      %v6943 = vmax.f32 %v6034, %v6883
      %v6944 = vmax.f32 %v6035, %v6740
      %v6945 = vmax.f32 %v6036, %v6886
      %v6946 = vmax.f32 %v6037, %v6742
      %v6947 = vmax.f32 %v6038, %v6888
      %v6948 = vmax.f32 %v6039, %v6745
      %v6949 = vmax.f32 %v6040, %v6891
      %v6950 = vmax.f32 %v6041, %v6747
      %v6951 = vmax.f32 %v6042, %v6893
      %v6952 = vmax.f32 %v6043, %v6750
      %v6953 = vmax.f32 %v6044, %v6896
      %v6954 = vmax.f32 %v6045, %v6752
      %v6955 = vmax.f32 %v6046, %v6898
      %v6956 = vmax.f32 %v6047, %v6755
      %v6957 = vmax.f32 %v6048, %v6901
      %v6958 = vmax.f32 %v6049, %v6757
      %v6959 = vmax.f32 %v6050, %v6903
      %v6960 = vmax.f32 %v6051, %v6760
      %v6961 = vmax.f32 %v6052, %v6906
      %v6962 = vmax.f32 %v6053, %v6762
      %v6963 = vmax.f32 %v6054, %v6908
      %v6964 = vmax.f32 %v6055, %v6765
      %v6965 = vmax.f32 %v6056, %v6911
      %v6966 = vmax.f32 %v6057, %v6767
      %v6967 = vmax.f32 %v6058, %v6913
      %v6968 = vmax.f32 %v6059, %v6770
      %v6969 = vmax.f32 %v6060, %v6916
      %v6970 = vmax.f32 %v6061, %v6772
      %v6971 = vmax.f32 %v6062, %v6918
      %v6972 = vmax.f32 %v6063, %v6775
      %v6973 = vmax.f32 %v6064, %v6921
      %v6974 = vsel %vm6417, -1e+30, %v6065
      %v6975 = vsel %vm6418, -1e+30, %v6066
      %v6976 = vsel %vm6419, -1e+30, %v6067
      %v6977 = vsel %vm6420, -1e+30, %v6068
      %v6978 = vsel %vm6421, -1e+30, %v6069
      %v6979 = vsel %vm6422, -1e+30, %v6070
      %v6980 = vsel %vm6423, -1e+30, %v6071
      %v6981 = vsel %vm6424, -1e+30, %v6072
      %v6982 = vsel %vm6425, -1e+30, %v6073
      %v6983 = vsel %vm6426, -1e+30, %v6074
      %v6984 = vsel %vm6427, -1e+30, %v6075
      %v6985 = vsel %vm6428, -1e+30, %v6076
      %v6986 = vsel %vm6429, -1e+30, %v6077
      %v6987 = vsel %vm6430, -1e+30, %v6078
      %v6988 = vsel %vm6431, -1e+30, %v6079
      %v6989 = vsel %vm6432, -1e+30, %v6080
      %v6990 = vsel %vm6433, -1e+30, %v6081
      %v6991 = vsel %vm6434, -1e+30, %v6082
      %v6992 = vsel %vm6435, -1e+30, %v6083
      %v6993 = vsel %vm6436, -1e+30, %v6084
      %v6994 = vsel %vm6437, -1e+30, %v6085
      %v6995 = vsel %vm6438, -1e+30, %v6086
      %v6996 = vsel %vm6439, -1e+30, %v6087
      %v6997 = vsel %vm6440, -1e+30, %v6088
      %v6998 = vsel %vm6441, -1e+30, %v6089
      %v6999 = vsel %vm6442, -1e+30, %v6090
      %v7000 = vsel %vm6443, -1e+30, %v6091
      %v7001 = vsel %vm6444, -1e+30, %v6092
      %v7002 = vsel %vm6445, -1e+30, %v6093
      %v7003 = vsel %vm6446, -1e+30, %v6094
      %v7004 = vsel %vm6447, -1e+30, %v6095
      %v7005 = vsel %vm6448, -1e+30, %v6096
      %v7006 = vsel %vm6449, -1e+30, %v6097
      %v7007 = vsel %vm6450, -1e+30, %v6098
      %v7008 = vsel %vm6451, -1e+30, %v6099
      %v7009 = vsel %vm6452, -1e+30, %v6100
      %v7010 = vsel %vm6453, -1e+30, %v6101
      %v7011 = vsel %vm6454, -1e+30, %v6102
      %v7012 = vsel %vm6455, -1e+30, %v6103
      %v7013 = vsel %vm6456, -1e+30, %v6104
      %v7014 = vsel %vm6457, -1e+30, %v6105
      %v7015 = vsel %vm6458, -1e+30, %v6106
      %v7016 = vsel %vm6459, -1e+30, %v6107
      %v7017 = vsel %vm6460, -1e+30, %v6108
      %v7018 = vsel %vm6461, -1e+30, %v6109
      %v7019 = vsel %vm6462, -1e+30, %v6110
      %v7020 = vsel %vm6463, -1e+30, %v6111
      %v7021 = vsel %vm6464, -1e+30, %v6112
      %v7022 = vsel %vm6465, -1e+30, %v6113
      %v7023 = vsel %vm6466, -1e+30, %v6114
      %v7024 = vsel %vm2519, %v6975, -inf
      %v7025 = vmax.f32 %v6974, %v7024
      %7026 = vmax.xlane.f32.xlu0 %v7025
      %v7027 = vpop.xlane.xlu0 %7026
      %v7028 = vsel %vm2519, %v6977, -inf
      %v7029 = vmax.f32 %v6976, %v7028
      %7030 = vmax.xlane.f32.xlu0 %v7029
      %v7031 = vpop.xlane.xlu0 %7030
      %v7032 = vsel %vm2519, %v6979, -inf
      %v7033 = vmax.f32 %v6978, %v7032
      %7034 = vmax.xlane.f32.xlu0 %v7033
      %v7035 = vpop.xlane.xlu0 %7034
      %v7036 = vsel %vm2519, %v6981, -inf
      %v7037 = vmax.f32 %v6980, %v7036
      %7038 = vmax.xlane.f32.xlu0 %v7037
      %v7039 = vpop.xlane.xlu0 %7038
      %v7040 = vsel %vm2519, %v6983, -inf
      %v7041 = vmax.f32 %v6982, %v7040
      %7042 = vmax.xlane.f32.xlu0 %v7041
      %v7043 = vpop.xlane.xlu0 %7042
      %v7044 = vsel %vm2519, %v6985, -inf
      %v7045 = vmax.f32 %v6984, %v7044
      %7046 = vmax.xlane.f32.xlu0 %v7045
      %v7047 = vpop.xlane.xlu0 %7046
      %v7048 = vsel %vm2519, %v6987, -inf
      %v7049 = vmax.f32 %v6986, %v7048
      %7050 = vmax.xlane.f32.xlu0 %v7049
      %v7051 = vpop.xlane.xlu0 %7050
      %v7052 = vsel %vm2519, %v6989, -inf
      %v7053 = vmax.f32 %v6988, %v7052
      %7054 = vmax.xlane.f32.xlu0 %v7053
      %v7055 = vpop.xlane.xlu0 %7054
      %v7056 = vsel %vm2519, %v6991, -inf
      %v7057 = vmax.f32 %v6990, %v7056
      %7058 = vmax.xlane.f32.xlu0 %v7057
      %v7059 = vpop.xlane.xlu0 %7058
      %v7060 = vsel %vm2519, %v6993, -inf
      %v7061 = vmax.f32 %v6992, %v7060
      %7062 = vmax.xlane.f32.xlu0 %v7061
      %v7063 = vpop.xlane.xlu0 %7062
      %v7064 = vsel %vm2519, %v6995, -inf
      %v7065 = vmax.f32 %v6994, %v7064
      %7066 = vmax.xlane.f32.xlu0 %v7065
      %v7067 = vpop.xlane.xlu0 %7066
      %v7068 = vsel %vm2519, %v6997, -inf
      %v7069 = vmax.f32 %v6996, %v7068
      %7070 = vmax.xlane.f32.xlu0 %v7069
      %v7071 = vpop.xlane.xlu0 %7070
      %v7072 = vsel %vm2519, %v6999, -inf
      %v7073 = vmax.f32 %v6998, %v7072
      %7074 = vmax.xlane.f32.xlu0 %v7073
      %v7075 = vpop.xlane.xlu0 %7074
      %v7076 = vsel %vm2519, %v7001, -inf
      %v7077 = vmax.f32 %v7000, %v7076
      %7078 = vmax.xlane.f32.xlu0 %v7077
      %v7079 = vpop.xlane.xlu0 %7078
      %v7080 = vsel %vm2519, %v7003, -inf
      %v7081 = vmax.f32 %v7002, %v7080
      %7082 = vmax.xlane.f32.xlu0 %v7081
      %v7083 = vpop.xlane.xlu0 %7082
      %v7084 = vsel %vm2519, %v7005, -inf
      %v7085 = vmax.f32 %v7004, %v7084
      %7086 = vmax.xlane.f32.xlu0 %v7085
      %v7087 = vpop.xlane.xlu0 %7086
      %v7088 = vsel %vm2519, %v7007, -inf
      %v7089 = vmax.f32 %v7006, %v7088
      %7090 = vmax.xlane.f32.xlu0 %v7089
      %v7091 = vpop.xlane.xlu0 %7090
      %v7092 = vsel %vm2519, %v7009, -inf
      %v7093 = vmax.f32 %v7008, %v7092
      %7094 = vmax.xlane.f32.xlu0 %v7093
      %v7095 = vpop.xlane.xlu0 %7094
      %v7096 = vsel %vm2519, %v7011, -inf
      %v7097 = vmax.f32 %v7010, %v7096
      %7098 = vmax.xlane.f32.xlu0 %v7097
      %v7099 = vpop.xlane.xlu0 %7098
      %v7100 = vsel %vm2519, %v7013, -inf
      %v7101 = vmax.f32 %v7012, %v7100
      %7102 = vmax.xlane.f32.xlu0 %v7101
      %v7103 = vpop.xlane.xlu0 %7102
      %v7104 = vsel %vm2519, %v7015, -inf
      %v7105 = vmax.f32 %v7014, %v7104
      %7106 = vmax.xlane.f32.xlu0 %v7105
      %v7107 = vpop.xlane.xlu0 %7106
      %v7108 = vsel %vm2519, %v7017, -inf
      %v7109 = vmax.f32 %v7016, %v7108
      %7110 = vmax.xlane.f32.xlu0 %v7109
      %v7111 = vpop.xlane.xlu0 %7110
      %v7112 = vsel %vm2519, %v7019, -inf
      %v7113 = vmax.f32 %v7018, %v7112
      %7114 = vmax.xlane.f32.xlu0 %v7113
      %v7115 = vpop.xlane.xlu0 %7114
      %v7116 = vsel %vm2519, %v7021, -inf
      %v7117 = vmax.f32 %v7020, %v7116
      %7118 = vmax.xlane.f32.xlu0 %v7117
      %v7119 = vpop.xlane.xlu0 %7118
      %v7120 = vsel %vm2616, %v7022, -inf
      %v7121 = vsel %vm2618, %v7023, -inf
      %v7122 = vmax.f32 %v7120, %v7121
      %7123 = vmax.xlane.f32.xlu0 %v7122
      %v7124 = vpop.xlane.xlu0 %7123
      %vm7125 = vcmp.eq.f32.partialorder %v6974, %v7027
      %vm7126 = vcmp.eq.f32.partialorder %v6975, %v7027
      %vm7127 = vcmp.eq.f32.partialorder %v6976, %v7031
      %vm7128 = vcmp.eq.f32.partialorder %v6977, %v7031
      %vm7129 = vcmp.eq.f32.partialorder %v6978, %v7035
      %vm7130 = vcmp.eq.f32.partialorder %v6979, %v7035
      %vm7131 = vcmp.eq.f32.partialorder %v6980, %v7039
      %vm7132 = vcmp.eq.f32.partialorder %v6981, %v7039
      %vm7133 = vcmp.eq.f32.partialorder %v6982, %v7043
      %vm7134 = vcmp.eq.f32.partialorder %v6983, %v7043
      %vm7135 = vcmp.eq.f32.partialorder %v6984, %v7047
      %vm7136 = vcmp.eq.f32.partialorder %v6985, %v7047
      %vm7137 = vcmp.eq.f32.partialorder %v6986, %v7051
      %vm7138 = vcmp.eq.f32.partialorder %v6987, %v7051
      %vm7139 = vcmp.eq.f32.partialorder %v6988, %v7055
      %vm7140 = vcmp.eq.f32.partialorder %v6989, %v7055
      %vm7141 = vcmp.eq.f32.partialorder %v6990, %v7059
      %vm7142 = vcmp.eq.f32.partialorder %v6991, %v7059
      %vm7143 = vcmp.eq.f32.partialorder %v6992, %v7063
      %vm7144 = vcmp.eq.f32.partialorder %v6993, %v7063
      %vm7145 = vcmp.eq.f32.partialorder %v6994, %v7067
      %vm7146 = vcmp.eq.f32.partialorder %v6995, %v7067
      %vm7147 = vcmp.eq.f32.partialorder %v6996, %v7071
      %vm7148 = vcmp.eq.f32.partialorder %v6997, %v7071
      %vm7149 = vcmp.eq.f32.partialorder %v6998, %v7075
      %vm7150 = vcmp.eq.f32.partialorder %v6999, %v7075
      %vm7151 = vcmp.eq.f32.partialorder %v7000, %v7079
      %vm7152 = vcmp.eq.f32.partialorder %v7001, %v7079
      %vm7153 = vcmp.eq.f32.partialorder %v7002, %v7083
      %vm7154 = vcmp.eq.f32.partialorder %v7003, %v7083
      %vm7155 = vcmp.eq.f32.partialorder %v7004, %v7087
      %vm7156 = vcmp.eq.f32.partialorder %v7005, %v7087
      %vm7157 = vcmp.eq.f32.partialorder %v7006, %v7091
      %vm7158 = vcmp.eq.f32.partialorder %v7007, %v7091
      %vm7159 = vcmp.eq.f32.partialorder %v7008, %v7095
      %vm7160 = vcmp.eq.f32.partialorder %v7009, %v7095
      %vm7161 = vcmp.eq.f32.partialorder %v7010, %v7099
      %vm7162 = vcmp.eq.f32.partialorder %v7011, %v7099
      %vm7163 = vcmp.eq.f32.partialorder %v7012, %v7103
      %vm7164 = vcmp.eq.f32.partialorder %v7013, %v7103
      %vm7165 = vcmp.eq.f32.partialorder %v7014, %v7107
      %vm7166 = vcmp.eq.f32.partialorder %v7015, %v7107
      %vm7167 = vcmp.eq.f32.partialorder %v7016, %v7111
      %vm7168 = vcmp.eq.f32.partialorder %v7017, %v7111
      %vm7169 = vcmp.eq.f32.partialorder %v7018, %v7115
      %vm7170 = vcmp.eq.f32.partialorder %v7019, %v7115
      %vm7171 = vcmp.eq.f32.partialorder %v7020, %v7119
      %vm7172 = vcmp.eq.f32.partialorder %v7021, %v7119
      %vm7173 = vcmp.eq.f32.partialorder %v7022, %v7124
      %vm7174 = vcmp.eq.f32.partialorder %v7023, %v7124
      %v7175 = vsel %vm7125, %v1613, 196.0
      %v7176 = vsel %vm7126, %v1614, 196.0
      %v7177 = vsel %vm7127, %v1613, 196.0
      %v7178 = vsel %vm7128, %v1614, 196.0
      %v7179 = vsel %vm7129, %v1613, 196.0
      %v7180 = vsel %vm7130, %v1614, 196.0
      %v7181 = vsel %vm7131, %v1613, 196.0
      %v7182 = vsel %vm7132, %v1614, 196.0
      %v7183 = vsel %vm7133, %v1613, 196.0
      %v7184 = vsel %vm7134, %v1614, 196.0
      %v7185 = vsel %vm7135, %v1613, 196.0
      %v7186 = vsel %vm7136, %v1614, 196.0
      %v7187 = vsel %vm7137, %v1613, 196.0
      %v7188 = vsel %vm7138, %v1614, 196.0
      %v7189 = vsel %vm7139, %v1613, 196.0
      %v7190 = vsel %vm7140, %v1614, 196.0
      %v7191 = vsel %vm7141, %v1613, 196.0
      %v7192 = vsel %vm7142, %v1614, 196.0
      %v7193 = vsel %vm7143, %v1613, 196.0
      %v7194 = vsel %vm7144, %v1614, 196.0
      %v7195 = vsel %vm7145, %v1613, 196.0
      %v7196 = vsel %vm7146, %v1614, 196.0
      %v7197 = vsel %vm7147, %v1613, 196.0
      %v7198 = vsel %vm7148, %v1614, 196.0
      %v7199 = vsel %vm7149, %v1613, 196.0
      %v7200 = vsel %vm7150, %v1614, 196.0
      %v7201 = vsel %vm7151, %v1613, 196.0
      %v7202 = vsel %vm7152, %v1614, 196.0
      %v7203 = vsel %vm7153, %v1613, 196.0
      %v7204 = vsel %vm7154, %v1614, 196.0
      %v7205 = vsel %vm7155, %v1613, 196.0
      %v7206 = vsel %vm7156, %v1614, 196.0
      %v7207 = vsel %vm7157, %v1613, 196.0
      %v7208 = vsel %vm7158, %v1614, 196.0
      %v7209 = vsel %vm7159, %v1613, 196.0
      %v7210 = vsel %vm7160, %v1614, 196.0
      %v7211 = vsel %vm7161, %v1613, 196.0
      %v7212 = vsel %vm7162, %v1614, 196.0
      %v7213 = vsel %vm7163, %v1613, 196.0
      %v7214 = vsel %vm7164, %v1614, 196.0
      %v7215 = vsel %vm7165, %v1613, 196.0
      %v7216 = vsel %vm7166, %v1614, 196.0
      %v7217 = vsel %vm7167, %v1613, 196.0
      %v7218 = vsel %vm7168, %v1614, 196.0
      %v7219 = vsel %vm7169, %v1613, 196.0
      %v7220 = vsel %vm7170, %v1614, 196.0
      %v7221 = vsel %vm7171, %v1613, 196.0
      %v7222 = vsel %vm7172, %v1614, 196.0
      %v7223 = vsel %vm7173, %v1613, 196.0
      %v7224 = vsel %vm7174, %v1614, 196.0
      %v7225 = vsel %vm2519, %v7176, inf
      %v7226 = vmin.f32 %v7175, %v7225
      %7227 = vmin.xlane.f32.xlu0 %v7226
      %v7228 = vpop.xlane.xlu0 %7227
      %v7229 = vsel %vm2519, %v7178, inf
      %v7230 = vmin.f32 %v7177, %v7229
      %7231 = vmin.xlane.f32.xlu0 %v7230
      %v7232 = vpop.xlane.xlu0 %7231
      %v7233 = vsel %vm2519, %v7180, inf
      %v7234 = vmin.f32 %v7179, %v7233
      %7235 = vmin.xlane.f32.xlu0 %v7234
      %v7236 = vpop.xlane.xlu0 %7235
      %v7237 = vsel %vm2519, %v7182, inf
      %v7238 = vmin.f32 %v7181, %v7237
      %7239 = vmin.xlane.f32.xlu0 %v7238
      %v7240 = vpop.xlane.xlu0 %7239
      %v7241 = vsel %vm2519, %v7184, inf
      %v7242 = vmin.f32 %v7183, %v7241
      %7243 = vmin.xlane.f32.xlu0 %v7242
      %v7244 = vpop.xlane.xlu0 %7243
      %v7245 = vsel %vm2519, %v7186, inf
      %v7246 = vmin.f32 %v7185, %v7245
      %7247 = vmin.xlane.f32.xlu0 %v7246
      %v7248 = vpop.xlane.xlu0 %7247
      %v7249 = vsel %vm2519, %v7188, inf
      %v7250 = vmin.f32 %v7187, %v7249
      %7251 = vmin.xlane.f32.xlu0 %v7250
      %v7252 = vpop.xlane.xlu0 %7251
      %v7253 = vsel %vm2519, %v7190, inf
      %v7254 = vmin.f32 %v7189, %v7253
      %7255 = vmin.xlane.f32.xlu0 %v7254
      %v7256 = vpop.xlane.xlu0 %7255
      %v7257 = vsel %vm2519, %v7192, inf
      %v7258 = vmin.f32 %v7191, %v7257
      %7259 = vmin.xlane.f32.xlu0 %v7258
      %v7260 = vpop.xlane.xlu0 %7259
      %v7261 = vsel %vm2519, %v7194, inf
      %v7262 = vmin.f32 %v7193, %v7261
      %7263 = vmin.xlane.f32.xlu0 %v7262
      %v7264 = vpop.xlane.xlu0 %7263
      %v7265 = vsel %vm2519, %v7196, inf
      %v7266 = vmin.f32 %v7195, %v7265
      %7267 = vmin.xlane.f32.xlu0 %v7266
      %v7268 = vpop.xlane.xlu0 %7267
      %v7269 = vsel %vm2519, %v7198, inf
      %v7270 = vmin.f32 %v7197, %v7269
      %7271 = vmin.xlane.f32.xlu0 %v7270
      %v7272 = vpop.xlane.xlu0 %7271
      %v7273 = vsel %vm2519, %v7200, inf
      %v7274 = vmin.f32 %v7199, %v7273
      %7275 = vmin.xlane.f32.xlu0 %v7274
      %v7276 = vpop.xlane.xlu0 %7275
      %v7277 = vsel %vm2519, %v7202, inf
      %v7278 = vmin.f32 %v7201, %v7277
      %7279 = vmin.xlane.f32.xlu0 %v7278
      %v7280 = vpop.xlane.xlu0 %7279
      %v7281 = vsel %vm2519, %v7204, inf
      %v7282 = vmin.f32 %v7203, %v7281
      %7283 = vmin.xlane.f32.xlu0 %v7282
      %v7284 = vpop.xlane.xlu0 %7283
      %v7285 = vsel %vm2519, %v7206, inf
      %v7286 = vmin.f32 %v7205, %v7285
      %7287 = vmin.xlane.f32.xlu0 %v7286
      %v7288 = vpop.xlane.xlu0 %7287
      %v7289 = vsel %vm2519, %v7208, inf
      %v7290 = vmin.f32 %v7207, %v7289
      %7291 = vmin.xlane.f32.xlu0 %v7290
      %v7292 = vpop.xlane.xlu0 %7291
      %v7293 = vsel %vm2519, %v7210, inf
      %v7294 = vmin.f32 %v7209, %v7293
      %7295 = vmin.xlane.f32.xlu0 %v7294
      %v7296 = vpop.xlane.xlu0 %7295
      %v7297 = vsel %vm2519, %v7212, inf
      %v7298 = vmin.f32 %v7211, %v7297
      %7299 = vmin.xlane.f32.xlu0 %v7298
      %v7300 = vpop.xlane.xlu0 %7299
      %v7301 = vsel %vm2519, %v7214, inf
      %v7302 = vmin.f32 %v7213, %v7301
      %7303 = vmin.xlane.f32.xlu0 %v7302
      %v7304 = vpop.xlane.xlu0 %7303
      %v7305 = vsel %vm2519, %v7216, inf
      %v7306 = vmin.f32 %v7215, %v7305
      %7307 = vmin.xlane.f32.xlu0 %v7306
      %v7308 = vpop.xlane.xlu0 %7307
      %v7309 = vsel %vm2519, %v7218, inf
      %v7310 = vmin.f32 %v7217, %v7309
      %7311 = vmin.xlane.f32.xlu0 %v7310
      %v7312 = vpop.xlane.xlu0 %7311
      %v7313 = vsel %vm2519, %v7220, inf
      %v7314 = vmin.f32 %v7219, %v7313
      %7315 = vmin.xlane.f32.xlu0 %v7314
      %v7316 = vpop.xlane.xlu0 %7315
      %v7317 = vsel %vm2519, %v7222, inf
      %v7318 = vmin.f32 %v7221, %v7317
      %7319 = vmin.xlane.f32.xlu0 %v7318
      %v7320 = vpop.xlane.xlu0 %7319
      %v7321 = vsel %vm2616, %v7223, inf
      %v7322 = vsel %vm2618, %v7224, inf
      %v7323 = vmin.f32 %v7321, %v7322
      %7324 = vmin.xlane.f32.xlu0 %v7323
      %v7325 = vpop.xlane.xlu0 %7324
      %vm7326 = vcmp.eq.f32.partialorder %v1613, %v7228
      %vm7327 = vcmp.eq.f32.partialorder %v1614, %v7228
      %vm7328 = vcmp.eq.f32.partialorder %v1613, %v7232
      %vm7329 = vcmp.eq.f32.partialorder %v1614, %v7232
      %vm7330 = vcmp.eq.f32.partialorder %v1613, %v7236
      %vm7331 = vcmp.eq.f32.partialorder %v1614, %v7236
      %vm7332 = vcmp.eq.f32.partialorder %v1613, %v7240
      %vm7333 = vcmp.eq.f32.partialorder %v1614, %v7240
      %vm7334 = vcmp.eq.f32.partialorder %v1613, %v7244
      %vm7335 = vcmp.eq.f32.partialorder %v1614, %v7244
      %vm7336 = vcmp.eq.f32.partialorder %v1613, %v7248
      %vm7337 = vcmp.eq.f32.partialorder %v1614, %v7248
      %vm7338 = vcmp.eq.f32.partialorder %v1613, %v7252
      %vm7339 = vcmp.eq.f32.partialorder %v1614, %v7252
      %vm7340 = vcmp.eq.f32.partialorder %v1613, %v7256
      %vm7341 = vcmp.eq.f32.partialorder %v1614, %v7256
      %vm7342 = vcmp.eq.f32.partialorder %v1613, %v7260
      %vm7343 = vcmp.eq.f32.partialorder %v1614, %v7260
      %vm7344 = vcmp.eq.f32.partialorder %v1613, %v7264
      %vm7345 = vcmp.eq.f32.partialorder %v1614, %v7264
      %vm7346 = vcmp.eq.f32.partialorder %v1613, %v7268
      %vm7347 = vcmp.eq.f32.partialorder %v1614, %v7268
      %vm7348 = vcmp.eq.f32.partialorder %v1613, %v7272
      %vm7349 = vcmp.eq.f32.partialorder %v1614, %v7272
      %vm7350 = vcmp.eq.f32.partialorder %v1613, %v7276
      %vm7351 = vcmp.eq.f32.partialorder %v1614, %v7276
      %vm7352 = vcmp.eq.f32.partialorder %v1613, %v7280
      %vm7353 = vcmp.eq.f32.partialorder %v1614, %v7280
      %vm7354 = vcmp.eq.f32.partialorder %v1613, %v7284
      %vm7355 = vcmp.eq.f32.partialorder %v1614, %v7284
      %vm7356 = vcmp.eq.f32.partialorder %v1613, %v7288
      %vm7357 = vcmp.eq.f32.partialorder %v1614, %v7288
      %vm7358 = vcmp.eq.f32.partialorder %v1613, %v7292
      %vm7359 = vcmp.eq.f32.partialorder %v1614, %v7292
      %vm7360 = vcmp.eq.f32.partialorder %v1613, %v7296
      %vm7361 = vcmp.eq.f32.partialorder %v1614, %v7296
      %vm7362 = vcmp.eq.f32.partialorder %v1613, %v7300
      %vm7363 = vcmp.eq.f32.partialorder %v1614, %v7300
      %vm7364 = vcmp.eq.f32.partialorder %v1613, %v7304
      %vm7365 = vcmp.eq.f32.partialorder %v1614, %v7304
      %vm7366 = vcmp.eq.f32.partialorder %v1613, %v7308
      %vm7367 = vcmp.eq.f32.partialorder %v1614, %v7308
      %vm7368 = vcmp.eq.f32.partialorder %v1613, %v7312
      %vm7369 = vcmp.eq.f32.partialorder %v1614, %v7312
      %vm7370 = vcmp.eq.f32.partialorder %v1613, %v7316
      %vm7371 = vcmp.eq.f32.partialorder %v1614, %v7316
      %vm7372 = vcmp.eq.f32.partialorder %v1613, %v7320
      %vm7373 = vcmp.eq.f32.partialorder %v1614, %v7320
      %vm7374 = vcmp.eq.f32.partialorder %v1613, %v7325
      %vm7375 = vcmp.eq.f32.partialorder %v1614, %v7325
      %v7376 = vsel %vm7326, 1, 0
      %v7377 = vsel %vm7327, 1, 0
      %v7378 = vsel %vm7328, 1, 0
      %v7379 = vsel %vm7329, 1, 0
      %v7380 = vsel %vm7330, 1, 0
      %v7381 = vsel %vm7331, 1, 0
      %v7382 = vsel %vm7332, 1, 0
      %v7383 = vsel %vm7333, 1, 0
      %v7384 = vsel %vm7334, 1, 0
      %v7385 = vsel %vm7335, 1, 0
      %v7386 = vsel %vm7336, 1, 0
      %v7387 = vsel %vm7337, 1, 0
      %v7388 = vsel %vm7338, 1, 0
      %v7389 = vsel %vm7339, 1, 0
      %v7390 = vsel %vm7340, 1, 0
      %v7391 = vsel %vm7341, 1, 0
      %v7392 = vsel %vm7342, 1, 0
      %v7393 = vsel %vm7343, 1, 0
      %v7394 = vsel %vm7344, 1, 0
      %v7395 = vsel %vm7345, 1, 0
      %v7396 = vsel %vm7346, 1, 0
      %v7397 = vsel %vm7347, 1, 0
      %v7398 = vsel %vm7348, 1, 0
      %v7399 = vsel %vm7349, 1, 0
      %v7400 = vsel %vm7350, 1, 0
      %v7401 = vsel %vm7351, 1, 0
      %v7402 = vsel %vm7352, 1, 0
      %v7403 = vsel %vm7353, 1, 0
      %v7404 = vsel %vm7354, 1, 0
      %v7405 = vsel %vm7355, 1, 0
      %v7406 = vsel %vm7356, 1, 0
      %v7407 = vsel %vm7357, 1, 0
      %v7408 = vsel %vm7358, 1, 0
      %v7409 = vsel %vm7359, 1, 0
      %v7410 = vsel %vm7360, 1, 0
      %v7411 = vsel %vm7361, 1, 0
      %v7412 = vsel %vm7362, 1, 0
      %v7413 = vsel %vm7363, 1, 0
      %v7414 = vsel %vm7364, 1, 0
      %v7415 = vsel %vm7365, 1, 0
      %v7416 = vsel %vm7366, 1, 0
      %v7417 = vsel %vm7367, 1, 0
      %v7418 = vsel %vm7368, 1, 0
      %v7419 = vsel %vm7369, 1, 0
      %v7420 = vsel %vm7370, 1, 0
      %v7421 = vsel %vm7371, 1, 0
      %v7422 = vsel %vm7372, 1, 0
      %v7423 = vsel %vm7373, 1, 0
      %v7424 = vsel %vm7374, 1, 0
      %v7425 = vsel %vm7375, 1, 0
      %v7426 = vcvt.s32.f32 %v7376
      %v7427 = vcvt.s32.f32 %v7377
      %v7428 = vcvt.s32.f32 %v7378
      %v7429 = vcvt.s32.f32 %v7379
      %v7430 = vcvt.s32.f32 %v7380
      %v7431 = vcvt.s32.f32 %v7381
      %v7432 = vcvt.s32.f32 %v7382
      %v7433 = vcvt.s32.f32 %v7383
      %v7434 = vcvt.s32.f32 %v7384
      %v7435 = vcvt.s32.f32 %v7385
      %v7436 = vcvt.s32.f32 %v7386
      %v7437 = vcvt.s32.f32 %v7387
      %v7438 = vcvt.s32.f32 %v7388
      %v7439 = vcvt.s32.f32 %v7389
      %v7440 = vcvt.s32.f32 %v7390
      %v7441 = vcvt.s32.f32 %v7391
      %v7442 = vcvt.s32.f32 %v7392
      %v7443 = vcvt.s32.f32 %v7393
      %v7444 = vcvt.s32.f32 %v7394
      %v7445 = vcvt.s32.f32 %v7395
      %v7446 = vcvt.s32.f32 %v7396
      %v7447 = vcvt.s32.f32 %v7397
      %v7448 = vcvt.s32.f32 %v7398
      %v7449 = vcvt.s32.f32 %v7399
      %v7450 = vcvt.s32.f32 %v7400
      %v7451 = vcvt.s32.f32 %v7401
      %v7452 = vcvt.s32.f32 %v7402
      %v7453 = vcvt.s32.f32 %v7403
      %v7454 = vcvt.s32.f32 %v7404
      %v7455 = vcvt.s32.f32 %v7405
      %v7456 = vcvt.s32.f32 %v7406
      %v7457 = vcvt.s32.f32 %v7407
      %v7458 = vcvt.s32.f32 %v7408
      %v7459 = vcvt.s32.f32 %v7409
      %v7460 = vcvt.s32.f32 %v7410
      %v7461 = vcvt.s32.f32 %v7411
      %v7462 = vcvt.s32.f32 %v7412
      %v7463 = vcvt.s32.f32 %v7413
      %v7464 = vcvt.s32.f32 %v7414
      %v7465 = vcvt.s32.f32 %v7415
      %v7466 = vcvt.s32.f32 %v7416
      %v7467 = vcvt.s32.f32 %v7417
      %v7468 = vcvt.s32.f32 %v7418
      %v7469 = vcvt.s32.f32 %v7419
      %v7470 = vcvt.s32.f32 %v7420
      %v7471 = vcvt.s32.f32 %v7421
      %v7472 = vcvt.s32.f32 %v7422
      %v7473 = vcvt.s32.f32 %v7423
      %v7474 = vcvt.s32.f32 %v7424
      %v7475 = vcvt.s32.f32 %v7425
      %v7476 = vpack.c.bf16 %v7428, %v7426
      %v7477 = vpack.c.bf16 %v7429, %v7427
      %v7478 = vpack.c.bf16 %v7432, %v7430
      %v7479 = vpack.c.bf16 %v7433, %v7431
      %v7480 = vpack.c.bf16 %v7436, %v7434
      %v7481 = vpack.c.bf16 %v7437, %v7435
      %v7482 = vpack.c.bf16 %v7440, %v7438
      %v7483 = vpack.c.bf16 %v7441, %v7439
      %v7484 = vpack.c.bf16 %v7444, %v7442
      %v7485 = vpack.c.bf16 %v7445, %v7443
      %v7486 = vpack.c.bf16 %v7448, %v7446
      %v7487 = vpack.c.bf16 %v7449, %v7447
      %v7488 = vpack.c.bf16 %v7452, %v7450
      %v7489 = vpack.c.bf16 %v7453, %v7451
      %v7490 = vpack.c.bf16 %v7456, %v7454
      %v7491 = vpack.c.bf16 %v7457, %v7455
      %v7492 = vpack.c.bf16 %v7460, %v7458
      %v7493 = vpack.c.bf16 %v7461, %v7459
      %v7494 = vpack.c.bf16 %v7464, %v7462
      %v7495 = vpack.c.bf16 %v7465, %v7463
      %v7496 = vpack.c.bf16 %v7468, %v7466
      %v7497 = vpack.c.bf16 %v7469, %v7467
      %v7498 = vpack.c.bf16 %v7472, %v7470
      %v7499 = vpack.c.bf16 %v7473, %v7471
      %v7500 = vpack.c.bf16 %v7474, %v7474
      %v7501 = vpack.c.bf16 %v7475, %v7475
      %v7503 = vsel %vm2519, %v7477, 0
      %v7506 = vsel %vm2519, %v7479, 0
      %v7509 = vsel %vm2519, %v7481, 0
      %v7512 = vsel %vm2519, %v7483, 0
      %v7515 = vsel %vm2519, %v7485, 0
      %v7518 = vsel %vm2519, %v7487, 0
      %v7521 = vsel %vm2519, %v7489, 0
      %v7524 = vsel %vm2519, %v7491, 0
      %v7527 = vsel %vm2519, %v7493, 0
      %v7530 = vsel %vm2519, %v7495, 0
      %v7533 = vsel %vm2519, %v7497, 0
      %v7536 = vsel %vm2519, %v7499, 0
      %v7539 = vsel %vm2519, %v7501, 0
      %7541 = vmatpush.bf16.msra.mxu0 %v2507
      %7542 = vmatpush.bf16.msra.mxu0 %v2505
      %7543 = vmatpush.bf16.msra.mxu0 %v2503
      %7544 = vmatpush.bf16.msra.mxu0 %v2501
      %7545 = vmatpush.bf16.msra.mxu0 %v2499
      %7546 = vmatpush.bf16.msra.mxu0 %v2497
      %7547 = vmatpush.bf16.msra.mxu0 %v2495
      %7548 = vmatpush.bf16.msra.mxu0 %v2493
      %7549 = vmatmul.bf16.gmra.mxu0 %v7476
      %v7550 = vpop.f32.mrf.mxu0
      %v7551 = vadd.f32 0.0, %v7550
      %v7552 = vpop.f32.mrf.mxu0
      %v7553 = vadd.f32 0.0, %v7552
      %7554 = vmatmul.bf16.gmra.mxu0 %v7478
      %v7555 = vpop.f32.mrf.mxu0
      %v7556 = vadd.f32 0.0, %v7555
      %v7557 = vpop.f32.mrf.mxu0
      %v7558 = vadd.f32 0.0, %v7557
      %7559 = vmatmul.bf16.gmra.mxu0 %v7480
      %v7560 = vpop.f32.mrf.mxu0
      %v7561 = vadd.f32 0.0, %v7560
      %v7562 = vpop.f32.mrf.mxu0
      %v7563 = vadd.f32 0.0, %v7562
      %7564 = vmatmul.bf16.gmra.mxu0 %v7482
      %v7565 = vpop.f32.mrf.mxu0
      %v7566 = vadd.f32 0.0, %v7565
      %v7567 = vpop.f32.mrf.mxu0
      %v7568 = vadd.f32 0.0, %v7567
      %7569 = vmatmul.bf16.gmra.mxu0 %v7484
      %v7570 = vpop.f32.mrf.mxu0
      %v7571 = vadd.f32 0.0, %v7570
      %v7572 = vpop.f32.mrf.mxu0
      %v7573 = vadd.f32 0.0, %v7572
      %7574 = vmatmul.bf16.gmra.mxu0 %v7486
      %v7575 = vpop.f32.mrf.mxu0
      %v7576 = vadd.f32 0.0, %v7575
      %v7577 = vpop.f32.mrf.mxu0
      %v7578 = vadd.f32 0.0, %v7577
      %7579 = vmatmul.bf16.gmra.mxu0 %v7488
      %v7580 = vpop.f32.mrf.mxu0
      %v7581 = vadd.f32 0.0, %v7580
      %v7582 = vpop.f32.mrf.mxu0
      %v7583 = vadd.f32 0.0, %v7582
      %7584 = vmatmul.bf16.gmra.mxu0 %v7490
      %v7585 = vpop.f32.mrf.mxu0
      %v7586 = vadd.f32 0.0, %v7585
      %v7587 = vpop.f32.mrf.mxu0
      %v7588 = vadd.f32 0.0, %v7587
      %7589 = vmatmul.bf16.gmra.mxu0 %v7492
      %v7590 = vpop.f32.mrf.mxu0
      %v7591 = vadd.f32 0.0, %v7590
      %v7592 = vpop.f32.mrf.mxu0
      %v7593 = vadd.f32 0.0, %v7592
      %7594 = vmatmul.bf16.gmra.mxu0 %v7494
      %v7595 = vpop.f32.mrf.mxu0
      %v7596 = vadd.f32 0.0, %v7595
      %v7597 = vpop.f32.mrf.mxu0
      %v7598 = vadd.f32 0.0, %v7597
      %7599 = vmatmul.bf16.gmra.mxu0 %v7496
      %v7600 = vpop.f32.mrf.mxu0
      %v7601 = vadd.f32 0.0, %v7600
      %v7602 = vpop.f32.mrf.mxu0
      %v7603 = vadd.f32 0.0, %v7602
      %7604 = vmatmul.bf16.gmra.mxu0 %v7498
      %v7605 = vpop.f32.mrf.mxu0
      %v7606 = vadd.f32 0.0, %v7605
      %v7607 = vpop.f32.mrf.mxu0
      %v7608 = vadd.f32 0.0, %v7607
      %7609 = vmatmul.bf16.gmra.mxu0 %v7500
      %v7610 = vpop.f32.mrf.mxu0
      %v7611 = vadd.f32 0.0, %v7610
      %v7612 = vpop.f32.mrf.mxu0
      %7613 = vdwg.mxu0
      %7614 = vmatpush.bf16.msra.mxu0 0
      %7615 = vmatpush.bf16.msra.mxu0 0
      %7616 = vmatpush.bf16.msra.mxu0 0
      %7617 = vmatpush.bf16.msra.mxu0 %v3041
      %7618 = vmatpush.bf16.msra.mxu0 %v2515
      %7619 = vmatpush.bf16.msra.mxu0 %v2513
      %7620 = vmatpush.bf16.msra.mxu0 %v2511
      %7621 = vmatpush.bf16.msra.mxu0 %v2509
      %7622 = vmatmul.bf16.gmra.mxu0 %v7503
      %v7623 = vpop.f32.mrf.mxu0
      %v7624 = vadd.f32 %v7551, %v7623
      %v7625 = vpop.f32.mrf.mxu0
      %v7626 = vadd.f32 %v7553, %v7625
      %7627 = vmatmul.bf16.gmra.mxu0 %v7506
      %v7628 = vpop.f32.mrf.mxu0
      %v7629 = vadd.f32 %v7556, %v7628
      %v7630 = vpop.f32.mrf.mxu0
      %v7631 = vadd.f32 %v7558, %v7630
      %7632 = vmatmul.bf16.gmra.mxu0 %v7509
      %v7633 = vpop.f32.mrf.mxu0
      %v7634 = vadd.f32 %v7561, %v7633
      %v7635 = vpop.f32.mrf.mxu0
      %v7636 = vadd.f32 %v7563, %v7635
      %7637 = vmatmul.bf16.gmra.mxu0 %v7512
      %v7638 = vpop.f32.mrf.mxu0
      %v7639 = vadd.f32 %v7566, %v7638
      %v7640 = vpop.f32.mrf.mxu0
      %v7641 = vadd.f32 %v7568, %v7640
      %7642 = vmatmul.bf16.gmra.mxu0 %v7515
      %v7643 = vpop.f32.mrf.mxu0
      %v7644 = vadd.f32 %v7571, %v7643
      %v7645 = vpop.f32.mrf.mxu0
      %v7646 = vadd.f32 %v7573, %v7645
      %7647 = vmatmul.bf16.gmra.mxu0 %v7518
      %v7648 = vpop.f32.mrf.mxu0
      %v7649 = vadd.f32 %v7576, %v7648
      %v7650 = vpop.f32.mrf.mxu0
      %v7651 = vadd.f32 %v7578, %v7650
      %7652 = vmatmul.bf16.gmra.mxu0 %v7521
      %v7653 = vpop.f32.mrf.mxu0
      %v7654 = vadd.f32 %v7581, %v7653
      %v7655 = vpop.f32.mrf.mxu0
      %v7656 = vadd.f32 %v7583, %v7655
      %7657 = vmatmul.bf16.gmra.mxu0 %v7524
      %v7658 = vpop.f32.mrf.mxu0
      %v7659 = vadd.f32 %v7586, %v7658
      %v7660 = vpop.f32.mrf.mxu0
      %v7661 = vadd.f32 %v7588, %v7660
      %7662 = vmatmul.bf16.gmra.mxu0 %v7527
      %v7663 = vpop.f32.mrf.mxu0
      %v7664 = vadd.f32 %v7591, %v7663
      %v7665 = vpop.f32.mrf.mxu0
      %v7666 = vadd.f32 %v7593, %v7665
      %7667 = vmatmul.bf16.gmra.mxu0 %v7530
      %v7668 = vpop.f32.mrf.mxu0
      %v7669 = vadd.f32 %v7596, %v7668
      %v7670 = vpop.f32.mrf.mxu0
      %v7671 = vadd.f32 %v7598, %v7670
      %7672 = vmatmul.bf16.gmra.mxu0 %v7533
      %v7673 = vpop.f32.mrf.mxu0
      %v7674 = vadd.f32 %v7601, %v7673
      %v7675 = vpop.f32.mrf.mxu0
      %v7676 = vadd.f32 %v7603, %v7675
      %7677 = vmatmul.bf16.gmra.mxu0 %v7536
      %v7678 = vpop.f32.mrf.mxu0
      %v7679 = vadd.f32 %v7606, %v7678
      %v7680 = vpop.f32.mrf.mxu0
      %v7681 = vadd.f32 %v7608, %v7680
      %7682 = vmatmul.bf16.gmra.mxu0 %v7539
      %v7683 = vpop.f32.mrf.mxu0
      %v7684 = vadd.f32 %v7611, %v7683
      %v7685 = vpop.f32.mrf.mxu0
      %7686 = vdwg.mxu0
      %7687 = vmatpush.bf16.msra.mxu0 %v2508
      %7688 = vmatpush.bf16.msra.mxu0 %v2506
      %7689 = vmatpush.bf16.msra.mxu0 %v2504
      %7690 = vmatpush.bf16.msra.mxu0 %v2502
      %7691 = vmatpush.bf16.msra.mxu0 %v2500
      %7692 = vmatpush.bf16.msra.mxu0 %v2498
      %7693 = vmatpush.bf16.msra.mxu0 %v2496
      %7694 = vmatpush.bf16.msra.mxu0 %v2494
      %7695 = vmatmul.bf16.gmra.mxu0 %v7476
      %v7696 = vpop.f32.mrf.mxu0
      %v7697 = vadd.f32 0.0, %v7696
      %v7698 = vpop.f32.mrf.mxu0
      %v7699 = vadd.f32 0.0, %v7698
      %7700 = vmatmul.bf16.gmra.mxu0 %v7478
      %v7701 = vpop.f32.mrf.mxu0
      %v7702 = vadd.f32 0.0, %v7701
      %v7703 = vpop.f32.mrf.mxu0
      %v7704 = vadd.f32 0.0, %v7703
      %7705 = vmatmul.bf16.gmra.mxu0 %v7480
      %v7706 = vpop.f32.mrf.mxu0
      %v7707 = vadd.f32 0.0, %v7706
      %v7708 = vpop.f32.mrf.mxu0
      %v7709 = vadd.f32 0.0, %v7708
      %7710 = vmatmul.bf16.gmra.mxu0 %v7482
      %v7711 = vpop.f32.mrf.mxu0
      %v7712 = vadd.f32 0.0, %v7711
      %v7713 = vpop.f32.mrf.mxu0
      %v7714 = vadd.f32 0.0, %v7713
      %7715 = vmatmul.bf16.gmra.mxu0 %v7484
      %v7716 = vpop.f32.mrf.mxu0
      %v7717 = vadd.f32 0.0, %v7716
      %v7718 = vpop.f32.mrf.mxu0
      %v7719 = vadd.f32 0.0, %v7718
      %7720 = vmatmul.bf16.gmra.mxu0 %v7486
      %v7721 = vpop.f32.mrf.mxu0
      %v7722 = vadd.f32 0.0, %v7721
      %v7723 = vpop.f32.mrf.mxu0
      %v7724 = vadd.f32 0.0, %v7723
      %7725 = vmatmul.bf16.gmra.mxu0 %v7488
      %v7726 = vpop.f32.mrf.mxu0
      %v7727 = vadd.f32 0.0, %v7726
      %v7728 = vpop.f32.mrf.mxu0
      %v7729 = vadd.f32 0.0, %v7728
      %7730 = vmatmul.bf16.gmra.mxu0 %v7490
      %v7731 = vpop.f32.mrf.mxu0
      %v7732 = vadd.f32 0.0, %v7731
      %v7733 = vpop.f32.mrf.mxu0
      %v7734 = vadd.f32 0.0, %v7733
      %7735 = vmatmul.bf16.gmra.mxu0 %v7492
      %v7736 = vpop.f32.mrf.mxu0
      %v7737 = vadd.f32 0.0, %v7736
      %v7738 = vpop.f32.mrf.mxu0
      %v7739 = vadd.f32 0.0, %v7738
      %7740 = vmatmul.bf16.gmra.mxu0 %v7494
      %v7741 = vpop.f32.mrf.mxu0
      %v7742 = vadd.f32 0.0, %v7741
      %v7743 = vpop.f32.mrf.mxu0
      %v7744 = vadd.f32 0.0, %v7743
      %7745 = vmatmul.bf16.gmra.mxu0 %v7496
      %v7746 = vpop.f32.mrf.mxu0
      %v7747 = vadd.f32 0.0, %v7746
      %v7748 = vpop.f32.mrf.mxu0
      %v7749 = vadd.f32 0.0, %v7748
      %7750 = vmatmul.bf16.gmra.mxu0 %v7498
      %v7751 = vpop.f32.mrf.mxu0
      %v7752 = vadd.f32 0.0, %v7751
      %v7753 = vpop.f32.mrf.mxu0
      %v7754 = vadd.f32 0.0, %v7753
      %7755 = vmatmul.bf16.gmra.mxu0 %v7500
      %v7756 = vpop.f32.mrf.mxu0
      %v7757 = vadd.f32 0.0, %v7756
      %v7758 = vpop.f32.mrf.mxu0
      %7759 = vdwg.mxu0
      %7760 = vmatpush.bf16.msra.mxu0 0
      %7761 = vmatpush.bf16.msra.mxu0 0
      %7762 = vmatpush.bf16.msra.mxu0 0
      %7763 = vmatpush.bf16.msra.mxu0 %v3044
      %7764 = vmatpush.bf16.msra.mxu0 %v2516
      %7765 = vmatpush.bf16.msra.mxu0 %v2514
      %7766 = vmatpush.bf16.msra.mxu0 %v2512
      %7767 = vmatpush.bf16.msra.mxu0 %v2510
      %7768 = vmatmul.bf16.gmra.mxu0 %v7503
      %v7769 = vpop.f32.mrf.mxu0
      %v7770 = vadd.f32 %v7697, %v7769
      %v7771 = vpop.f32.mrf.mxu0
      %v7772 = vadd.f32 %v7699, %v7771
      %7773 = vmatmul.bf16.gmra.mxu0 %v7506
      %v7774 = vpop.f32.mrf.mxu0
      %v7775 = vadd.f32 %v7702, %v7774
      %v7776 = vpop.f32.mrf.mxu0
      %v7777 = vadd.f32 %v7704, %v7776
      %7778 = vmatmul.bf16.gmra.mxu0 %v7509
      %v7779 = vpop.f32.mrf.mxu0
      %v7780 = vadd.f32 %v7707, %v7779
      %v7781 = vpop.f32.mrf.mxu0
      %v7782 = vadd.f32 %v7709, %v7781
      %7783 = vmatmul.bf16.gmra.mxu0 %v7512
      %v7784 = vpop.f32.mrf.mxu0
      %v7785 = vadd.f32 %v7712, %v7784
      %v7786 = vpop.f32.mrf.mxu0
      %v7787 = vadd.f32 %v7714, %v7786
      %7788 = vmatmul.bf16.gmra.mxu0 %v7515
      %v7789 = vpop.f32.mrf.mxu0
      %v7790 = vadd.f32 %v7717, %v7789
      %v7791 = vpop.f32.mrf.mxu0
      %v7792 = vadd.f32 %v7719, %v7791
      %7793 = vmatmul.bf16.gmra.mxu0 %v7518
      %v7794 = vpop.f32.mrf.mxu0
      %v7795 = vadd.f32 %v7722, %v7794
      %v7796 = vpop.f32.mrf.mxu0
      %v7797 = vadd.f32 %v7724, %v7796
      %7798 = vmatmul.bf16.gmra.mxu0 %v7521
      %v7799 = vpop.f32.mrf.mxu0
      %v7800 = vadd.f32 %v7727, %v7799
      %v7801 = vpop.f32.mrf.mxu0
      %v7802 = vadd.f32 %v7729, %v7801
      %7803 = vmatmul.bf16.gmra.mxu0 %v7524
      %v7804 = vpop.f32.mrf.mxu0
      %v7805 = vadd.f32 %v7732, %v7804
      %v7806 = vpop.f32.mrf.mxu0
      %v7807 = vadd.f32 %v7734, %v7806
      %7808 = vmatmul.bf16.gmra.mxu0 %v7527
      %v7809 = vpop.f32.mrf.mxu0
      %v7810 = vadd.f32 %v7737, %v7809
      %v7811 = vpop.f32.mrf.mxu0
      %v7812 = vadd.f32 %v7739, %v7811
      %7813 = vmatmul.bf16.gmra.mxu0 %v7530
      %v7814 = vpop.f32.mrf.mxu0
      %v7815 = vadd.f32 %v7742, %v7814
      %v7816 = vpop.f32.mrf.mxu0
      %v7817 = vadd.f32 %v7744, %v7816
      %7818 = vmatmul.bf16.gmra.mxu0 %v7533
      %v7819 = vpop.f32.mrf.mxu0
      %v7820 = vadd.f32 %v7747, %v7819
      %v7821 = vpop.f32.mrf.mxu0
      %v7822 = vadd.f32 %v7749, %v7821
      %7823 = vmatmul.bf16.gmra.mxu0 %v7536
      %v7824 = vpop.f32.mrf.mxu0
      %v7825 = vadd.f32 %v7752, %v7824
      %v7826 = vpop.f32.mrf.mxu0
      %v7827 = vadd.f32 %v7754, %v7826
      %7828 = vmatmul.bf16.gmra.mxu0 %v7539
      %v7829 = vpop.f32.mrf.mxu0
      %v7830 = vadd.f32 %v7757, %v7829
      %v7831 = vpop.f32.mrf.mxu0
      %7832 = vdwg.mxu0
      %v7833 = vmax.f32 %v6924, %v7624
      %v7834 = vmax.f32 %v6925, %v7770
      %v7835 = vmax.f32 %v6926, %v7626
      %v7836 = vmax.f32 %v6927, %v7772
      %v7837 = vmax.f32 %v6928, %v7629
      %v7838 = vmax.f32 %v6929, %v7775
      %v7839 = vmax.f32 %v6930, %v7631
      %v7840 = vmax.f32 %v6931, %v7777
      %v7841 = vmax.f32 %v6932, %v7634
      %v7842 = vmax.f32 %v6933, %v7780
      %v7843 = vmax.f32 %v6934, %v7636
      %v7844 = vmax.f32 %v6935, %v7782
      %v7845 = vmax.f32 %v6936, %v7639
      %v7846 = vmax.f32 %v6937, %v7785
      %v7847 = vmax.f32 %v6938, %v7641
      %v7848 = vmax.f32 %v6939, %v7787
      %v7849 = vmax.f32 %v6940, %v7644
      %v7850 = vmax.f32 %v6941, %v7790
      %v7851 = vmax.f32 %v6942, %v7646
      %v7852 = vmax.f32 %v6943, %v7792
      %v7853 = vmax.f32 %v6944, %v7649
      %v7854 = vmax.f32 %v6945, %v7795
      %v7855 = vmax.f32 %v6946, %v7651
      %v7856 = vmax.f32 %v6947, %v7797
      %v7857 = vmax.f32 %v6948, %v7654
      %v7858 = vmax.f32 %v6949, %v7800
      %v7859 = vmax.f32 %v6950, %v7656
      %v7860 = vmax.f32 %v6951, %v7802
      %v7861 = vmax.f32 %v6952, %v7659
      %v7862 = vmax.f32 %v6953, %v7805
      %v7863 = vmax.f32 %v6954, %v7661
      %v7864 = vmax.f32 %v6955, %v7807
      %v7865 = vmax.f32 %v6956, %v7664
      %v7866 = vmax.f32 %v6957, %v7810
      %v7867 = vmax.f32 %v6958, %v7666
      %v7868 = vmax.f32 %v6959, %v7812
      %v7869 = vmax.f32 %v6960, %v7669
      %v7870 = vmax.f32 %v6961, %v7815
      %v7871 = vmax.f32 %v6962, %v7671
      %v7872 = vmax.f32 %v6963, %v7817
      %v7873 = vmax.f32 %v6964, %v7674
      %v7874 = vmax.f32 %v6965, %v7820
      %v7875 = vmax.f32 %v6966, %v7676
      %v7876 = vmax.f32 %v6967, %v7822
      %v7877 = vmax.f32 %v6968, %v7679
      %v7878 = vmax.f32 %v6969, %v7825
      %v7879 = vmax.f32 %v6970, %v7681
      %v7880 = vmax.f32 %v6971, %v7827
      %v7881 = vmax.f32 %v6972, %v7684
      %v7882 = vmax.f32 %v6973, %v7830
      %v7883 = vsel %vm7326, -1e+30, %v6974
      %v7884 = vsel %vm7327, -1e+30, %v6975
      %v7885 = vsel %vm7328, -1e+30, %v6976
      %v7886 = vsel %vm7329, -1e+30, %v6977
      %v7887 = vsel %vm7330, -1e+30, %v6978
      %v7888 = vsel %vm7331, -1e+30, %v6979
      %v7889 = vsel %vm7332, -1e+30, %v6980
      %v7890 = vsel %vm7333, -1e+30, %v6981
      %v7891 = vsel %vm7334, -1e+30, %v6982
      %v7892 = vsel %vm7335, -1e+30, %v6983
      %v7893 = vsel %vm7336, -1e+30, %v6984
      %v7894 = vsel %vm7337, -1e+30, %v6985
      %v7895 = vsel %vm7338, -1e+30, %v6986
      %v7896 = vsel %vm7339, -1e+30, %v6987
      %v7897 = vsel %vm7340, -1e+30, %v6988
      %v7898 = vsel %vm7341, -1e+30, %v6989
      %v7899 = vsel %vm7342, -1e+30, %v6990
      %v7900 = vsel %vm7343, -1e+30, %v6991
      %v7901 = vsel %vm7344, -1e+30, %v6992
      %v7902 = vsel %vm7345, -1e+30, %v6993
      %v7903 = vsel %vm7346, -1e+30, %v6994
      %v7904 = vsel %vm7347, -1e+30, %v6995
      %v7905 = vsel %vm7348, -1e+30, %v6996
      %v7906 = vsel %vm7349, -1e+30, %v6997
      %v7907 = vsel %vm7350, -1e+30, %v6998
      %v7908 = vsel %vm7351, -1e+30, %v6999
      %v7909 = vsel %vm7352, -1e+30, %v7000
      %v7910 = vsel %vm7353, -1e+30, %v7001
      %v7911 = vsel %vm7354, -1e+30, %v7002
      %v7912 = vsel %vm7355, -1e+30, %v7003
      %v7913 = vsel %vm7356, -1e+30, %v7004
      %v7914 = vsel %vm7357, -1e+30, %v7005
      %v7915 = vsel %vm7358, -1e+30, %v7006
      %v7916 = vsel %vm7359, -1e+30, %v7007
      %v7917 = vsel %vm7360, -1e+30, %v7008
      %v7918 = vsel %vm7361, -1e+30, %v7009
      %v7919 = vsel %vm7362, -1e+30, %v7010
      %v7920 = vsel %vm7363, -1e+30, %v7011
      %v7921 = vsel %vm7364, -1e+30, %v7012
      %v7922 = vsel %vm7365, -1e+30, %v7013
      %v7923 = vsel %vm7366, -1e+30, %v7014
      %v7924 = vsel %vm7367, -1e+30, %v7015
      %v7925 = vsel %vm7368, -1e+30, %v7016
      %v7926 = vsel %vm7369, -1e+30, %v7017
      %v7927 = vsel %vm7370, -1e+30, %v7018
      %v7928 = vsel %vm7371, -1e+30, %v7019
      %v7929 = vsel %vm7372, -1e+30, %v7020
      %v7930 = vsel %vm7373, -1e+30, %v7021
      %v7931 = vsel %vm7374, -1e+30, %v7022
      %v7932 = vsel %vm7375, -1e+30, %v7023
      %v7933 = vsel %vm2519, %v7884, -inf
      %v7934 = vmax.f32 %v7883, %v7933
      %7935 = vmax.xlane.f32.xlu0 %v7934
      %v7936 = vpop.xlane.xlu0 %7935
      %v7937 = vsel %vm2519, %v7886, -inf
      %v7938 = vmax.f32 %v7885, %v7937
      %7939 = vmax.xlane.f32.xlu0 %v7938
      %v7940 = vpop.xlane.xlu0 %7939
      %v7941 = vsel %vm2519, %v7888, -inf
      %v7942 = vmax.f32 %v7887, %v7941
      %7943 = vmax.xlane.f32.xlu0 %v7942
      %v7944 = vpop.xlane.xlu0 %7943
      %v7945 = vsel %vm2519, %v7890, -inf
      %v7946 = vmax.f32 %v7889, %v7945
      %7947 = vmax.xlane.f32.xlu0 %v7946
      %v7948 = vpop.xlane.xlu0 %7947
      %v7949 = vsel %vm2519, %v7892, -inf
      %v7950 = vmax.f32 %v7891, %v7949
      %7951 = vmax.xlane.f32.xlu0 %v7950
      %v7952 = vpop.xlane.xlu0 %7951
      %v7953 = vsel %vm2519, %v7894, -inf
      %v7954 = vmax.f32 %v7893, %v7953
      %7955 = vmax.xlane.f32.xlu0 %v7954
      %v7956 = vpop.xlane.xlu0 %7955
      %v7957 = vsel %vm2519, %v7896, -inf
      %v7958 = vmax.f32 %v7895, %v7957
      %7959 = vmax.xlane.f32.xlu0 %v7958
      %v7960 = vpop.xlane.xlu0 %7959
      %v7961 = vsel %vm2519, %v7898, -inf
      %v7962 = vmax.f32 %v7897, %v7961
      %7963 = vmax.xlane.f32.xlu0 %v7962
      %v7964 = vpop.xlane.xlu0 %7963
      %v7965 = vsel %vm2519, %v7900, -inf
      %v7966 = vmax.f32 %v7899, %v7965
      %7967 = vmax.xlane.f32.xlu0 %v7966
      %v7968 = vpop.xlane.xlu0 %7967
      %v7969 = vsel %vm2519, %v7902, -inf
      %v7970 = vmax.f32 %v7901, %v7969
      %7971 = vmax.xlane.f32.xlu0 %v7970
      %v7972 = vpop.xlane.xlu0 %7971
      %v7973 = vsel %vm2519, %v7904, -inf
      %v7974 = vmax.f32 %v7903, %v7973
      %7975 = vmax.xlane.f32.xlu0 %v7974
      %v7976 = vpop.xlane.xlu0 %7975
      %v7977 = vsel %vm2519, %v7906, -inf
      %v7978 = vmax.f32 %v7905, %v7977
      %7979 = vmax.xlane.f32.xlu0 %v7978
      %v7980 = vpop.xlane.xlu0 %7979
      %v7981 = vsel %vm2519, %v7908, -inf
      %v7982 = vmax.f32 %v7907, %v7981
      %7983 = vmax.xlane.f32.xlu0 %v7982
      %v7984 = vpop.xlane.xlu0 %7983
      %v7985 = vsel %vm2519, %v7910, -inf
      %v7986 = vmax.f32 %v7909, %v7985
      %7987 = vmax.xlane.f32.xlu0 %v7986
      %v7988 = vpop.xlane.xlu0 %7987
      %v7989 = vsel %vm2519, %v7912, -inf
      %v7990 = vmax.f32 %v7911, %v7989
      %7991 = vmax.xlane.f32.xlu0 %v7990
      %v7992 = vpop.xlane.xlu0 %7991
      %v7993 = vsel %vm2519, %v7914, -inf
      %v7994 = vmax.f32 %v7913, %v7993
      %7995 = vmax.xlane.f32.xlu0 %v7994
      %v7996 = vpop.xlane.xlu0 %7995
      %v7997 = vsel %vm2519, %v7916, -inf
      %v7998 = vmax.f32 %v7915, %v7997
      %7999 = vmax.xlane.f32.xlu0 %v7998
      %v8000 = vpop.xlane.xlu0 %7999
      %v8001 = vsel %vm2519, %v7918, -inf
      %v8002 = vmax.f32 %v7917, %v8001
      %8003 = vmax.xlane.f32.xlu0 %v8002
      %v8004 = vpop.xlane.xlu0 %8003
      %v8005 = vsel %vm2519, %v7920, -inf
      %v8006 = vmax.f32 %v7919, %v8005
      %8007 = vmax.xlane.f32.xlu0 %v8006
      %v8008 = vpop.xlane.xlu0 %8007
      %v8009 = vsel %vm2519, %v7922, -inf
      %v8010 = vmax.f32 %v7921, %v8009
      %8011 = vmax.xlane.f32.xlu0 %v8010
      %v8012 = vpop.xlane.xlu0 %8011
      %v8013 = vsel %vm2519, %v7924, -inf
      %v8014 = vmax.f32 %v7923, %v8013
      %8015 = vmax.xlane.f32.xlu0 %v8014
      %v8016 = vpop.xlane.xlu0 %8015
      %v8017 = vsel %vm2519, %v7926, -inf
      %v8018 = vmax.f32 %v7925, %v8017
      %8019 = vmax.xlane.f32.xlu0 %v8018
      %v8020 = vpop.xlane.xlu0 %8019
      %v8021 = vsel %vm2519, %v7928, -inf
      %v8022 = vmax.f32 %v7927, %v8021
      %8023 = vmax.xlane.f32.xlu0 %v8022
      %v8024 = vpop.xlane.xlu0 %8023
      %v8025 = vsel %vm2519, %v7930, -inf
      %v8026 = vmax.f32 %v7929, %v8025
      %8027 = vmax.xlane.f32.xlu0 %v8026
      %v8028 = vpop.xlane.xlu0 %8027
      %v8029 = vsel %vm2616, %v7931, -inf
      %v8030 = vsel %vm2618, %v7932, -inf
      %v8031 = vmax.f32 %v8029, %v8030
      %8032 = vmax.xlane.f32.xlu0 %v8031
      %v8033 = vpop.xlane.xlu0 %8032
      %vm8034 = vcmp.eq.f32.partialorder %v7883, %v7936
      %vm8035 = vcmp.eq.f32.partialorder %v7884, %v7936
      %vm8036 = vcmp.eq.f32.partialorder %v7885, %v7940
      %vm8037 = vcmp.eq.f32.partialorder %v7886, %v7940
      %vm8038 = vcmp.eq.f32.partialorder %v7887, %v7944
      %vm8039 = vcmp.eq.f32.partialorder %v7888, %v7944
      %vm8040 = vcmp.eq.f32.partialorder %v7889, %v7948
      %vm8041 = vcmp.eq.f32.partialorder %v7890, %v7948
      %vm8042 = vcmp.eq.f32.partialorder %v7891, %v7952
      %vm8043 = vcmp.eq.f32.partialorder %v7892, %v7952
      %vm8044 = vcmp.eq.f32.partialorder %v7893, %v7956
      %vm8045 = vcmp.eq.f32.partialorder %v7894, %v7956
      %vm8046 = vcmp.eq.f32.partialorder %v7895, %v7960
      %vm8047 = vcmp.eq.f32.partialorder %v7896, %v7960
      %vm8048 = vcmp.eq.f32.partialorder %v7897, %v7964
      %vm8049 = vcmp.eq.f32.partialorder %v7898, %v7964
      %vm8050 = vcmp.eq.f32.partialorder %v7899, %v7968
      %vm8051 = vcmp.eq.f32.partialorder %v7900, %v7968
      %vm8052 = vcmp.eq.f32.partialorder %v7901, %v7972
      %vm8053 = vcmp.eq.f32.partialorder %v7902, %v7972
      %vm8054 = vcmp.eq.f32.partialorder %v7903, %v7976
      %vm8055 = vcmp.eq.f32.partialorder %v7904, %v7976
      %vm8056 = vcmp.eq.f32.partialorder %v7905, %v7980
      %vm8057 = vcmp.eq.f32.partialorder %v7906, %v7980
      %vm8058 = vcmp.eq.f32.partialorder %v7907, %v7984
      %vm8059 = vcmp.eq.f32.partialorder %v7908, %v7984
      %vm8060 = vcmp.eq.f32.partialorder %v7909, %v7988
      %vm8061 = vcmp.eq.f32.partialorder %v7910, %v7988
      %vm8062 = vcmp.eq.f32.partialorder %v7911, %v7992
      %vm8063 = vcmp.eq.f32.partialorder %v7912, %v7992
      %vm8064 = vcmp.eq.f32.partialorder %v7913, %v7996
      %vm8065 = vcmp.eq.f32.partialorder %v7914, %v7996
      %vm8066 = vcmp.eq.f32.partialorder %v7915, %v8000
      %vm8067 = vcmp.eq.f32.partialorder %v7916, %v8000
      %vm8068 = vcmp.eq.f32.partialorder %v7917, %v8004
      %vm8069 = vcmp.eq.f32.partialorder %v7918, %v8004
      %vm8070 = vcmp.eq.f32.partialorder %v7919, %v8008
      %vm8071 = vcmp.eq.f32.partialorder %v7920, %v8008
      %vm8072 = vcmp.eq.f32.partialorder %v7921, %v8012
      %vm8073 = vcmp.eq.f32.partialorder %v7922, %v8012
      %vm8074 = vcmp.eq.f32.partialorder %v7923, %v8016
      %vm8075 = vcmp.eq.f32.partialorder %v7924, %v8016
      %vm8076 = vcmp.eq.f32.partialorder %v7925, %v8020
      %vm8077 = vcmp.eq.f32.partialorder %v7926, %v8020
      %vm8078 = vcmp.eq.f32.partialorder %v7927, %v8024
      %vm8079 = vcmp.eq.f32.partialorder %v7928, %v8024
      %vm8080 = vcmp.eq.f32.partialorder %v7929, %v8028
      %vm8081 = vcmp.eq.f32.partialorder %v7930, %v8028
      %vm8082 = vcmp.eq.f32.partialorder %v7931, %v8033
      %vm8083 = vcmp.eq.f32.partialorder %v7932, %v8033
      %v8084 = vsel %vm8034, %v1613, 196.0
      %v8085 = vsel %vm8035, %v1614, 196.0
      %v8086 = vsel %vm8036, %v1613, 196.0
      %v8087 = vsel %vm8037, %v1614, 196.0
      %v8088 = vsel %vm8038, %v1613, 196.0
      %v8089 = vsel %vm8039, %v1614, 196.0
      %v8090 = vsel %vm8040, %v1613, 196.0
      %v8091 = vsel %vm8041, %v1614, 196.0
      %v8092 = vsel %vm8042, %v1613, 196.0
      %v8093 = vsel %vm8043, %v1614, 196.0
      %v8094 = vsel %vm8044, %v1613, 196.0
      %v8095 = vsel %vm8045, %v1614, 196.0
      %v8096 = vsel %vm8046, %v1613, 196.0
      %v8097 = vsel %vm8047, %v1614, 196.0
      %v8098 = vsel %vm8048, %v1613, 196.0
      %v8099 = vsel %vm8049, %v1614, 196.0
      %v8100 = vsel %vm8050, %v1613, 196.0
      %v8101 = vsel %vm8051, %v1614, 196.0
      %v8102 = vsel %vm8052, %v1613, 196.0
      %v8103 = vsel %vm8053, %v1614, 196.0
      %v8104 = vsel %vm8054, %v1613, 196.0
      %v8105 = vsel %vm8055, %v1614, 196.0
      %v8106 = vsel %vm8056, %v1613, 196.0
      %v8107 = vsel %vm8057, %v1614, 196.0
      %v8108 = vsel %vm8058, %v1613, 196.0
      %v8109 = vsel %vm8059, %v1614, 196.0
      %v8110 = vsel %vm8060, %v1613, 196.0
      %v8111 = vsel %vm8061, %v1614, 196.0
      %v8112 = vsel %vm8062, %v1613, 196.0
      %v8113 = vsel %vm8063, %v1614, 196.0
      %v8114 = vsel %vm8064, %v1613, 196.0
      %v8115 = vsel %vm8065, %v1614, 196.0
      %v8116 = vsel %vm8066, %v1613, 196.0
      %v8117 = vsel %vm8067, %v1614, 196.0
      %v8118 = vsel %vm8068, %v1613, 196.0
      %v8119 = vsel %vm8069, %v1614, 196.0
      %v8120 = vsel %vm8070, %v1613, 196.0
      %v8121 = vsel %vm8071, %v1614, 196.0
      %v8122 = vsel %vm8072, %v1613, 196.0
      %v8123 = vsel %vm8073, %v1614, 196.0
      %v8124 = vsel %vm8074, %v1613, 196.0
      %v8125 = vsel %vm8075, %v1614, 196.0
      %v8126 = vsel %vm8076, %v1613, 196.0
      %v8127 = vsel %vm8077, %v1614, 196.0
      %v8128 = vsel %vm8078, %v1613, 196.0
      %v8129 = vsel %vm8079, %v1614, 196.0
      %v8130 = vsel %vm8080, %v1613, 196.0
      %v8131 = vsel %vm8081, %v1614, 196.0
      %v8132 = vsel %vm8082, %v1613, 196.0
      %v8133 = vsel %vm8083, %v1614, 196.0
      %v8134 = vsel %vm2519, %v8085, inf
      %v8135 = vmin.f32 %v8084, %v8134
      %8136 = vmin.xlane.f32.xlu0 %v8135
      %v8137 = vpop.xlane.xlu0 %8136
      %v8138 = vsel %vm2519, %v8087, inf
      %v8139 = vmin.f32 %v8086, %v8138
      %8140 = vmin.xlane.f32.xlu0 %v8139
      %v8141 = vpop.xlane.xlu0 %8140
      %v8142 = vsel %vm2519, %v8089, inf
      %v8143 = vmin.f32 %v8088, %v8142
      %8144 = vmin.xlane.f32.xlu0 %v8143
      %v8145 = vpop.xlane.xlu0 %8144
      %v8146 = vsel %vm2519, %v8091, inf
      %v8147 = vmin.f32 %v8090, %v8146
      %8148 = vmin.xlane.f32.xlu0 %v8147
      %v8149 = vpop.xlane.xlu0 %8148
      %v8150 = vsel %vm2519, %v8093, inf
      %v8151 = vmin.f32 %v8092, %v8150
      %8152 = vmin.xlane.f32.xlu0 %v8151
      %v8153 = vpop.xlane.xlu0 %8152
      %v8154 = vsel %vm2519, %v8095, inf
      %v8155 = vmin.f32 %v8094, %v8154
      %8156 = vmin.xlane.f32.xlu0 %v8155
      %v8157 = vpop.xlane.xlu0 %8156
      %v8158 = vsel %vm2519, %v8097, inf
      %v8159 = vmin.f32 %v8096, %v8158
      %8160 = vmin.xlane.f32.xlu0 %v8159
      %v8161 = vpop.xlane.xlu0 %8160
      %v8162 = vsel %vm2519, %v8099, inf
      %v8163 = vmin.f32 %v8098, %v8162
      %8164 = vmin.xlane.f32.xlu0 %v8163
      %v8165 = vpop.xlane.xlu0 %8164
      %v8166 = vsel %vm2519, %v8101, inf
      %v8167 = vmin.f32 %v8100, %v8166
      %8168 = vmin.xlane.f32.xlu0 %v8167
      %v8169 = vpop.xlane.xlu0 %8168
      %v8170 = vsel %vm2519, %v8103, inf
      %v8171 = vmin.f32 %v8102, %v8170
      %8172 = vmin.xlane.f32.xlu0 %v8171
      %v8173 = vpop.xlane.xlu0 %8172
      %v8174 = vsel %vm2519, %v8105, inf
      %v8175 = vmin.f32 %v8104, %v8174
      %8176 = vmin.xlane.f32.xlu0 %v8175
      %v8177 = vpop.xlane.xlu0 %8176
      %v8178 = vsel %vm2519, %v8107, inf
      %v8179 = vmin.f32 %v8106, %v8178
      %8180 = vmin.xlane.f32.xlu0 %v8179
      %v8181 = vpop.xlane.xlu0 %8180
      %v8182 = vsel %vm2519, %v8109, inf
      %v8183 = vmin.f32 %v8108, %v8182
      %8184 = vmin.xlane.f32.xlu0 %v8183
      %v8185 = vpop.xlane.xlu0 %8184
      %v8186 = vsel %vm2519, %v8111, inf
      %v8187 = vmin.f32 %v8110, %v8186
      %8188 = vmin.xlane.f32.xlu0 %v8187
      %v8189 = vpop.xlane.xlu0 %8188
      %v8190 = vsel %vm2519, %v8113, inf
      %v8191 = vmin.f32 %v8112, %v8190
      %8192 = vmin.xlane.f32.xlu0 %v8191
      %v8193 = vpop.xlane.xlu0 %8192
      %v8194 = vsel %vm2519, %v8115, inf
      %v8195 = vmin.f32 %v8114, %v8194
      %8196 = vmin.xlane.f32.xlu0 %v8195
      %v8197 = vpop.xlane.xlu0 %8196
      %v8198 = vsel %vm2519, %v8117, inf
      %v8199 = vmin.f32 %v8116, %v8198
      %8200 = vmin.xlane.f32.xlu0 %v8199
      %v8201 = vpop.xlane.xlu0 %8200
      %v8202 = vsel %vm2519, %v8119, inf
      %v8203 = vmin.f32 %v8118, %v8202
      %8204 = vmin.xlane.f32.xlu0 %v8203
      %v8205 = vpop.xlane.xlu0 %8204
      %v8206 = vsel %vm2519, %v8121, inf
      %v8207 = vmin.f32 %v8120, %v8206
      %8208 = vmin.xlane.f32.xlu0 %v8207
      %v8209 = vpop.xlane.xlu0 %8208
      %v8210 = vsel %vm2519, %v8123, inf
      %v8211 = vmin.f32 %v8122, %v8210
      %8212 = vmin.xlane.f32.xlu0 %v8211
      %v8213 = vpop.xlane.xlu0 %8212
      %v8214 = vsel %vm2519, %v8125, inf
      %v8215 = vmin.f32 %v8124, %v8214
      %8216 = vmin.xlane.f32.xlu0 %v8215
      %v8217 = vpop.xlane.xlu0 %8216
      %v8218 = vsel %vm2519, %v8127, inf
      %v8219 = vmin.f32 %v8126, %v8218
      %8220 = vmin.xlane.f32.xlu0 %v8219
      %v8221 = vpop.xlane.xlu0 %8220
      %v8222 = vsel %vm2519, %v8129, inf
      %v8223 = vmin.f32 %v8128, %v8222
      %8224 = vmin.xlane.f32.xlu0 %v8223
      %v8225 = vpop.xlane.xlu0 %8224
      %v8226 = vsel %vm2519, %v8131, inf
      %v8227 = vmin.f32 %v8130, %v8226
      %8228 = vmin.xlane.f32.xlu0 %v8227
      %v8229 = vpop.xlane.xlu0 %8228
      %v8230 = vsel %vm2616, %v8132, inf
      %v8231 = vsel %vm2618, %v8133, inf
      %v8232 = vmin.f32 %v8230, %v8231
      %8233 = vmin.xlane.f32.xlu0 %v8232
      %v8234 = vpop.xlane.xlu0 %8233
      %vm8235 = vcmp.eq.f32.partialorder %v1613, %v8137
      %vm8236 = vcmp.eq.f32.partialorder %v1614, %v8137
      %vm8237 = vcmp.eq.f32.partialorder %v1613, %v8141
      %vm8238 = vcmp.eq.f32.partialorder %v1614, %v8141
      %vm8239 = vcmp.eq.f32.partialorder %v1613, %v8145
      %vm8240 = vcmp.eq.f32.partialorder %v1614, %v8145
      %vm8241 = vcmp.eq.f32.partialorder %v1613, %v8149
      %vm8242 = vcmp.eq.f32.partialorder %v1614, %v8149
      %vm8243 = vcmp.eq.f32.partialorder %v1613, %v8153
      %vm8244 = vcmp.eq.f32.partialorder %v1614, %v8153
      %vm8245 = vcmp.eq.f32.partialorder %v1613, %v8157
      %vm8246 = vcmp.eq.f32.partialorder %v1614, %v8157
      %vm8247 = vcmp.eq.f32.partialorder %v1613, %v8161
      %vm8248 = vcmp.eq.f32.partialorder %v1614, %v8161
      %vm8249 = vcmp.eq.f32.partialorder %v1613, %v8165
      %vm8250 = vcmp.eq.f32.partialorder %v1614, %v8165
      %vm8251 = vcmp.eq.f32.partialorder %v1613, %v8169
      %vm8252 = vcmp.eq.f32.partialorder %v1614, %v8169
      %vm8253 = vcmp.eq.f32.partialorder %v1613, %v8173
      %vm8254 = vcmp.eq.f32.partialorder %v1614, %v8173
      %vm8255 = vcmp.eq.f32.partialorder %v1613, %v8177
      %vm8256 = vcmp.eq.f32.partialorder %v1614, %v8177
      %vm8257 = vcmp.eq.f32.partialorder %v1613, %v8181
      %vm8258 = vcmp.eq.f32.partialorder %v1614, %v8181
      %vm8259 = vcmp.eq.f32.partialorder %v1613, %v8185
      %vm8260 = vcmp.eq.f32.partialorder %v1614, %v8185
      %vm8261 = vcmp.eq.f32.partialorder %v1613, %v8189
      %vm8262 = vcmp.eq.f32.partialorder %v1614, %v8189
      %vm8263 = vcmp.eq.f32.partialorder %v1613, %v8193
      %vm8264 = vcmp.eq.f32.partialorder %v1614, %v8193
      %vm8265 = vcmp.eq.f32.partialorder %v1613, %v8197
      %vm8266 = vcmp.eq.f32.partialorder %v1614, %v8197
      %vm8267 = vcmp.eq.f32.partialorder %v1613, %v8201
      %vm8268 = vcmp.eq.f32.partialorder %v1614, %v8201
      %vm8269 = vcmp.eq.f32.partialorder %v1613, %v8205
      %vm8270 = vcmp.eq.f32.partialorder %v1614, %v8205
      %vm8271 = vcmp.eq.f32.partialorder %v1613, %v8209
      %vm8272 = vcmp.eq.f32.partialorder %v1614, %v8209
      %vm8273 = vcmp.eq.f32.partialorder %v1613, %v8213
      %vm8274 = vcmp.eq.f32.partialorder %v1614, %v8213
      %vm8275 = vcmp.eq.f32.partialorder %v1613, %v8217
      %vm8276 = vcmp.eq.f32.partialorder %v1614, %v8217
      %vm8277 = vcmp.eq.f32.partialorder %v1613, %v8221
      %vm8278 = vcmp.eq.f32.partialorder %v1614, %v8221
      %vm8279 = vcmp.eq.f32.partialorder %v1613, %v8225
      %vm8280 = vcmp.eq.f32.partialorder %v1614, %v8225
      %vm8281 = vcmp.eq.f32.partialorder %v1613, %v8229
      %vm8282 = vcmp.eq.f32.partialorder %v1614, %v8229
      %vm8283 = vcmp.eq.f32.partialorder %v1613, %v8234
      %vm8284 = vcmp.eq.f32.partialorder %v1614, %v8234
      %v8285 = vsel %vm8235, 1, 0
      %v8286 = vsel %vm8236, 1, 0
      %v8287 = vsel %vm8237, 1, 0
      %v8288 = vsel %vm8238, 1, 0
      %v8289 = vsel %vm8239, 1, 0
      %v8290 = vsel %vm8240, 1, 0
      %v8291 = vsel %vm8241, 1, 0
      %v8292 = vsel %vm8242, 1, 0
      %v8293 = vsel %vm8243, 1, 0
      %v8294 = vsel %vm8244, 1, 0
      %v8295 = vsel %vm8245, 1, 0
      %v8296 = vsel %vm8246, 1, 0
      %v8297 = vsel %vm8247, 1, 0
      %v8298 = vsel %vm8248, 1, 0
      %v8299 = vsel %vm8249, 1, 0
      %v8300 = vsel %vm8250, 1, 0
      %v8301 = vsel %vm8251, 1, 0
      %v8302 = vsel %vm8252, 1, 0
      %v8303 = vsel %vm8253, 1, 0
      %v8304 = vsel %vm8254, 1, 0
      %v8305 = vsel %vm8255, 1, 0
      %v8306 = vsel %vm8256, 1, 0
      %v8307 = vsel %vm8257, 1, 0
      %v8308 = vsel %vm8258, 1, 0
      %v8309 = vsel %vm8259, 1, 0
      %v8310 = vsel %vm8260, 1, 0
      %v8311 = vsel %vm8261, 1, 0
      %v8312 = vsel %vm8262, 1, 0
      %v8313 = vsel %vm8263, 1, 0
      %v8314 = vsel %vm8264, 1, 0
      %v8315 = vsel %vm8265, 1, 0
      %v8316 = vsel %vm8266, 1, 0
      %v8317 = vsel %vm8267, 1, 0
      %v8318 = vsel %vm8268, 1, 0
      %v8319 = vsel %vm8269, 1, 0
      %v8320 = vsel %vm8270, 1, 0
      %v8321 = vsel %vm8271, 1, 0
      %v8322 = vsel %vm8272, 1, 0
      %v8323 = vsel %vm8273, 1, 0
      %v8324 = vsel %vm8274, 1, 0
      %v8325 = vsel %vm8275, 1, 0
      %v8326 = vsel %vm8276, 1, 0
      %v8327 = vsel %vm8277, 1, 0
      %v8328 = vsel %vm8278, 1, 0
      %v8329 = vsel %vm8279, 1, 0
      %v8330 = vsel %vm8280, 1, 0
      %v8331 = vsel %vm8281, 1, 0
      %v8332 = vsel %vm8282, 1, 0
      %v8333 = vsel %vm8283, 1, 0
      %v8334 = vsel %vm8284, 1, 0
      %v8335 = vcvt.s32.f32 %v8285
      %v8336 = vcvt.s32.f32 %v8286
      %v8337 = vcvt.s32.f32 %v8287
      %v8338 = vcvt.s32.f32 %v8288
      %v8339 = vcvt.s32.f32 %v8289
      %v8340 = vcvt.s32.f32 %v8290
      %v8341 = vcvt.s32.f32 %v8291
      %v8342 = vcvt.s32.f32 %v8292
      %v8343 = vcvt.s32.f32 %v8293
      %v8344 = vcvt.s32.f32 %v8294
      %v8345 = vcvt.s32.f32 %v8295
      %v8346 = vcvt.s32.f32 %v8296
      %v8347 = vcvt.s32.f32 %v8297
      %v8348 = vcvt.s32.f32 %v8298
      %v8349 = vcvt.s32.f32 %v8299
      %v8350 = vcvt.s32.f32 %v8300
      %v8351 = vcvt.s32.f32 %v8301
      %v8352 = vcvt.s32.f32 %v8302
      %v8353 = vcvt.s32.f32 %v8303
      %v8354 = vcvt.s32.f32 %v8304
      %v8355 = vcvt.s32.f32 %v8305
      %v8356 = vcvt.s32.f32 %v8306
      %v8357 = vcvt.s32.f32 %v8307
      %v8358 = vcvt.s32.f32 %v8308
      %v8359 = vcvt.s32.f32 %v8309
      %v8360 = vcvt.s32.f32 %v8310
      %v8361 = vcvt.s32.f32 %v8311
      %v8362 = vcvt.s32.f32 %v8312
      %v8363 = vcvt.s32.f32 %v8313
      %v8364 = vcvt.s32.f32 %v8314
      %v8365 = vcvt.s32.f32 %v8315
      %v8366 = vcvt.s32.f32 %v8316
      %v8367 = vcvt.s32.f32 %v8317
      %v8368 = vcvt.s32.f32 %v8318
      %v8369 = vcvt.s32.f32 %v8319
      %v8370 = vcvt.s32.f32 %v8320
      %v8371 = vcvt.s32.f32 %v8321
      %v8372 = vcvt.s32.f32 %v8322
      %v8373 = vcvt.s32.f32 %v8323
      %v8374 = vcvt.s32.f32 %v8324
      %v8375 = vcvt.s32.f32 %v8325
      %v8376 = vcvt.s32.f32 %v8326
      %v8377 = vcvt.s32.f32 %v8327
      %v8378 = vcvt.s32.f32 %v8328
      %v8379 = vcvt.s32.f32 %v8329
      %v8380 = vcvt.s32.f32 %v8330
      %v8381 = vcvt.s32.f32 %v8331
      %v8382 = vcvt.s32.f32 %v8332
      %v8383 = vcvt.s32.f32 %v8333
      %v8384 = vcvt.s32.f32 %v8334
      %v8385 = vpack.c.bf16 %v8337, %v8335
      %v8386 = vpack.c.bf16 %v8338, %v8336
      %v8387 = vpack.c.bf16 %v8341, %v8339
      %v8388 = vpack.c.bf16 %v8342, %v8340
      %v8389 = vpack.c.bf16 %v8345, %v8343
      %v8390 = vpack.c.bf16 %v8346, %v8344
      %v8391 = vpack.c.bf16 %v8349, %v8347
      %v8392 = vpack.c.bf16 %v8350, %v8348
      %v8393 = vpack.c.bf16 %v8353, %v8351
      %v8394 = vpack.c.bf16 %v8354, %v8352
      %v8395 = vpack.c.bf16 %v8357, %v8355
      %v8396 = vpack.c.bf16 %v8358, %v8356
      %v8397 = vpack.c.bf16 %v8361, %v8359
      %v8398 = vpack.c.bf16 %v8362, %v8360
      %v8399 = vpack.c.bf16 %v8365, %v8363
      %v8400 = vpack.c.bf16 %v8366, %v8364
      %v8401 = vpack.c.bf16 %v8369, %v8367
      %v8402 = vpack.c.bf16 %v8370, %v8368
      %v8403 = vpack.c.bf16 %v8373, %v8371
      %v8404 = vpack.c.bf16 %v8374, %v8372
      %v8405 = vpack.c.bf16 %v8377, %v8375
      %v8406 = vpack.c.bf16 %v8378, %v8376
      %v8407 = vpack.c.bf16 %v8381, %v8379
      %v8408 = vpack.c.bf16 %v8382, %v8380
      %v8409 = vpack.c.bf16 %v8383, %v8383
      %v8410 = vpack.c.bf16 %v8384, %v8384
      %v8412 = vsel %vm2519, %v8386, 0
      %v8415 = vsel %vm2519, %v8388, 0
      %v8418 = vsel %vm2519, %v8390, 0
      %v8421 = vsel %vm2519, %v8392, 0
      %v8424 = vsel %vm2519, %v8394, 0
      %v8427 = vsel %vm2519, %v8396, 0
      %v8430 = vsel %vm2519, %v8398, 0
      %v8433 = vsel %vm2519, %v8400, 0
      %v8436 = vsel %vm2519, %v8402, 0
      %v8439 = vsel %vm2519, %v8404, 0
      %v8442 = vsel %vm2519, %v8406, 0
      %v8445 = vsel %vm2519, %v8408, 0
      %v8448 = vsel %vm2519, %v8410, 0
      %8450 = vmatpush.bf16.msra.mxu0 %v2507
      %8451 = vmatpush.bf16.msra.mxu0 %v2505
      %8452 = vmatpush.bf16.msra.mxu0 %v2503
      %8453 = vmatpush.bf16.msra.mxu0 %v2501
      %8454 = vmatpush.bf16.msra.mxu0 %v2499
      %8455 = vmatpush.bf16.msra.mxu0 %v2497
      %8456 = vmatpush.bf16.msra.mxu0 %v2495
      %8457 = vmatpush.bf16.msra.mxu0 %v2493
      %8458 = vmatmul.bf16.gmra.mxu0 %v8385
      %v8459 = vpop.f32.mrf.mxu0
      %v8460 = vadd.f32 0.0, %v8459
      %v8461 = vpop.f32.mrf.mxu0
      %v8462 = vadd.f32 0.0, %v8461
      %8463 = vmatmul.bf16.gmra.mxu0 %v8387
      %v8464 = vpop.f32.mrf.mxu0
      %v8465 = vadd.f32 0.0, %v8464
      %v8466 = vpop.f32.mrf.mxu0
      %v8467 = vadd.f32 0.0, %v8466
      %8468 = vmatmul.bf16.gmra.mxu0 %v8389
      %v8469 = vpop.f32.mrf.mxu0
      %v8470 = vadd.f32 0.0, %v8469
      %v8471 = vpop.f32.mrf.mxu0
      %v8472 = vadd.f32 0.0, %v8471
      %8473 = vmatmul.bf16.gmra.mxu0 %v8391
      %v8474 = vpop.f32.mrf.mxu0
      %v8475 = vadd.f32 0.0, %v8474
      %v8476 = vpop.f32.mrf.mxu0
      %v8477 = vadd.f32 0.0, %v8476
      %8478 = vmatmul.bf16.gmra.mxu0 %v8393
      %v8479 = vpop.f32.mrf.mxu0
      %v8480 = vadd.f32 0.0, %v8479
      %v8481 = vpop.f32.mrf.mxu0
      %v8482 = vadd.f32 0.0, %v8481
      %8483 = vmatmul.bf16.gmra.mxu0 %v8395
      %v8484 = vpop.f32.mrf.mxu0
      %v8485 = vadd.f32 0.0, %v8484
      %v8486 = vpop.f32.mrf.mxu0
      %v8487 = vadd.f32 0.0, %v8486
      %8488 = vmatmul.bf16.gmra.mxu0 %v8397
      %v8489 = vpop.f32.mrf.mxu0
      %v8490 = vadd.f32 0.0, %v8489
      %v8491 = vpop.f32.mrf.mxu0
      %v8492 = vadd.f32 0.0, %v8491
      %8493 = vmatmul.bf16.gmra.mxu0 %v8399
      %v8494 = vpop.f32.mrf.mxu0
      %v8495 = vadd.f32 0.0, %v8494
      %v8496 = vpop.f32.mrf.mxu0
      %v8497 = vadd.f32 0.0, %v8496
      %8498 = vmatmul.bf16.gmra.mxu0 %v8401
      %v8499 = vpop.f32.mrf.mxu0
      %v8500 = vadd.f32 0.0, %v8499
      %v8501 = vpop.f32.mrf.mxu0
      %v8502 = vadd.f32 0.0, %v8501
      %8503 = vmatmul.bf16.gmra.mxu0 %v8403
      %v8504 = vpop.f32.mrf.mxu0
      %v8505 = vadd.f32 0.0, %v8504
      %v8506 = vpop.f32.mrf.mxu0
      %v8507 = vadd.f32 0.0, %v8506
      %8508 = vmatmul.bf16.gmra.mxu0 %v8405
      %v8509 = vpop.f32.mrf.mxu0
      %v8510 = vadd.f32 0.0, %v8509
      %v8511 = vpop.f32.mrf.mxu0
      %v8512 = vadd.f32 0.0, %v8511
      %8513 = vmatmul.bf16.gmra.mxu0 %v8407
      %v8514 = vpop.f32.mrf.mxu0
      %v8515 = vadd.f32 0.0, %v8514
      %v8516 = vpop.f32.mrf.mxu0
      %v8517 = vadd.f32 0.0, %v8516
      %8518 = vmatmul.bf16.gmra.mxu0 %v8409
      %v8519 = vpop.f32.mrf.mxu0
      %v8520 = vadd.f32 0.0, %v8519
      %v8521 = vpop.f32.mrf.mxu0
      %8522 = vdwg.mxu0
      %8523 = vmatpush.bf16.msra.mxu0 0
      %8524 = vmatpush.bf16.msra.mxu0 0
      %8525 = vmatpush.bf16.msra.mxu0 0
      %8526 = vmatpush.bf16.msra.mxu0 %v3041
      %8527 = vmatpush.bf16.msra.mxu0 %v2515
      %8528 = vmatpush.bf16.msra.mxu0 %v2513
      %8529 = vmatpush.bf16.msra.mxu0 %v2511
      %8530 = vmatpush.bf16.msra.mxu0 %v2509
      %8531 = vmatmul.bf16.gmra.mxu0 %v8412
      %v8532 = vpop.f32.mrf.mxu0
      %v8533 = vadd.f32 %v8460, %v8532
      %v8534 = vpop.f32.mrf.mxu0
      %v8535 = vadd.f32 %v8462, %v8534
      %8536 = vmatmul.bf16.gmra.mxu0 %v8415
      %v8537 = vpop.f32.mrf.mxu0
      %v8538 = vadd.f32 %v8465, %v8537
      %v8539 = vpop.f32.mrf.mxu0
      %v8540 = vadd.f32 %v8467, %v8539
      %8541 = vmatmul.bf16.gmra.mxu0 %v8418
      %v8542 = vpop.f32.mrf.mxu0
      %v8543 = vadd.f32 %v8470, %v8542
      %v8544 = vpop.f32.mrf.mxu0
      %v8545 = vadd.f32 %v8472, %v8544
      %8546 = vmatmul.bf16.gmra.mxu0 %v8421
      %v8547 = vpop.f32.mrf.mxu0
      %v8548 = vadd.f32 %v8475, %v8547
      %v8549 = vpop.f32.mrf.mxu0
      %v8550 = vadd.f32 %v8477, %v8549
      %8551 = vmatmul.bf16.gmra.mxu0 %v8424
      %v8552 = vpop.f32.mrf.mxu0
      %v8553 = vadd.f32 %v8480, %v8552
      %v8554 = vpop.f32.mrf.mxu0
      %v8555 = vadd.f32 %v8482, %v8554
      %8556 = vmatmul.bf16.gmra.mxu0 %v8427
      %v8557 = vpop.f32.mrf.mxu0
      %v8558 = vadd.f32 %v8485, %v8557
      %v8559 = vpop.f32.mrf.mxu0
      %v8560 = vadd.f32 %v8487, %v8559
      %8561 = vmatmul.bf16.gmra.mxu0 %v8430
      %v8562 = vpop.f32.mrf.mxu0
      %v8563 = vadd.f32 %v8490, %v8562
      %v8564 = vpop.f32.mrf.mxu0
      %v8565 = vadd.f32 %v8492, %v8564
      %8566 = vmatmul.bf16.gmra.mxu0 %v8433
      %v8567 = vpop.f32.mrf.mxu0
      %v8568 = vadd.f32 %v8495, %v8567
      %v8569 = vpop.f32.mrf.mxu0
      %v8570 = vadd.f32 %v8497, %v8569
      %8571 = vmatmul.bf16.gmra.mxu0 %v8436
      %v8572 = vpop.f32.mrf.mxu0
      %v8573 = vadd.f32 %v8500, %v8572
      %v8574 = vpop.f32.mrf.mxu0
      %v8575 = vadd.f32 %v8502, %v8574
      %8576 = vmatmul.bf16.gmra.mxu0 %v8439
      %v8577 = vpop.f32.mrf.mxu0
      %v8578 = vadd.f32 %v8505, %v8577
      %v8579 = vpop.f32.mrf.mxu0
      %v8580 = vadd.f32 %v8507, %v8579
      %8581 = vmatmul.bf16.gmra.mxu0 %v8442
      %v8582 = vpop.f32.mrf.mxu0
      %v8583 = vadd.f32 %v8510, %v8582
      %v8584 = vpop.f32.mrf.mxu0
      %v8585 = vadd.f32 %v8512, %v8584
      %8586 = vmatmul.bf16.gmra.mxu0 %v8445
      %v8587 = vpop.f32.mrf.mxu0
      %v8588 = vadd.f32 %v8515, %v8587
      %v8589 = vpop.f32.mrf.mxu0
      %v8590 = vadd.f32 %v8517, %v8589
      %8591 = vmatmul.bf16.gmra.mxu0 %v8448
      %v8592 = vpop.f32.mrf.mxu0
      %v8593 = vadd.f32 %v8520, %v8592
      %v8594 = vpop.f32.mrf.mxu0
      %8595 = vdwg.mxu0
      %8596 = vmatpush.bf16.msra.mxu0 %v2508
      %8597 = vmatpush.bf16.msra.mxu0 %v2506
      %8598 = vmatpush.bf16.msra.mxu0 %v2504
      %8599 = vmatpush.bf16.msra.mxu0 %v2502
      %8600 = vmatpush.bf16.msra.mxu0 %v2500
      %8601 = vmatpush.bf16.msra.mxu0 %v2498
      %8602 = vmatpush.bf16.msra.mxu0 %v2496
      %8603 = vmatpush.bf16.msra.mxu0 %v2494
      %8604 = vmatmul.bf16.gmra.mxu0 %v8385
      %v8605 = vpop.f32.mrf.mxu0
      %v8606 = vadd.f32 0.0, %v8605
      %v8607 = vpop.f32.mrf.mxu0
      %v8608 = vadd.f32 0.0, %v8607
      %8609 = vmatmul.bf16.gmra.mxu0 %v8387
      %v8610 = vpop.f32.mrf.mxu0
      %v8611 = vadd.f32 0.0, %v8610
      %v8612 = vpop.f32.mrf.mxu0
      %v8613 = vadd.f32 0.0, %v8612
      %8614 = vmatmul.bf16.gmra.mxu0 %v8389
      %v8615 = vpop.f32.mrf.mxu0
      %v8616 = vadd.f32 0.0, %v8615
      %v8617 = vpop.f32.mrf.mxu0
      %v8618 = vadd.f32 0.0, %v8617
      %8619 = vmatmul.bf16.gmra.mxu0 %v8391
      %v8620 = vpop.f32.mrf.mxu0
      %v8621 = vadd.f32 0.0, %v8620
      %v8622 = vpop.f32.mrf.mxu0
      %v8623 = vadd.f32 0.0, %v8622
      %8624 = vmatmul.bf16.gmra.mxu0 %v8393
      %v8625 = vpop.f32.mrf.mxu0
      %v8626 = vadd.f32 0.0, %v8625
      %v8627 = vpop.f32.mrf.mxu0
      %v8628 = vadd.f32 0.0, %v8627
      %8629 = vmatmul.bf16.gmra.mxu0 %v8395
      %v8630 = vpop.f32.mrf.mxu0
      %v8631 = vadd.f32 0.0, %v8630
      %v8632 = vpop.f32.mrf.mxu0
      %v8633 = vadd.f32 0.0, %v8632
      %8634 = vmatmul.bf16.gmra.mxu0 %v8397
      %v8635 = vpop.f32.mrf.mxu0
      %v8636 = vadd.f32 0.0, %v8635
      %v8637 = vpop.f32.mrf.mxu0
      %v8638 = vadd.f32 0.0, %v8637
      %8639 = vmatmul.bf16.gmra.mxu0 %v8399
      %v8640 = vpop.f32.mrf.mxu0
      %v8641 = vadd.f32 0.0, %v8640
      %v8642 = vpop.f32.mrf.mxu0
      %v8643 = vadd.f32 0.0, %v8642
      %8644 = vmatmul.bf16.gmra.mxu0 %v8401
      %v8645 = vpop.f32.mrf.mxu0
      %v8646 = vadd.f32 0.0, %v8645
      %v8647 = vpop.f32.mrf.mxu0
      %v8648 = vadd.f32 0.0, %v8647
      %8649 = vmatmul.bf16.gmra.mxu0 %v8403
      %v8650 = vpop.f32.mrf.mxu0
      %v8651 = vadd.f32 0.0, %v8650
      %v8652 = vpop.f32.mrf.mxu0
      %v8653 = vadd.f32 0.0, %v8652
      %8654 = vmatmul.bf16.gmra.mxu0 %v8405
      %v8655 = vpop.f32.mrf.mxu0
      %v8656 = vadd.f32 0.0, %v8655
      %v8657 = vpop.f32.mrf.mxu0
      %v8658 = vadd.f32 0.0, %v8657
      %8659 = vmatmul.bf16.gmra.mxu0 %v8407
      %v8660 = vpop.f32.mrf.mxu0
      %v8661 = vadd.f32 0.0, %v8660
      %v8662 = vpop.f32.mrf.mxu0
      %v8663 = vadd.f32 0.0, %v8662
      %8664 = vmatmul.bf16.gmra.mxu0 %v8409
      %v8665 = vpop.f32.mrf.mxu0
      %v8666 = vadd.f32 0.0, %v8665
      %v8667 = vpop.f32.mrf.mxu0
      %8668 = vdwg.mxu0
      %8669 = vmatpush.bf16.msra.mxu0 0
      %8670 = vmatpush.bf16.msra.mxu0 0
      %8671 = vmatpush.bf16.msra.mxu0 0
      %8672 = vmatpush.bf16.msra.mxu0 %v3044
      %8673 = vmatpush.bf16.msra.mxu0 %v2516
      %8674 = vmatpush.bf16.msra.mxu0 %v2514
      %8675 = vmatpush.bf16.msra.mxu0 %v2512
      %8676 = vmatpush.bf16.msra.mxu0 %v2510
      %8677 = vmatmul.bf16.gmra.mxu0 %v8412
      %v8678 = vpop.f32.mrf.mxu0
      %v8679 = vadd.f32 %v8606, %v8678
      %v8680 = vpop.f32.mrf.mxu0
      %v8681 = vadd.f32 %v8608, %v8680
      %8682 = vmatmul.bf16.gmra.mxu0 %v8415
      %v8683 = vpop.f32.mrf.mxu0
      %v8684 = vadd.f32 %v8611, %v8683
      %v8685 = vpop.f32.mrf.mxu0
      %v8686 = vadd.f32 %v8613, %v8685
      %8687 = vmatmul.bf16.gmra.mxu0 %v8418
      %v8688 = vpop.f32.mrf.mxu0
      %v8689 = vadd.f32 %v8616, %v8688
      %v8690 = vpop.f32.mrf.mxu0
      %v8691 = vadd.f32 %v8618, %v8690
      %8692 = vmatmul.bf16.gmra.mxu0 %v8421
      %v8693 = vpop.f32.mrf.mxu0
      %v8694 = vadd.f32 %v8621, %v8693
      %v8695 = vpop.f32.mrf.mxu0
      %v8696 = vadd.f32 %v8623, %v8695
      %8697 = vmatmul.bf16.gmra.mxu0 %v8424
      %v8698 = vpop.f32.mrf.mxu0
      %v8699 = vadd.f32 %v8626, %v8698
      %v8700 = vpop.f32.mrf.mxu0
      %v8701 = vadd.f32 %v8628, %v8700
      %8702 = vmatmul.bf16.gmra.mxu0 %v8427
      %v8703 = vpop.f32.mrf.mxu0
      %v8704 = vadd.f32 %v8631, %v8703
      %v8705 = vpop.f32.mrf.mxu0
      %v8706 = vadd.f32 %v8633, %v8705
      %8707 = vmatmul.bf16.gmra.mxu0 %v8430
      %v8708 = vpop.f32.mrf.mxu0
      %v8709 = vadd.f32 %v8636, %v8708
      %v8710 = vpop.f32.mrf.mxu0
      %v8711 = vadd.f32 %v8638, %v8710
      %8712 = vmatmul.bf16.gmra.mxu0 %v8433
      %v8713 = vpop.f32.mrf.mxu0
      %v8714 = vadd.f32 %v8641, %v8713
      %v8715 = vpop.f32.mrf.mxu0
      %v8716 = vadd.f32 %v8643, %v8715
      %8717 = vmatmul.bf16.gmra.mxu0 %v8436
      %v8718 = vpop.f32.mrf.mxu0
      %v8719 = vadd.f32 %v8646, %v8718
      %v8720 = vpop.f32.mrf.mxu0
      %v8721 = vadd.f32 %v8648, %v8720
      %8722 = vmatmul.bf16.gmra.mxu0 %v8439
      %v8723 = vpop.f32.mrf.mxu0
      %v8724 = vadd.f32 %v8651, %v8723
      %v8725 = vpop.f32.mrf.mxu0
      %v8726 = vadd.f32 %v8653, %v8725
      %8727 = vmatmul.bf16.gmra.mxu0 %v8442
      %v8728 = vpop.f32.mrf.mxu0
      %v8729 = vadd.f32 %v8656, %v8728
      %v8730 = vpop.f32.mrf.mxu0
      %v8731 = vadd.f32 %v8658, %v8730
      %8732 = vmatmul.bf16.gmra.mxu0 %v8445
      %v8733 = vpop.f32.mrf.mxu0
      %v8734 = vadd.f32 %v8661, %v8733
      %v8735 = vpop.f32.mrf.mxu0
      %v8736 = vadd.f32 %v8663, %v8735
      %8737 = vmatmul.bf16.gmra.mxu0 %v8448
      %v8738 = vpop.f32.mrf.mxu0
      %v8739 = vadd.f32 %v8666, %v8738
      %v8740 = vpop.f32.mrf.mxu0
      %8741 = vdwg.mxu0
      %v8742 = vmax.f32 %v7833, %v8533
      %v8743 = vmax.f32 %v7834, %v8679
      %v8744 = vmax.f32 %v7835, %v8535
      %v8745 = vmax.f32 %v7836, %v8681
      %v8746 = vmax.f32 %v7837, %v8538
      %v8747 = vmax.f32 %v7838, %v8684
      %v8748 = vmax.f32 %v7839, %v8540
      %v8749 = vmax.f32 %v7840, %v8686
      %v8750 = vmax.f32 %v7841, %v8543
      %v8751 = vmax.f32 %v7842, %v8689
      %v8752 = vmax.f32 %v7843, %v8545
      %v8753 = vmax.f32 %v7844, %v8691
      %v8754 = vmax.f32 %v7845, %v8548
      %v8755 = vmax.f32 %v7846, %v8694
      %v8756 = vmax.f32 %v7847, %v8550
      %v8757 = vmax.f32 %v7848, %v8696
      %v8758 = vmax.f32 %v7849, %v8553
      %v8759 = vmax.f32 %v7850, %v8699
      %v8760 = vmax.f32 %v7851, %v8555
      %v8761 = vmax.f32 %v7852, %v8701
      %v8762 = vmax.f32 %v7853, %v8558
      %v8763 = vmax.f32 %v7854, %v8704
      %v8764 = vmax.f32 %v7855, %v8560
      %v8765 = vmax.f32 %v7856, %v8706
      %v8766 = vmax.f32 %v7857, %v8563
      %v8767 = vmax.f32 %v7858, %v8709
      %v8768 = vmax.f32 %v7859, %v8565
      %v8769 = vmax.f32 %v7860, %v8711
      %v8770 = vmax.f32 %v7861, %v8568
      %v8771 = vmax.f32 %v7862, %v8714
      %v8772 = vmax.f32 %v7863, %v8570
      %v8773 = vmax.f32 %v7864, %v8716
      %v8774 = vmax.f32 %v7865, %v8573
      %v8775 = vmax.f32 %v7866, %v8719
      %v8776 = vmax.f32 %v7867, %v8575
      %v8777 = vmax.f32 %v7868, %v8721
      %v8778 = vmax.f32 %v7869, %v8578
      %v8779 = vmax.f32 %v7870, %v8724
      %v8780 = vmax.f32 %v7871, %v8580
      %v8781 = vmax.f32 %v7872, %v8726
      %v8782 = vmax.f32 %v7873, %v8583
      %v8783 = vmax.f32 %v7874, %v8729
      %v8784 = vmax.f32 %v7875, %v8585
      %v8785 = vmax.f32 %v7876, %v8731
      %v8786 = vmax.f32 %v7877, %v8588
      %v8787 = vmax.f32 %v7878, %v8734
      %v8788 = vmax.f32 %v7879, %v8590
      %v8789 = vmax.f32 %v7880, %v8736
      %v8790 = vmax.f32 %v7881, %v8593
      %v8791 = vmax.f32 %v7882, %v8739
      %v8792 = vsel %vm8235, -1e+30, %v7883
      %v8793 = vsel %vm8236, -1e+30, %v7884
      %v8794 = vsel %vm8237, -1e+30, %v7885
      %v8795 = vsel %vm8238, -1e+30, %v7886
      %v8796 = vsel %vm8239, -1e+30, %v7887
      %v8797 = vsel %vm8240, -1e+30, %v7888
      %v8798 = vsel %vm8241, -1e+30, %v7889
      %v8799 = vsel %vm8242, -1e+30, %v7890
      %v8800 = vsel %vm8243, -1e+30, %v7891
      %v8801 = vsel %vm8244, -1e+30, %v7892
      %v8802 = vsel %vm8245, -1e+30, %v7893
      %v8803 = vsel %vm8246, -1e+30, %v7894
      %v8804 = vsel %vm8247, -1e+30, %v7895
      %v8805 = vsel %vm8248, -1e+30, %v7896
      %v8806 = vsel %vm8249, -1e+30, %v7897
      %v8807 = vsel %vm8250, -1e+30, %v7898
      %v8808 = vsel %vm8251, -1e+30, %v7899
      %v8809 = vsel %vm8252, -1e+30, %v7900
      %v8810 = vsel %vm8253, -1e+30, %v7901
      %v8811 = vsel %vm8254, -1e+30, %v7902
      %v8812 = vsel %vm8255, -1e+30, %v7903
      %v8813 = vsel %vm8256, -1e+30, %v7904
      %v8814 = vsel %vm8257, -1e+30, %v7905
      %v8815 = vsel %vm8258, -1e+30, %v7906
      %v8816 = vsel %vm8259, -1e+30, %v7907
      %v8817 = vsel %vm8260, -1e+30, %v7908
      %v8818 = vsel %vm8261, -1e+30, %v7909
      %v8819 = vsel %vm8262, -1e+30, %v7910
      %v8820 = vsel %vm8263, -1e+30, %v7911
      %v8821 = vsel %vm8264, -1e+30, %v7912
      %v8822 = vsel %vm8265, -1e+30, %v7913
      %v8823 = vsel %vm8266, -1e+30, %v7914
      %v8824 = vsel %vm8267, -1e+30, %v7915
      %v8825 = vsel %vm8268, -1e+30, %v7916
      %v8826 = vsel %vm8269, -1e+30, %v7917
      %v8827 = vsel %vm8270, -1e+30, %v7918
      %v8828 = vsel %vm8271, -1e+30, %v7919
      %v8829 = vsel %vm8272, -1e+30, %v7920
      %v8830 = vsel %vm8273, -1e+30, %v7921
      %v8831 = vsel %vm8274, -1e+30, %v7922
      %v8832 = vsel %vm8275, -1e+30, %v7923
      %v8833 = vsel %vm8276, -1e+30, %v7924
      %v8834 = vsel %vm8277, -1e+30, %v7925
      %v8835 = vsel %vm8278, -1e+30, %v7926
      %v8836 = vsel %vm8279, -1e+30, %v7927
      %v8837 = vsel %vm8280, -1e+30, %v7928
      %v8838 = vsel %vm8281, -1e+30, %v7929
      %v8839 = vsel %vm8282, -1e+30, %v7930
      %v8840 = vsel %vm8283, -1e+30, %v7931
      %v8841 = vsel %vm8284, -1e+30, %v7932
      %v8842 = vsel %vm2519, %v8793, -inf
      %v8843 = vmax.f32 %v8792, %v8842
      %8844 = vmax.xlane.f32.xlu0 %v8843
      %v8845 = vpop.xlane.xlu0 %8844
      %v8846 = vsel %vm2519, %v8795, -inf
      %v8847 = vmax.f32 %v8794, %v8846
      %8848 = vmax.xlane.f32.xlu0 %v8847
      %v8849 = vpop.xlane.xlu0 %8848
      %v8850 = vsel %vm2519, %v8797, -inf
      %v8851 = vmax.f32 %v8796, %v8850
      %8852 = vmax.xlane.f32.xlu0 %v8851
      %v8853 = vpop.xlane.xlu0 %8852
      %v8854 = vsel %vm2519, %v8799, -inf
      %v8855 = vmax.f32 %v8798, %v8854
      %8856 = vmax.xlane.f32.xlu0 %v8855
      %v8857 = vpop.xlane.xlu0 %8856
      %v8858 = vsel %vm2519, %v8801, -inf
      %v8859 = vmax.f32 %v8800, %v8858
      %8860 = vmax.xlane.f32.xlu0 %v8859
      %v8861 = vpop.xlane.xlu0 %8860
      %v8862 = vsel %vm2519, %v8803, -inf
      %v8863 = vmax.f32 %v8802, %v8862
      %8864 = vmax.xlane.f32.xlu0 %v8863
      %v8865 = vpop.xlane.xlu0 %8864
      %v8866 = vsel %vm2519, %v8805, -inf
      %v8867 = vmax.f32 %v8804, %v8866
      %8868 = vmax.xlane.f32.xlu0 %v8867
      %v8869 = vpop.xlane.xlu0 %8868
      %v8870 = vsel %vm2519, %v8807, -inf
      %v8871 = vmax.f32 %v8806, %v8870
      %8872 = vmax.xlane.f32.xlu0 %v8871
      %v8873 = vpop.xlane.xlu0 %8872
      %v8874 = vsel %vm2519, %v8809, -inf
      %v8875 = vmax.f32 %v8808, %v8874
      %8876 = vmax.xlane.f32.xlu0 %v8875
      %v8877 = vpop.xlane.xlu0 %8876
      %v8878 = vsel %vm2519, %v8811, -inf
      %v8879 = vmax.f32 %v8810, %v8878
      %8880 = vmax.xlane.f32.xlu0 %v8879
      %v8881 = vpop.xlane.xlu0 %8880
      %v8882 = vsel %vm2519, %v8813, -inf
      %v8883 = vmax.f32 %v8812, %v8882
      %8884 = vmax.xlane.f32.xlu0 %v8883
      %v8885 = vpop.xlane.xlu0 %8884
      %v8886 = vsel %vm2519, %v8815, -inf
      %v8887 = vmax.f32 %v8814, %v8886
      %8888 = vmax.xlane.f32.xlu0 %v8887
      %v8889 = vpop.xlane.xlu0 %8888
      %v8890 = vsel %vm2519, %v8817, -inf
      %v8891 = vmax.f32 %v8816, %v8890
      %8892 = vmax.xlane.f32.xlu0 %v8891
      %v8893 = vpop.xlane.xlu0 %8892
      %v8894 = vsel %vm2519, %v8819, -inf
      %v8895 = vmax.f32 %v8818, %v8894
      %8896 = vmax.xlane.f32.xlu0 %v8895
      %v8897 = vpop.xlane.xlu0 %8896
      %v8898 = vsel %vm2519, %v8821, -inf
      %v8899 = vmax.f32 %v8820, %v8898
      %8900 = vmax.xlane.f32.xlu0 %v8899
      %v8901 = vpop.xlane.xlu0 %8900
      %v8902 = vsel %vm2519, %v8823, -inf
      %v8903 = vmax.f32 %v8822, %v8902
      %8904 = vmax.xlane.f32.xlu0 %v8903
      %v8905 = vpop.xlane.xlu0 %8904
      %v8906 = vsel %vm2519, %v8825, -inf
      %v8907 = vmax.f32 %v8824, %v8906
      %8908 = vmax.xlane.f32.xlu0 %v8907
      %v8909 = vpop.xlane.xlu0 %8908
      %v8910 = vsel %vm2519, %v8827, -inf
      %v8911 = vmax.f32 %v8826, %v8910
      %8912 = vmax.xlane.f32.xlu0 %v8911
      %v8913 = vpop.xlane.xlu0 %8912
      %v8914 = vsel %vm2519, %v8829, -inf
      %v8915 = vmax.f32 %v8828, %v8914
      %8916 = vmax.xlane.f32.xlu0 %v8915
      %v8917 = vpop.xlane.xlu0 %8916
      %v8918 = vsel %vm2519, %v8831, -inf
      %v8919 = vmax.f32 %v8830, %v8918
      %8920 = vmax.xlane.f32.xlu0 %v8919
      %v8921 = vpop.xlane.xlu0 %8920
      %v8922 = vsel %vm2519, %v8833, -inf
      %v8923 = vmax.f32 %v8832, %v8922
      %8924 = vmax.xlane.f32.xlu0 %v8923
      %v8925 = vpop.xlane.xlu0 %8924
      %v8926 = vsel %vm2519, %v8835, -inf
      %v8927 = vmax.f32 %v8834, %v8926
      %8928 = vmax.xlane.f32.xlu0 %v8927
      %v8929 = vpop.xlane.xlu0 %8928
      %v8930 = vsel %vm2519, %v8837, -inf
      %v8931 = vmax.f32 %v8836, %v8930
      %8932 = vmax.xlane.f32.xlu0 %v8931
      %v8933 = vpop.xlane.xlu0 %8932
      %v8934 = vsel %vm2519, %v8839, -inf
      %v8935 = vmax.f32 %v8838, %v8934
      %8936 = vmax.xlane.f32.xlu0 %v8935
      %v8937 = vpop.xlane.xlu0 %8936
      %v8938 = vsel %vm2616, %v8840, -inf
      %v8939 = vsel %vm2618, %v8841, -inf
      %v8940 = vmax.f32 %v8938, %v8939
      %8941 = vmax.xlane.f32.xlu0 %v8940
      %v8942 = vpop.xlane.xlu0 %8941
      %vm8943 = vcmp.eq.f32.partialorder %v8792, %v8845
      %vm8944 = vcmp.eq.f32.partialorder %v8793, %v8845
      %vm8945 = vcmp.eq.f32.partialorder %v8794, %v8849
      %vm8946 = vcmp.eq.f32.partialorder %v8795, %v8849
      %vm8947 = vcmp.eq.f32.partialorder %v8796, %v8853
      %vm8948 = vcmp.eq.f32.partialorder %v8797, %v8853
      %vm8949 = vcmp.eq.f32.partialorder %v8798, %v8857
      %vm8950 = vcmp.eq.f32.partialorder %v8799, %v8857
      %vm8951 = vcmp.eq.f32.partialorder %v8800, %v8861
      %vm8952 = vcmp.eq.f32.partialorder %v8801, %v8861
      %vm8953 = vcmp.eq.f32.partialorder %v8802, %v8865
      %vm8954 = vcmp.eq.f32.partialorder %v8803, %v8865
      %vm8955 = vcmp.eq.f32.partialorder %v8804, %v8869
      %vm8956 = vcmp.eq.f32.partialorder %v8805, %v8869
      %vm8957 = vcmp.eq.f32.partialorder %v8806, %v8873
      %vm8958 = vcmp.eq.f32.partialorder %v8807, %v8873
      %vm8959 = vcmp.eq.f32.partialorder %v8808, %v8877
      %vm8960 = vcmp.eq.f32.partialorder %v8809, %v8877
      %vm8961 = vcmp.eq.f32.partialorder %v8810, %v8881
      %vm8962 = vcmp.eq.f32.partialorder %v8811, %v8881
      %vm8963 = vcmp.eq.f32.partialorder %v8812, %v8885
      %vm8964 = vcmp.eq.f32.partialorder %v8813, %v8885
      %vm8965 = vcmp.eq.f32.partialorder %v8814, %v8889
      %vm8966 = vcmp.eq.f32.partialorder %v8815, %v8889
      %vm8967 = vcmp.eq.f32.partialorder %v8816, %v8893
      %vm8968 = vcmp.eq.f32.partialorder %v8817, %v8893
      %vm8969 = vcmp.eq.f32.partialorder %v8818, %v8897
      %vm8970 = vcmp.eq.f32.partialorder %v8819, %v8897
      %vm8971 = vcmp.eq.f32.partialorder %v8820, %v8901
      %vm8972 = vcmp.eq.f32.partialorder %v8821, %v8901
      %vm8973 = vcmp.eq.f32.partialorder %v8822, %v8905
      %vm8974 = vcmp.eq.f32.partialorder %v8823, %v8905
      %vm8975 = vcmp.eq.f32.partialorder %v8824, %v8909
      %vm8976 = vcmp.eq.f32.partialorder %v8825, %v8909
      %vm8977 = vcmp.eq.f32.partialorder %v8826, %v8913
      %vm8978 = vcmp.eq.f32.partialorder %v8827, %v8913
      %vm8979 = vcmp.eq.f32.partialorder %v8828, %v8917
      %vm8980 = vcmp.eq.f32.partialorder %v8829, %v8917
      %vm8981 = vcmp.eq.f32.partialorder %v8830, %v8921
      %vm8982 = vcmp.eq.f32.partialorder %v8831, %v8921
      %vm8983 = vcmp.eq.f32.partialorder %v8832, %v8925
      %vm8984 = vcmp.eq.f32.partialorder %v8833, %v8925
      %vm8985 = vcmp.eq.f32.partialorder %v8834, %v8929
      %vm8986 = vcmp.eq.f32.partialorder %v8835, %v8929
      %vm8987 = vcmp.eq.f32.partialorder %v8836, %v8933
      %vm8988 = vcmp.eq.f32.partialorder %v8837, %v8933
      %vm8989 = vcmp.eq.f32.partialorder %v8838, %v8937
      %vm8990 = vcmp.eq.f32.partialorder %v8839, %v8937
      %vm8991 = vcmp.eq.f32.partialorder %v8840, %v8942
      %vm8992 = vcmp.eq.f32.partialorder %v8841, %v8942
      %v8993 = vsel %vm8943, %v1613, 196.0
      %v8994 = vsel %vm8944, %v1614, 196.0
      %v8995 = vsel %vm8945, %v1613, 196.0
      %v8996 = vsel %vm8946, %v1614, 196.0
      %v8997 = vsel %vm8947, %v1613, 196.0
      %v8998 = vsel %vm8948, %v1614, 196.0
      %v8999 = vsel %vm8949, %v1613, 196.0
      %v9000 = vsel %vm8950, %v1614, 196.0
      %v9001 = vsel %vm8951, %v1613, 196.0
      %v9002 = vsel %vm8952, %v1614, 196.0
      %v9003 = vsel %vm8953, %v1613, 196.0
      %v9004 = vsel %vm8954, %v1614, 196.0
      %v9005 = vsel %vm8955, %v1613, 196.0
      %v9006 = vsel %vm8956, %v1614, 196.0
      %v9007 = vsel %vm8957, %v1613, 196.0
      %v9008 = vsel %vm8958, %v1614, 196.0
      %v9009 = vsel %vm8959, %v1613, 196.0
      %v9010 = vsel %vm8960, %v1614, 196.0
      %v9011 = vsel %vm8961, %v1613, 196.0
      %v9012 = vsel %vm8962, %v1614, 196.0
      %v9013 = vsel %vm8963, %v1613, 196.0
      %v9014 = vsel %vm8964, %v1614, 196.0
      %v9015 = vsel %vm8965, %v1613, 196.0
      %v9016 = vsel %vm8966, %v1614, 196.0
      %v9017 = vsel %vm8967, %v1613, 196.0
      %v9018 = vsel %vm8968, %v1614, 196.0
      %v9019 = vsel %vm8969, %v1613, 196.0
      %v9020 = vsel %vm8970, %v1614, 196.0
      %v9021 = vsel %vm8971, %v1613, 196.0
      %v9022 = vsel %vm8972, %v1614, 196.0
      %v9023 = vsel %vm8973, %v1613, 196.0
      %v9024 = vsel %vm8974, %v1614, 196.0
      %v9025 = vsel %vm8975, %v1613, 196.0
      %v9026 = vsel %vm8976, %v1614, 196.0
      %v9027 = vsel %vm8977, %v1613, 196.0
      %v9028 = vsel %vm8978, %v1614, 196.0
      %v9029 = vsel %vm8979, %v1613, 196.0
      %v9030 = vsel %vm8980, %v1614, 196.0
      %v9031 = vsel %vm8981, %v1613, 196.0
      %v9032 = vsel %vm8982, %v1614, 196.0
      %v9033 = vsel %vm8983, %v1613, 196.0
      %v9034 = vsel %vm8984, %v1614, 196.0
      %v9035 = vsel %vm8985, %v1613, 196.0
      %v9036 = vsel %vm8986, %v1614, 196.0
      %v9037 = vsel %vm8987, %v1613, 196.0
      %v9038 = vsel %vm8988, %v1614, 196.0
      %v9039 = vsel %vm8989, %v1613, 196.0
      %v9040 = vsel %vm8990, %v1614, 196.0
      %v9041 = vsel %vm8991, %v1613, 196.0
      %v9042 = vsel %vm8992, %v1614, 196.0
      %v9043 = vsel %vm2519, %v8994, inf
      %v9044 = vmin.f32 %v8993, %v9043
      %9045 = vmin.xlane.f32.xlu0 %v9044
      %v9046 = vpop.xlane.xlu0 %9045
      %v9047 = vsel %vm2519, %v8996, inf
      %v9048 = vmin.f32 %v8995, %v9047
      %9049 = vmin.xlane.f32.xlu0 %v9048
      %v9050 = vpop.xlane.xlu0 %9049
      %v9051 = vsel %vm2519, %v8998, inf
      %v9052 = vmin.f32 %v8997, %v9051
      %9053 = vmin.xlane.f32.xlu0 %v9052
      %v9054 = vpop.xlane.xlu0 %9053
      %v9055 = vsel %vm2519, %v9000, inf
      %v9056 = vmin.f32 %v8999, %v9055
      %9057 = vmin.xlane.f32.xlu0 %v9056
      %v9058 = vpop.xlane.xlu0 %9057
      %v9059 = vsel %vm2519, %v9002, inf
      %v9060 = vmin.f32 %v9001, %v9059
      %9061 = vmin.xlane.f32.xlu0 %v9060
      %v9062 = vpop.xlane.xlu0 %9061
      %v9063 = vsel %vm2519, %v9004, inf
      %v9064 = vmin.f32 %v9003, %v9063
      %9065 = vmin.xlane.f32.xlu0 %v9064
      %v9066 = vpop.xlane.xlu0 %9065
      %v9067 = vsel %vm2519, %v9006, inf
      %v9068 = vmin.f32 %v9005, %v9067
      %9069 = vmin.xlane.f32.xlu0 %v9068
      %v9070 = vpop.xlane.xlu0 %9069
      %v9071 = vsel %vm2519, %v9008, inf
      %v9072 = vmin.f32 %v9007, %v9071
      %9073 = vmin.xlane.f32.xlu0 %v9072
      %v9074 = vpop.xlane.xlu0 %9073
      %v9075 = vsel %vm2519, %v9010, inf
      %v9076 = vmin.f32 %v9009, %v9075
      %9077 = vmin.xlane.f32.xlu0 %v9076
      %v9078 = vpop.xlane.xlu0 %9077
      %v9079 = vsel %vm2519, %v9012, inf
      %v9080 = vmin.f32 %v9011, %v9079
      %9081 = vmin.xlane.f32.xlu0 %v9080
      %v9082 = vpop.xlane.xlu0 %9081
      %v9083 = vsel %vm2519, %v9014, inf
      %v9084 = vmin.f32 %v9013, %v9083
      %9085 = vmin.xlane.f32.xlu0 %v9084
      %v9086 = vpop.xlane.xlu0 %9085
      %v9087 = vsel %vm2519, %v9016, inf
      %v9088 = vmin.f32 %v9015, %v9087
      %9089 = vmin.xlane.f32.xlu0 %v9088
      %v9090 = vpop.xlane.xlu0 %9089
      %v9091 = vsel %vm2519, %v9018, inf
      %v9092 = vmin.f32 %v9017, %v9091
      %9093 = vmin.xlane.f32.xlu0 %v9092
      %v9094 = vpop.xlane.xlu0 %9093
      %v9095 = vsel %vm2519, %v9020, inf
      %v9096 = vmin.f32 %v9019, %v9095
      %9097 = vmin.xlane.f32.xlu0 %v9096
      %v9098 = vpop.xlane.xlu0 %9097
      %v9099 = vsel %vm2519, %v9022, inf
      %v9100 = vmin.f32 %v9021, %v9099
      %9101 = vmin.xlane.f32.xlu0 %v9100
      %v9102 = vpop.xlane.xlu0 %9101
      %v9103 = vsel %vm2519, %v9024, inf
      %v9104 = vmin.f32 %v9023, %v9103
      %9105 = vmin.xlane.f32.xlu0 %v9104
      %v9106 = vpop.xlane.xlu0 %9105
      %v9107 = vsel %vm2519, %v9026, inf
      %v9108 = vmin.f32 %v9025, %v9107
      %9109 = vmin.xlane.f32.xlu0 %v9108
      %v9110 = vpop.xlane.xlu0 %9109
      %v9111 = vsel %vm2519, %v9028, inf
      %v9112 = vmin.f32 %v9027, %v9111
      %9113 = vmin.xlane.f32.xlu0 %v9112
      %v9114 = vpop.xlane.xlu0 %9113
      %v9115 = vsel %vm2519, %v9030, inf
      %v9116 = vmin.f32 %v9029, %v9115
      %9117 = vmin.xlane.f32.xlu0 %v9116
      %v9118 = vpop.xlane.xlu0 %9117
      %v9119 = vsel %vm2519, %v9032, inf
      %v9120 = vmin.f32 %v9031, %v9119
      %9121 = vmin.xlane.f32.xlu0 %v9120
      %v9122 = vpop.xlane.xlu0 %9121
      %v9123 = vsel %vm2519, %v9034, inf
      %v9124 = vmin.f32 %v9033, %v9123
      %9125 = vmin.xlane.f32.xlu0 %v9124
      %v9126 = vpop.xlane.xlu0 %9125
      %v9127 = vsel %vm2519, %v9036, inf
      %v9128 = vmin.f32 %v9035, %v9127
      %9129 = vmin.xlane.f32.xlu0 %v9128
      %v9130 = vpop.xlane.xlu0 %9129
      %v9131 = vsel %vm2519, %v9038, inf
      %v9132 = vmin.f32 %v9037, %v9131
      %9133 = vmin.xlane.f32.xlu0 %v9132
      %v9134 = vpop.xlane.xlu0 %9133
      %v9135 = vsel %vm2519, %v9040, inf
      %v9136 = vmin.f32 %v9039, %v9135
      %9137 = vmin.xlane.f32.xlu0 %v9136
      %v9138 = vpop.xlane.xlu0 %9137
      %v9139 = vsel %vm2616, %v9041, inf
      %v9140 = vsel %vm2618, %v9042, inf
      %v9141 = vmin.f32 %v9139, %v9140
      %9142 = vmin.xlane.f32.xlu0 %v9141
      %v9143 = vpop.xlane.xlu0 %9142
      %vm9144 = vcmp.eq.f32.partialorder %v1613, %v9046
      %vm9145 = vcmp.eq.f32.partialorder %v1614, %v9046
      %vm9146 = vcmp.eq.f32.partialorder %v1613, %v9050
      %vm9147 = vcmp.eq.f32.partialorder %v1614, %v9050
      %vm9148 = vcmp.eq.f32.partialorder %v1613, %v9054
      %vm9149 = vcmp.eq.f32.partialorder %v1614, %v9054
      %vm9150 = vcmp.eq.f32.partialorder %v1613, %v9058
      %vm9151 = vcmp.eq.f32.partialorder %v1614, %v9058
      %vm9152 = vcmp.eq.f32.partialorder %v1613, %v9062
      %vm9153 = vcmp.eq.f32.partialorder %v1614, %v9062
      %vm9154 = vcmp.eq.f32.partialorder %v1613, %v9066
      %vm9155 = vcmp.eq.f32.partialorder %v1614, %v9066
      %vm9156 = vcmp.eq.f32.partialorder %v1613, %v9070
      %vm9157 = vcmp.eq.f32.partialorder %v1614, %v9070
      %vm9158 = vcmp.eq.f32.partialorder %v1613, %v9074
      %vm9159 = vcmp.eq.f32.partialorder %v1614, %v9074
      %vm9160 = vcmp.eq.f32.partialorder %v1613, %v9078
      %vm9161 = vcmp.eq.f32.partialorder %v1614, %v9078
      %vm9162 = vcmp.eq.f32.partialorder %v1613, %v9082
      %vm9163 = vcmp.eq.f32.partialorder %v1614, %v9082
      %vm9164 = vcmp.eq.f32.partialorder %v1613, %v9086
      %vm9165 = vcmp.eq.f32.partialorder %v1614, %v9086
      %vm9166 = vcmp.eq.f32.partialorder %v1613, %v9090
      %vm9167 = vcmp.eq.f32.partialorder %v1614, %v9090
      %vm9168 = vcmp.eq.f32.partialorder %v1613, %v9094
      %vm9169 = vcmp.eq.f32.partialorder %v1614, %v9094
      %vm9170 = vcmp.eq.f32.partialorder %v1613, %v9098
      %vm9171 = vcmp.eq.f32.partialorder %v1614, %v9098
      %vm9172 = vcmp.eq.f32.partialorder %v1613, %v9102
      %vm9173 = vcmp.eq.f32.partialorder %v1614, %v9102
      %vm9174 = vcmp.eq.f32.partialorder %v1613, %v9106
      %vm9175 = vcmp.eq.f32.partialorder %v1614, %v9106
      %vm9176 = vcmp.eq.f32.partialorder %v1613, %v9110
      %vm9177 = vcmp.eq.f32.partialorder %v1614, %v9110
      %vm9178 = vcmp.eq.f32.partialorder %v1613, %v9114
      %vm9179 = vcmp.eq.f32.partialorder %v1614, %v9114
      %vm9180 = vcmp.eq.f32.partialorder %v1613, %v9118
      %vm9181 = vcmp.eq.f32.partialorder %v1614, %v9118
      %vm9182 = vcmp.eq.f32.partialorder %v1613, %v9122
      %vm9183 = vcmp.eq.f32.partialorder %v1614, %v9122
      %vm9184 = vcmp.eq.f32.partialorder %v1613, %v9126
      %vm9185 = vcmp.eq.f32.partialorder %v1614, %v9126
      %vm9186 = vcmp.eq.f32.partialorder %v1613, %v9130
      %vm9187 = vcmp.eq.f32.partialorder %v1614, %v9130
      %vm9188 = vcmp.eq.f32.partialorder %v1613, %v9134
      %vm9189 = vcmp.eq.f32.partialorder %v1614, %v9134
      %vm9190 = vcmp.eq.f32.partialorder %v1613, %v9138
      %vm9191 = vcmp.eq.f32.partialorder %v1614, %v9138
      %vm9192 = vcmp.eq.f32.partialorder %v1613, %v9143
      %vm9193 = vcmp.eq.f32.partialorder %v1614, %v9143
      %v9194 = vsel %vm9144, 1, 0
      %v9195 = vsel %vm9145, 1, 0
      %v9196 = vsel %vm9146, 1, 0
      %v9197 = vsel %vm9147, 1, 0
      %v9198 = vsel %vm9148, 1, 0
      %v9199 = vsel %vm9149, 1, 0
      %v9200 = vsel %vm9150, 1, 0
      %v9201 = vsel %vm9151, 1, 0
      %v9202 = vsel %vm9152, 1, 0
      %v9203 = vsel %vm9153, 1, 0
      %v9204 = vsel %vm9154, 1, 0
      %v9205 = vsel %vm9155, 1, 0
      %v9206 = vsel %vm9156, 1, 0
      %v9207 = vsel %vm9157, 1, 0
      %v9208 = vsel %vm9158, 1, 0
      %v9209 = vsel %vm9159, 1, 0
      %v9210 = vsel %vm9160, 1, 0
      %v9211 = vsel %vm9161, 1, 0
      %v9212 = vsel %vm9162, 1, 0
      %v9213 = vsel %vm9163, 1, 0
      %v9214 = vsel %vm9164, 1, 0
      %v9215 = vsel %vm9165, 1, 0
      %v9216 = vsel %vm9166, 1, 0
      %v9217 = vsel %vm9167, 1, 0
      %v9218 = vsel %vm9168, 1, 0
      %v9219 = vsel %vm9169, 1, 0
      %v9220 = vsel %vm9170, 1, 0
      %v9221 = vsel %vm9171, 1, 0
      %v9222 = vsel %vm9172, 1, 0
      %v9223 = vsel %vm9173, 1, 0
      %v9224 = vsel %vm9174, 1, 0
      %v9225 = vsel %vm9175, 1, 0
      %v9226 = vsel %vm9176, 1, 0
      %v9227 = vsel %vm9177, 1, 0
      %v9228 = vsel %vm9178, 1, 0
      %v9229 = vsel %vm9179, 1, 0
      %v9230 = vsel %vm9180, 1, 0
      %v9231 = vsel %vm9181, 1, 0
      %v9232 = vsel %vm9182, 1, 0
      %v9233 = vsel %vm9183, 1, 0
      %v9234 = vsel %vm9184, 1, 0
      %v9235 = vsel %vm9185, 1, 0
      %v9236 = vsel %vm9186, 1, 0
      %v9237 = vsel %vm9187, 1, 0
      %v9238 = vsel %vm9188, 1, 0
      %v9239 = vsel %vm9189, 1, 0
      %v9240 = vsel %vm9190, 1, 0
      %v9241 = vsel %vm9191, 1, 0
      %v9242 = vsel %vm9192, 1, 0
      %v9243 = vsel %vm9193, 1, 0
      %v9244 = vcvt.s32.f32 %v9194
      %v9245 = vcvt.s32.f32 %v9195
      %v9246 = vcvt.s32.f32 %v9196
      %v9247 = vcvt.s32.f32 %v9197
      %v9248 = vcvt.s32.f32 %v9198
      %v9249 = vcvt.s32.f32 %v9199
      %v9250 = vcvt.s32.f32 %v9200
      %v9251 = vcvt.s32.f32 %v9201
      %v9252 = vcvt.s32.f32 %v9202
      %v9253 = vcvt.s32.f32 %v9203
      %v9254 = vcvt.s32.f32 %v9204
      %v9255 = vcvt.s32.f32 %v9205
      %v9256 = vcvt.s32.f32 %v9206
      %v9257 = vcvt.s32.f32 %v9207
      %v9258 = vcvt.s32.f32 %v9208
      %v9259 = vcvt.s32.f32 %v9209
      %v9260 = vcvt.s32.f32 %v9210
      %v9261 = vcvt.s32.f32 %v9211
      %v9262 = vcvt.s32.f32 %v9212
      %v9263 = vcvt.s32.f32 %v9213
      %v9264 = vcvt.s32.f32 %v9214
      %v9265 = vcvt.s32.f32 %v9215
      %v9266 = vcvt.s32.f32 %v9216
      %v9267 = vcvt.s32.f32 %v9217
      %v9268 = vcvt.s32.f32 %v9218
      %v9269 = vcvt.s32.f32 %v9219
      %v9270 = vcvt.s32.f32 %v9220
      %v9271 = vcvt.s32.f32 %v9221
      %v9272 = vcvt.s32.f32 %v9222
      %v9273 = vcvt.s32.f32 %v9223
      %v9274 = vcvt.s32.f32 %v9224
      %v9275 = vcvt.s32.f32 %v9225
      %v9276 = vcvt.s32.f32 %v9226
      %v9277 = vcvt.s32.f32 %v9227
      %v9278 = vcvt.s32.f32 %v9228
      %v9279 = vcvt.s32.f32 %v9229
      %v9280 = vcvt.s32.f32 %v9230
      %v9281 = vcvt.s32.f32 %v9231
      %v9282 = vcvt.s32.f32 %v9232
      %v9283 = vcvt.s32.f32 %v9233
      %v9284 = vcvt.s32.f32 %v9234
      %v9285 = vcvt.s32.f32 %v9235
      %v9286 = vcvt.s32.f32 %v9236
      %v9287 = vcvt.s32.f32 %v9237
      %v9288 = vcvt.s32.f32 %v9238
      %v9289 = vcvt.s32.f32 %v9239
      %v9290 = vcvt.s32.f32 %v9240
      %v9291 = vcvt.s32.f32 %v9241
      %v9292 = vcvt.s32.f32 %v9242
      %v9293 = vcvt.s32.f32 %v9243
      %v9294 = vpack.c.bf16 %v9246, %v9244
      %v9295 = vpack.c.bf16 %v9247, %v9245
      %v9296 = vpack.c.bf16 %v9250, %v9248
      %v9297 = vpack.c.bf16 %v9251, %v9249
      %v9298 = vpack.c.bf16 %v9254, %v9252
      %v9299 = vpack.c.bf16 %v9255, %v9253
      %v9300 = vpack.c.bf16 %v9258, %v9256
      %v9301 = vpack.c.bf16 %v9259, %v9257
      %v9302 = vpack.c.bf16 %v9262, %v9260
      %v9303 = vpack.c.bf16 %v9263, %v9261
      %v9304 = vpack.c.bf16 %v9266, %v9264
      %v9305 = vpack.c.bf16 %v9267, %v9265
      %v9306 = vpack.c.bf16 %v9270, %v9268
      %v9307 = vpack.c.bf16 %v9271, %v9269
      %v9308 = vpack.c.bf16 %v9274, %v9272
      %v9309 = vpack.c.bf16 %v9275, %v9273
      %v9310 = vpack.c.bf16 %v9278, %v9276
      %v9311 = vpack.c.bf16 %v9279, %v9277
      %v9312 = vpack.c.bf16 %v9282, %v9280
      %v9313 = vpack.c.bf16 %v9283, %v9281
      %v9314 = vpack.c.bf16 %v9286, %v9284
      %v9315 = vpack.c.bf16 %v9287, %v9285
      %v9316 = vpack.c.bf16 %v9290, %v9288
      %v9317 = vpack.c.bf16 %v9291, %v9289
      %v9318 = vpack.c.bf16 %v9292, %v9292
      %v9319 = vpack.c.bf16 %v9293, %v9293
      %v9321 = vsel %vm2519, %v9295, 0
      %v9324 = vsel %vm2519, %v9297, 0
      %v9327 = vsel %vm2519, %v9299, 0
      %v9330 = vsel %vm2519, %v9301, 0
      %v9333 = vsel %vm2519, %v9303, 0
      %v9336 = vsel %vm2519, %v9305, 0
      %v9339 = vsel %vm2519, %v9307, 0
      %v9342 = vsel %vm2519, %v9309, 0
      %v9345 = vsel %vm2519, %v9311, 0
      %v9348 = vsel %vm2519, %v9313, 0
      %v9351 = vsel %vm2519, %v9315, 0
      %v9354 = vsel %vm2519, %v9317, 0
      %v9357 = vsel %vm2519, %v9319, 0
      %9359 = vmatpush.bf16.msra.mxu0 %v2507
      %9360 = vmatpush.bf16.msra.mxu0 %v2505
      %9361 = vmatpush.bf16.msra.mxu0 %v2503
      %9362 = vmatpush.bf16.msra.mxu0 %v2501
      %9363 = vmatpush.bf16.msra.mxu0 %v2499
      %9364 = vmatpush.bf16.msra.mxu0 %v2497
      %9365 = vmatpush.bf16.msra.mxu0 %v2495
      %9366 = vmatpush.bf16.msra.mxu0 %v2493
      %9367 = vmatmul.bf16.gmra.mxu0 %v9294
      %v9368 = vpop.f32.mrf.mxu0
      %v9369 = vadd.f32 0.0, %v9368
      %v9370 = vpop.f32.mrf.mxu0
      %v9371 = vadd.f32 0.0, %v9370
      %9372 = vmatmul.bf16.gmra.mxu0 %v9296
      %v9373 = vpop.f32.mrf.mxu0
      %v9374 = vadd.f32 0.0, %v9373
      %v9375 = vpop.f32.mrf.mxu0
      %v9376 = vadd.f32 0.0, %v9375
      %9377 = vmatmul.bf16.gmra.mxu0 %v9298
      %v9378 = vpop.f32.mrf.mxu0
      %v9379 = vadd.f32 0.0, %v9378
      %v9380 = vpop.f32.mrf.mxu0
      %v9381 = vadd.f32 0.0, %v9380
      %9382 = vmatmul.bf16.gmra.mxu0 %v9300
      %v9383 = vpop.f32.mrf.mxu0
      %v9384 = vadd.f32 0.0, %v9383
      %v9385 = vpop.f32.mrf.mxu0
      %v9386 = vadd.f32 0.0, %v9385
      %9387 = vmatmul.bf16.gmra.mxu0 %v9302
      %v9388 = vpop.f32.mrf.mxu0
      %v9389 = vadd.f32 0.0, %v9388
      %v9390 = vpop.f32.mrf.mxu0
      %v9391 = vadd.f32 0.0, %v9390
      %9392 = vmatmul.bf16.gmra.mxu0 %v9304
      %v9393 = vpop.f32.mrf.mxu0
      %v9394 = vadd.f32 0.0, %v9393
      %v9395 = vpop.f32.mrf.mxu0
      %v9396 = vadd.f32 0.0, %v9395
      %9397 = vmatmul.bf16.gmra.mxu0 %v9306
      %v9398 = vpop.f32.mrf.mxu0
      %v9399 = vadd.f32 0.0, %v9398
      %v9400 = vpop.f32.mrf.mxu0
      %v9401 = vadd.f32 0.0, %v9400
      %9402 = vmatmul.bf16.gmra.mxu0 %v9308
      %v9403 = vpop.f32.mrf.mxu0
      %v9404 = vadd.f32 0.0, %v9403
      %v9405 = vpop.f32.mrf.mxu0
      %v9406 = vadd.f32 0.0, %v9405
      %9407 = vmatmul.bf16.gmra.mxu0 %v9310
      %v9408 = vpop.f32.mrf.mxu0
      %v9409 = vadd.f32 0.0, %v9408
      %v9410 = vpop.f32.mrf.mxu0
      %v9411 = vadd.f32 0.0, %v9410
      %9412 = vmatmul.bf16.gmra.mxu0 %v9312
      %v9413 = vpop.f32.mrf.mxu0
      %v9414 = vadd.f32 0.0, %v9413
      %v9415 = vpop.f32.mrf.mxu0
      %v9416 = vadd.f32 0.0, %v9415
      %9417 = vmatmul.bf16.gmra.mxu0 %v9314
      %v9418 = vpop.f32.mrf.mxu0
      %v9419 = vadd.f32 0.0, %v9418
      %v9420 = vpop.f32.mrf.mxu0
      %v9421 = vadd.f32 0.0, %v9420
      %9422 = vmatmul.bf16.gmra.mxu0 %v9316
      %v9423 = vpop.f32.mrf.mxu0
      %v9424 = vadd.f32 0.0, %v9423
      %v9425 = vpop.f32.mrf.mxu0
      %v9426 = vadd.f32 0.0, %v9425
      %9427 = vmatmul.bf16.gmra.mxu0 %v9318
      %v9428 = vpop.f32.mrf.mxu0
      %v9429 = vadd.f32 0.0, %v9428
      %v9430 = vpop.f32.mrf.mxu0
      %9431 = vdwg.mxu0
      %9432 = vmatpush.bf16.msra.mxu0 0
      %9433 = vmatpush.bf16.msra.mxu0 0
      %9434 = vmatpush.bf16.msra.mxu0 0
      %9435 = vmatpush.bf16.msra.mxu0 %v3041
      %9436 = vmatpush.bf16.msra.mxu0 %v2515
      %9437 = vmatpush.bf16.msra.mxu0 %v2513
      %9438 = vmatpush.bf16.msra.mxu0 %v2511
      %9439 = vmatpush.bf16.msra.mxu0 %v2509
      %9440 = vmatmul.bf16.gmra.mxu0 %v9321
      %v9441 = vpop.f32.mrf.mxu0
      %v9442 = vadd.f32 %v9369, %v9441
      %v9443 = vpop.f32.mrf.mxu0
      %v9444 = vadd.f32 %v9371, %v9443
      %9445 = vmatmul.bf16.gmra.mxu0 %v9324
      %v9446 = vpop.f32.mrf.mxu0
      %v9447 = vadd.f32 %v9374, %v9446
      %v9448 = vpop.f32.mrf.mxu0
      %v9449 = vadd.f32 %v9376, %v9448
      %9450 = vmatmul.bf16.gmra.mxu0 %v9327
      %v9451 = vpop.f32.mrf.mxu0
      %v9452 = vadd.f32 %v9379, %v9451
      %v9453 = vpop.f32.mrf.mxu0
      %v9454 = vadd.f32 %v9381, %v9453
      %9455 = vmatmul.bf16.gmra.mxu0 %v9330
      %v9456 = vpop.f32.mrf.mxu0
      %v9457 = vadd.f32 %v9384, %v9456
      %v9458 = vpop.f32.mrf.mxu0
      %v9459 = vadd.f32 %v9386, %v9458
      %9460 = vmatmul.bf16.gmra.mxu0 %v9333
      %v9461 = vpop.f32.mrf.mxu0
      %v9462 = vadd.f32 %v9389, %v9461
      %v9463 = vpop.f32.mrf.mxu0
      %v9464 = vadd.f32 %v9391, %v9463
      %9465 = vmatmul.bf16.gmra.mxu0 %v9336
      %v9466 = vpop.f32.mrf.mxu0
      %v9467 = vadd.f32 %v9394, %v9466
      %v9468 = vpop.f32.mrf.mxu0
      %v9469 = vadd.f32 %v9396, %v9468
      %9470 = vmatmul.bf16.gmra.mxu0 %v9339
      %v9471 = vpop.f32.mrf.mxu0
      %v9472 = vadd.f32 %v9399, %v9471
      %v9473 = vpop.f32.mrf.mxu0
      %v9474 = vadd.f32 %v9401, %v9473
      %9475 = vmatmul.bf16.gmra.mxu0 %v9342
      %v9476 = vpop.f32.mrf.mxu0
      %v9477 = vadd.f32 %v9404, %v9476
      %v9478 = vpop.f32.mrf.mxu0
      %v9479 = vadd.f32 %v9406, %v9478
      %9480 = vmatmul.bf16.gmra.mxu0 %v9345
      %v9481 = vpop.f32.mrf.mxu0
      %v9482 = vadd.f32 %v9409, %v9481
      %v9483 = vpop.f32.mrf.mxu0
      %v9484 = vadd.f32 %v9411, %v9483
      %9485 = vmatmul.bf16.gmra.mxu0 %v9348
      %v9486 = vpop.f32.mrf.mxu0
      %v9487 = vadd.f32 %v9414, %v9486
      %v9488 = vpop.f32.mrf.mxu0
      %v9489 = vadd.f32 %v9416, %v9488
      %9490 = vmatmul.bf16.gmra.mxu0 %v9351
      %v9491 = vpop.f32.mrf.mxu0
      %v9492 = vadd.f32 %v9419, %v9491
      %v9493 = vpop.f32.mrf.mxu0
      %v9494 = vadd.f32 %v9421, %v9493
      %9495 = vmatmul.bf16.gmra.mxu0 %v9354
      %v9496 = vpop.f32.mrf.mxu0
      %v9497 = vadd.f32 %v9424, %v9496
      %v9498 = vpop.f32.mrf.mxu0
      %v9499 = vadd.f32 %v9426, %v9498
      %9500 = vmatmul.bf16.gmra.mxu0 %v9357
      %v9501 = vpop.f32.mrf.mxu0
      %v9502 = vadd.f32 %v9429, %v9501
      %v9503 = vpop.f32.mrf.mxu0
      %9504 = vdwg.mxu0
      %9505 = vmatpush.bf16.msra.mxu0 %v2508
      %9506 = vmatpush.bf16.msra.mxu0 %v2506
      %9507 = vmatpush.bf16.msra.mxu0 %v2504
      %9508 = vmatpush.bf16.msra.mxu0 %v2502
      %9509 = vmatpush.bf16.msra.mxu0 %v2500
      %9510 = vmatpush.bf16.msra.mxu0 %v2498
      %9511 = vmatpush.bf16.msra.mxu0 %v2496
      %9512 = vmatpush.bf16.msra.mxu0 %v2494
      %9513 = vmatmul.bf16.gmra.mxu0 %v9294
      %v9514 = vpop.f32.mrf.mxu0
      %v9515 = vadd.f32 0.0, %v9514
      %v9516 = vpop.f32.mrf.mxu0
      %v9517 = vadd.f32 0.0, %v9516
      %9518 = vmatmul.bf16.gmra.mxu0 %v9296
      %v9519 = vpop.f32.mrf.mxu0
      %v9520 = vadd.f32 0.0, %v9519
      %v9521 = vpop.f32.mrf.mxu0
      %v9522 = vadd.f32 0.0, %v9521
      %9523 = vmatmul.bf16.gmra.mxu0 %v9298
      %v9524 = vpop.f32.mrf.mxu0
      %v9525 = vadd.f32 0.0, %v9524
      %v9526 = vpop.f32.mrf.mxu0
      %v9527 = vadd.f32 0.0, %v9526
      %9528 = vmatmul.bf16.gmra.mxu0 %v9300
      %v9529 = vpop.f32.mrf.mxu0
      %v9530 = vadd.f32 0.0, %v9529
      %v9531 = vpop.f32.mrf.mxu0
      %v9532 = vadd.f32 0.0, %v9531
      %9533 = vmatmul.bf16.gmra.mxu0 %v9302
      %v9534 = vpop.f32.mrf.mxu0
      %v9535 = vadd.f32 0.0, %v9534
      %v9536 = vpop.f32.mrf.mxu0
      %v9537 = vadd.f32 0.0, %v9536
      %9538 = vmatmul.bf16.gmra.mxu0 %v9304
      %v9539 = vpop.f32.mrf.mxu0
      %v9540 = vadd.f32 0.0, %v9539
      %v9541 = vpop.f32.mrf.mxu0
      %v9542 = vadd.f32 0.0, %v9541
      %9543 = vmatmul.bf16.gmra.mxu0 %v9306
      %v9544 = vpop.f32.mrf.mxu0
      %v9545 = vadd.f32 0.0, %v9544
      %v9546 = vpop.f32.mrf.mxu0
      %v9547 = vadd.f32 0.0, %v9546
      %9548 = vmatmul.bf16.gmra.mxu0 %v9308
      %v9549 = vpop.f32.mrf.mxu0
      %v9550 = vadd.f32 0.0, %v9549
      %v9551 = vpop.f32.mrf.mxu0
      %v9552 = vadd.f32 0.0, %v9551
      %9553 = vmatmul.bf16.gmra.mxu0 %v9310
      %v9554 = vpop.f32.mrf.mxu0
      %v9555 = vadd.f32 0.0, %v9554
      %v9556 = vpop.f32.mrf.mxu0
      %v9557 = vadd.f32 0.0, %v9556
      %9558 = vmatmul.bf16.gmra.mxu0 %v9312
      %v9559 = vpop.f32.mrf.mxu0
      %v9560 = vadd.f32 0.0, %v9559
      %v9561 = vpop.f32.mrf.mxu0
      %v9562 = vadd.f32 0.0, %v9561
      %9563 = vmatmul.bf16.gmra.mxu0 %v9314
      %v9564 = vpop.f32.mrf.mxu0
      %v9565 = vadd.f32 0.0, %v9564
      %v9566 = vpop.f32.mrf.mxu0
      %v9567 = vadd.f32 0.0, %v9566
      %9568 = vmatmul.bf16.gmra.mxu0 %v9316
      %v9569 = vpop.f32.mrf.mxu0
      %v9570 = vadd.f32 0.0, %v9569
      %v9571 = vpop.f32.mrf.mxu0
      %v9572 = vadd.f32 0.0, %v9571
      %9573 = vmatmul.bf16.gmra.mxu0 %v9318
      %v9574 = vpop.f32.mrf.mxu0
      %v9575 = vadd.f32 0.0, %v9574
      %v9576 = vpop.f32.mrf.mxu0
      %9577 = vdwg.mxu0
      %9578 = vmatpush.bf16.msra.mxu0 0
      %9579 = vmatpush.bf16.msra.mxu0 0
      %9580 = vmatpush.bf16.msra.mxu0 0
      %9581 = vmatpush.bf16.msra.mxu0 %v3044
      %9582 = vmatpush.bf16.msra.mxu0 %v2516
      %9583 = vmatpush.bf16.msra.mxu0 %v2514
      %9584 = vmatpush.bf16.msra.mxu0 %v2512
      %9585 = vmatpush.bf16.msra.mxu0 %v2510
      %9586 = vmatmul.bf16.gmra.mxu0 %v9321
      %v9587 = vpop.f32.mrf.mxu0
      %v9588 = vadd.f32 %v9515, %v9587
      %v9589 = vpop.f32.mrf.mxu0
      %v9590 = vadd.f32 %v9517, %v9589
      %9591 = vmatmul.bf16.gmra.mxu0 %v9324
      %v9592 = vpop.f32.mrf.mxu0
      %v9593 = vadd.f32 %v9520, %v9592
      %v9594 = vpop.f32.mrf.mxu0
      %v9595 = vadd.f32 %v9522, %v9594
      %9596 = vmatmul.bf16.gmra.mxu0 %v9327
      %v9597 = vpop.f32.mrf.mxu0
      %v9598 = vadd.f32 %v9525, %v9597
      %v9599 = vpop.f32.mrf.mxu0
      %v9600 = vadd.f32 %v9527, %v9599
      %9601 = vmatmul.bf16.gmra.mxu0 %v9330
      %v9602 = vpop.f32.mrf.mxu0
      %v9603 = vadd.f32 %v9530, %v9602
      %v9604 = vpop.f32.mrf.mxu0
      %v9605 = vadd.f32 %v9532, %v9604
      %9606 = vmatmul.bf16.gmra.mxu0 %v9333
      %v9607 = vpop.f32.mrf.mxu0
      %v9608 = vadd.f32 %v9535, %v9607
      %v9609 = vpop.f32.mrf.mxu0
      %v9610 = vadd.f32 %v9537, %v9609
      %9611 = vmatmul.bf16.gmra.mxu0 %v9336
      %v9612 = vpop.f32.mrf.mxu0
      %v9613 = vadd.f32 %v9540, %v9612
      %v9614 = vpop.f32.mrf.mxu0
      %v9615 = vadd.f32 %v9542, %v9614
      %9616 = vmatmul.bf16.gmra.mxu0 %v9339
      %v9617 = vpop.f32.mrf.mxu0
      %v9618 = vadd.f32 %v9545, %v9617
      %v9619 = vpop.f32.mrf.mxu0
      %v9620 = vadd.f32 %v9547, %v9619
      %9621 = vmatmul.bf16.gmra.mxu0 %v9342
      %v9622 = vpop.f32.mrf.mxu0
      %v9623 = vadd.f32 %v9550, %v9622
      %v9624 = vpop.f32.mrf.mxu0
      %v9625 = vadd.f32 %v9552, %v9624
      %9626 = vmatmul.bf16.gmra.mxu0 %v9345
      %v9627 = vpop.f32.mrf.mxu0
      %v9628 = vadd.f32 %v9555, %v9627
      %v9629 = vpop.f32.mrf.mxu0
      %v9630 = vadd.f32 %v9557, %v9629
      %9631 = vmatmul.bf16.gmra.mxu0 %v9348
      %v9632 = vpop.f32.mrf.mxu0
      %v9633 = vadd.f32 %v9560, %v9632
      %v9634 = vpop.f32.mrf.mxu0
      %v9635 = vadd.f32 %v9562, %v9634
      %9636 = vmatmul.bf16.gmra.mxu0 %v9351
      %v9637 = vpop.f32.mrf.mxu0
      %v9638 = vadd.f32 %v9565, %v9637
      %v9639 = vpop.f32.mrf.mxu0
      %v9640 = vadd.f32 %v9567, %v9639
      %9641 = vmatmul.bf16.gmra.mxu0 %v9354
      %v9642 = vpop.f32.mrf.mxu0
      %v9643 = vadd.f32 %v9570, %v9642
      %v9644 = vpop.f32.mrf.mxu0
      %v9645 = vadd.f32 %v9572, %v9644
      %9646 = vmatmul.bf16.gmra.mxu0 %v9357
      %v9647 = vpop.f32.mrf.mxu0
      %v9648 = vadd.f32 %v9575, %v9647
      %v9649 = vpop.f32.mrf.mxu0
      %9650 = vdwg.mxu0
      %v9651 = vmax.f32 %v8742, %v9442
      %v9652 = vmax.f32 %v8743, %v9588
      %v9653 = vmax.f32 %v8744, %v9444
      %v9654 = vmax.f32 %v8745, %v9590
      %v9655 = vmax.f32 %v8746, %v9447
      %v9656 = vmax.f32 %v8747, %v9593
      %v9657 = vmax.f32 %v8748, %v9449
      %v9658 = vmax.f32 %v8749, %v9595
      %v9659 = vmax.f32 %v8750, %v9452
      %v9660 = vmax.f32 %v8751, %v9598
      %v9661 = vmax.f32 %v8752, %v9454
      %v9662 = vmax.f32 %v8753, %v9600
      %v9663 = vmax.f32 %v8754, %v9457
      %v9664 = vmax.f32 %v8755, %v9603
      %v9665 = vmax.f32 %v8756, %v9459
      %v9666 = vmax.f32 %v8757, %v9605
      %v9667 = vmax.f32 %v8758, %v9462
      %v9668 = vmax.f32 %v8759, %v9608
      %v9669 = vmax.f32 %v8760, %v9464
      %v9670 = vmax.f32 %v8761, %v9610
      %v9671 = vmax.f32 %v8762, %v9467
      %v9672 = vmax.f32 %v8763, %v9613
      %v9673 = vmax.f32 %v8764, %v9469
      %v9674 = vmax.f32 %v8765, %v9615
      %v9675 = vmax.f32 %v8766, %v9472
      %v9676 = vmax.f32 %v8767, %v9618
      %v9677 = vmax.f32 %v8768, %v9474
      %v9678 = vmax.f32 %v8769, %v9620
      %v9679 = vmax.f32 %v8770, %v9477
      %v9680 = vmax.f32 %v8771, %v9623
      %v9681 = vmax.f32 %v8772, %v9479
      %v9682 = vmax.f32 %v8773, %v9625
      %v9683 = vmax.f32 %v8774, %v9482
      %v9684 = vmax.f32 %v8775, %v9628
      %v9685 = vmax.f32 %v8776, %v9484
      %v9686 = vmax.f32 %v8777, %v9630
      %v9687 = vmax.f32 %v8778, %v9487
      %v9688 = vmax.f32 %v8779, %v9633
      %v9689 = vmax.f32 %v8780, %v9489
      %v9690 = vmax.f32 %v8781, %v9635
      %v9691 = vmax.f32 %v8782, %v9492
      %v9692 = vmax.f32 %v8783, %v9638
      %v9693 = vmax.f32 %v8784, %v9494
      %v9694 = vmax.f32 %v8785, %v9640
      %v9695 = vmax.f32 %v8786, %v9497
      %v9696 = vmax.f32 %v8787, %v9643
      %v9697 = vmax.f32 %v8788, %v9499
      %v9698 = vmax.f32 %v8789, %v9645
      %v9699 = vmax.f32 %v8790, %v9502
      %v9700 = vmax.f32 %v8791, %v9648
      %v9701 = vsel %vm9144, -1e+30, %v8792
      %v9702 = vsel %vm9145, -1e+30, %v8793
      %v9703 = vsel %vm9146, -1e+30, %v8794
      %v9704 = vsel %vm9147, -1e+30, %v8795
      %v9705 = vsel %vm9148, -1e+30, %v8796
      %v9706 = vsel %vm9149, -1e+30, %v8797
      %v9707 = vsel %vm9150, -1e+30, %v8798
      %v9708 = vsel %vm9151, -1e+30, %v8799
      %v9709 = vsel %vm9152, -1e+30, %v8800
      %v9710 = vsel %vm9153, -1e+30, %v8801
      %v9711 = vsel %vm9154, -1e+30, %v8802
      %v9712 = vsel %vm9155, -1e+30, %v8803
      %v9713 = vsel %vm9156, -1e+30, %v8804
      %v9714 = vsel %vm9157, -1e+30, %v8805
      %v9715 = vsel %vm9158, -1e+30, %v8806
      %v9716 = vsel %vm9159, -1e+30, %v8807
      %v9717 = vsel %vm9160, -1e+30, %v8808
      %v9718 = vsel %vm9161, -1e+30, %v8809
      %v9719 = vsel %vm9162, -1e+30, %v8810
      %v9720 = vsel %vm9163, -1e+30, %v8811
      %v9721 = vsel %vm9164, -1e+30, %v8812
      %v9722 = vsel %vm9165, -1e+30, %v8813
      %v9723 = vsel %vm9166, -1e+30, %v8814
      %v9724 = vsel %vm9167, -1e+30, %v8815
      %v9725 = vsel %vm9168, -1e+30, %v8816
      %v9726 = vsel %vm9169, -1e+30, %v8817
      %v9727 = vsel %vm9170, -1e+30, %v8818
      %v9728 = vsel %vm9171, -1e+30, %v8819
      %v9729 = vsel %vm9172, -1e+30, %v8820
      %v9730 = vsel %vm9173, -1e+30, %v8821
      %v9731 = vsel %vm9174, -1e+30, %v8822
      %v9732 = vsel %vm9175, -1e+30, %v8823
      %v9733 = vsel %vm9176, -1e+30, %v8824
      %v9734 = vsel %vm9177, -1e+30, %v8825
      %v9735 = vsel %vm9178, -1e+30, %v8826
      %v9736 = vsel %vm9179, -1e+30, %v8827
      %v9737 = vsel %vm9180, -1e+30, %v8828
      %v9738 = vsel %vm9181, -1e+30, %v8829
      %v9739 = vsel %vm9182, -1e+30, %v8830
      %v9740 = vsel %vm9183, -1e+30, %v8831
      %v9741 = vsel %vm9184, -1e+30, %v8832
      %v9742 = vsel %vm9185, -1e+30, %v8833
      %v9743 = vsel %vm9186, -1e+30, %v8834
      %v9744 = vsel %vm9187, -1e+30, %v8835
      %v9745 = vsel %vm9188, -1e+30, %v8836
      %v9746 = vsel %vm9189, -1e+30, %v8837
      %v9747 = vsel %vm9190, -1e+30, %v8838
      %v9748 = vsel %vm9191, -1e+30, %v8839
      %v9749 = vsel %vm9192, -1e+30, %v8840
      %v9750 = vsel %vm9193, -1e+30, %v8841
      %v9751 = vsel %vm2519, %v9702, -inf
      %v9752 = vmax.f32 %v9701, %v9751
      %9753 = vmax.xlane.f32.xlu0 %v9752
      %v9754 = vpop.xlane.xlu0 %9753
      %v9755 = vsel %vm2519, %v9704, -inf
      %v9756 = vmax.f32 %v9703, %v9755
      %9757 = vmax.xlane.f32.xlu0 %v9756
      %v9758 = vpop.xlane.xlu0 %9757
      %v9759 = vsel %vm2519, %v9706, -inf
      %v9760 = vmax.f32 %v9705, %v9759
      %9761 = vmax.xlane.f32.xlu0 %v9760
      %v9762 = vpop.xlane.xlu0 %9761
      %v9763 = vsel %vm2519, %v9708, -inf
      %v9764 = vmax.f32 %v9707, %v9763
      %9765 = vmax.xlane.f32.xlu0 %v9764
      %v9766 = vpop.xlane.xlu0 %9765
      %v9767 = vsel %vm2519, %v9710, -inf
      %v9768 = vmax.f32 %v9709, %v9767
      %9769 = vmax.xlane.f32.xlu0 %v9768
      %v9770 = vpop.xlane.xlu0 %9769
      %v9771 = vsel %vm2519, %v9712, -inf
      %v9772 = vmax.f32 %v9711, %v9771
      %9773 = vmax.xlane.f32.xlu0 %v9772
      %v9774 = vpop.xlane.xlu0 %9773
      %v9775 = vsel %vm2519, %v9714, -inf
      %v9776 = vmax.f32 %v9713, %v9775
      %9777 = vmax.xlane.f32.xlu0 %v9776
      %v9778 = vpop.xlane.xlu0 %9777
      %v9779 = vsel %vm2519, %v9716, -inf
      %v9780 = vmax.f32 %v9715, %v9779
      %9781 = vmax.xlane.f32.xlu0 %v9780
      %v9782 = vpop.xlane.xlu0 %9781
      %v9783 = vsel %vm2519, %v9718, -inf
      %v9784 = vmax.f32 %v9717, %v9783
      %9785 = vmax.xlane.f32.xlu0 %v9784
      %v9786 = vpop.xlane.xlu0 %9785
      %v9787 = vsel %vm2519, %v9720, -inf
      %v9788 = vmax.f32 %v9719, %v9787
      %9789 = vmax.xlane.f32.xlu0 %v9788
      %v9790 = vpop.xlane.xlu0 %9789
      %v9791 = vsel %vm2519, %v9722, -inf
      %v9792 = vmax.f32 %v9721, %v9791
      %9793 = vmax.xlane.f32.xlu0 %v9792
      %v9794 = vpop.xlane.xlu0 %9793
      %v9795 = vsel %vm2519, %v9724, -inf
      %v9796 = vmax.f32 %v9723, %v9795
      %9797 = vmax.xlane.f32.xlu0 %v9796
      %v9798 = vpop.xlane.xlu0 %9797
      %v9799 = vsel %vm2519, %v9726, -inf
      %v9800 = vmax.f32 %v9725, %v9799
      %9801 = vmax.xlane.f32.xlu0 %v9800
      %v9802 = vpop.xlane.xlu0 %9801
      %v9803 = vsel %vm2519, %v9728, -inf
      %v9804 = vmax.f32 %v9727, %v9803
      %9805 = vmax.xlane.f32.xlu0 %v9804
      %v9806 = vpop.xlane.xlu0 %9805
      %v9807 = vsel %vm2519, %v9730, -inf
      %v9808 = vmax.f32 %v9729, %v9807
      %9809 = vmax.xlane.f32.xlu0 %v9808
      %v9810 = vpop.xlane.xlu0 %9809
      %v9811 = vsel %vm2519, %v9732, -inf
      %v9812 = vmax.f32 %v9731, %v9811
      %9813 = vmax.xlane.f32.xlu0 %v9812
      %v9814 = vpop.xlane.xlu0 %9813
      %v9815 = vsel %vm2519, %v9734, -inf
      %v9816 = vmax.f32 %v9733, %v9815
      %9817 = vmax.xlane.f32.xlu0 %v9816
      %v9818 = vpop.xlane.xlu0 %9817
      %v9819 = vsel %vm2519, %v9736, -inf
      %v9820 = vmax.f32 %v9735, %v9819
      %9821 = vmax.xlane.f32.xlu0 %v9820
      %v9822 = vpop.xlane.xlu0 %9821
      %v9823 = vsel %vm2519, %v9738, -inf
      %v9824 = vmax.f32 %v9737, %v9823
      %9825 = vmax.xlane.f32.xlu0 %v9824
      %v9826 = vpop.xlane.xlu0 %9825
      %v9827 = vsel %vm2519, %v9740, -inf
      %v9828 = vmax.f32 %v9739, %v9827
      %9829 = vmax.xlane.f32.xlu0 %v9828
      %v9830 = vpop.xlane.xlu0 %9829
      %v9831 = vsel %vm2519, %v9742, -inf
      %v9832 = vmax.f32 %v9741, %v9831
      %9833 = vmax.xlane.f32.xlu0 %v9832
      %v9834 = vpop.xlane.xlu0 %9833
      %v9835 = vsel %vm2519, %v9744, -inf
      %v9836 = vmax.f32 %v9743, %v9835
      %9837 = vmax.xlane.f32.xlu0 %v9836
      %v9838 = vpop.xlane.xlu0 %9837
      %v9839 = vsel %vm2519, %v9746, -inf
      %v9840 = vmax.f32 %v9745, %v9839
      %9841 = vmax.xlane.f32.xlu0 %v9840
      %v9842 = vpop.xlane.xlu0 %9841
      %v9843 = vsel %vm2519, %v9748, -inf
      %v9844 = vmax.f32 %v9747, %v9843
      %9845 = vmax.xlane.f32.xlu0 %v9844
      %v9846 = vpop.xlane.xlu0 %9845
      %v9847 = vsel %vm2616, %v9749, -inf
      %v9848 = vsel %vm2618, %v9750, -inf
      %v9849 = vmax.f32 %v9847, %v9848
      %9850 = vmax.xlane.f32.xlu0 %v9849
      %v9851 = vpop.xlane.xlu0 %9850
      %vm9852 = vcmp.eq.f32.partialorder %v9701, %v9754
      %vm9853 = vcmp.eq.f32.partialorder %v9702, %v9754
      %vm9854 = vcmp.eq.f32.partialorder %v9703, %v9758
      %vm9855 = vcmp.eq.f32.partialorder %v9704, %v9758
      %vm9856 = vcmp.eq.f32.partialorder %v9705, %v9762
      %vm9857 = vcmp.eq.f32.partialorder %v9706, %v9762
      %vm9858 = vcmp.eq.f32.partialorder %v9707, %v9766
      %vm9859 = vcmp.eq.f32.partialorder %v9708, %v9766
      %vm9860 = vcmp.eq.f32.partialorder %v9709, %v9770
      %vm9861 = vcmp.eq.f32.partialorder %v9710, %v9770
      %vm9862 = vcmp.eq.f32.partialorder %v9711, %v9774
      %vm9863 = vcmp.eq.f32.partialorder %v9712, %v9774
      %vm9864 = vcmp.eq.f32.partialorder %v9713, %v9778
      %vm9865 = vcmp.eq.f32.partialorder %v9714, %v9778
      %vm9866 = vcmp.eq.f32.partialorder %v9715, %v9782
      %vm9867 = vcmp.eq.f32.partialorder %v9716, %v9782
      %vm9868 = vcmp.eq.f32.partialorder %v9717, %v9786
      %vm9869 = vcmp.eq.f32.partialorder %v9718, %v9786
      %vm9870 = vcmp.eq.f32.partialorder %v9719, %v9790
      %vm9871 = vcmp.eq.f32.partialorder %v9720, %v9790
      %vm9872 = vcmp.eq.f32.partialorder %v9721, %v9794
      %vm9873 = vcmp.eq.f32.partialorder %v9722, %v9794
      %vm9874 = vcmp.eq.f32.partialorder %v9723, %v9798
      %vm9875 = vcmp.eq.f32.partialorder %v9724, %v9798
      %vm9876 = vcmp.eq.f32.partialorder %v9725, %v9802
      %vm9877 = vcmp.eq.f32.partialorder %v9726, %v9802
      %vm9878 = vcmp.eq.f32.partialorder %v9727, %v9806
      %vm9879 = vcmp.eq.f32.partialorder %v9728, %v9806
      %vm9880 = vcmp.eq.f32.partialorder %v9729, %v9810
      %vm9881 = vcmp.eq.f32.partialorder %v9730, %v9810
      %vm9882 = vcmp.eq.f32.partialorder %v9731, %v9814
      %vm9883 = vcmp.eq.f32.partialorder %v9732, %v9814
      %vm9884 = vcmp.eq.f32.partialorder %v9733, %v9818
      %vm9885 = vcmp.eq.f32.partialorder %v9734, %v9818
      %vm9886 = vcmp.eq.f32.partialorder %v9735, %v9822
      %vm9887 = vcmp.eq.f32.partialorder %v9736, %v9822
      %vm9888 = vcmp.eq.f32.partialorder %v9737, %v9826
      %vm9889 = vcmp.eq.f32.partialorder %v9738, %v9826
      %vm9890 = vcmp.eq.f32.partialorder %v9739, %v9830
      %vm9891 = vcmp.eq.f32.partialorder %v9740, %v9830
      %vm9892 = vcmp.eq.f32.partialorder %v9741, %v9834
      %vm9893 = vcmp.eq.f32.partialorder %v9742, %v9834
      %vm9894 = vcmp.eq.f32.partialorder %v9743, %v9838
      %vm9895 = vcmp.eq.f32.partialorder %v9744, %v9838
      %vm9896 = vcmp.eq.f32.partialorder %v9745, %v9842
      %vm9897 = vcmp.eq.f32.partialorder %v9746, %v9842
      %vm9898 = vcmp.eq.f32.partialorder %v9747, %v9846
      %vm9899 = vcmp.eq.f32.partialorder %v9748, %v9846
      %vm9900 = vcmp.eq.f32.partialorder %v9749, %v9851
      %vm9901 = vcmp.eq.f32.partialorder %v9750, %v9851
      %v9902 = vsel %vm9852, %v1613, 196.0
      %v9903 = vsel %vm9853, %v1614, 196.0
      %v9904 = vsel %vm9854, %v1613, 196.0
      %v9905 = vsel %vm9855, %v1614, 196.0
      %v9906 = vsel %vm9856, %v1613, 196.0
      %v9907 = vsel %vm9857, %v1614, 196.0
      %v9908 = vsel %vm9858, %v1613, 196.0
      %v9909 = vsel %vm9859, %v1614, 196.0
      %v9910 = vsel %vm9860, %v1613, 196.0
      %v9911 = vsel %vm9861, %v1614, 196.0
      %v9912 = vsel %vm9862, %v1613, 196.0
      %v9913 = vsel %vm9863, %v1614, 196.0
      %v9914 = vsel %vm9864, %v1613, 196.0
      %v9915 = vsel %vm9865, %v1614, 196.0
      %v9916 = vsel %vm9866, %v1613, 196.0
      %v9917 = vsel %vm9867, %v1614, 196.0
      %v9918 = vsel %vm9868, %v1613, 196.0
      %v9919 = vsel %vm9869, %v1614, 196.0
      %v9920 = vsel %vm9870, %v1613, 196.0
      %v9921 = vsel %vm9871, %v1614, 196.0
      %v9922 = vsel %vm9872, %v1613, 196.0
      %v9923 = vsel %vm9873, %v1614, 196.0
      %v9924 = vsel %vm9874, %v1613, 196.0
      %v9925 = vsel %vm9875, %v1614, 196.0
      %v9926 = vsel %vm9876, %v1613, 196.0
      %v9927 = vsel %vm9877, %v1614, 196.0
      %v9928 = vsel %vm9878, %v1613, 196.0
      %v9929 = vsel %vm9879, %v1614, 196.0
      %v9930 = vsel %vm9880, %v1613, 196.0
      %v9931 = vsel %vm9881, %v1614, 196.0
      %v9932 = vsel %vm9882, %v1613, 196.0
      %v9933 = vsel %vm9883, %v1614, 196.0
      %v9934 = vsel %vm9884, %v1613, 196.0
      %v9935 = vsel %vm9885, %v1614, 196.0
      %v9936 = vsel %vm9886, %v1613, 196.0
      %v9937 = vsel %vm9887, %v1614, 196.0
      %v9938 = vsel %vm9888, %v1613, 196.0
      %v9939 = vsel %vm9889, %v1614, 196.0
      %v9940 = vsel %vm9890, %v1613, 196.0
      %v9941 = vsel %vm9891, %v1614, 196.0
      %v9942 = vsel %vm9892, %v1613, 196.0
      %v9943 = vsel %vm9893, %v1614, 196.0
      %v9944 = vsel %vm9894, %v1613, 196.0
      %v9945 = vsel %vm9895, %v1614, 196.0
      %v9946 = vsel %vm9896, %v1613, 196.0
      %v9947 = vsel %vm9897, %v1614, 196.0
      %v9948 = vsel %vm9898, %v1613, 196.0
      %v9949 = vsel %vm9899, %v1614, 196.0
      %v9950 = vsel %vm9900, %v1613, 196.0
      %v9951 = vsel %vm9901, %v1614, 196.0
      %v9952 = vsel %vm2519, %v9903, inf
      %v9953 = vmin.f32 %v9902, %v9952
      %9954 = vmin.xlane.f32.xlu0 %v9953
      %v9955 = vpop.xlane.xlu0 %9954
      %v9956 = vsel %vm2519, %v9905, inf
      %v9957 = vmin.f32 %v9904, %v9956
      %9958 = vmin.xlane.f32.xlu0 %v9957
      %v9959 = vpop.xlane.xlu0 %9958
      %v9960 = vsel %vm2519, %v9907, inf
      %v9961 = vmin.f32 %v9906, %v9960
      %9962 = vmin.xlane.f32.xlu0 %v9961
      %v9963 = vpop.xlane.xlu0 %9962
      %v9964 = vsel %vm2519, %v9909, inf
      %v9965 = vmin.f32 %v9908, %v9964
      %9966 = vmin.xlane.f32.xlu0 %v9965
      %v9967 = vpop.xlane.xlu0 %9966
      %v9968 = vsel %vm2519, %v9911, inf
      %v9969 = vmin.f32 %v9910, %v9968
      %9970 = vmin.xlane.f32.xlu0 %v9969
      %v9971 = vpop.xlane.xlu0 %9970
      %v9972 = vsel %vm2519, %v9913, inf
      %v9973 = vmin.f32 %v9912, %v9972
      %9974 = vmin.xlane.f32.xlu0 %v9973
      %v9975 = vpop.xlane.xlu0 %9974
      %v9976 = vsel %vm2519, %v9915, inf
      %v9977 = vmin.f32 %v9914, %v9976
      %9978 = vmin.xlane.f32.xlu0 %v9977
      %v9979 = vpop.xlane.xlu0 %9978
      %v9980 = vsel %vm2519, %v9917, inf
      %v9981 = vmin.f32 %v9916, %v9980
      %9982 = vmin.xlane.f32.xlu0 %v9981
      %v9983 = vpop.xlane.xlu0 %9982
      %v9984 = vsel %vm2519, %v9919, inf
      %v9985 = vmin.f32 %v9918, %v9984
      %9986 = vmin.xlane.f32.xlu0 %v9985
      %v9987 = vpop.xlane.xlu0 %9986
      %v9988 = vsel %vm2519, %v9921, inf
      %v9989 = vmin.f32 %v9920, %v9988
      %9990 = vmin.xlane.f32.xlu0 %v9989
      %v9991 = vpop.xlane.xlu0 %9990
      %v9992 = vsel %vm2519, %v9923, inf
      %v9993 = vmin.f32 %v9922, %v9992
      %9994 = vmin.xlane.f32.xlu0 %v9993
      %v9995 = vpop.xlane.xlu0 %9994
      %v9996 = vsel %vm2519, %v9925, inf
      %v9997 = vmin.f32 %v9924, %v9996
      %9998 = vmin.xlane.f32.xlu0 %v9997
      %v9999 = vpop.xlane.xlu0 %9998
      %v10000 = vsel %vm2519, %v9927, inf
      %v10001 = vmin.f32 %v9926, %v10000
      %10002 = vmin.xlane.f32.xlu0 %v10001
      %v10003 = vpop.xlane.xlu0 %10002
      %v10004 = vsel %vm2519, %v9929, inf
      %v10005 = vmin.f32 %v9928, %v10004
      %10006 = vmin.xlane.f32.xlu0 %v10005
      %v10007 = vpop.xlane.xlu0 %10006
      %v10008 = vsel %vm2519, %v9931, inf
      %v10009 = vmin.f32 %v9930, %v10008
      %10010 = vmin.xlane.f32.xlu0 %v10009
      %v10011 = vpop.xlane.xlu0 %10010
      %v10012 = vsel %vm2519, %v9933, inf
      %v10013 = vmin.f32 %v9932, %v10012
      %10014 = vmin.xlane.f32.xlu0 %v10013
      %v10015 = vpop.xlane.xlu0 %10014
      %v10016 = vsel %vm2519, %v9935, inf
      %v10017 = vmin.f32 %v9934, %v10016
      %10018 = vmin.xlane.f32.xlu0 %v10017
      %v10019 = vpop.xlane.xlu0 %10018
      %v10020 = vsel %vm2519, %v9937, inf
      %v10021 = vmin.f32 %v9936, %v10020
      %10022 = vmin.xlane.f32.xlu0 %v10021
      %v10023 = vpop.xlane.xlu0 %10022
      %v10024 = vsel %vm2519, %v9939, inf
      %v10025 = vmin.f32 %v9938, %v10024
      %10026 = vmin.xlane.f32.xlu0 %v10025
      %v10027 = vpop.xlane.xlu0 %10026
      %v10028 = vsel %vm2519, %v9941, inf
      %v10029 = vmin.f32 %v9940, %v10028
      %10030 = vmin.xlane.f32.xlu0 %v10029
      %v10031 = vpop.xlane.xlu0 %10030
      %v10032 = vsel %vm2519, %v9943, inf
      %v10033 = vmin.f32 %v9942, %v10032
      %10034 = vmin.xlane.f32.xlu0 %v10033
      %v10035 = vpop.xlane.xlu0 %10034
      %v10036 = vsel %vm2519, %v9945, inf
      %v10037 = vmin.f32 %v9944, %v10036
      %10038 = vmin.xlane.f32.xlu0 %v10037
      %v10039 = vpop.xlane.xlu0 %10038
      %v10040 = vsel %vm2519, %v9947, inf
      %v10041 = vmin.f32 %v9946, %v10040
      %10042 = vmin.xlane.f32.xlu0 %v10041
      %v10043 = vpop.xlane.xlu0 %10042
      %v10044 = vsel %vm2519, %v9949, inf
      %v10045 = vmin.f32 %v9948, %v10044
      %10046 = vmin.xlane.f32.xlu0 %v10045
      %v10047 = vpop.xlane.xlu0 %10046
      %v10048 = vsel %vm2616, %v9950, inf
      %v10049 = vsel %vm2618, %v9951, inf
      %v10050 = vmin.f32 %v10048, %v10049
      %10051 = vmin.xlane.f32.xlu0 %v10050
      %v10052 = vpop.xlane.xlu0 %10051
      %vm10053 = vcmp.eq.f32.partialorder %v1613, %v9955
      %vm10054 = vcmp.eq.f32.partialorder %v1614, %v9955
      %vm10055 = vcmp.eq.f32.partialorder %v1613, %v9959
      %vm10056 = vcmp.eq.f32.partialorder %v1614, %v9959
      %vm10057 = vcmp.eq.f32.partialorder %v1613, %v9963
      %vm10058 = vcmp.eq.f32.partialorder %v1614, %v9963
      %vm10059 = vcmp.eq.f32.partialorder %v1613, %v9967
      %vm10060 = vcmp.eq.f32.partialorder %v1614, %v9967
      %vm10061 = vcmp.eq.f32.partialorder %v1613, %v9971
      %vm10062 = vcmp.eq.f32.partialorder %v1614, %v9971
      %vm10063 = vcmp.eq.f32.partialorder %v1613, %v9975
      %vm10064 = vcmp.eq.f32.partialorder %v1614, %v9975
      %vm10065 = vcmp.eq.f32.partialorder %v1613, %v9979
      %vm10066 = vcmp.eq.f32.partialorder %v1614, %v9979
      %vm10067 = vcmp.eq.f32.partialorder %v1613, %v9983
      %vm10068 = vcmp.eq.f32.partialorder %v1614, %v9983
      %vm10069 = vcmp.eq.f32.partialorder %v1613, %v9987
      %vm10070 = vcmp.eq.f32.partialorder %v1614, %v9987
      %vm10071 = vcmp.eq.f32.partialorder %v1613, %v9991
      %vm10072 = vcmp.eq.f32.partialorder %v1614, %v9991
      %vm10073 = vcmp.eq.f32.partialorder %v1613, %v9995
      %vm10074 = vcmp.eq.f32.partialorder %v1614, %v9995
      %vm10075 = vcmp.eq.f32.partialorder %v1613, %v9999
      %vm10076 = vcmp.eq.f32.partialorder %v1614, %v9999
      %vm10077 = vcmp.eq.f32.partialorder %v1613, %v10003
      %vm10078 = vcmp.eq.f32.partialorder %v1614, %v10003
      %vm10079 = vcmp.eq.f32.partialorder %v1613, %v10007
      %vm10080 = vcmp.eq.f32.partialorder %v1614, %v10007
      %vm10081 = vcmp.eq.f32.partialorder %v1613, %v10011
      %vm10082 = vcmp.eq.f32.partialorder %v1614, %v10011
      %vm10083 = vcmp.eq.f32.partialorder %v1613, %v10015
      %vm10084 = vcmp.eq.f32.partialorder %v1614, %v10015
      %vm10085 = vcmp.eq.f32.partialorder %v1613, %v10019
      %vm10086 = vcmp.eq.f32.partialorder %v1614, %v10019
      %vm10087 = vcmp.eq.f32.partialorder %v1613, %v10023
      %vm10088 = vcmp.eq.f32.partialorder %v1614, %v10023
      %vm10089 = vcmp.eq.f32.partialorder %v1613, %v10027
      %vm10090 = vcmp.eq.f32.partialorder %v1614, %v10027
      %vm10091 = vcmp.eq.f32.partialorder %v1613, %v10031
      %vm10092 = vcmp.eq.f32.partialorder %v1614, %v10031
      %vm10093 = vcmp.eq.f32.partialorder %v1613, %v10035
      %vm10094 = vcmp.eq.f32.partialorder %v1614, %v10035
      %vm10095 = vcmp.eq.f32.partialorder %v1613, %v10039
      %vm10096 = vcmp.eq.f32.partialorder %v1614, %v10039
      %vm10097 = vcmp.eq.f32.partialorder %v1613, %v10043
      %vm10098 = vcmp.eq.f32.partialorder %v1614, %v10043
      %vm10099 = vcmp.eq.f32.partialorder %v1613, %v10047
      %vm10100 = vcmp.eq.f32.partialorder %v1614, %v10047
      %vm10101 = vcmp.eq.f32.partialorder %v1613, %v10052
      %vm10102 = vcmp.eq.f32.partialorder %v1614, %v10052
      %v10103 = vsel %vm10053, 1, 0
      %v10104 = vsel %vm10054, 1, 0
      %v10105 = vsel %vm10055, 1, 0
      %v10106 = vsel %vm10056, 1, 0
      %v10107 = vsel %vm10057, 1, 0
      %v10108 = vsel %vm10058, 1, 0
      %v10109 = vsel %vm10059, 1, 0
      %v10110 = vsel %vm10060, 1, 0
      %v10111 = vsel %vm10061, 1, 0
      %v10112 = vsel %vm10062, 1, 0
      %v10113 = vsel %vm10063, 1, 0
      %v10114 = vsel %vm10064, 1, 0
      %v10115 = vsel %vm10065, 1, 0
      %v10116 = vsel %vm10066, 1, 0
      %v10117 = vsel %vm10067, 1, 0
      %v10118 = vsel %vm10068, 1, 0
      %v10119 = vsel %vm10069, 1, 0
      %v10120 = vsel %vm10070, 1, 0
      %v10121 = vsel %vm10071, 1, 0
      %v10122 = vsel %vm10072, 1, 0
      %v10123 = vsel %vm10073, 1, 0
      %v10124 = vsel %vm10074, 1, 0
      %v10125 = vsel %vm10075, 1, 0
      %v10126 = vsel %vm10076, 1, 0
      %v10127 = vsel %vm10077, 1, 0
      %v10128 = vsel %vm10078, 1, 0
      %v10129 = vsel %vm10079, 1, 0
      %v10130 = vsel %vm10080, 1, 0
      %v10131 = vsel %vm10081, 1, 0
      %v10132 = vsel %vm10082, 1, 0
      %v10133 = vsel %vm10083, 1, 0
      %v10134 = vsel %vm10084, 1, 0
      %v10135 = vsel %vm10085, 1, 0
      %v10136 = vsel %vm10086, 1, 0
      %v10137 = vsel %vm10087, 1, 0
      %v10138 = vsel %vm10088, 1, 0
      %v10139 = vsel %vm10089, 1, 0
      %v10140 = vsel %vm10090, 1, 0
      %v10141 = vsel %vm10091, 1, 0
      %v10142 = vsel %vm10092, 1, 0
      %v10143 = vsel %vm10093, 1, 0
      %v10144 = vsel %vm10094, 1, 0
      %v10145 = vsel %vm10095, 1, 0
      %v10146 = vsel %vm10096, 1, 0
      %v10147 = vsel %vm10097, 1, 0
      %v10148 = vsel %vm10098, 1, 0
      %v10149 = vsel %vm10099, 1, 0
      %v10150 = vsel %vm10100, 1, 0
      %v10151 = vsel %vm10101, 1, 0
      %v10152 = vsel %vm10102, 1, 0
      %v10153 = vcvt.s32.f32 %v10103
      %v10154 = vcvt.s32.f32 %v10104
      %v10155 = vcvt.s32.f32 %v10105
      %v10156 = vcvt.s32.f32 %v10106
      %v10157 = vcvt.s32.f32 %v10107
      %v10158 = vcvt.s32.f32 %v10108
      %v10159 = vcvt.s32.f32 %v10109
      %v10160 = vcvt.s32.f32 %v10110
      %v10161 = vcvt.s32.f32 %v10111
      %v10162 = vcvt.s32.f32 %v10112
      %v10163 = vcvt.s32.f32 %v10113
      %v10164 = vcvt.s32.f32 %v10114
      %v10165 = vcvt.s32.f32 %v10115
      %v10166 = vcvt.s32.f32 %v10116
      %v10167 = vcvt.s32.f32 %v10117
      %v10168 = vcvt.s32.f32 %v10118
      %v10169 = vcvt.s32.f32 %v10119
      %v10170 = vcvt.s32.f32 %v10120
      %v10171 = vcvt.s32.f32 %v10121
      %v10172 = vcvt.s32.f32 %v10122
      %v10173 = vcvt.s32.f32 %v10123
      %v10174 = vcvt.s32.f32 %v10124
      %v10175 = vcvt.s32.f32 %v10125
      %v10176 = vcvt.s32.f32 %v10126
      %v10177 = vcvt.s32.f32 %v10127
      %v10178 = vcvt.s32.f32 %v10128
      %v10179 = vcvt.s32.f32 %v10129
      %v10180 = vcvt.s32.f32 %v10130
      %v10181 = vcvt.s32.f32 %v10131
      %v10182 = vcvt.s32.f32 %v10132
      %v10183 = vcvt.s32.f32 %v10133
      %v10184 = vcvt.s32.f32 %v10134
      %v10185 = vcvt.s32.f32 %v10135
      %v10186 = vcvt.s32.f32 %v10136
      %v10187 = vcvt.s32.f32 %v10137
      %v10188 = vcvt.s32.f32 %v10138
      %v10189 = vcvt.s32.f32 %v10139
      %v10190 = vcvt.s32.f32 %v10140
      %v10191 = vcvt.s32.f32 %v10141
      %v10192 = vcvt.s32.f32 %v10142
      %v10193 = vcvt.s32.f32 %v10143
      %v10194 = vcvt.s32.f32 %v10144
      %v10195 = vcvt.s32.f32 %v10145
      %v10196 = vcvt.s32.f32 %v10146
      %v10197 = vcvt.s32.f32 %v10147
      %v10198 = vcvt.s32.f32 %v10148
      %v10199 = vcvt.s32.f32 %v10149
      %v10200 = vcvt.s32.f32 %v10150
      %v10201 = vcvt.s32.f32 %v10151
      %v10202 = vcvt.s32.f32 %v10152
      %v10203 = vpack.c.bf16 %v10155, %v10153
      %v10204 = vpack.c.bf16 %v10156, %v10154
      %v10205 = vpack.c.bf16 %v10159, %v10157
      %v10206 = vpack.c.bf16 %v10160, %v10158
      %v10207 = vpack.c.bf16 %v10163, %v10161
      %v10208 = vpack.c.bf16 %v10164, %v10162
      %v10209 = vpack.c.bf16 %v10167, %v10165
      %v10210 = vpack.c.bf16 %v10168, %v10166
      %v10211 = vpack.c.bf16 %v10171, %v10169
      %v10212 = vpack.c.bf16 %v10172, %v10170
      %v10213 = vpack.c.bf16 %v10175, %v10173
      %v10214 = vpack.c.bf16 %v10176, %v10174
      %v10215 = vpack.c.bf16 %v10179, %v10177
      %v10216 = vpack.c.bf16 %v10180, %v10178
      %v10217 = vpack.c.bf16 %v10183, %v10181
      %v10218 = vpack.c.bf16 %v10184, %v10182
      %v10219 = vpack.c.bf16 %v10187, %v10185
      %v10220 = vpack.c.bf16 %v10188, %v10186
      %v10221 = vpack.c.bf16 %v10191, %v10189
      %v10222 = vpack.c.bf16 %v10192, %v10190
      %v10223 = vpack.c.bf16 %v10195, %v10193
      %v10224 = vpack.c.bf16 %v10196, %v10194
      %v10225 = vpack.c.bf16 %v10199, %v10197
      %v10226 = vpack.c.bf16 %v10200, %v10198
      %v10227 = vpack.c.bf16 %v10201, %v10201
      %v10228 = vpack.c.bf16 %v10202, %v10202
      %v10230 = vsel %vm2519, %v10204, 0
      %v10233 = vsel %vm2519, %v10206, 0
      %v10236 = vsel %vm2519, %v10208, 0
      %v10239 = vsel %vm2519, %v10210, 0
      %v10242 = vsel %vm2519, %v10212, 0
      %v10245 = vsel %vm2519, %v10214, 0
      %v10248 = vsel %vm2519, %v10216, 0
      %v10251 = vsel %vm2519, %v10218, 0
      %v10254 = vsel %vm2519, %v10220, 0
      %v10257 = vsel %vm2519, %v10222, 0
      %v10260 = vsel %vm2519, %v10224, 0
      %v10263 = vsel %vm2519, %v10226, 0
      %v10266 = vsel %vm2519, %v10228, 0
      %10268 = vmatpush.bf16.msra.mxu0 %v2507
      %10269 = vmatpush.bf16.msra.mxu0 %v2505
      %10270 = vmatpush.bf16.msra.mxu0 %v2503
      %10271 = vmatpush.bf16.msra.mxu0 %v2501
      %10272 = vmatpush.bf16.msra.mxu0 %v2499
      %10273 = vmatpush.bf16.msra.mxu0 %v2497
      %10274 = vmatpush.bf16.msra.mxu0 %v2495
      %10275 = vmatpush.bf16.msra.mxu0 %v2493
      %10276 = vmatmul.bf16.gmra.mxu0 %v10203
      %v10277 = vpop.f32.mrf.mxu0
      %v10278 = vadd.f32 0.0, %v10277
      %v10279 = vpop.f32.mrf.mxu0
      %v10280 = vadd.f32 0.0, %v10279
      %10281 = vmatmul.bf16.gmra.mxu0 %v10205
      %v10282 = vpop.f32.mrf.mxu0
      %v10283 = vadd.f32 0.0, %v10282
      %v10284 = vpop.f32.mrf.mxu0
      %v10285 = vadd.f32 0.0, %v10284
      %10286 = vmatmul.bf16.gmra.mxu0 %v10207
      %v10287 = vpop.f32.mrf.mxu0
      %v10288 = vadd.f32 0.0, %v10287
      %v10289 = vpop.f32.mrf.mxu0
      %v10290 = vadd.f32 0.0, %v10289
      %10291 = vmatmul.bf16.gmra.mxu0 %v10209
      %v10292 = vpop.f32.mrf.mxu0
      %v10293 = vadd.f32 0.0, %v10292
      %v10294 = vpop.f32.mrf.mxu0
      %v10295 = vadd.f32 0.0, %v10294
      %10296 = vmatmul.bf16.gmra.mxu0 %v10211
      %v10297 = vpop.f32.mrf.mxu0
      %v10298 = vadd.f32 0.0, %v10297
      %v10299 = vpop.f32.mrf.mxu0
      %v10300 = vadd.f32 0.0, %v10299
      %10301 = vmatmul.bf16.gmra.mxu0 %v10213
      %v10302 = vpop.f32.mrf.mxu0
      %v10303 = vadd.f32 0.0, %v10302
      %v10304 = vpop.f32.mrf.mxu0
      %v10305 = vadd.f32 0.0, %v10304
      %10306 = vmatmul.bf16.gmra.mxu0 %v10215
      %v10307 = vpop.f32.mrf.mxu0
      %v10308 = vadd.f32 0.0, %v10307
      %v10309 = vpop.f32.mrf.mxu0
      %v10310 = vadd.f32 0.0, %v10309
      %10311 = vmatmul.bf16.gmra.mxu0 %v10217
      %v10312 = vpop.f32.mrf.mxu0
      %v10313 = vadd.f32 0.0, %v10312
      %v10314 = vpop.f32.mrf.mxu0
      %v10315 = vadd.f32 0.0, %v10314
      %10316 = vmatmul.bf16.gmra.mxu0 %v10219
      %v10317 = vpop.f32.mrf.mxu0
      %v10318 = vadd.f32 0.0, %v10317
      %v10319 = vpop.f32.mrf.mxu0
      %v10320 = vadd.f32 0.0, %v10319
      %10321 = vmatmul.bf16.gmra.mxu0 %v10221
      %v10322 = vpop.f32.mrf.mxu0
      %v10323 = vadd.f32 0.0, %v10322
      %v10324 = vpop.f32.mrf.mxu0
      %v10325 = vadd.f32 0.0, %v10324
      %10326 = vmatmul.bf16.gmra.mxu0 %v10223
      %v10327 = vpop.f32.mrf.mxu0
      %v10328 = vadd.f32 0.0, %v10327
      %v10329 = vpop.f32.mrf.mxu0
      %v10330 = vadd.f32 0.0, %v10329
      %10331 = vmatmul.bf16.gmra.mxu0 %v10225
      %v10332 = vpop.f32.mrf.mxu0
      %v10333 = vadd.f32 0.0, %v10332
      %v10334 = vpop.f32.mrf.mxu0
      %v10335 = vadd.f32 0.0, %v10334
      %10336 = vmatmul.bf16.gmra.mxu0 %v10227
      %v10337 = vpop.f32.mrf.mxu0
      %v10338 = vadd.f32 0.0, %v10337
      %v10339 = vpop.f32.mrf.mxu0
      %10340 = vdwg.mxu0
      %10341 = vmatpush.bf16.msra.mxu0 0
      %10342 = vmatpush.bf16.msra.mxu0 0
      %10343 = vmatpush.bf16.msra.mxu0 0
      %10344 = vmatpush.bf16.msra.mxu0 %v3041
      %10345 = vmatpush.bf16.msra.mxu0 %v2515
      %10346 = vmatpush.bf16.msra.mxu0 %v2513
      %10347 = vmatpush.bf16.msra.mxu0 %v2511
      %10348 = vmatpush.bf16.msra.mxu0 %v2509
      %10349 = vmatmul.bf16.gmra.mxu0 %v10230
      %v10350 = vpop.f32.mrf.mxu0
      %v10351 = vadd.f32 %v10278, %v10350
      %v10352 = vpop.f32.mrf.mxu0
      %v10353 = vadd.f32 %v10280, %v10352
      %10354 = vmatmul.bf16.gmra.mxu0 %v10233
      %v10355 = vpop.f32.mrf.mxu0
      %v10356 = vadd.f32 %v10283, %v10355
      %v10357 = vpop.f32.mrf.mxu0
      %v10358 = vadd.f32 %v10285, %v10357
      %10359 = vmatmul.bf16.gmra.mxu0 %v10236
      %v10360 = vpop.f32.mrf.mxu0
      %v10361 = vadd.f32 %v10288, %v10360
      %v10362 = vpop.f32.mrf.mxu0
      %v10363 = vadd.f32 %v10290, %v10362
      %10364 = vmatmul.bf16.gmra.mxu0 %v10239
      %v10365 = vpop.f32.mrf.mxu0
      %v10366 = vadd.f32 %v10293, %v10365
      %v10367 = vpop.f32.mrf.mxu0
      %v10368 = vadd.f32 %v10295, %v10367
      %10369 = vmatmul.bf16.gmra.mxu0 %v10242
      %v10370 = vpop.f32.mrf.mxu0
      %v10371 = vadd.f32 %v10298, %v10370
      %v10372 = vpop.f32.mrf.mxu0
      %v10373 = vadd.f32 %v10300, %v10372
      %10374 = vmatmul.bf16.gmra.mxu0 %v10245
      %v10375 = vpop.f32.mrf.mxu0
      %v10376 = vadd.f32 %v10303, %v10375
      %v10377 = vpop.f32.mrf.mxu0
      %v10378 = vadd.f32 %v10305, %v10377
      %10379 = vmatmul.bf16.gmra.mxu0 %v10248
      %v10380 = vpop.f32.mrf.mxu0
      %v10381 = vadd.f32 %v10308, %v10380
      %v10382 = vpop.f32.mrf.mxu0
      %v10383 = vadd.f32 %v10310, %v10382
      %10384 = vmatmul.bf16.gmra.mxu0 %v10251
      %v10385 = vpop.f32.mrf.mxu0
      %v10386 = vadd.f32 %v10313, %v10385
      %v10387 = vpop.f32.mrf.mxu0
      %v10388 = vadd.f32 %v10315, %v10387
      %10389 = vmatmul.bf16.gmra.mxu0 %v10254
      %v10390 = vpop.f32.mrf.mxu0
      %v10391 = vadd.f32 %v10318, %v10390
      %v10392 = vpop.f32.mrf.mxu0
      %v10393 = vadd.f32 %v10320, %v10392
      %10394 = vmatmul.bf16.gmra.mxu0 %v10257
      %v10395 = vpop.f32.mrf.mxu0
      %v10396 = vadd.f32 %v10323, %v10395
      %v10397 = vpop.f32.mrf.mxu0
      %v10398 = vadd.f32 %v10325, %v10397
      %10399 = vmatmul.bf16.gmra.mxu0 %v10260
      %v10400 = vpop.f32.mrf.mxu0
      %v10401 = vadd.f32 %v10328, %v10400
      %v10402 = vpop.f32.mrf.mxu0
      %v10403 = vadd.f32 %v10330, %v10402
      %10404 = vmatmul.bf16.gmra.mxu0 %v10263
      %v10405 = vpop.f32.mrf.mxu0
      %v10406 = vadd.f32 %v10333, %v10405
      %v10407 = vpop.f32.mrf.mxu0
      %v10408 = vadd.f32 %v10335, %v10407
      %10409 = vmatmul.bf16.gmra.mxu0 %v10266
      %v10410 = vpop.f32.mrf.mxu0
      %v10411 = vadd.f32 %v10338, %v10410
      %v10412 = vpop.f32.mrf.mxu0
      %10413 = vdwg.mxu0
      %10414 = vmatpush.bf16.msra.mxu0 %v2508
      %10415 = vmatpush.bf16.msra.mxu0 %v2506
      %10416 = vmatpush.bf16.msra.mxu0 %v2504
      %10417 = vmatpush.bf16.msra.mxu0 %v2502
      %10418 = vmatpush.bf16.msra.mxu0 %v2500
      %10419 = vmatpush.bf16.msra.mxu0 %v2498
      %10420 = vmatpush.bf16.msra.mxu0 %v2496
      %10421 = vmatpush.bf16.msra.mxu0 %v2494
      %10422 = vmatmul.bf16.gmra.mxu0 %v10203
      %v10423 = vpop.f32.mrf.mxu0
      %v10424 = vadd.f32 0.0, %v10423
      %v10425 = vpop.f32.mrf.mxu0
      %v10426 = vadd.f32 0.0, %v10425
      %10427 = vmatmul.bf16.gmra.mxu0 %v10205
      %v10428 = vpop.f32.mrf.mxu0
      %v10429 = vadd.f32 0.0, %v10428
      %v10430 = vpop.f32.mrf.mxu0
      %v10431 = vadd.f32 0.0, %v10430
      %10432 = vmatmul.bf16.gmra.mxu0 %v10207
      %v10433 = vpop.f32.mrf.mxu0
      %v10434 = vadd.f32 0.0, %v10433
      %v10435 = vpop.f32.mrf.mxu0
      %v10436 = vadd.f32 0.0, %v10435
      %10437 = vmatmul.bf16.gmra.mxu0 %v10209
      %v10438 = vpop.f32.mrf.mxu0
      %v10439 = vadd.f32 0.0, %v10438
      %v10440 = vpop.f32.mrf.mxu0
      %v10441 = vadd.f32 0.0, %v10440
      %10442 = vmatmul.bf16.gmra.mxu0 %v10211
      %v10443 = vpop.f32.mrf.mxu0
      %v10444 = vadd.f32 0.0, %v10443
      %v10445 = vpop.f32.mrf.mxu0
      %v10446 = vadd.f32 0.0, %v10445
      %10447 = vmatmul.bf16.gmra.mxu0 %v10213
      %v10448 = vpop.f32.mrf.mxu0
      %v10449 = vadd.f32 0.0, %v10448
      %v10450 = vpop.f32.mrf.mxu0
      %v10451 = vadd.f32 0.0, %v10450
      %10452 = vmatmul.bf16.gmra.mxu0 %v10215
      %v10453 = vpop.f32.mrf.mxu0
      %v10454 = vadd.f32 0.0, %v10453
      %v10455 = vpop.f32.mrf.mxu0
      %v10456 = vadd.f32 0.0, %v10455
      %10457 = vmatmul.bf16.gmra.mxu0 %v10217
      %v10458 = vpop.f32.mrf.mxu0
      %v10459 = vadd.f32 0.0, %v10458
      %v10460 = vpop.f32.mrf.mxu0
      %v10461 = vadd.f32 0.0, %v10460
      %10462 = vmatmul.bf16.gmra.mxu0 %v10219
      %v10463 = vpop.f32.mrf.mxu0
      %v10464 = vadd.f32 0.0, %v10463
      %v10465 = vpop.f32.mrf.mxu0
      %v10466 = vadd.f32 0.0, %v10465
      %10467 = vmatmul.bf16.gmra.mxu0 %v10221
      %v10468 = vpop.f32.mrf.mxu0
      %v10469 = vadd.f32 0.0, %v10468
      %v10470 = vpop.f32.mrf.mxu0
      %v10471 = vadd.f32 0.0, %v10470
      %10472 = vmatmul.bf16.gmra.mxu0 %v10223
      %v10473 = vpop.f32.mrf.mxu0
      %v10474 = vadd.f32 0.0, %v10473
      %v10475 = vpop.f32.mrf.mxu0
      %v10476 = vadd.f32 0.0, %v10475
      %10477 = vmatmul.bf16.gmra.mxu0 %v10225
      %v10478 = vpop.f32.mrf.mxu0
      %v10479 = vadd.f32 0.0, %v10478
      %v10480 = vpop.f32.mrf.mxu0
      %v10481 = vadd.f32 0.0, %v10480
      %10482 = vmatmul.bf16.gmra.mxu0 %v10227
      %v10483 = vpop.f32.mrf.mxu0
      %v10484 = vadd.f32 0.0, %v10483
      %v10485 = vpop.f32.mrf.mxu0
      %10486 = vdwg.mxu0
      %10487 = vmatpush.bf16.msra.mxu0 0
      %10488 = vmatpush.bf16.msra.mxu0 0
      %10489 = vmatpush.bf16.msra.mxu0 0
      %10490 = vmatpush.bf16.msra.mxu0 %v3044
      %10491 = vmatpush.bf16.msra.mxu0 %v2516
      %10492 = vmatpush.bf16.msra.mxu0 %v2514
      %10493 = vmatpush.bf16.msra.mxu0 %v2512
      %10494 = vmatpush.bf16.msra.mxu0 %v2510
      %10495 = vmatmul.bf16.gmra.mxu0 %v10230
      %v10496 = vpop.f32.mrf.mxu0
      %v10497 = vadd.f32 %v10424, %v10496
      %v10498 = vpop.f32.mrf.mxu0
      %v10499 = vadd.f32 %v10426, %v10498
      %10500 = vmatmul.bf16.gmra.mxu0 %v10233
      %v10501 = vpop.f32.mrf.mxu0
      %v10502 = vadd.f32 %v10429, %v10501
      %v10503 = vpop.f32.mrf.mxu0
      %v10504 = vadd.f32 %v10431, %v10503
      %10505 = vmatmul.bf16.gmra.mxu0 %v10236
      %v10506 = vpop.f32.mrf.mxu0
      %v10507 = vadd.f32 %v10434, %v10506
      %v10508 = vpop.f32.mrf.mxu0
      %v10509 = vadd.f32 %v10436, %v10508
      %10510 = vmatmul.bf16.gmra.mxu0 %v10239
      %v10511 = vpop.f32.mrf.mxu0
      %v10512 = vadd.f32 %v10439, %v10511
      %v10513 = vpop.f32.mrf.mxu0
      %v10514 = vadd.f32 %v10441, %v10513
      %10515 = vmatmul.bf16.gmra.mxu0 %v10242
      %v10516 = vpop.f32.mrf.mxu0
      %v10517 = vadd.f32 %v10444, %v10516
      %v10518 = vpop.f32.mrf.mxu0
      %v10519 = vadd.f32 %v10446, %v10518
      %10520 = vmatmul.bf16.gmra.mxu0 %v10245
      %v10521 = vpop.f32.mrf.mxu0
      %v10522 = vadd.f32 %v10449, %v10521
      %v10523 = vpop.f32.mrf.mxu0
      %v10524 = vadd.f32 %v10451, %v10523
      %10525 = vmatmul.bf16.gmra.mxu0 %v10248
      %v10526 = vpop.f32.mrf.mxu0
      %v10527 = vadd.f32 %v10454, %v10526
      %v10528 = vpop.f32.mrf.mxu0
      %v10529 = vadd.f32 %v10456, %v10528
      %10530 = vmatmul.bf16.gmra.mxu0 %v10251
      %v10531 = vpop.f32.mrf.mxu0
      %v10532 = vadd.f32 %v10459, %v10531
      %v10533 = vpop.f32.mrf.mxu0
      %v10534 = vadd.f32 %v10461, %v10533
      %10535 = vmatmul.bf16.gmra.mxu0 %v10254
      %v10536 = vpop.f32.mrf.mxu0
      %v10537 = vadd.f32 %v10464, %v10536
      %v10538 = vpop.f32.mrf.mxu0
      %v10539 = vadd.f32 %v10466, %v10538
      %10540 = vmatmul.bf16.gmra.mxu0 %v10257
      %v10541 = vpop.f32.mrf.mxu0
      %v10542 = vadd.f32 %v10469, %v10541
      %v10543 = vpop.f32.mrf.mxu0
      %v10544 = vadd.f32 %v10471, %v10543
      %10545 = vmatmul.bf16.gmra.mxu0 %v10260
      %v10546 = vpop.f32.mrf.mxu0
      %v10547 = vadd.f32 %v10474, %v10546
      %v10548 = vpop.f32.mrf.mxu0
      %v10549 = vadd.f32 %v10476, %v10548
      %10550 = vmatmul.bf16.gmra.mxu0 %v10263
      %v10551 = vpop.f32.mrf.mxu0
      %v10552 = vadd.f32 %v10479, %v10551
      %v10553 = vpop.f32.mrf.mxu0
      %v10554 = vadd.f32 %v10481, %v10553
      %10555 = vmatmul.bf16.gmra.mxu0 %v10266
      %v10556 = vpop.f32.mrf.mxu0
      %v10557 = vadd.f32 %v10484, %v10556
      %v10558 = vpop.f32.mrf.mxu0
      %10559 = vdwg.mxu0
      %v10560 = vmax.f32 %v9651, %v10351
      %v10561 = vmax.f32 %v9652, %v10497
      %v10562 = vmax.f32 %v9653, %v10353
      %v10563 = vmax.f32 %v9654, %v10499
      %v10564 = vmax.f32 %v9655, %v10356
      %v10565 = vmax.f32 %v9656, %v10502
      %v10566 = vmax.f32 %v9657, %v10358
      %v10567 = vmax.f32 %v9658, %v10504
      %v10568 = vmax.f32 %v9659, %v10361
      %v10569 = vmax.f32 %v9660, %v10507
      %v10570 = vmax.f32 %v9661, %v10363
      %v10571 = vmax.f32 %v9662, %v10509
      %v10572 = vmax.f32 %v9663, %v10366
      %v10573 = vmax.f32 %v9664, %v10512
      %v10574 = vmax.f32 %v9665, %v10368
      %v10575 = vmax.f32 %v9666, %v10514
      %v10576 = vmax.f32 %v9667, %v10371
      %v10577 = vmax.f32 %v9668, %v10517
      %v10578 = vmax.f32 %v9669, %v10373
      %v10579 = vmax.f32 %v9670, %v10519
      %v10580 = vmax.f32 %v9671, %v10376
      %v10581 = vmax.f32 %v9672, %v10522
      %v10582 = vmax.f32 %v9673, %v10378
      %v10583 = vmax.f32 %v9674, %v10524
      %v10584 = vmax.f32 %v9675, %v10381
      %v10585 = vmax.f32 %v9676, %v10527
      %v10586 = vmax.f32 %v9677, %v10383
      %v10587 = vmax.f32 %v9678, %v10529
      %v10588 = vmax.f32 %v9679, %v10386
      %v10589 = vmax.f32 %v9680, %v10532
      %v10590 = vmax.f32 %v9681, %v10388
      %v10591 = vmax.f32 %v9682, %v10534
      %v10592 = vmax.f32 %v9683, %v10391
      %v10593 = vmax.f32 %v9684, %v10537
      %v10594 = vmax.f32 %v9685, %v10393
      %v10595 = vmax.f32 %v9686, %v10539
      %v10596 = vmax.f32 %v9687, %v10396
      %v10597 = vmax.f32 %v9688, %v10542
      %v10598 = vmax.f32 %v9689, %v10398
      %v10599 = vmax.f32 %v9690, %v10544
      %v10600 = vmax.f32 %v9691, %v10401
      %v10601 = vmax.f32 %v9692, %v10547
      %v10602 = vmax.f32 %v9693, %v10403
      %v10603 = vmax.f32 %v9694, %v10549
      %v10604 = vmax.f32 %v9695, %v10406
      %v10605 = vmax.f32 %v9696, %v10552
      %v10606 = vmax.f32 %v9697, %v10408
      %v10607 = vmax.f32 %v9698, %v10554
      %v10608 = vmax.f32 %v9699, %v10411
      %v10609 = vmax.f32 %v9700, %v10557
      %v10610 = vadd.f32 %v1848, %v10560
      %v10611 = vadd.f32 %v1994, %v10561
      %v10612 = vadd.f32 %v1850, %v10562
      %v10613 = vadd.f32 %v1996, %v10563
      %v10614 = vadd.f32 %v1853, %v10564
      %v10615 = vadd.f32 %v1999, %v10565
      %v10616 = vadd.f32 %v1855, %v10566
      %v10617 = vadd.f32 %v2001, %v10567
      %v10618 = vadd.f32 %v1858, %v10568
      %v10619 = vadd.f32 %v2004, %v10569
      %v10620 = vadd.f32 %v1860, %v10570
      %v10621 = vadd.f32 %v2006, %v10571
      %v10622 = vadd.f32 %v1863, %v10572
      %v10623 = vadd.f32 %v2009, %v10573
      %v10624 = vadd.f32 %v1865, %v10574
      %v10625 = vadd.f32 %v2011, %v10575
      %v10626 = vadd.f32 %v1868, %v10576
      %v10627 = vadd.f32 %v2014, %v10577
      %v10628 = vadd.f32 %v1870, %v10578
      %v10629 = vadd.f32 %v2016, %v10579
      %v10630 = vadd.f32 %v1873, %v10580
      %v10631 = vadd.f32 %v2019, %v10581
      %v10632 = vadd.f32 %v1875, %v10582
      %v10633 = vadd.f32 %v2021, %v10583
      %v10634 = vadd.f32 %v1878, %v10584
      %v10635 = vadd.f32 %v2024, %v10585
      %v10636 = vadd.f32 %v1880, %v10586
      %v10637 = vadd.f32 %v2026, %v10587
      %v10638 = vadd.f32 %v1883, %v10588
      %v10639 = vadd.f32 %v2029, %v10589
      %v10640 = vadd.f32 %v1885, %v10590
      %v10641 = vadd.f32 %v2031, %v10591
      %v10642 = vadd.f32 %v1888, %v10592
      %v10643 = vadd.f32 %v2034, %v10593
      %v10644 = vadd.f32 %v1890, %v10594
      %v10645 = vadd.f32 %v2036, %v10595
      %v10646 = vadd.f32 %v1893, %v10596
      %v10647 = vadd.f32 %v2039, %v10597
      %v10648 = vadd.f32 %v1895, %v10598
      %v10649 = vadd.f32 %v2041, %v10599
      %v10650 = vadd.f32 %v1898, %v10600
      %v10651 = vadd.f32 %v2044, %v10601
      %v10652 = vadd.f32 %v1900, %v10602
      %v10653 = vadd.f32 %v2046, %v10603
      %v10654 = vadd.f32 %v1903, %v10604
      %v10655 = vadd.f32 %v2049, %v10605
      %v10656 = vadd.f32 %v1905, %v10606
      %v10657 = vadd.f32 %v2051, %v10607
      %v10658 = vadd.f32 %v1908, %v10608
      %v10659 = vadd.f32 %v2054, %v10609
      %v10660 = vmax.f32 %v10610, 0.0
      %v10661 = vmax.f32 %v10611, 0.0
      %v10662 = vmax.f32 %v10612, 0.0
      %v10663 = vmax.f32 %v10613, 0.0
      %v10664 = vmax.f32 %v10614, 0.0
      %v10665 = vmax.f32 %v10615, 0.0
      %v10666 = vmax.f32 %v10616, 0.0
      %v10667 = vmax.f32 %v10617, 0.0
      %v10668 = vmax.f32 %v10618, 0.0
      %v10669 = vmax.f32 %v10619, 0.0
      %v10670 = vmax.f32 %v10620, 0.0
      %v10671 = vmax.f32 %v10621, 0.0
      %v10672 = vmax.f32 %v10622, 0.0
      %v10673 = vmax.f32 %v10623, 0.0
      %v10674 = vmax.f32 %v10624, 0.0
      %v10675 = vmax.f32 %v10625, 0.0
      %v10676 = vmax.f32 %v10626, 0.0
      %v10677 = vmax.f32 %v10627, 0.0
      %v10678 = vmax.f32 %v10628, 0.0
      %v10679 = vmax.f32 %v10629, 0.0
      %v10680 = vmax.f32 %v10630, 0.0
      %v10681 = vmax.f32 %v10631, 0.0
      %v10682 = vmax.f32 %v10632, 0.0
      %v10683 = vmax.f32 %v10633, 0.0
      %v10684 = vmax.f32 %v10634, 0.0
      %v10685 = vmax.f32 %v10635, 0.0
      %v10686 = vmax.f32 %v10636, 0.0
      %v10687 = vmax.f32 %v10637, 0.0
      %v10688 = vmax.f32 %v10638, 0.0
      %v10689 = vmax.f32 %v10639, 0.0
      %v10690 = vmax.f32 %v10640, 0.0
      %v10691 = vmax.f32 %v10641, 0.0
      %v10692 = vmax.f32 %v10642, 0.0
      %v10693 = vmax.f32 %v10643, 0.0
      %v10694 = vmax.f32 %v10644, 0.0
      %v10695 = vmax.f32 %v10645, 0.0
      %v10696 = vmax.f32 %v10646, 0.0
      %v10697 = vmax.f32 %v10647, 0.0
      %v10698 = vmax.f32 %v10648, 0.0
      %v10699 = vmax.f32 %v10649, 0.0
      %v10700 = vmax.f32 %v10650, 0.0
      %v10701 = vmax.f32 %v10651, 0.0
      %v10702 = vmax.f32 %v10652, 0.0
      %v10703 = vmax.f32 %v10653, 0.0
      %v10704 = vmax.f32 %v10654, 0.0
      %v10705 = vmax.f32 %v10655, 0.0
      %v10706 = vmax.f32 %v10656, 0.0
      %v10707 = vmax.f32 %v10657, 0.0
      %v10708 = vmax.f32 %v10658, 0.0
      %v10709 = vmax.f32 %v10659, 0.0
      %10710 = vst [vmem:[%s278] sm:$0xff] %v10660
      %10711 = vst.msk [vmem:[%s278 + $0x8] sm:$0xff] %vm515, %v10661
      %10712 = vst [vmem:[%s278 + $0x10] sm:$0xff] %v10662
      %10713 = vst.msk [vmem:[%s278 + $0x18] sm:$0xff] %vm515, %v10663
      %10714 = vst [vmem:[%s278 + $0x20] sm:$0xff] %v10664
      %10715 = vst.msk [vmem:[%s278 + $0x28] sm:$0xff] %vm515, %v10665
      %10716 = vst [vmem:[%s278 + $0x30] sm:$0xff] %v10666
      %10717 = vst.msk [vmem:[%s278 + $0x38] sm:$0xff] %vm515, %v10667
      %10718 = vst [vmem:[%s278 + $0x40] sm:$0xff] %v10668
      %10719 = vst.msk [vmem:[%s278 + $0x48] sm:$0xff] %vm515, %v10669
      %10720 = vst [vmem:[%s278 + $0x50] sm:$0xff] %v10670
      %10721 = vst.msk [vmem:[%s278 + $0x58] sm:$0xff] %vm515, %v10671
      %10722 = vst [vmem:[%s278 + $0x60] sm:$0xff] %v10672
      %10723 = vst.msk [vmem:[%s278 + $0x68] sm:$0xff] %vm515, %v10673
      %10724 = vst [vmem:[%s278 + $0x70] sm:$0xff] %v10674
      %10725 = vst.msk [vmem:[%s278 + $0x78] sm:$0xff] %vm515, %v10675
      %10726 = vst [vmem:[%s278 + $0x80] sm:$0xff] %v10676
      %10727 = vst.msk [vmem:[%s278 + $0x88] sm:$0xff] %vm515, %v10677
      %10728 = vst [vmem:[%s278 + $0x90] sm:$0xff] %v10678
      %10729 = vst.msk [vmem:[%s278 + $0x98] sm:$0xff] %vm515, %v10679
      %10730 = vst [vmem:[%s278 + $0xa0] sm:$0xff] %v10680
      %10731 = vst.msk [vmem:[%s278 + $0xa8] sm:$0xff] %vm515, %v10681
      %10732 = vst [vmem:[%s278 + $0xb0] sm:$0xff] %v10682
      %10733 = vst.msk [vmem:[%s278 + $0xb8] sm:$0xff] %vm515, %v10683
      %10734 = vst [vmem:[%s278 + $0xc0] sm:$0xff] %v10684
      %10735 = vst.msk [vmem:[%s278 + $0xc8] sm:$0xff] %vm515, %v10685
      %10736 = vst [vmem:[%s278 + $0xd0] sm:$0xff] %v10686
      %10737 = vst.msk [vmem:[%s278 + $0xd8] sm:$0xff] %vm515, %v10687
      %10738 = vst [vmem:[%s278 + $0xe0] sm:$0xff] %v10688
      %10739 = vst.msk [vmem:[%s278 + $0xe8] sm:$0xff] %vm515, %v10689
      %10740 = vst [vmem:[%s278 + $0xf0] sm:$0xff] %v10690
      %10741 = vst.msk [vmem:[%s278 + $0xf8] sm:$0xff] %vm515, %v10691
      %10742 = vst [vmem:[%s278 + $0x100] sm:$0xff] %v10692
      %10743 = vst.msk [vmem:[%s278 + $0x108] sm:$0xff] %vm515, %v10693
      %10744 = vst [vmem:[%s278 + $0x110] sm:$0xff] %v10694
      %10745 = vst.msk [vmem:[%s278 + $0x118] sm:$0xff] %vm515, %v10695
      %10746 = vst [vmem:[%s278 + $0x120] sm:$0xff] %v10696
      %10747 = vst.msk [vmem:[%s278 + $0x128] sm:$0xff] %vm515, %v10697
      %10748 = vst [vmem:[%s278 + $0x130] sm:$0xff] %v10698
      %10749 = vst.msk [vmem:[%s278 + $0x138] sm:$0xff] %vm515, %v10699
      %10750 = vst [vmem:[%s278 + $0x140] sm:$0xff] %v10700
      %10751 = vst.msk [vmem:[%s278 + $0x148] sm:$0xff] %vm515, %v10701
      %10752 = vst [vmem:[%s278 + $0x150] sm:$0xff] %v10702
      %10753 = vst.msk [vmem:[%s278 + $0x158] sm:$0xff] %vm515, %v10703
      %10754 = vst [vmem:[%s278 + $0x160] sm:$0xff] %v10704
      %10755 = vst.msk [vmem:[%s278 + $0x168] sm:$0xff] %vm515, %v10705
      %10756 = vst [vmem:[%s278 + $0x170] sm:$0xff] %v10706
      %10757 = vst.msk [vmem:[%s278 + $0x178] sm:$0xff] %vm515, %v10707
      %10758 = vst [vmem:[%s278 + $0x180] sm:$0xf] %v10708
      %vm10759 = vcmask 519168
      %10760 = vst.msk [vmem:[%s278 + $0x188] sm:$0xf] %vm10759, %v10709
      %p10761 = scmp.lt.s32.totalorder %s18, 1
      %s10762 = scalar_select %p10761, %s18, 1
      %s10763 = smul.addr %s10762, 50
      %s10764 = smul.addr %s10763, 8
      %s10765 = scalar_lea.vmem %s7, %s10764
      // Predicated region
      $region49: #{dy_graph_conv2d_forward.1} parent=47 // pred_check
        %p10766 = pneg %p188
      $region50: #{dy_graph_conv2d_forward.1} parent=47 // pred_check_branch
        %10768 = sbr.rel (%p10766) target = $region52
      $region51: #{dy_graph_conv2d_forward.1} parent=47 // pred_region
        _
      $region52: #{dy_graph_conv2d_forward.1} parent=47 // pred_fallthru
        _
    $region48: #{dy_graph_conv2d_forward.1} parent=5 // pred_fallthru
      _
    %p10769 = scmp.le.s32.totalorder 2, %s13
    // Predicated region
    $region53: #{dy_graph_conv2d_forward.1} parent=5 // pred_check
      %p10770 = pneg %p10769
    $region54: #{dy_graph_conv2d_forward.1} parent=5 // pred_check_branch
      %10772 = sbr.rel (%p10770) target = $region56
    $region55: #{dy_graph_conv2d_forward.1} parent=5 // pred_region
      %s10773 = ssub.s32 %s13, 2
      // Predicated region
      $region57: #{dy_graph_conv2d_forward.1} parent=55 // pred_check
        %p10774 = pneg %p194
      $region58: #{dy_graph_conv2d_forward.1} parent=55 // pred_check_branch
        %10776 = sbr.rel (%p10774) target = $region60
      $region59: #{dy_graph_conv2d_forward.1} parent=55 // pred_region
        %p10777 = scmp.lt.s32.totalorder %s19, 1
        %s10778 = scalar_select %p10777, %s19, 1
        %s10779 = smul.addr %s10778, 50
        %s10780 = smul.addr %s10779, 8
        %s10781 = scalar_lea.vmem %s7, %s10780
      $region60: #{dy_graph_conv2d_forward.1} parent=55 // pred_fallthru
        _
    $region56: #{dy_graph_conv2d_forward.1} parent=5 // pred_fallthru
      _
  $region6: #{dy_graph_conv2d_forward.1} parent=0 // loop_footer
    %s17 = sadd.s32 1, %s13
  $region7: #{dy_graph_conv2d_forward.1} parent=0 // loop_footer_branch
    %12 = sbr.rel target = $region3
  $region8: #{dy_graph_conv2d_forward.1} parent=0 // loop_exit
    _

</llo_original>
